<compile_context>
chip_gen: v6e
topology: v6e:2x2x1
jax: 0.10.0
libtpu: 0.0.40
codegen_flags: <defaults>
</compile_context>

<pallas_src>
import numpy as np
import jax
import jax.numpy as jnp
from jax.experimental import pallas as pl
from jax.experimental.pallas import tpu as pltpu


# ------------------------------ fused kernel -------------------------------

def _fused_forward_kernel(
    x_ref, eps_ref,
    wd0_ref, m0_ref, mt0_ref, g0_ref, b0_ref,
    wd1_ref, m1_ref, mt1_ref, g1_ref, b1_ref,
    wd2_ref, m2_ref, mt2_ref, g2_ref, b2_ref,
    wml_ref, bml_ref, wg_ref, bg_ref, wp_ref, bp_ref, lng_ref, lnb_ref,
    out_ref,
):
    """Entire ManifoldLearningModule.forward in one kernel body."""

    def conv_bn_relu(x, wd_ref, m_ref, mt_ref, g_ref, b_ref):
        # Conv as a single dense MXU matmul (bf16 operands, f32 accumulation).
        a = jnp.dot(x.astype(jnp.bfloat16), wd_ref[...],
                    preferred_element_type=jnp.float32)            # [B, P*C]
        bsz, pc = a.shape
        c = m_ref.shape[1]
        inv_n = 1.0 / float(bsz * (pc // c))
        # Per-channel batch statistics via 0/1 pooling matmuls (no reshapes).
        s1 = jnp.sum(jnp.dot(a, m_ref[...],
                             preferred_element_type=jnp.float32),
                     axis=0, keepdims=True)                        # [1, C]
        s2 = jnp.sum(jnp.dot(a * a, m_ref[...],
                             preferred_element_type=jnp.float32),
                     axis=0, keepdims=True)                        # [1, C]
        mean = s1 * inv_n
        var = jnp.maximum(s2 * inv_n - mean * mean, 0.0)           # biased, like PyTorch
        scale_c = g_ref[...] * jax.lax.rsqrt(var + 1e-5)           # [1, C]
        shift_c = b_ref[...] - mean * scale_c                      # [1, C]
        # Broadcast the per-channel affine back to [B, P*C] layout via M^T.
        scale_b = jnp.dot(scale_c, mt_ref[...],
                          preferred_element_type=jnp.float32)      # [1, P*C]
        shift_b = jnp.dot(shift_c, mt_ref[...],
                          preferred_element_type=jnp.float32)      # [1, P*C]
        return jnp.maximum(a * scale_b + shift_b, 0.0)             # BN + ReLU

    h = conv_bn_relu(x_ref[...], wd0_ref, m0_ref, mt0_ref, g0_ref, b0_ref)
    h = conv_bn_relu(h, wd1_ref, m1_ref, mt1_ref, g1_ref, b1_ref)
    h = conv_bn_relu(h, wd2_ref, m2_ref, mt2_ref, g2_ref, b2_ref)  # [B, flat]

    # ------------------------------ latent head ----------------------------
    latent = eps_ref.shape[1]
    mulv = jnp.dot(h, wml_ref[...],
                   preferred_element_type=jnp.float32) + bml_ref[...]   # [B, 2L]
    mu = mulv[:, :latent]
    logvar = mulv[:, latent:]
    # TODO(synk): torch.randn_like could be drawn in-kernel via pltpu.prng_*;
    # kept as an explicit eps input for deterministic testing.
    z = mu + eps_ref[...] * jnp.exp(0.5 * logvar)                  # reparameterize
    zg = jnp.dot(z, wg_ref[...],
                 preferred_element_type=jnp.float32) + bg_ref[...]
    zf = jnp.dot(zg, wp_ref[...],
                 preferred_element_type=jnp.float32) + bp_ref[...] + z
    m = jnp.mean(zf, axis=-1, keepdims=True)                       # LayerNorm
    v = jnp.mean((zf - m) ** 2, axis=-1, keepdims=True)
    zf = (zf - m) * jax.lax.rsqrt(v + 1e-5) * lng_ref[...] + lnb_ref[...]

    # Pack the four latent outputs into one lane-contiguous slab.
    out_ref[...] = jnp.concatenate([zf, mu, logvar, z], axis=-1)   # [B, 4L]


# ------------------------------ model wrapper -------------------------------

def manifold_forward(x_nchw, weights, eps):
    """Matches ManifoldLearningModule.forward: returns (z_final, (mu, logvar, z))."""
    batch = x_nchw.shape[0]
    latent = eps.shape[1]
    # Stage-0 Toeplitz matrix is built for NCHW-flatten rows -> plain reshape,
    # no transpose needed.
    x_flat = x_nchw.reshape(batch, -1).astype(jnp.float32)

    def vmem():
        return pl.BlockSpec(memory_space=pltpu.MemorySpace.VMEM)

    out = pl.pallas_call(
        _fused_forward_kernel,
        out_shape=jax.ShapeDtypeStruct((batch, 4 * latent), jnp.float32),
        in_specs=[vmem() for _ in range(2 + len(weights))],
        out_specs=vmem(),
    )(x_flat, eps, *weights)

    z_final = out[:, 0 * latent:1 * latent]
    mu = out[:, 1 * latent:2 * latent]
    logvar = out[:, 2 * latent:3 * latent]
    z = out[:, 3 * latent:4 * latent]
    return z_final, (mu, logvar, z)


# -------------------------- parameter initialisation ------------------------

def init_raw_params(key, input_dim, hidden_dim, latent_dim, flat_dim):
    """PyTorch-default-style initialisation of the module's parameters."""
    keys = jax.random.split(key, 7)

    def linear(k, fan_in, fan_out):
        kw, kb = jax.random.split(k)
        lim = 1.0 / float(np.sqrt(fan_in))
        w = jax.random.uniform(kw, (fan_in, fan_out), jnp.float32, -lim, lim)
        b = jax.random.uniform(kb, (fan_out,), jnp.float32, -lim, lim)
        return w, b

    params = {}
    cins = [input_dim, hidden_dim, hidden_dim]
    for i, cin in enumerate(cins):
        kw, _ = jax.random.split(keys[i])
        lim = 1.0 / float(np.sqrt(cin * 9))
        params[f"conv{i}_w"] = jax.random.uniform(
            kw, (3, 3, cin, hidden_dim), jnp.float32, -lim, lim)    # HWIO
        # NOTE: conv bias omitted — a per-channel bias immediately followed by
        # batch-statistics BatchNorm cancels exactly in the forward output.
        params[f"bn{i}_g"] = jnp.ones((hidden_dim,), jnp.float32)
        params[f"bn{i}_b"] = jnp.zeros((hidden_dim,), jnp.float32)

    params["fc_mu_w"], params["fc_mu_b"] = linear(keys[3], flat_dim, latent_dim)
    params["fc_lv_w"], params["fc_lv_b"] = linear(keys[4], flat_dim, latent_dim)
    params["gnn_w"], params["gnn_b"] = linear(keys[5], latent_dim, latent_dim)
    params["proj_w"], params["proj_b"] = linear(keys[6], latent_dim, latent_dim)
    params["ln_g"] = jnp.ones((latent_dim,), jnp.float32)
    params["ln_b"] = jnp.zeros((latent_dim,), jnp.float32)
    return params


def _conv3x3_s2p1_as_dense(w_hwio, H, W, row_layout):
    """Dense [H*W*Cin, Ho*Wo*Cout] matrix equivalent to Conv2d(k=3, s=2, p=1).

    row_layout: 'nchw' -> rows indexed  cin*H*W + ih*W + iw   (stage-0 input)
                'nhwc' -> rows indexed (ih*W + iw)*Cin + cin  (conv-stage outputs)
    Columns are always (oh*Wo + ow)*Cout + cout (position-major, channel-minor).
    """
    KH, KW, Cin, Cout = w_hwio.shape
    Ho, Wo = (H + 1) // 2, (W + 1) // 2
    dense = np.zeros((H * W * Cin, Ho * Wo * Cout), np.float32)
    cin_idx = np.arange(Cin)
    for oh in range(Ho):
        for ow in range(Wo):
            c0 = (oh * Wo + ow) * Cout
            for kh in range(KH):
                ih = 2 * oh + kh - 1
                if ih < 0 or ih >= H:
                    continue
                for kw in range(KW):
                    iw = 2 * ow + kw - 1
                    if iw < 0 or iw >= W:
                        continue
                    if row_layout == "nchw":
                        rows = cin_idx * (H * W) + ih * W + iw
                    else:
                        rows = (ih * W + iw) * Cin + cin_idx
                    dense[rows, c0:c0 + Cout] += w_hwio[kh, kw]
    return dense


def build_kernel_weights(params, input_dim, hidden_dim, latent_dim, H, W):
    """Turn module params into the flat tuple of arrays the fused kernel takes."""
    p = {k: np.asarray(v, np.float32) for k, v in params.items()}
    weights = []

    h_cur, w_cur = H, W
    cins = [input_dim, hidden_dim, hidden_dim]
    layouts = ["nchw", "nhwc", "nhwc"]
    for i in range(3):
        dense = _conv3x3_s2p1_as_dense(p[f"conv{i}_w"], h_cur, w_cur, layouts[i])
        h_cur, w_cur = (h_cur + 1) // 2, (w_cur + 1) // 2
        pos = h_cur * w_cur
        eye = np.eye(hidden_dim, dtype=np.float32)
        pool = np.tile(eye, (pos, 1))          # [P*C, C] per-channel pooling
        bcast = np.tile(eye, (1, pos))         # [C, P*C] per-channel broadcast
        weights += [
            jnp.asarray(dense, jnp.bfloat16),  # bf16 MXU operand (f32 accum in-kernel)
            jnp.asarray(pool), jnp.asarray(bcast),
            jnp.asarray(p[f"bn{i}_g"].reshape(1, hidden_dim)),
            jnp.asarray(p[f"bn{i}_b"].reshape(1, hidden_dim)),
        ]

    # Permute fc rows from PyTorch NCHW-flatten order to the conv-stage output
    # layout (position-major, channel-minor) so no runtime transpose is needed,
    # and merge fc_mu / fc_logvar into one (F, 2L) weight.
    hf, wf, c = h_cur, w_cur, hidden_dim
    perm = np.zeros(hf * wf * c, np.int32)
    for hh in range(hf):
        for ww in range(wf):
            for cc in range(c):
                perm[(hh * wf + ww) * c + cc] = cc * hf * wf + hh * wf + ww
    w_ml = np.concatenate([p["fc_mu_w"][perm], p["fc_lv_w"][perm]], axis=1)
    b_ml = np.concatenate([p["fc_mu_b"], p["fc_lv_b"]]).reshape(1, -1)
    weights += [jnp.asarray(w_ml), jnp.asarray(b_ml)]

    weights += [
        jnp.asarray(p["gnn_w"]), jnp.asarray(p["gnn_b"].reshape(1, latent_dim)),
        jnp.asarray(p["proj_w"]), jnp.asarray(p["proj_b"].reshape(1, latent_dim)),
        jnp.asarray(p["ln_g"].reshape(1, latent_dim)),
        jnp.asarray(p["ln_b"].reshape(1, latent_dim)),
    ]
    return tuple(weights)


# ------------------------------------ main -----------------------------------

if __name__ == "__main__":
    # Small shapes consistent with the module's forward:
    # input_dim=8, hidden_dim=16, latent_dim=8, 16x16 spatial -> 2x2 after
    # three stride-2 convs, so the lazily-built fc layers see flat_dim=64.
    B, C_IN, H, W = 2, 8, 16, 16
    HIDDEN, LATENT = 16, 8
    FLAT = HIDDEN * (H // 8) * (W // 8)

    root = jax.random.PRNGKey(0)
    k_x, k_param, k_eps = jax.random.split(root, 3)
    x = jax.random.normal(k_x, (B, C_IN, H, W), jnp.float32)
    params = init_raw_params(k_param, C_IN, HIDDEN, LATENT, FLAT)
    weights = build_kernel_weights(params, C_IN, HIDDEN, LATENT, H, W)
    # Deterministic stand-in for torch.randn_like() in reparameterize().
    eps = jax.random.normal(k_eps, (B, LATENT), jnp.float32)

    fwd = jax.jit(manifold_forward)
    z_final, (mu, logvar, z) = fwd(x, weights, eps)
    jax.block_until_ready((z_final, mu, logvar, z))

    assert z_final.shape == (B, LATENT)
    assert mu.shape == (B, LATENT) and logvar.shape == (B, LATENT)
    assert z.shape == (B, LATENT)
    assert bool(jnp.all(jnp.isfinite(z_final)))
    print("KERNEL_OK")
</pallas_src>

<mosaic_0001>
module attributes {stable_mosaic.version = 11 : i64} {
  func.func @_fused_forward_kernel(%arg0: memref<2x2048xf32, #tpu.memory_space<vmem>>, %arg1: memref<2x8xf32, #tpu.memory_space<vmem>>, %arg2: memref<2048x1024xbf16, #tpu.memory_space<vmem>>, %arg3: memref<1024x16xf32, #tpu.memory_space<vmem>>, %arg4: memref<16x1024xf32, #tpu.memory_space<vmem>>, %arg5: memref<1x16xf32, #tpu.memory_space<vmem>>, %arg6: memref<1x16xf32, #tpu.memory_space<vmem>>, %arg7: memref<1024x256xbf16, #tpu.memory_space<vmem>>, %arg8: memref<256x16xf32, #tpu.memory_space<vmem>>, %arg9: memref<16x256xf32, #tpu.memory_space<vmem>>, %arg10: memref<1x16xf32, #tpu.memory_space<vmem>>, %arg11: memref<1x16xf32, #tpu.memory_space<vmem>>, %arg12: memref<256x64xbf16, #tpu.memory_space<vmem>>, %arg13: memref<64x16xf32, #tpu.memory_space<vmem>>, %arg14: memref<16x64xf32, #tpu.memory_space<vmem>>, %arg15: memref<1x16xf32, #tpu.memory_space<vmem>>, %arg16: memref<1x16xf32, #tpu.memory_space<vmem>>, %arg17: memref<64x16xf32, #tpu.memory_space<vmem>>, %arg18: memref<1x16xf32, #tpu.memory_space<vmem>>, %arg19: memref<8x8xf32, #tpu.memory_space<vmem>>, %arg20: memref<1x8xf32, #tpu.memory_space<vmem>>, %arg21: memref<8x8xf32, #tpu.memory_space<vmem>>, %arg22: memref<1x8xf32, #tpu.memory_space<vmem>>, %arg23: memref<1x8xf32, #tpu.memory_space<vmem>>, %arg24: memref<1x8xf32, #tpu.memory_space<vmem>>, %arg25: memref<2x32xf32, #tpu.memory_space<vmem>>) attributes {dimension_semantics = [], scalar_prefetch = 0 : i64, scratch_operands = 0 : i64, tpu.core_type = #tpu.core_type<tc>} {
    %c0 = arith.constant 0 : index
    %c0_0 = arith.constant 0 : index
    %0 = vector.load %arg0[%c0, %c0_0] : memref<2x2048xf32, #tpu.memory_space<vmem>>, vector<2x2048xf32>
    %1 = arith.truncf %0 : vector<2x2048xf32> to vector<2x2048xbf16>
    %c0_1 = arith.constant 0 : index
    %c0_2 = arith.constant 0 : index
    %2 = vector.load %arg2[%c0_1, %c0_2] : memref<2048x1024xbf16, #tpu.memory_space<vmem>>, vector<2048x1024xbf16>
    %cst = arith.constant dense<0.000000e+00> : vector<2x1024xf32>
    %3 = tpu.matmul %1, %2, %cst {dimension_numbers = #tpu.dot_dimension_numbers<[1], [0], [0], [1], [0, 0, 1, 1], [], []>} : vector<2x2048xbf16>, vector<2048x1024xbf16>, vector<2x1024xf32> -> vector<2x1024xf32>
    %c0_3 = arith.constant 0 : index
    %c0_4 = arith.constant 0 : index
    %4 = vector.load %arg3[%c0_3, %c0_4] : memref<1024x16xf32, #tpu.memory_space<vmem>>, vector<1024x16xf32>
    %cst_5 = arith.constant dense<0.000000e+00> : vector<2x16xf32>
    %5 = tpu.matmul %3, %4, %cst_5 {dimension_numbers = #tpu.dot_dimension_numbers<[1], [0], [0], [1], [0, 0, 1, 1], [], []>} : vector<2x1024xf32>, vector<1024x16xf32>, vector<2x16xf32> -> vector<2x16xf32>
    %cst_6 = arith.constant dense<0.000000e+00> : vector<16xf32>
    %6 = vector.multi_reduction <add>, %5, %cst_6 [0] : vector<2x16xf32> to vector<16xf32>
    %7 = vector.shape_cast %6 : vector<16xf32> to vector<1x16xf32>
    %8 = arith.mulf %3, %3 : vector<2x1024xf32>
    %c0_7 = arith.constant 0 : index
    %c0_8 = arith.constant 0 : index
    %9 = vector.load %arg3[%c0_7, %c0_8] : memref<1024x16xf32, #tpu.memory_space<vmem>>, vector<1024x16xf32>
    %cst_9 = arith.constant dense<0.000000e+00> : vector<2x16xf32>
    %10 = tpu.matmul %8, %9, %cst_9 {dimension_numbers = #tpu.dot_dimension_numbers<[1], [0], [0], [1], [0, 0, 1, 1], [], []>} : vector<2x1024xf32>, vector<1024x16xf32>, vector<2x16xf32> -> vector<2x16xf32>
    %cst_10 = arith.constant dense<0.000000e+00> : vector<16xf32>
    %11 = vector.multi_reduction <add>, %10, %cst_10 [0] : vector<2x16xf32> to vector<16xf32>
    %12 = vector.shape_cast %11 : vector<16xf32> to vector<1x16xf32>
    %cst_11 = arith.constant 7.812500e-03 : f32
    %13 = vector.broadcast %cst_11 : f32 to vector<1x16xf32>
    %14 = arith.mulf %7, %13 : vector<1x16xf32>
    %cst_12 = arith.constant 7.812500e-03 : f32
    %15 = vector.broadcast %cst_12 : f32 to vector<1x16xf32>
    %16 = arith.mulf %12, %15 : vector<1x16xf32>
    %17 = arith.mulf %14, %14 : vector<1x16xf32>
    %18 = arith.subf %16, %17 : vector<1x16xf32>
    %cst_13 = arith.constant 0.000000e+00 : f32
    %19 = vector.broadcast %cst_13 : f32 to vector<1x16xf32>
    %20 = arith.maximumf %18, %19 : vector<1x16xf32>
    %c0_14 = arith.constant 0 : index
    %c0_15 = arith.constant 0 : index
    %21 = vector.load %arg5[%c0_14, %c0_15] : memref<1x16xf32, #tpu.memory_space<vmem>>, vector<1x16xf32>
    %cst_16 = arith.constant 9.99999974E-6 : f32
    %22 = vector.broadcast %cst_16 : f32 to vector<1x16xf32>
    %23 = arith.addf %20, %22 : vector<1x16xf32>
    %24 = math.rsqrt %23 : vector<1x16xf32>
    %25 = arith.mulf %21, %24 : vector<1x16xf32>
    %c0_17 = arith.constant 0 : index
    %c0_18 = arith.constant 0 : index
    %26 = vector.load %arg6[%c0_17, %c0_18] : memref<1x16xf32, #tpu.memory_space<vmem>>, vector<1x16xf32>
    %27 = arith.mulf %14, %25 : vector<1x16xf32>
    %28 = arith.subf %26, %27 : vector<1x16xf32>
    %c0_19 = arith.constant 0 : index
    %c0_20 = arith.constant 0 : index
    %29 = vector.load %arg4[%c0_19, %c0_20] : memref<16x1024xf32, #tpu.memory_space<vmem>>, vector<16x1024xf32>
    %cst_21 = arith.constant dense<0.000000e+00> : vector<1x1024xf32>
    %30 = tpu.matmul %25, %29, %cst_21 {dimension_numbers = #tpu.dot_dimension_numbers<[1], [0], [0], [1], [0, 0, 1, 1], [], []>} : vector<1x16xf32>, vector<16x1024xf32>, vector<1x1024xf32> -> vector<1x1024xf32>
    %c0_22 = arith.constant 0 : index
    %c0_23 = arith.constant 0 : index
    %31 = vector.load %arg4[%c0_22, %c0_23] : memref<16x1024xf32, #tpu.memory_space<vmem>>, vector<16x1024xf32>
    %cst_24 = arith.constant dense<0.000000e+00> : vector<1x1024xf32>
    %32 = tpu.matmul %28, %31, %cst_24 {dimension_numbers = #tpu.dot_dimension_numbers<[1], [0], [0], [1], [0, 0, 1, 1], [], []>} : vector<1x16xf32>, vector<16x1024xf32>, vector<1x1024xf32> -> vector<1x1024xf32>
    %33 = vector.broadcast %30 : vector<1x1024xf32> to vector<2x1024xf32>
    %34 = arith.mulf %3, %33 : vector<2x1024xf32>
    %35 = vector.broadcast %32 : vector<1x1024xf32> to vector<2x1024xf32>
    %36 = arith.addf %34, %35 : vector<2x1024xf32>
    %cst_25 = arith.constant 0.000000e+00 : f32
    %37 = vector.broadcast %cst_25 : f32 to vector<2x1024xf32>
    %38 = arith.maximumf %36, %37 : vector<2x1024xf32>
    %39 = arith.truncf %38 : vector<2x1024xf32> to vector<2x1024xbf16>
    %c0_26 = arith.constant 0 : index
    %c0_27 = arith.constant 0 : index
    %40 = vector.load %arg7[%c0_26, %c0_27] : memref<1024x256xbf16, #tpu.memory_space<vmem>>, vector<1024x256xbf16>
    %cst_28 = arith.constant dense<0.000000e+00> : vector<2x256xf32>
    %41 = tpu.matmul %39, %40, %cst_28 {dimension_numbers = #tpu.dot_dimension_numbers<[1], [0], [0], [1], [0, 0, 1, 1], [], []>} : vector<2x1024xbf16>, vector<1024x256xbf16>, vector<2x256xf32> -> vector<2x256xf32>
    %c0_29 = arith.constant 0 : index
    %c0_30 = arith.constant 0 : index
    %42 = vector.load %arg8[%c0_29, %c0_30] : memref<256x16xf32, #tpu.memory_space<vmem>>, vector<256x16xf32>
    %cst_31 = arith.constant dense<0.000000e+00> : vector<2x16xf32>
    %43 = tpu.matmul %41, %42, %cst_31 {dimension_numbers = #tpu.dot_dimension_numbers<[1], [0], [0], [1], [0, 0, 1, 1], [], []>} : vector<2x256xf32>, vector<256x16xf32>, vector<2x16xf32> -> vector<2x16xf32>
    %cst_32 = arith.constant dense<0.000000e+00> : vector<16xf32>
    %44 = vector.multi_reduction <add>, %43, %cst_32 [0] : vector<2x16xf32> to vector<16xf32>
    %45 = vector.shape_cast %44 : vector<16xf32> to vector<1x16xf32>
    %46 = arith.mulf %41, %41 : vector<2x256xf32>
    %c0_33 = arith.constant 0 : index
    %c0_34 = arith.constant 0 : index
    %47 = vector.load %arg8[%c0_33, %c0_34] : memref<256x16xf32, #tpu.memory_space<vmem>>, vector<256x16xf32>
    %cst_35 = arith.constant dense<0.000000e+00> : vector<2x16xf32>
    %48 = tpu.matmul %46, %47, %cst_35 {dimension_numbers = #tpu.dot_dimension_numbers<[1], [0], [0], [1], [0, 0, 1, 1], [], []>} : vector<2x256xf32>, vector<256x16xf32>, vector<2x16xf32> -> vector<2x16xf32>
    %cst_36 = arith.constant dense<0.000000e+00> : vector<16xf32>
    %49 = vector.multi_reduction <add>, %48, %cst_36 [0] : vector<2x16xf32> to vector<16xf32>
    %50 = vector.shape_cast %49 : vector<16xf32> to vector<1x16xf32>
    %cst_37 = arith.constant 3.125000e-02 : f32
    %51 = vector.broadcast %cst_37 : f32 to vector<1x16xf32>
    %52 = arith.mulf %45, %51 : vector<1x16xf32>
    %cst_38 = arith.constant 3.125000e-02 : f32
    %53 = vector.broadcast %cst_38 : f32 to vector<1x16xf32>
    %54 = arith.mulf %50, %53 : vector<1x16xf32>
    %55 = arith.mulf %52, %52 : vector<1x16xf32>
    %56 = arith.subf %54, %55 : vector<1x16xf32>
    %cst_39 = arith.constant 0.000000e+00 : f32
    %57 = vector.broadcast %cst_39 : f32 to vector<1x16xf32>
    %58 = arith.maximumf %56, %57 : vector<1x16xf32>
    %c0_40 = arith.constant 0 : index
    %c0_41 = arith.constant 0 : index
    %59 = vector.load %arg10[%c0_40, %c0_41] : memref<1x16xf32, #tpu.memory_space<vmem>>, vector<1x16xf32>
    %cst_42 = arith.constant 9.99999974E-6 : f32
    %60 = vector.broadcast %cst_42 : f32 to vector<1x16xf32>
    %61 = arith.addf %58, %60 : vector<1x16xf32>
    %62 = math.rsqrt %61 : vector<1x16xf32>
    %63 = arith.mulf %59, %62 : vector<1x16xf32>
    %c0_43 = arith.constant 0 : index
    %c0_44 = arith.constant 0 : index
    %64 = vector.load %arg11[%c0_43, %c0_44] : memref<1x16xf32, #tpu.memory_space<vmem>>, vector<1x16xf32>
    %65 = arith.mulf %52, %63 : vector<1x16xf32>
    %66 = arith.subf %64, %65 : vector<1x16xf32>
    %c0_45 = arith.constant 0 : index
    %c0_46 = arith.constant 0 : index
    %67 = vector.load %arg9[%c0_45, %c0_46] : memref<16x256xf32, #tpu.memory_space<vmem>>, vector<16x256xf32>
    %cst_47 = arith.constant dense<0.000000e+00> : vector<1x256xf32>
    %68 = tpu.matmul %63, %67, %cst_47 {dimension_numbers = #tpu.dot_dimension_numbers<[1], [0], [0], [1], [0, 0, 1, 1], [], []>} : vector<1x16xf32>, vector<16x256xf32>, vector<1x256xf32> -> vector<1x256xf32>
    %c0_48 = arith.constant 0 : index
    %c0_49 = arith.constant 0 : index
    %69 = vector.load %arg9[%c0_48, %c0_49] : memref<16x256xf32, #tpu.memory_space<vmem>>, vector<16x256xf32>
    %cst_50 = arith.constant dense<0.000000e+00> : vector<1x256xf32>
    %70 = tpu.matmul %66, %69, %cst_50 {dimension_numbers = #tpu.dot_dimension_numbers<[1], [0], [0], [1], [0, 0, 1, 1], [], []>} : vector<1x16xf32>, vector<16x256xf32>, vector<1x256xf32> -> vector<1x256xf32>
    %71 = vector.broadcast %68 : vector<1x256xf32> to vector<2x256xf32>
    %72 = arith.mulf %41, %71 : vector<2x256xf32>
    %73 = vector.broadcast %70 : vector<1x256xf32> to vector<2x256xf32>
    %74 = arith.addf %72, %73 : vector<2x256xf32>
    %cst_51 = arith.constant 0.000000e+00 : f32
    %75 = vector.broadcast %cst_51 : f32 to vector<2x256xf32>
    %76 = arith.maximumf %74, %75 : vector<2x256xf32>
    %77 = arith.truncf %76 : vector<2x256xf32> to vector<2x256xbf16>
    %c0_52 = arith.constant 0 : index
    %c0_53 = arith.constant 0 : index
    %78 = vector.load %arg12[%c0_52, %c0_53] : memref<256x64xbf16, #tpu.memory_space<vmem>>, vector<256x64xbf16>
    %cst_54 = arith.constant dense<0.000000e+00> : vector<2x64xf32>
    %79 = tpu.matmul %77, %78, %cst_54 {dimension_numbers = #tpu.dot_dimension_numbers<[1], [0], [0], [1], [0, 0, 1, 1], [], []>} : vector<2x256xbf16>, vector<256x64xbf16>, vector<2x64xf32> -> vector<2x64xf32>
    %c0_55 = arith.constant 0 : index
    %c0_56 = arith.constant 0 : index
    %80 = vector.load %arg13[%c0_55, %c0_56] : memref<64x16xf32, #tpu.memory_space<vmem>>, vector<64x16xf32>
    %cst_57 = arith.constant dense<0.000000e+00> : vector<2x16xf32>
    %81 = tpu.matmul %79, %80, %cst_57 {dimension_numbers = #tpu.dot_dimension_numbers<[1], [0], [0], [1], [0, 0, 1, 1], [], []>} : vector<2x64xf32>, vector<64x16xf32>, vector<2x16xf32> -> vector<2x16xf32>
    %cst_58 = arith.constant dense<0.000000e+00> : vector<16xf32>
    %82 = vector.multi_reduction <add>, %81, %cst_58 [0] : vector<2x16xf32> to vector<16xf32>
    %83 = vector.shape_cast %82 : vector<16xf32> to vector<1x16xf32>
    %84 = arith.mulf %79, %79 : vector<2x64xf32>
    %c0_59 = arith.constant 0 : index
    %c0_60 = arith.constant 0 : index
    %85 = vector.load %arg13[%c0_59, %c0_60] : memref<64x16xf32, #tpu.memory_space<vmem>>, vector<64x16xf32>
    %cst_61 = arith.constant dense<0.000000e+00> : vector<2x16xf32>
    %86 = tpu.matmul %84, %85, %cst_61 {dimension_numbers = #tpu.dot_dimension_numbers<[1], [0], [0], [1], [0, 0, 1, 1], [], []>} : vector<2x64xf32>, vector<64x16xf32>, vector<2x16xf32> -> vector<2x16xf32>
    %cst_62 = arith.constant dense<0.000000e+00> : vector<16xf32>
    %87 = vector.multi_reduction <add>, %86, %cst_62 [0] : vector<2x16xf32> to vector<16xf32>
    %88 = vector.shape_cast %87 : vector<16xf32> to vector<1x16xf32>
    %cst_63 = arith.constant 1.250000e-01 : f32
    %89 = vector.broadcast %cst_63 : f32 to vector<1x16xf32>
    %90 = arith.mulf %83, %89 : vector<1x16xf32>
    %cst_64 = arith.constant 1.250000e-01 : f32
    %91 = vector.broadcast %cst_64 : f32 to vector<1x16xf32>
    %92 = arith.mulf %88, %91 : vector<1x16xf32>
    %93 = arith.mulf %90, %90 : vector<1x16xf32>
    %94 = arith.subf %92, %93 : vector<1x16xf32>
    %cst_65 = arith.constant 0.000000e+00 : f32
    %95 = vector.broadcast %cst_65 : f32 to vector<1x16xf32>
    %96 = arith.maximumf %94, %95 : vector<1x16xf32>
    %c0_66 = arith.constant 0 : index
    %c0_67 = arith.constant 0 : index
    %97 = vector.load %arg15[%c0_66, %c0_67] : memref<1x16xf32, #tpu.memory_space<vmem>>, vector<1x16xf32>
    %cst_68 = arith.constant 9.99999974E-6 : f32
    %98 = vector.broadcast %cst_68 : f32 to vector<1x16xf32>
    %99 = arith.addf %96, %98 : vector<1x16xf32>
    %100 = math.rsqrt %99 : vector<1x16xf32>
    %101 = arith.mulf %97, %100 : vector<1x16xf32>
    %c0_69 = arith.constant 0 : index
    %c0_70 = arith.constant 0 : index
    %102 = vector.load %arg16[%c0_69, %c0_70] : memref<1x16xf32, #tpu.memory_space<vmem>>, vector<1x16xf32>
    %103 = arith.mulf %90, %101 : vector<1x16xf32>
    %104 = arith.subf %102, %103 : vector<1x16xf32>
    %c0_71 = arith.constant 0 : index
    %c0_72 = arith.constant 0 : index
    %105 = vector.load %arg14[%c0_71, %c0_72] : memref<16x64xf32, #tpu.memory_space<vmem>>, vector<16x64xf32>
    %cst_73 = arith.constant dense<0.000000e+00> : vector<1x64xf32>
    %106 = tpu.matmul %101, %105, %cst_73 {dimension_numbers = #tpu.dot_dimension_numbers<[1], [0], [0], [1], [0, 0, 1, 1], [], []>} : vector<1x16xf32>, vector<16x64xf32>, vector<1x64xf32> -> vector<1x64xf32>
    %c0_74 = arith.constant 0 : index
    %c0_75 = arith.constant 0 : index
    %107 = vector.load %arg14[%c0_74, %c0_75] : memref<16x64xf32, #tpu.memory_space<vmem>>, vector<16x64xf32>
    %cst_76 = arith.constant dense<0.000000e+00> : vector<1x64xf32>
    %108 = tpu.matmul %104, %107, %cst_76 {dimension_numbers = #tpu.dot_dimension_numbers<[1], [0], [0], [1], [0, 0, 1, 1], [], []>} : vector<1x16xf32>, vector<16x64xf32>, vector<1x64xf32> -> vector<1x64xf32>
    %109 = vector.broadcast %106 : vector<1x64xf32> to vector<2x64xf32>
    %110 = arith.mulf %79, %109 : vector<2x64xf32>
    %111 = vector.broadcast %108 : vector<1x64xf32> to vector<2x64xf32>
    %112 = arith.addf %110, %111 : vector<2x64xf32>
    %cst_77 = arith.constant 0.000000e+00 : f32
    %113 = vector.broadcast %cst_77 : f32 to vector<2x64xf32>
    %114 = arith.maximumf %112, %113 : vector<2x64xf32>
    %c0_78 = arith.constant 0 : index
    %c0_79 = arith.constant 0 : index
    %115 = vector.load %arg17[%c0_78, %c0_79] : memref<64x16xf32, #tpu.memory_space<vmem>>, vector<64x16xf32>
    %cst_80 = arith.constant dense<0.000000e+00> : vector<2x16xf32>
    %116 = tpu.matmul %114, %115, %cst_80 {dimension_numbers = #tpu.dot_dimension_numbers<[1], [0], [0], [1], [0, 0, 1, 1], [], []>} : vector<2x64xf32>, vector<64x16xf32>, vector<2x16xf32> -> vector<2x16xf32>
    %c0_81 = arith.constant 0 : index
    %c0_82 = arith.constant 0 : index
    %117 = vector.load %arg18[%c0_81, %c0_82] : memref<1x16xf32, #tpu.memory_space<vmem>>, vector<1x16xf32>
    %118 = vector.broadcast %117 : vector<1x16xf32> to vector<2x16xf32>
    %119 = arith.addf %116, %118 : vector<2x16xf32>
    %120 = vector.extract_strided_slice %119 {offsets = [0, 0], sizes = [2, 8], strides = [1, 1]} : vector<2x16xf32> to vector<2x8xf32>
    %121 = vector.extract_strided_slice %119 {offsets = [0, 8], sizes = [2, 8], strides = [1, 1]} : vector<2x16xf32> to vector<2x8xf32>
    %c0_83 = arith.constant 0 : index
    %c0_84 = arith.constant 0 : index
    %122 = vector.load %arg1[%c0_83, %c0_84] : memref<2x8xf32, #tpu.memory_space<vmem>>, vector<2x8xf32>
    %cst_85 = arith.constant 5.000000e-01 : f32
    %123 = vector.broadcast %cst_85 : f32 to vector<2x8xf32>
    %124 = arith.mulf %123, %121 : vector<2x8xf32>
    %125 = math.exp %124 : vector<2x8xf32>
    %126 = arith.mulf %122, %125 : vector<2x8xf32>
    %127 = arith.addf %120, %126 : vector<2x8xf32>
    %c0_86 = arith.constant 0 : index
    %c0_87 = arith.constant 0 : index
    %128 = vector.load %arg19[%c0_86, %c0_87] : memref<8x8xf32, #tpu.memory_space<vmem>>, vector<8x8xf32>
    %cst_88 = arith.constant dense<0.000000e+00> : vector<2x8xf32>
    %129 = tpu.matmul %127, %128, %cst_88 {dimension_numbers = #tpu.dot_dimension_numbers<[1], [0], [0], [1], [0, 0, 1, 1], [], []>} : vector<2x8xf32>, vector<8x8xf32>, vector<2x8xf32> -> vector<2x8xf32>
    %c0_89 = arith.constant 0 : index
    %c0_90 = arith.constant 0 : index
    %130 = vector.load %arg20[%c0_89, %c0_90] : memref<1x8xf32, #tpu.memory_space<vmem>>, vector<1x8xf32>
    %131 = vector.broadcast %130 : vector<1x8xf32> to vector<2x8xf32>
    %132 = arith.addf %129, %131 : vector<2x8xf32>
    %c0_91 = arith.constant 0 : index
    %c0_92 = arith.constant 0 : index
    %133 = vector.load %arg21[%c0_91, %c0_92] : memref<8x8xf32, #tpu.memory_space<vmem>>, vector<8x8xf32>
    %cst_93 = arith.constant dense<0.000000e+00> : vector<2x8xf32>
    %134 = tpu.matmul %132, %133, %cst_93 {dimension_numbers = #tpu.dot_dimension_numbers<[1], [0], [0], [1], [0, 0, 1, 1], [], []>} : vector<2x8xf32>, vector<8x8xf32>, vector<2x8xf32> -> vector<2x8xf32>
    %c0_94 = arith.constant 0 : index
    %c0_95 = arith.constant 0 : index
    %135 = vector.load %arg22[%c0_94, %c0_95] : memref<1x8xf32, #tpu.memory_space<vmem>>, vector<1x8xf32>
    %136 = vector.broadcast %135 : vector<1x8xf32> to vector<2x8xf32>
    %137 = arith.addf %134, %136 : vector<2x8xf32>
    %138 = arith.addf %137, %127 : vector<2x8xf32>
    %cst_96 = arith.constant dense<0.000000e+00> : vector<2xf32>
    %139 = vector.multi_reduction <add>, %138, %cst_96 [1] : vector<2x8xf32> to vector<2xf32>
    %140 = vector.shape_cast %139 : vector<2xf32> to vector<2x1xf32>
    %cst_97 = arith.constant 8.000000e+00 : f32
    %141 = vector.broadcast %cst_97 : f32 to vector<2x1xf32>
    %142 = arith.divf %140, %141 : vector<2x1xf32>
    %143 = vector.broadcast %142 : vector<2x1xf32> to vector<2x8xf32>
    %144 = arith.subf %138, %143 : vector<2x8xf32>
    %145 = arith.mulf %144, %144 : vector<2x8xf32>
    %cst_98 = arith.constant dense<0.000000e+00> : vector<2xf32>
    %146 = vector.multi_reduction <add>, %145, %cst_98 [1] : vector<2x8xf32> to vector<2xf32>
    %147 = vector.shape_cast %146 : vector<2xf32> to vector<2x1xf32>
    %cst_99 = arith.constant 8.000000e+00 : f32
    %148 = vector.broadcast %cst_99 : f32 to vector<2x1xf32>
    %149 = arith.divf %147, %148 : vector<2x1xf32>
    %150 = vector.broadcast %142 : vector<2x1xf32> to vector<2x8xf32>
    %151 = arith.subf %138, %150 : vector<2x8xf32>
    %cst_100 = arith.constant 9.99999974E-6 : f32
    %152 = vector.broadcast %cst_100 : f32 to vector<2x1xf32>
    %153 = arith.addf %149, %152 : vector<2x1xf32>
    %154 = math.rsqrt %153 : vector<2x1xf32>
    %155 = vector.broadcast %154 : vector<2x1xf32> to vector<2x8xf32>
    %156 = arith.mulf %151, %155 : vector<2x8xf32>
    %c0_101 = arith.constant 0 : index
    %c0_102 = arith.constant 0 : index
    %157 = vector.load %arg23[%c0_101, %c0_102] : memref<1x8xf32, #tpu.memory_space<vmem>>, vector<1x8xf32>
    %158 = vector.broadcast %157 : vector<1x8xf32> to vector<2x8xf32>
    %159 = arith.mulf %156, %158 : vector<2x8xf32>
    %c0_103 = arith.constant 0 : index
    %c0_104 = arith.constant 0 : index
    %160 = vector.load %arg24[%c0_103, %c0_104] : memref<1x8xf32, #tpu.memory_space<vmem>>, vector<1x8xf32>
    %161 = vector.broadcast %160 : vector<1x8xf32> to vector<2x8xf32>
    %162 = arith.addf %159, %161 : vector<2x8xf32>
    %163 = tpu.concatenate %162, %120, %121, %127 in 1 : vector<2x8xf32>, vector<2x8xf32>, vector<2x8xf32>, vector<2x8xf32> -> vector<2x32xf32>
    %c0_105 = arith.constant 0 : index
    %c0_106 = arith.constant 0 : index
    %164 = vector.load %arg25[%c0_105, %c0_106] : memref<2x32xf32, #tpu.memory_space<vmem>>, vector<2x32xf32>
    tpu.vector_store %arg25[%c0_105, %c0_106], %163 {strides = array<i32>} : memref<2x32xf32, #tpu.memory_space<vmem>>, vector<2x32xf32>,
    return
  }
}

</mosaic_0001>

<llo_original>
// kernel: manifold_forward.1
$region0: #{manifold_forward.1}
  #allocation0 [shape = 'u32[]', space=smem, size = 0x4, offset = 0x4, fixed_abs, tag = 'smem constant byte address 0x4 - core index']
  #allocation1 [shape = 'u32[144,128]{1,0:T(1,128)}', space=vmem, size = 0x12000, scoped, tag = 'internal scratch']
  %s0 = inlined_call_operand.vmem [shape: f32[2,2048], index: 0, kind: input, shape index: {}]
  %s1 = inlined_call_operand.hbm [shape: f32[2,8], index: 1, kind: input, shape index: {}]
  %s2 = inlined_call_operand.hbm [shape: bf16[2048,1024], index: 2, kind: input, shape index: {}]
  %s3 = inlined_call_operand.vmem [shape: f32[1024,16], index: 3, kind: input, shape index: {}]
  %s4 = inlined_call_operand.hbm [shape: f32[16,1024], index: 4, kind: input, shape index: {}]
  %s5 = inlined_call_operand.hbm [shape: f32[1,16], index: 5, kind: input, shape index: {}]
  %s6 = inlined_call_operand.hbm [shape: f32[1,16], index: 6, kind: input, shape index: {}]
  %s7 = inlined_call_operand.hbm [shape: bf16[1024,256], index: 7, kind: input, shape index: {}]
  %s8 = inlined_call_operand.vmem [shape: f32[256,16], index: 8, kind: input, shape index: {}]
  %s9 = inlined_call_operand.hbm [shape: f32[16,256], index: 9, kind: input, shape index: {}]
  %s10 = inlined_call_operand.hbm [shape: f32[1,16], index: 10, kind: input, shape index: {}]
  %s11 = inlined_call_operand.hbm [shape: f32[1,16], index: 11, kind: input, shape index: {}]
  %s12 = inlined_call_operand.vmem [shape: bf16[256,64], index: 12, kind: input, shape index: {}]
  %s13 = inlined_call_operand.vmem [shape: f32[64,16], index: 13, kind: input, shape index: {}]
  %s14 = inlined_call_operand.hbm [shape: f32[16,64], index: 14, kind: input, shape index: {}]
  %s15 = inlined_call_operand.hbm [shape: f32[1,16], index: 15, kind: input, shape index: {}]
  %s16 = inlined_call_operand.hbm [shape: f32[1,16], index: 16, kind: input, shape index: {}]
  %s17 = inlined_call_operand.vmem [shape: f32[64,16], index: 17, kind: input, shape index: {}]
  %s18 = inlined_call_operand.hbm [shape: f32[1,16], index: 18, kind: input, shape index: {}]
  %s19 = inlined_call_operand.hbm [shape: f32[8,8], index: 19, kind: input, shape index: {}]
  %s20 = inlined_call_operand.hbm [shape: f32[1,8], index: 20, kind: input, shape index: {}]
  %s21 = inlined_call_operand.hbm [shape: f32[8,8], index: 21, kind: input, shape index: {}]
  %s22 = inlined_call_operand.hbm [shape: f32[1,8], index: 22, kind: input, shape index: {}]
  %s23 = inlined_call_operand.hbm [shape: f32[1,8], index: 23, kind: input, shape index: {}]
  %s24 = inlined_call_operand.hbm [shape: f32[1,8], index: 24, kind: input, shape index: {}]
  %s25 = inlined_call_operand.vmem [shape: f32[2,32], index: 25, kind: output, shape index: {}]
  %s26 = sld [smem:[#allocation0]]
  $region186: #{manifold_forward.1} parent=0
    _
  %s28 = ssub.s32 1, %s26
  %s29 = scalar_select 0, %s28, %s26
  $region1: #{manifold_forward.1} parent=0
    #allocation2 [shape = 'u8[1024]{0}', space=vmem, size = 0x400, scoped, tag = 'input window, operand 1, single buffered']
    #allocation3 [shape = 's32[1]{0}', space=sflag, size = 0x4, scoped, tag = 'scoped memory for manifold_forward.1']
    #allocation4 [shape = 'u8[4194304]{0}', space=vmem, size = 0x400000, scoped, tag = 'input window, operand 2, single buffered']
    #allocation5 [shape = 's32[1]{0}', space=sflag, size = 0x4, scoped, tag = 'scoped memory for manifold_forward.1']
    #allocation6 [shape = 'u8[65536]{0}', space=vmem, size = 0x10000, scoped, tag = 'input window, operand 4, single buffered']
    #allocation7 [shape = 'u8[512]{0}', space=vmem, size = 0x400, scoped, tag = 'input window, operand 5, single buffered']
    #allocation8 [shape = 's32[1]{0}', space=sflag, size = 0x4, scoped, tag = 'scoped memory for manifold_forward.1']
    #allocation9 [shape = 'u8[512]{0}', space=vmem, size = 0x400, scoped, tag = 'input window, operand 6, single buffered']
    #allocation10 [shape = 'u8[524288]{0}', space=vmem, size = 0x80000, scoped, tag = 'input window, operand 7, single buffered']
    #allocation11 [shape = 's32[1]{0}', space=sflag, size = 0x4, scoped, tag = 'scoped memory for manifold_forward.1']
    #allocation12 [shape = 'u8[16384]{0}', space=vmem, size = 0x4000, scoped, tag = 'input window, operand 9, single buffered']
    #allocation13 [shape = 'u8[512]{0}', space=vmem, size = 0x400, scoped, tag = 'input window, operand 10, single buffered']
    #allocation14 [shape = 's32[1]{0}', space=sflag, size = 0x4, scoped, tag = 'scoped memory for manifold_forward.1']
    #allocation15 [shape = 'u8[512]{0}', space=vmem, size = 0x400, scoped, tag = 'input window, operand 11, single buffered']
    #allocation16 [shape = 'u8[8192]{0}', space=vmem, size = 0x2000, scoped, tag = 'input window, operand 14, single buffered']
    #allocation17 [shape = 's32[1]{0}', space=sflag, size = 0x4, scoped, tag = 'scoped memory for manifold_forward.1']
    #allocation18 [shape = 'u8[512]{0}', space=vmem, size = 0x400, scoped, tag = 'input window, operand 15, single buffered']
    #allocation19 [shape = 'u8[512]{0}', space=vmem, size = 0x400, scoped, tag = 'input window, operand 16, single buffered']
    #allocation20 [shape = 's32[1]{0}', space=sflag, size = 0x4, scoped, tag = 'scoped memory for manifold_forward.1']
    #allocation21 [shape = 'u8[512]{0}', space=vmem, size = 0x400, scoped, tag = 'input window, operand 18, single buffered']
    #allocation22 [shape = 'u8[4096]{0}', space=vmem, size = 0x1000, scoped, tag = 'input window, operand 19, single buffered']
    #allocation23 [shape = 's32[1]{0}', space=sflag, size = 0x4, scoped, tag = 'scoped memory for manifold_forward.1']
    #allocation24 [shape = 'u8[512]{0}', space=vmem, size = 0x400, scoped, tag = 'input window, operand 20, single buffered']
    #allocation25 [shape = 'u8[4096]{0}', space=vmem, size = 0x1000, scoped, tag = 'input window, operand 21, single buffered']
    #allocation26 [shape = 's32[1]{0}', space=sflag, size = 0x4, scoped, tag = 'scoped memory for manifold_forward.1']
    #allocation27 [shape = 'u8[512]{0}', space=vmem, size = 0x400, scoped, tag = 'input window, operand 22, single buffered']
    #allocation28 [shape = 'u8[512]{0}', space=vmem, size = 0x400, scoped, tag = 'input window, operand 23, single buffered']
    #allocation29 [shape = 's32[1]{0}', space=sflag, size = 0x4, scoped, tag = 'scoped memory for manifold_forward.1']
    #allocation30 [shape = 'u8[512]{0}', space=vmem, size = 0x400, scoped, tag = 'input window, operand 24, single buffered']
    %30 = vsyncpa [#allocation3], 0
    %31 = vsyncpa [#allocation5], 0
    %32 = vsyncpa [#allocation8], 0
    %33 = vsyncpa [#allocation11], 0
    %34 = vsyncpa [#allocation14], 0
    %35 = vsyncpa [#allocation17], 0
    %36 = vsyncpa [#allocation20], 0
    %37 = vsyncpa [#allocation23], 0
    %38 = vsyncpa [#allocation26], 0
    %39 = vsyncpa [#allocation29], 0
    // Predicated region
    $region2: #{manifold_forward.1} parent=1 // pred_check
      _
    $region3: #{manifold_forward.1} parent=1 // pred_check_branch
      %41 = sbr.rel (0) target = $region5
    $region4: #{manifold_forward.1} parent=1 // pred_region
      _
    $region5: #{manifold_forward.1} parent=1 // pred_fallthru
      _
    // Predicated region
    $region6: #{manifold_forward.1} parent=1 // pred_check
      _
    $region7: #{manifold_forward.1} parent=1 // pred_check_branch
      %43 = sbr.rel (0) target = $region9
    $region8: #{manifold_forward.1} parent=1 // pred_region
      %s45 = ssub.s32 32, 32
      %46 = vsyncadd [#allocation3], %s45
      %s48 = sshll.u32 [#allocation2], 4
      %s49 = int_to_ptr.vmem [resolvable:$true] %s48
      %51 = dma.hbm_to_vmem [thread:$0]  %s1, 32, %s49, [#allocation3]
    $region9: #{manifold_forward.1} parent=1 // pred_fallthru
      _
    // Predicated region
    $region10: #{manifold_forward.1} parent=1 // pred_check
      _
    $region11: #{manifold_forward.1} parent=1 // pred_check_branch
      %53 = sbr.rel (0) target = $region13
    $region12: #{manifold_forward.1} parent=1 // pred_region
      %s55 = ssub.s32 131072, 131072
      %56 = vsyncadd [#allocation5], %s55
      %s57 = sshll.u32 [#allocation4], 4
      %s58 = int_to_ptr.vmem [resolvable:$true] %s57
      %63 = dma.hbm_to_vmem [thread:$0]  %s2, 131072, %s58, [#allocation5], 512, 512, 32
    $region13: #{manifold_forward.1} parent=1 // pred_fallthru
      _
    // Predicated region
    $region14: #{manifold_forward.1} parent=1 // pred_check
      _
    $region15: #{manifold_forward.1} parent=1 // pred_check_branch
      %65 = sbr.rel (0) target = $region17
    $region16: #{manifold_forward.1} parent=1 // pred_region
      _
    $region17: #{manifold_forward.1} parent=1 // pred_fallthru
      _
    // Predicated region
    $region18: #{manifold_forward.1} parent=1 // pred_check
      _
    $region19: #{manifold_forward.1} parent=1 // pred_check_branch
      %67 = sbr.rel (0) target = $region21
    $region20: #{manifold_forward.1} parent=1 // pred_region
      %s69 = ssub.s32 2048, 2048
      %70 = vsyncadd [#allocation5], %s69
      %s71 = sshll.u32 [#allocation6], 4
      %s72 = int_to_ptr.vmem [resolvable:$true] %s71
      %77 = dma.hbm_to_vmem [thread:$0]  %s4, 2048, %s72, [#allocation5], 1024, 1024, 64
    $region21: #{manifold_forward.1} parent=1 // pred_fallthru
      _
    // Predicated region
    $region22: #{manifold_forward.1} parent=1 // pred_check
      _
    $region23: #{manifold_forward.1} parent=1 // pred_check_branch
      %79 = sbr.rel (0) target = $region25
    $region24: #{manifold_forward.1} parent=1 // pred_region
      %s81 = ssub.s32 16, 16
      %82 = vsyncadd [#allocation8], %s81
      %s84 = sshll.u32 [#allocation7], 4
      %s85 = int_to_ptr.vmem [resolvable:$true] %s84
      %87 = dma.hbm_to_vmem [thread:$0]  %s5, 16, %s85, [#allocation8]
    $region25: #{manifold_forward.1} parent=1 // pred_fallthru
      _
    // Predicated region
    $region26: #{manifold_forward.1} parent=1 // pred_check
      _
    $region27: #{manifold_forward.1} parent=1 // pred_check_branch
      %89 = sbr.rel (0) target = $region29
    $region28: #{manifold_forward.1} parent=1 // pred_region
      %s91 = ssub.s32 16, 16
      %92 = vsyncadd [#allocation8], %s91
      %s94 = sshll.u32 [#allocation9], 4
      %s95 = int_to_ptr.vmem [resolvable:$true] %s94
      %97 = dma.hbm_to_vmem [thread:$0]  %s6, 16, %s95, [#allocation8]
    $region29: #{manifold_forward.1} parent=1 // pred_fallthru
      _
    // Predicated region
    $region30: #{manifold_forward.1} parent=1 // pred_check
      _
    $region31: #{manifold_forward.1} parent=1 // pred_check_branch
      %99 = sbr.rel (0) target = $region33
    $region32: #{manifold_forward.1} parent=1 // pred_region
      %s101 = ssub.s32 16384, 16384
      %102 = vsyncadd [#allocation11], %s101
      %s103 = sshll.u32 [#allocation10], 4
      %s104 = int_to_ptr.vmem [resolvable:$true] %s103
      %109 = dma.hbm_to_vmem [thread:$0]  %s7, 16384, %s104, [#allocation11], 128, 128, 8
    $region33: #{manifold_forward.1} parent=1 // pred_fallthru
      _
    // Predicated region
    $region34: #{manifold_forward.1} parent=1 // pred_check
      _
    $region35: #{manifold_forward.1} parent=1 // pred_check_branch
      %111 = sbr.rel (0) target = $region37
    $region36: #{manifold_forward.1} parent=1 // pred_region
      _
    $region37: #{manifold_forward.1} parent=1 // pred_fallthru
      _
    // Predicated region
    $region38: #{manifold_forward.1} parent=1 // pred_check
      _
    $region39: #{manifold_forward.1} parent=1 // pred_check_branch
      %113 = sbr.rel (0) target = $region41
    $region40: #{manifold_forward.1} parent=1 // pred_region
      %s115 = ssub.s32 512, 512
      %116 = vsyncadd [#allocation11], %s115
      %s117 = sshll.u32 [#allocation12], 4
      %s118 = int_to_ptr.vmem [resolvable:$true] %s117
      %123 = dma.hbm_to_vmem [thread:$0]  %s9, 512, %s118, [#allocation11], 256, 256, 16
    $region41: #{manifold_forward.1} parent=1 // pred_fallthru
      _
    // Predicated region
    $region42: #{manifold_forward.1} parent=1 // pred_check
      _
    $region43: #{manifold_forward.1} parent=1 // pred_check_branch
      %125 = sbr.rel (0) target = $region45
    $region44: #{manifold_forward.1} parent=1 // pred_region
      %s127 = ssub.s32 16, 16
      %128 = vsyncadd [#allocation14], %s127
      %s130 = sshll.u32 [#allocation13], 4
      %s131 = int_to_ptr.vmem [resolvable:$true] %s130
      %133 = dma.hbm_to_vmem [thread:$0]  %s10, 16, %s131, [#allocation14]
    $region45: #{manifold_forward.1} parent=1 // pred_fallthru
      _
    // Predicated region
    $region46: #{manifold_forward.1} parent=1 // pred_check
      _
    $region47: #{manifold_forward.1} parent=1 // pred_check_branch
      %135 = sbr.rel (0) target = $region49
    $region48: #{manifold_forward.1} parent=1 // pred_region
      %s137 = ssub.s32 16, 16
      %138 = vsyncadd [#allocation14], %s137
      %s140 = sshll.u32 [#allocation15], 4
      %s141 = int_to_ptr.vmem [resolvable:$true] %s140
      %143 = dma.hbm_to_vmem [thread:$0]  %s11, 16, %s141, [#allocation14]
    $region49: #{manifold_forward.1} parent=1 // pred_fallthru
      _
    // Predicated region
    $region50: #{manifold_forward.1} parent=1 // pred_check
      _
    $region51: #{manifold_forward.1} parent=1 // pred_check_branch
      %145 = sbr.rel (0) target = $region53
    $region52: #{manifold_forward.1} parent=1 // pred_region
      _
    $region53: #{manifold_forward.1} parent=1 // pred_fallthru
      _
    // Predicated region
    $region54: #{manifold_forward.1} parent=1 // pred_check
      _
    $region55: #{manifold_forward.1} parent=1 // pred_check_branch
      %147 = sbr.rel (0) target = $region57
    $region56: #{manifold_forward.1} parent=1 // pred_region
      _
    $region57: #{manifold_forward.1} parent=1 // pred_fallthru
      _
    // Predicated region
    $region58: #{manifold_forward.1} parent=1 // pred_check
      _
    $region59: #{manifold_forward.1} parent=1 // pred_check_branch
      %149 = sbr.rel (0) target = $region61
    $region60: #{manifold_forward.1} parent=1 // pred_region
      %s151 = ssub.s32 256, 256
      %152 = vsyncadd [#allocation17], %s151
      %s153 = sshll.u32 [#allocation16], 4
      %s154 = int_to_ptr.vmem [resolvable:$true] %s153
      %159 = dma.hbm_to_vmem [thread:$0]  %s14, 256, %s154, [#allocation17], 128, 128, 8
    $region61: #{manifold_forward.1} parent=1 // pred_fallthru
      _
    // Predicated region
    $region62: #{manifold_forward.1} parent=1 // pred_check
      _
    $region63: #{manifold_forward.1} parent=1 // pred_check_branch
      %161 = sbr.rel (0) target = $region65
    $region64: #{manifold_forward.1} parent=1 // pred_region
      %s163 = ssub.s32 16, 16
      %164 = vsyncadd [#allocation17], %s163
      %s166 = sshll.u32 [#allocation18], 4
      %s167 = int_to_ptr.vmem [resolvable:$true] %s166
      %169 = dma.hbm_to_vmem [thread:$0]  %s15, 16, %s167, [#allocation17]
    $region65: #{manifold_forward.1} parent=1 // pred_fallthru
      _
    // Predicated region
    $region66: #{manifold_forward.1} parent=1 // pred_check
      _
    $region67: #{manifold_forward.1} parent=1 // pred_check_branch
      %171 = sbr.rel (0) target = $region69
    $region68: #{manifold_forward.1} parent=1 // pred_region
      %s173 = ssub.s32 16, 16
      %174 = vsyncadd [#allocation20], %s173
      %s176 = sshll.u32 [#allocation19], 4
      %s177 = int_to_ptr.vmem [resolvable:$true] %s176
      %179 = dma.hbm_to_vmem [thread:$0]  %s16, 16, %s177, [#allocation20]
    $region69: #{manifold_forward.1} parent=1 // pred_fallthru
      _
    // Predicated region
    $region70: #{manifold_forward.1} parent=1 // pred_check
      _
    $region71: #{manifold_forward.1} parent=1 // pred_check_branch
      %181 = sbr.rel (0) target = $region73
    $region72: #{manifold_forward.1} parent=1 // pred_region
      _
    $region73: #{manifold_forward.1} parent=1 // pred_fallthru
      _
    // Predicated region
    $region74: #{manifold_forward.1} parent=1 // pred_check
      _
    $region75: #{manifold_forward.1} parent=1 // pred_check_branch
      %183 = sbr.rel (0) target = $region77
    $region76: #{manifold_forward.1} parent=1 // pred_region
      %s185 = ssub.s32 16, 16
      %186 = vsyncadd [#allocation20], %s185
      %s188 = sshll.u32 [#allocation21], 4
      %s189 = int_to_ptr.vmem [resolvable:$true] %s188
      %191 = dma.hbm_to_vmem [thread:$0]  %s18, 16, %s189, [#allocation20]
    $region77: #{manifold_forward.1} parent=1 // pred_fallthru
      _
    // Predicated region
    $region78: #{manifold_forward.1} parent=1 // pred_check
      _
    $region79: #{manifold_forward.1} parent=1 // pred_check_branch
      %193 = sbr.rel (0) target = $region81
    $region80: #{manifold_forward.1} parent=1 // pred_region
      %s195 = ssub.s32 128, 128
      %196 = vsyncadd [#allocation23], %s195
      %s198 = sshll.u32 [#allocation22], 4
      %s199 = int_to_ptr.vmem [resolvable:$true] %s198
      %201 = dma.hbm_to_vmem [thread:$0]  %s19, 128, %s199, [#allocation23]
    $region81: #{manifold_forward.1} parent=1 // pred_fallthru
      _
    // Predicated region
    $region82: #{manifold_forward.1} parent=1 // pred_check
      _
    $region83: #{manifold_forward.1} parent=1 // pred_check_branch
      %203 = sbr.rel (0) target = $region85
    $region84: #{manifold_forward.1} parent=1 // pred_region
      %s205 = ssub.s32 16, 16
      %206 = vsyncadd [#allocation23], %s205
      %s208 = sshll.u32 [#allocation24], 4
      %s209 = int_to_ptr.vmem [resolvable:$true] %s208
      %211 = dma.hbm_to_vmem [thread:$0]  %s20, 16, %s209, [#allocation23]
    $region85: #{manifold_forward.1} parent=1 // pred_fallthru
      _
    // Predicated region
    $region86: #{manifold_forward.1} parent=1 // pred_check
      _
    $region87: #{manifold_forward.1} parent=1 // pred_check_branch
      %213 = sbr.rel (0) target = $region89
    $region88: #{manifold_forward.1} parent=1 // pred_region
      %s215 = ssub.s32 128, 128
      %216 = vsyncadd [#allocation26], %s215
      %s218 = sshll.u32 [#allocation25], 4
      %s219 = int_to_ptr.vmem [resolvable:$true] %s218
      %221 = dma.hbm_to_vmem [thread:$0]  %s21, 128, %s219, [#allocation26]
    $region89: #{manifold_forward.1} parent=1 // pred_fallthru
      _
    // Predicated region
    $region90: #{manifold_forward.1} parent=1 // pred_check
      _
    $region91: #{manifold_forward.1} parent=1 // pred_check_branch
      %223 = sbr.rel (0) target = $region93
    $region92: #{manifold_forward.1} parent=1 // pred_region
      %s225 = ssub.s32 16, 16
      %226 = vsyncadd [#allocation26], %s225
      %s228 = sshll.u32 [#allocation27], 4
      %s229 = int_to_ptr.vmem [resolvable:$true] %s228
      %231 = dma.hbm_to_vmem [thread:$0]  %s22, 16, %s229, [#allocation26]
    $region93: #{manifold_forward.1} parent=1 // pred_fallthru
      _
    // Predicated region
    $region94: #{manifold_forward.1} parent=1 // pred_check
      _
    $region95: #{manifold_forward.1} parent=1 // pred_check_branch
      %233 = sbr.rel (0) target = $region97
    $region96: #{manifold_forward.1} parent=1 // pred_region
      %s235 = ssub.s32 16, 16
      %236 = vsyncadd [#allocation29], %s235
      %s238 = sshll.u32 [#allocation28], 4
      %s239 = int_to_ptr.vmem [resolvable:$true] %s238
      %241 = dma.hbm_to_vmem [thread:$0]  %s23, 16, %s239, [#allocation29]
    $region97: #{manifold_forward.1} parent=1 // pred_fallthru
      _
    // Predicated region
    $region98: #{manifold_forward.1} parent=1 // pred_check
      _
    $region99: #{manifold_forward.1} parent=1 // pred_check_branch
      %243 = sbr.rel (0) target = $region101
    $region100: #{manifold_forward.1} parent=1 // pred_region
      %s245 = ssub.s32 16, 16
      %246 = vsyncadd [#allocation29], %s245
      %s248 = sshll.u32 [#allocation30], 4
      %s249 = int_to_ptr.vmem [resolvable:$true] %s248
      %251 = dma.hbm_to_vmem [thread:$0]  %s24, 16, %s249, [#allocation29]
    $region101: #{manifold_forward.1} parent=1 // pred_fallthru
      _
    // Predicated region
    $region102: #{manifold_forward.1} parent=1 // pred_check
      _
    $region103: #{manifold_forward.1} parent=1 // pred_check_branch
      %253 = sbr.rel (0) target = $region105
    $region104: #{manifold_forward.1} parent=1 // pred_region
      %254 = dma.done [#allocation3], 32
    $region105: #{manifold_forward.1} parent=1 // pred_fallthru
      _
    // Predicated region
    $region106: #{manifold_forward.1} parent=1 // pred_check
      _
    $region107: #{manifold_forward.1} parent=1 // pred_check_branch
      %256 = sbr.rel (0) target = $region109
    $region108: #{manifold_forward.1} parent=1 // pred_region
      %257 = dma.done [#allocation5], 131072
    $region109: #{manifold_forward.1} parent=1 // pred_fallthru
      _
    // Predicated region
    $region110: #{manifold_forward.1} parent=1 // pred_check
      _
    $region111: #{manifold_forward.1} parent=1 // pred_check_branch
      %259 = sbr.rel (0) target = $region113
    $region112: #{manifold_forward.1} parent=1 // pred_region
      %260 = dma.done [#allocation5], 2048
    $region113: #{manifold_forward.1} parent=1 // pred_fallthru
      _
    // Predicated region
    $region114: #{manifold_forward.1} parent=1 // pred_check
      _
    $region115: #{manifold_forward.1} parent=1 // pred_check_branch
      %262 = sbr.rel (0) target = $region117
    $region116: #{manifold_forward.1} parent=1 // pred_region
      %263 = dma.done [#allocation8], 16
    $region117: #{manifold_forward.1} parent=1 // pred_fallthru
      _
    // Predicated region
    $region118: #{manifold_forward.1} parent=1 // pred_check
      _
    $region119: #{manifold_forward.1} parent=1 // pred_check_branch
      %265 = sbr.rel (0) target = $region121
    $region120: #{manifold_forward.1} parent=1 // pred_region
      %266 = dma.done [#allocation8], 16
    $region121: #{manifold_forward.1} parent=1 // pred_fallthru
      _
    // Predicated region
    $region122: #{manifold_forward.1} parent=1 // pred_check
      _
    $region123: #{manifold_forward.1} parent=1 // pred_check_branch
      %268 = sbr.rel (0) target = $region125
    $region124: #{manifold_forward.1} parent=1 // pred_region
      %269 = dma.done [#allocation11], 16384
    $region125: #{manifold_forward.1} parent=1 // pred_fallthru
      _
    // Predicated region
    $region126: #{manifold_forward.1} parent=1 // pred_check
      _
    $region127: #{manifold_forward.1} parent=1 // pred_check_branch
      %271 = sbr.rel (0) target = $region129
    $region128: #{manifold_forward.1} parent=1 // pred_region
      %272 = dma.done [#allocation11], 512
    $region129: #{manifold_forward.1} parent=1 // pred_fallthru
      _
    // Predicated region
    $region130: #{manifold_forward.1} parent=1 // pred_check
      _
    $region131: #{manifold_forward.1} parent=1 // pred_check_branch
      %274 = sbr.rel (0) target = $region133
    $region132: #{manifold_forward.1} parent=1 // pred_region
      %275 = dma.done [#allocation14], 16
    $region133: #{manifold_forward.1} parent=1 // pred_fallthru
      _
    // Predicated region
    $region134: #{manifold_forward.1} parent=1 // pred_check
      _
    $region135: #{manifold_forward.1} parent=1 // pred_check_branch
      %277 = sbr.rel (0) target = $region137
    $region136: #{manifold_forward.1} parent=1 // pred_region
      %278 = dma.done [#allocation14], 16
    $region137: #{manifold_forward.1} parent=1 // pred_fallthru
      _
    // Predicated region
    $region138: #{manifold_forward.1} parent=1 // pred_check
      _
    $region139: #{manifold_forward.1} parent=1 // pred_check_branch
      %280 = sbr.rel (0) target = $region141
    $region140: #{manifold_forward.1} parent=1 // pred_region
      %281 = dma.done [#allocation17], 256
    $region141: #{manifold_forward.1} parent=1 // pred_fallthru
      _
    // Predicated region
    $region142: #{manifold_forward.1} parent=1 // pred_check
      _
    $region143: #{manifold_forward.1} parent=1 // pred_check_branch
      %283 = sbr.rel (0) target = $region145
    $region144: #{manifold_forward.1} parent=1 // pred_region
      %284 = dma.done [#allocation17], 16
    $region145: #{manifold_forward.1} parent=1 // pred_fallthru
      _
    // Predicated region
    $region146: #{manifold_forward.1} parent=1 // pred_check
      _
    $region147: #{manifold_forward.1} parent=1 // pred_check_branch
      %286 = sbr.rel (0) target = $region149
    $region148: #{manifold_forward.1} parent=1 // pred_region
      %287 = dma.done [#allocation20], 16
    $region149: #{manifold_forward.1} parent=1 // pred_fallthru
      _
    // Predicated region
    $region150: #{manifold_forward.1} parent=1 // pred_check
      _
    $region151: #{manifold_forward.1} parent=1 // pred_check_branch
      %289 = sbr.rel (0) target = $region153
    $region152: #{manifold_forward.1} parent=1 // pred_region
      %290 = dma.done [#allocation20], 16
    $region153: #{manifold_forward.1} parent=1 // pred_fallthru
      _
    // Predicated region
    $region154: #{manifold_forward.1} parent=1 // pred_check
      _
    $region155: #{manifold_forward.1} parent=1 // pred_check_branch
      %292 = sbr.rel (0) target = $region157
    $region156: #{manifold_forward.1} parent=1 // pred_region
      %293 = dma.done [#allocation23], 128
    $region157: #{manifold_forward.1} parent=1 // pred_fallthru
      _
    // Predicated region
    $region158: #{manifold_forward.1} parent=1 // pred_check
      _
    $region159: #{manifold_forward.1} parent=1 // pred_check_branch
      %295 = sbr.rel (0) target = $region161
    $region160: #{manifold_forward.1} parent=1 // pred_region
      %296 = dma.done [#allocation23], 16
    $region161: #{manifold_forward.1} parent=1 // pred_fallthru
      _
    // Predicated region
    $region162: #{manifold_forward.1} parent=1 // pred_check
      _
    $region163: #{manifold_forward.1} parent=1 // pred_check_branch
      %298 = sbr.rel (0) target = $region165
    $region164: #{manifold_forward.1} parent=1 // pred_region
      %299 = dma.done [#allocation26], 128
    $region165: #{manifold_forward.1} parent=1 // pred_fallthru
      _
    // Predicated region
    $region166: #{manifold_forward.1} parent=1 // pred_check
      _
    $region167: #{manifold_forward.1} parent=1 // pred_check_branch
      %301 = sbr.rel (0) target = $region169
    $region168: #{manifold_forward.1} parent=1 // pred_region
      %302 = dma.done [#allocation26], 16
    $region169: #{manifold_forward.1} parent=1 // pred_fallthru
      _
    // Predicated region
    $region170: #{manifold_forward.1} parent=1 // pred_check
      _
    $region171: #{manifold_forward.1} parent=1 // pred_check_branch
      %304 = sbr.rel (0) target = $region173
    $region172: #{manifold_forward.1} parent=1 // pred_region
      %305 = dma.done [#allocation29], 16
    $region173: #{manifold_forward.1} parent=1 // pred_fallthru
      _
    // Predicated region
    $region174: #{manifold_forward.1} parent=1 // pred_check
      _
    $region175: #{manifold_forward.1} parent=1 // pred_check_branch
      %307 = sbr.rel (0) target = $region177
    $region176: #{manifold_forward.1} parent=1 // pred_region
      %308 = dma.done [#allocation29], 16
    $region177: #{manifold_forward.1} parent=1 // pred_fallthru
      _
    %v310 = vld [vmem:[%s0] sm:$0xff]
    %v311 = vld [vmem:[%s0 + $0x8] sm:$0xff]
    %v312 = vld [vmem:[%s0 + $0x10] sm:$0xff]
    %v313 = vld [vmem:[%s0 + $0x18] sm:$0xff]
    %v318 = vcombine.high %v310, %v310
    %v320 = vunpack.c.l.s4 1983009808
    %v321 = vunpack.c.0.s8 %v320
    %v322 = vlaneseq
    %v323 = vshrl.u32 %v322, 7
    %v324 = vsub.s32 %v321, %v323
    %v325 = vrot.slane %v310, %v324
    %v327 = vunpack.c.l.s4 1983009808
    %v328 = vunpack.c.0.s8 %v327
    %v329 = vlaneseq
    %v330 = vshrl.u32 %v329, 7
    %v331 = vsub.s32 %v328, %v330
    %v332 = vrot.slane %v318, %v331
    %v333 = vcombine.high %v325, %v325
    %v334 = vcombine.high %v332, %v332
    %v335 = vcombine.high %v311, %v311
    %v337 = vunpack.c.l.s4 1983009808
    %v338 = vunpack.c.0.s8 %v337
    %v339 = vlaneseq
    %v340 = vshrl.u32 %v339, 7
    %v341 = vsub.s32 %v338, %v340
    %v342 = vrot.slane %v311, %v341
    %v344 = vunpack.c.l.s4 1983009808
    %v345 = vunpack.c.0.s8 %v344
    %v346 = vlaneseq
    %v347 = vshrl.u32 %v346, 7
    %v348 = vsub.s32 %v345, %v347
    %v349 = vrot.slane %v335, %v348
    %v350 = vcombine.high %v342, %v342
    %v351 = vcombine.high %v349, %v349
    %v352 = vcombine.high %v312, %v312
    %v354 = vunpack.c.l.s4 1983009808
    %v355 = vunpack.c.0.s8 %v354
    %v356 = vlaneseq
    %v357 = vshrl.u32 %v356, 7
    %v358 = vsub.s32 %v355, %v357
    %v359 = vrot.slane %v312, %v358
    %v361 = vunpack.c.l.s4 1983009808
    %v362 = vunpack.c.0.s8 %v361
    %v363 = vlaneseq
    %v364 = vshrl.u32 %v363, 7
    %v365 = vsub.s32 %v362, %v364
    %v366 = vrot.slane %v352, %v365
    %v367 = vcombine.high %v359, %v359
    %v368 = vcombine.high %v366, %v366
    %v369 = vcombine.high %v313, %v313
    %v371 = vunpack.c.l.s4 1983009808
    %v372 = vunpack.c.0.s8 %v371
    %v373 = vlaneseq
    %v374 = vshrl.u32 %v373, 7
    %v375 = vsub.s32 %v372, %v374
    %v376 = vrot.slane %v313, %v375
    %v378 = vunpack.c.l.s4 1983009808
    %v379 = vunpack.c.0.s8 %v378
    %v380 = vlaneseq
    %v381 = vshrl.u32 %v380, 7
    %v382 = vsub.s32 %v379, %v381
    %v383 = vrot.slane %v369, %v382
    %v384 = vcombine.high %v376, %v376
    %v385 = vcombine.high %v383, %v383
    %v402 = vpack.c.bf16 %v325, %v325
    %v403 = vpack.c.bf16 %v333, %v333
    %v404 = vpack.c.bf16 %v332, %v332
    %v405 = vpack.c.bf16 %v334, %v334
    %v406 = vpack.c.bf16 %v342, %v342
    %v407 = vpack.c.bf16 %v350, %v350
    %v408 = vpack.c.bf16 %v349, %v349
    %v409 = vpack.c.bf16 %v351, %v351
    %v410 = vpack.c.bf16 %v359, %v359
    %v411 = vpack.c.bf16 %v367, %v367
    %v412 = vpack.c.bf16 %v366, %v366
    %v413 = vpack.c.bf16 %v368, %v368
    %v414 = vpack.c.bf16 %v376, %v376
    %v415 = vpack.c.bf16 %v384, %v384
    %v416 = vpack.c.bf16 %v383, %v383
    %v417 = vpack.c.bf16 %v385, %v385
    %v418 = vld [vmem:[#allocation4] sm:$0xff]
    %v419 = vld [vmem:[#allocation4 + $0x8] sm:$0xff]
    %v420 = vld [vmem:[#allocation4 + $0x10] sm:$0xff]
    %v421 = vld [vmem:[#allocation4 + $0x18] sm:$0xff]
    %v422 = vld [vmem:[#allocation4 + $0x20] sm:$0xff]
    %v423 = vld [vmem:[#allocation4 + $0x28] sm:$0xff]
    %v424 = vld [vmem:[#allocation4 + $0x30] sm:$0xff]
    %v425 = vld [vmem:[#allocation4 + $0x38] sm:$0xff]
    %v426 = vld [vmem:[#allocation4 + $0x40] sm:$0xff]
    %v427 = vld [vmem:[#allocation4 + $0x48] sm:$0xff]
    %v428 = vld [vmem:[#allocation4 + $0x50] sm:$0xff]
    %v429 = vld [vmem:[#allocation4 + $0x58] sm:$0xff]
    %v430 = vld [vmem:[#allocation4 + $0x60] sm:$0xff]
    %v431 = vld [vmem:[#allocation4 + $0x68] sm:$0xff]
    %v432 = vld [vmem:[#allocation4 + $0x70] sm:$0xff]
    %v433 = vld [vmem:[#allocation4 + $0x78] sm:$0xff]
    %v434 = vld [vmem:[#allocation4 + $0x80] sm:$0xff]
    %v435 = vld [vmem:[#allocation4 + $0x88] sm:$0xff]
    %v436 = vld [vmem:[#allocation4 + $0x90] sm:$0xff]
    %v437 = vld [vmem:[#allocation4 + $0x98] sm:$0xff]
    %v438 = vld [vmem:[#allocation4 + $0xa0] sm:$0xff]
    %v439 = vld [vmem:[#allocation4 + $0xa8] sm:$0xff]
    %v440 = vld [vmem:[#allocation4 + $0xb0] sm:$0xff]
    %v441 = vld [vmem:[#allocation4 + $0xb8] sm:$0xff]
    %v442 = vld [vmem:[#allocation4 + $0xc0] sm:$0xff]
    %v443 = vld [vmem:[#allocation4 + $0xc8] sm:$0xff]
    %v444 = vld [vmem:[#allocation4 + $0xd0] sm:$0xff]
    %v445 = vld [vmem:[#allocation4 + $0xd8] sm:$0xff]
    %v446 = vld [vmem:[#allocation4 + $0xe0] sm:$0xff]
    %v447 = vld [vmem:[#allocation4 + $0xe8] sm:$0xff]
    %v448 = vld [vmem:[#allocation4 + $0xf0] sm:$0xff]
    %v449 = vld [vmem:[#allocation4 + $0xf8] sm:$0xff]
    %v450 = vld [vmem:[#allocation4 + $0x100] sm:$0xff]
    %v451 = vld [vmem:[#allocation4 + $0x108] sm:$0xff]
    %v452 = vld [vmem:[#allocation4 + $0x110] sm:$0xff]
    %v453 = vld [vmem:[#allocation4 + $0x118] sm:$0xff]
    %v454 = vld [vmem:[#allocation4 + $0x120] sm:$0xff]
    %v455 = vld [vmem:[#allocation4 + $0x128] sm:$0xff]
    %v456 = vld [vmem:[#allocation4 + $0x130] sm:$0xff]
    %v457 = vld [vmem:[#allocation4 + $0x138] sm:$0xff]
    %v458 = vld [vmem:[#allocation4 + $0x140] sm:$0xff]
    %v459 = vld [vmem:[#allocation4 + $0x148] sm:$0xff]
    %v460 = vld [vmem:[#allocation4 + $0x150] sm:$0xff]
    %v461 = vld [vmem:[#allocation4 + $0x158] sm:$0xff]
    %v462 = vld [vmem:[#allocation4 + $0x160] sm:$0xff]
    %v463 = vld [vmem:[#allocation4 + $0x168] sm:$0xff]
    %v464 = vld [vmem:[#allocation4 + $0x170] sm:$0xff]
    %v465 = vld [vmem:[#allocation4 + $0x178] sm:$0xff]
    %v466 = vld [vmem:[#allocation4 + $0x180] sm:$0xff]
    %v467 = vld [vmem:[#allocation4 + $0x188] sm:$0xff]
    %v468 = vld [vmem:[#allocation4 + $0x190] sm:$0xff]
    %v469 = vld [vmem:[#allocation4 + $0x198] sm:$0xff]
    %v470 = vld [vmem:[#allocation4 + $0x1a0] sm:$0xff]
    %v471 = vld [vmem:[#allocation4 + $0x1a8] sm:$0xff]
    %v472 = vld [vmem:[#allocation4 + $0x1b0] sm:$0xff]
    %v473 = vld [vmem:[#allocation4 + $0x1b8] sm:$0xff]
    %v474 = vld [vmem:[#allocation4 + $0x1c0] sm:$0xff]
    %v475 = vld [vmem:[#allocation4 + $0x1c8] sm:$0xff]
    %v476 = vld [vmem:[#allocation4 + $0x1d0] sm:$0xff]
    %v477 = vld [vmem:[#allocation4 + $0x1d8] sm:$0xff]
    %v478 = vld [vmem:[#allocation4 + $0x1e0] sm:$0xff]
    %v479 = vld [vmem:[#allocation4 + $0x1e8] sm:$0xff]
    %v480 = vld [vmem:[#allocation4 + $0x1f0] sm:$0xff]
    %v481 = vld [vmem:[#allocation4 + $0x1f8] sm:$0xff]
    %v482 = vld [vmem:[#allocation4 + $0x200] sm:$0xff]
    %v483 = vld [vmem:[#allocation4 + $0x208] sm:$0xff]
    %v484 = vld [vmem:[#allocation4 + $0x210] sm:$0xff]
    %v485 = vld [vmem:[#allocation4 + $0x218] sm:$0xff]
    %v486 = vld [vmem:[#allocation4 + $0x220] sm:$0xff]
    %v487 = vld [vmem:[#allocation4 + $0x228] sm:$0xff]
    %v488 = vld [vmem:[#allocation4 + $0x230] sm:$0xff]
    %v489 = vld [vmem:[#allocation4 + $0x238] sm:$0xff]
    %v490 = vld [vmem:[#allocation4 + $0x240] sm:$0xff]
    %v491 = vld [vmem:[#allocation4 + $0x248] sm:$0xff]
    %v492 = vld [vmem:[#allocation4 + $0x250] sm:$0xff]
    %v493 = vld [vmem:[#allocation4 + $0x258] sm:$0xff]
    %v494 = vld [vmem:[#allocation4 + $0x260] sm:$0xff]
    %v495 = vld [vmem:[#allocation4 + $0x268] sm:$0xff]
    %v496 = vld [vmem:[#allocation4 + $0x270] sm:$0xff]
    %v497 = vld [vmem:[#allocation4 + $0x278] sm:$0xff]
    %v498 = vld [vmem:[#allocation4 + $0x280] sm:$0xff]
    %v499 = vld [vmem:[#allocation4 + $0x288] sm:$0xff]
    %v500 = vld [vmem:[#allocation4 + $0x290] sm:$0xff]
    %v501 = vld [vmem:[#allocation4 + $0x298] sm:$0xff]
    %v502 = vld [vmem:[#allocation4 + $0x2a0] sm:$0xff]
    %v503 = vld [vmem:[#allocation4 + $0x2a8] sm:$0xff]
    %v504 = vld [vmem:[#allocation4 + $0x2b0] sm:$0xff]
    %v505 = vld [vmem:[#allocation4 + $0x2b8] sm:$0xff]
    %v506 = vld [vmem:[#allocation4 + $0x2c0] sm:$0xff]
    %v507 = vld [vmem:[#allocation4 + $0x2c8] sm:$0xff]
    %v508 = vld [vmem:[#allocation4 + $0x2d0] sm:$0xff]
    %v509 = vld [vmem:[#allocation4 + $0x2d8] sm:$0xff]
    %v510 = vld [vmem:[#allocation4 + $0x2e0] sm:$0xff]
    %v511 = vld [vmem:[#allocation4 + $0x2e8] sm:$0xff]
    %v512 = vld [vmem:[#allocation4 + $0x2f0] sm:$0xff]
    %v513 = vld [vmem:[#allocation4 + $0x2f8] sm:$0xff]
    %v514 = vld [vmem:[#allocation4 + $0x300] sm:$0xff]
    %v515 = vld [vmem:[#allocation4 + $0x308] sm:$0xff]
    %v516 = vld [vmem:[#allocation4 + $0x310] sm:$0xff]
    %v517 = vld [vmem:[#allocation4 + $0x318] sm:$0xff]
    %v518 = vld [vmem:[#allocation4 + $0x320] sm:$0xff]
    %v519 = vld [vmem:[#allocation4 + $0x328] sm:$0xff]
    %v520 = vld [vmem:[#allocation4 + $0x330] sm:$0xff]
    %v521 = vld [vmem:[#allocation4 + $0x338] sm:$0xff]
    %v522 = vld [vmem:[#allocation4 + $0x340] sm:$0xff]
    %v523 = vld [vmem:[#allocation4 + $0x348] sm:$0xff]
    %v524 = vld [vmem:[#allocation4 + $0x350] sm:$0xff]
    %v525 = vld [vmem:[#allocation4 + $0x358] sm:$0xff]
    %v526 = vld [vmem:[#allocation4 + $0x360] sm:$0xff]
    %v527 = vld [vmem:[#allocation4 + $0x368] sm:$0xff]
    %v528 = vld [vmem:[#allocation4 + $0x370] sm:$0xff]
    %v529 = vld [vmem:[#allocation4 + $0x378] sm:$0xff]
    %v530 = vld [vmem:[#allocation4 + $0x380] sm:$0xff]
    %v531 = vld [vmem:[#allocation4 + $0x388] sm:$0xff]
    %v532 = vld [vmem:[#allocation4 + $0x390] sm:$0xff]
    %v533 = vld [vmem:[#allocation4 + $0x398] sm:$0xff]
    %v534 = vld [vmem:[#allocation4 + $0x3a0] sm:$0xff]
    %v535 = vld [vmem:[#allocation4 + $0x3a8] sm:$0xff]
    %v536 = vld [vmem:[#allocation4 + $0x3b0] sm:$0xff]
    %v537 = vld [vmem:[#allocation4 + $0x3b8] sm:$0xff]
    %v538 = vld [vmem:[#allocation4 + $0x3c0] sm:$0xff]
    %v539 = vld [vmem:[#allocation4 + $0x3c8] sm:$0xff]
    %v540 = vld [vmem:[#allocation4 + $0x3d0] sm:$0xff]
    %v541 = vld [vmem:[#allocation4 + $0x3d8] sm:$0xff]
    %v542 = vld [vmem:[#allocation4 + $0x3e0] sm:$0xff]
    %v543 = vld [vmem:[#allocation4 + $0x3e8] sm:$0xff]
    %v544 = vld [vmem:[#allocation4 + $0x3f0] sm:$0xff]
    %v545 = vld [vmem:[#allocation4 + $0x3f8] sm:$0xff]
    %v546 = vld [vmem:[#allocation4 + $0x400] sm:$0xff]
    %v547 = vld [vmem:[#allocation4 + $0x408] sm:$0xff]
    %v548 = vld [vmem:[#allocation4 + $0x410] sm:$0xff]
    %v549 = vld [vmem:[#allocation4 + $0x418] sm:$0xff]
    %v550 = vld [vmem:[#allocation4 + $0x420] sm:$0xff]
    %v551 = vld [vmem:[#allocation4 + $0x428] sm:$0xff]
    %v552 = vld [vmem:[#allocation4 + $0x430] sm:$0xff]
    %v553 = vld [vmem:[#allocation4 + $0x438] sm:$0xff]
    %v554 = vld [vmem:[#allocation4 + $0x440] sm:$0xff]
    %v555 = vld [vmem:[#allocation4 + $0x448] sm:$0xff]
    %v556 = vld [vmem:[#allocation4 + $0x450] sm:$0xff]
    %v557 = vld [vmem:[#allocation4 + $0x458] sm:$0xff]
    %v558 = vld [vmem:[#allocation4 + $0x460] sm:$0xff]
    %v559 = vld [vmem:[#allocation4 + $0x468] sm:$0xff]
    %v560 = vld [vmem:[#allocation4 + $0x470] sm:$0xff]
    %v561 = vld [vmem:[#allocation4 + $0x478] sm:$0xff]
    %v562 = vld [vmem:[#allocation4 + $0x480] sm:$0xff]
    %v563 = vld [vmem:[#allocation4 + $0x488] sm:$0xff]
    %v564 = vld [vmem:[#allocation4 + $0x490] sm:$0xff]
    %v565 = vld [vmem:[#allocation4 + $0x498] sm:$0xff]
    %v566 = vld [vmem:[#allocation4 + $0x4a0] sm:$0xff]
    %v567 = vld [vmem:[#allocation4 + $0x4a8] sm:$0xff]
    %v568 = vld [vmem:[#allocation4 + $0x4b0] sm:$0xff]
    %v569 = vld [vmem:[#allocation4 + $0x4b8] sm:$0xff]
    %v570 = vld [vmem:[#allocation4 + $0x4c0] sm:$0xff]
    %v571 = vld [vmem:[#allocation4 + $0x4c8] sm:$0xff]
    %v572 = vld [vmem:[#allocation4 + $0x4d0] sm:$0xff]
    %v573 = vld [vmem:[#allocation4 + $0x4d8] sm:$0xff]
    %v574 = vld [vmem:[#allocation4 + $0x4e0] sm:$0xff]
    %v575 = vld [vmem:[#allocation4 + $0x4e8] sm:$0xff]
    %v576 = vld [vmem:[#allocation4 + $0x4f0] sm:$0xff]
    %v577 = vld [vmem:[#allocation4 + $0x4f8] sm:$0xff]
    %v578 = vld [vmem:[#allocation4 + $0x500] sm:$0xff]
    %v579 = vld [vmem:[#allocation4 + $0x508] sm:$0xff]
    %v580 = vld [vmem:[#allocation4 + $0x510] sm:$0xff]
    %v581 = vld [vmem:[#allocation4 + $0x518] sm:$0xff]
    %v582 = vld [vmem:[#allocation4 + $0x520] sm:$0xff]
    %v583 = vld [vmem:[#allocation4 + $0x528] sm:$0xff]
    %v584 = vld [vmem:[#allocation4 + $0x530] sm:$0xff]
    %v585 = vld [vmem:[#allocation4 + $0x538] sm:$0xff]
    %v586 = vld [vmem:[#allocation4 + $0x540] sm:$0xff]
    %v587 = vld [vmem:[#allocation4 + $0x548] sm:$0xff]
    %v588 = vld [vmem:[#allocation4 + $0x550] sm:$0xff]
    %v589 = vld [vmem:[#allocation4 + $0x558] sm:$0xff]
    %v590 = vld [vmem:[#allocation4 + $0x560] sm:$0xff]
    %v591 = vld [vmem:[#allocation4 + $0x568] sm:$0xff]
    %v592 = vld [vmem:[#allocation4 + $0x570] sm:$0xff]
    %v593 = vld [vmem:[#allocation4 + $0x578] sm:$0xff]
    %v594 = vld [vmem:[#allocation4 + $0x580] sm:$0xff]
    %v595 = vld [vmem:[#allocation4 + $0x588] sm:$0xff]
    %v596 = vld [vmem:[#allocation4 + $0x590] sm:$0xff]
    %v597 = vld [vmem:[#allocation4 + $0x598] sm:$0xff]
    %v598 = vld [vmem:[#allocation4 + $0x5a0] sm:$0xff]
    %v599 = vld [vmem:[#allocation4 + $0x5a8] sm:$0xff]
    %v600 = vld [vmem:[#allocation4 + $0x5b0] sm:$0xff]
    %v601 = vld [vmem:[#allocation4 + $0x5b8] sm:$0xff]
    %v602 = vld [vmem:[#allocation4 + $0x5c0] sm:$0xff]
    %v603 = vld [vmem:[#allocation4 + $0x5c8] sm:$0xff]
    %v604 = vld [vmem:[#allocation4 + $0x5d0] sm:$0xff]
    %v605 = vld [vmem:[#allocation4 + $0x5d8] sm:$0xff]
    %v606 = vld [vmem:[#allocation4 + $0x5e0] sm:$0xff]
    %v607 = vld [vmem:[#allocation4 + $0x5e8] sm:$0xff]
    %v608 = vld [vmem:[#allocation4 + $0x5f0] sm:$0xff]
    %v609 = vld [vmem:[#allocation4 + $0x5f8] sm:$0xff]
    %v610 = vld [vmem:[#allocation4 + $0x600] sm:$0xff]
    %v611 = vld [vmem:[#allocation4 + $0x608] sm:$0xff]
    %v612 = vld [vmem:[#allocation4 + $0x610] sm:$0xff]
    %v613 = vld [vmem:[#allocation4 + $0x618] sm:$0xff]
    %v614 = vld [vmem:[#allocation4 + $0x620] sm:$0xff]
    %v615 = vld [vmem:[#allocation4 + $0x628] sm:$0xff]
    %v616 = vld [vmem:[#allocation4 + $0x630] sm:$0xff]
    %v617 = vld [vmem:[#allocation4 + $0x638] sm:$0xff]
    %v618 = vld [vmem:[#allocation4 + $0x640] sm:$0xff]
    %v619 = vld [vmem:[#allocation4 + $0x648] sm:$0xff]
    %v620 = vld [vmem:[#allocation4 + $0x650] sm:$0xff]
    %v621 = vld [vmem:[#allocation4 + $0x658] sm:$0xff]
    %v622 = vld [vmem:[#allocation4 + $0x660] sm:$0xff]
    %v623 = vld [vmem:[#allocation4 + $0x668] sm:$0xff]
    %v624 = vld [vmem:[#allocation4 + $0x670] sm:$0xff]
    %v625 = vld [vmem:[#allocation4 + $0x678] sm:$0xff]
    %v626 = vld [vmem:[#allocation4 + $0x680] sm:$0xff]
    %v627 = vld [vmem:[#allocation4 + $0x688] sm:$0xff]
    %v628 = vld [vmem:[#allocation4 + $0x690] sm:$0xff]
    %v629 = vld [vmem:[#allocation4 + $0x698] sm:$0xff]
    %v630 = vld [vmem:[#allocation4 + $0x6a0] sm:$0xff]
    %v631 = vld [vmem:[#allocation4 + $0x6a8] sm:$0xff]
    %v632 = vld [vmem:[#allocation4 + $0x6b0] sm:$0xff]
    %v633 = vld [vmem:[#allocation4 + $0x6b8] sm:$0xff]
    %v634 = vld [vmem:[#allocation4 + $0x6c0] sm:$0xff]
    %v635 = vld [vmem:[#allocation4 + $0x6c8] sm:$0xff]
    %v636 = vld [vmem:[#allocation4 + $0x6d0] sm:$0xff]
    %v637 = vld [vmem:[#allocation4 + $0x6d8] sm:$0xff]
    %v638 = vld [vmem:[#allocation4 + $0x6e0] sm:$0xff]
    %v639 = vld [vmem:[#allocation4 + $0x6e8] sm:$0xff]
    %v640 = vld [vmem:[#allocation4 + $0x6f0] sm:$0xff]
    %v641 = vld [vmem:[#allocation4 + $0x6f8] sm:$0xff]
    %v642 = vld [vmem:[#allocation4 + $0x700] sm:$0xff]
    %v643 = vld [vmem:[#allocation4 + $0x708] sm:$0xff]
    %v644 = vld [vmem:[#allocation4 + $0x710] sm:$0xff]
    %v645 = vld [vmem:[#allocation4 + $0x718] sm:$0xff]
    %v646 = vld [vmem:[#allocation4 + $0x720] sm:$0xff]
    %v647 = vld [vmem:[#allocation4 + $0x728] sm:$0xff]
    %v648 = vld [vmem:[#allocation4 + $0x730] sm:$0xff]
    %v649 = vld [vmem:[#allocation4 + $0x738] sm:$0xff]
    %v650 = vld [vmem:[#allocation4 + $0x740] sm:$0xff]
    %v651 = vld [vmem:[#allocation4 + $0x748] sm:$0xff]
    %v652 = vld [vmem:[#allocation4 + $0x750] sm:$0xff]
    %v653 = vld [vmem:[#allocation4 + $0x758] sm:$0xff]
    %v654 = vld [vmem:[#allocation4 + $0x760] sm:$0xff]
    %v655 = vld [vmem:[#allocation4 + $0x768] sm:$0xff]
    %v656 = vld [vmem:[#allocation4 + $0x770] sm:$0xff]
    %v657 = vld [vmem:[#allocation4 + $0x778] sm:$0xff]
    %v658 = vld [vmem:[#allocation4 + $0x780] sm:$0xff]
    %v659 = vld [vmem:[#allocation4 + $0x788] sm:$0xff]
    %v660 = vld [vmem:[#allocation4 + $0x790] sm:$0xff]
    %v661 = vld [vmem:[#allocation4 + $0x798] sm:$0xff]
    %v662 = vld [vmem:[#allocation4 + $0x7a0] sm:$0xff]
    %v663 = vld [vmem:[#allocation4 + $0x7a8] sm:$0xff]
    %v664 = vld [vmem:[#allocation4 + $0x7b0] sm:$0xff]
    %v665 = vld [vmem:[#allocation4 + $0x7b8] sm:$0xff]
    %v666 = vld [vmem:[#allocation4 + $0x7c0] sm:$0xff]
    %v667 = vld [vmem:[#allocation4 + $0x7c8] sm:$0xff]
    %v668 = vld [vmem:[#allocation4 + $0x7d0] sm:$0xff]
    %v669 = vld [vmem:[#allocation4 + $0x7d8] sm:$0xff]
    %v670 = vld [vmem:[#allocation4 + $0x7e0] sm:$0xff]
    %v671 = vld [vmem:[#allocation4 + $0x7e8] sm:$0xff]
    %v672 = vld [vmem:[#allocation4 + $0x7f0] sm:$0xff]
    %v673 = vld [vmem:[#allocation4 + $0x7f8] sm:$0xff]
    %v674 = vld [vmem:[#allocation4 + $0x800] sm:$0xff]
    %v675 = vld [vmem:[#allocation4 + $0x808] sm:$0xff]
    %v676 = vld [vmem:[#allocation4 + $0x810] sm:$0xff]
    %v677 = vld [vmem:[#allocation4 + $0x818] sm:$0xff]
    %v678 = vld [vmem:[#allocation4 + $0x820] sm:$0xff]
    %v679 = vld [vmem:[#allocation4 + $0x828] sm:$0xff]
    %v680 = vld [vmem:[#allocation4 + $0x830] sm:$0xff]
    %v681 = vld [vmem:[#allocation4 + $0x838] sm:$0xff]
    %v682 = vld [vmem:[#allocation4 + $0x840] sm:$0xff]
    %v683 = vld [vmem:[#allocation4 + $0x848] sm:$0xff]
    %v684 = vld [vmem:[#allocation4 + $0x850] sm:$0xff]
    %v685 = vld [vmem:[#allocation4 + $0x858] sm:$0xff]
    %v686 = vld [vmem:[#allocation4 + $0x860] sm:$0xff]
    %v687 = vld [vmem:[#allocation4 + $0x868] sm:$0xff]
    %v688 = vld [vmem:[#allocation4 + $0x870] sm:$0xff]
    %v689 = vld [vmem:[#allocation4 + $0x878] sm:$0xff]
    %v690 = vld [vmem:[#allocation4 + $0x880] sm:$0xff]
    %v691 = vld [vmem:[#allocation4 + $0x888] sm:$0xff]
    %v692 = vld [vmem:[#allocation4 + $0x890] sm:$0xff]
    %v693 = vld [vmem:[#allocation4 + $0x898] sm:$0xff]
    %v694 = vld [vmem:[#allocation4 + $0x8a0] sm:$0xff]
    %v695 = vld [vmem:[#allocation4 + $0x8a8] sm:$0xff]
    %v696 = vld [vmem:[#allocation4 + $0x8b0] sm:$0xff]
    %v697 = vld [vmem:[#allocation4 + $0x8b8] sm:$0xff]
    %v698 = vld [vmem:[#allocation4 + $0x8c0] sm:$0xff]
    %v699 = vld [vmem:[#allocation4 + $0x8c8] sm:$0xff]
    %v700 = vld [vmem:[#allocation4 + $0x8d0] sm:$0xff]
    %v701 = vld [vmem:[#allocation4 + $0x8d8] sm:$0xff]
    %v702 = vld [vmem:[#allocation4 + $0x8e0] sm:$0xff]
    %v703 = vld [vmem:[#allocation4 + $0x8e8] sm:$0xff]
    %v704 = vld [vmem:[#allocation4 + $0x8f0] sm:$0xff]
    %v705 = vld [vmem:[#allocation4 + $0x8f8] sm:$0xff]
    %v706 = vld [vmem:[#allocation4 + $0x900] sm:$0xff]
    %v707 = vld [vmem:[#allocation4 + $0x908] sm:$0xff]
    %v708 = vld [vmem:[#allocation4 + $0x910] sm:$0xff]
    %v709 = vld [vmem:[#allocation4 + $0x918] sm:$0xff]
    %v710 = vld [vmem:[#allocation4 + $0x920] sm:$0xff]
    %v711 = vld [vmem:[#allocation4 + $0x928] sm:$0xff]
    %v712 = vld [vmem:[#allocation4 + $0x930] sm:$0xff]
    %v713 = vld [vmem:[#allocation4 + $0x938] sm:$0xff]
    %v714 = vld [vmem:[#allocation4 + $0x940] sm:$0xff]
    %v715 = vld [vmem:[#allocation4 + $0x948] sm:$0xff]
    %v716 = vld [vmem:[#allocation4 + $0x950] sm:$0xff]
    %v717 = vld [vmem:[#allocation4 + $0x958] sm:$0xff]
    %v718 = vld [vmem:[#allocation4 + $0x960] sm:$0xff]
    %v719 = vld [vmem:[#allocation4 + $0x968] sm:$0xff]
    %v720 = vld [vmem:[#allocation4 + $0x970] sm:$0xff]
    %v721 = vld [vmem:[#allocation4 + $0x978] sm:$0xff]
    %v722 = vld [vmem:[#allocation4 + $0x980] sm:$0xff]
    %v723 = vld [vmem:[#allocation4 + $0x988] sm:$0xff]
    %v724 = vld [vmem:[#allocation4 + $0x990] sm:$0xff]
    %v725 = vld [vmem:[#allocation4 + $0x998] sm:$0xff]
    %v726 = vld [vmem:[#allocation4 + $0x9a0] sm:$0xff]
    %v727 = vld [vmem:[#allocation4 + $0x9a8] sm:$0xff]
    %v728 = vld [vmem:[#allocation4 + $0x9b0] sm:$0xff]
    %v729 = vld [vmem:[#allocation4 + $0x9b8] sm:$0xff]
    %v730 = vld [vmem:[#allocation4 + $0x9c0] sm:$0xff]
    %v731 = vld [vmem:[#allocation4 + $0x9c8] sm:$0xff]
    %v732 = vld [vmem:[#allocation4 + $0x9d0] sm:$0xff]
    %v733 = vld [vmem:[#allocation4 + $0x9d8] sm:$0xff]
    %v734 = vld [vmem:[#allocation4 + $0x9e0] sm:$0xff]
    %v735 = vld [vmem:[#allocation4 + $0x9e8] sm:$0xff]
    %v736 = vld [vmem:[#allocation4 + $0x9f0] sm:$0xff]
    %v737 = vld [vmem:[#allocation4 + $0x9f8] sm:$0xff]
    %v738 = vld [vmem:[#allocation4 + $0xa00] sm:$0xff]
    %v739 = vld [vmem:[#allocation4 + $0xa08] sm:$0xff]
    %v740 = vld [vmem:[#allocation4 + $0xa10] sm:$0xff]
    %v741 = vld [vmem:[#allocation4 + $0xa18] sm:$0xff]
    %v742 = vld [vmem:[#allocation4 + $0xa20] sm:$0xff]
    %v743 = vld [vmem:[#allocation4 + $0xa28] sm:$0xff]
    %v744 = vld [vmem:[#allocation4 + $0xa30] sm:$0xff]
    %v745 = vld [vmem:[#allocation4 + $0xa38] sm:$0xff]
    %v746 = vld [vmem:[#allocation4 + $0xa40] sm:$0xff]
    %v747 = vld [vmem:[#allocation4 + $0xa48] sm:$0xff]
    %v748 = vld [vmem:[#allocation4 + $0xa50] sm:$0xff]
    %v749 = vld [vmem:[#allocation4 + $0xa58] sm:$0xff]
    %v750 = vld [vmem:[#allocation4 + $0xa60] sm:$0xff]
    %v751 = vld [vmem:[#allocation4 + $0xa68] sm:$0xff]
    %v752 = vld [vmem:[#allocation4 + $0xa70] sm:$0xff]
    %v753 = vld [vmem:[#allocation4 + $0xa78] sm:$0xff]
    %v754 = vld [vmem:[#allocation4 + $0xa80] sm:$0xff]
    %v755 = vld [vmem:[#allocation4 + $0xa88] sm:$0xff]
    %v756 = vld [vmem:[#allocation4 + $0xa90] sm:$0xff]
    %v757 = vld [vmem:[#allocation4 + $0xa98] sm:$0xff]
    %v758 = vld [vmem:[#allocation4 + $0xaa0] sm:$0xff]
    %v759 = vld [vmem:[#allocation4 + $0xaa8] sm:$0xff]
    %v760 = vld [vmem:[#allocation4 + $0xab0] sm:$0xff]
    %v761 = vld [vmem:[#allocation4 + $0xab8] sm:$0xff]
    %v762 = vld [vmem:[#allocation4 + $0xac0] sm:$0xff]
    %v763 = vld [vmem:[#allocation4 + $0xac8] sm:$0xff]
    %v764 = vld [vmem:[#allocation4 + $0xad0] sm:$0xff]
    %v765 = vld [vmem:[#allocation4 + $0xad8] sm:$0xff]
    %v766 = vld [vmem:[#allocation4 + $0xae0] sm:$0xff]
    %v767 = vld [vmem:[#allocation4 + $0xae8] sm:$0xff]
    %v768 = vld [vmem:[#allocation4 + $0xaf0] sm:$0xff]
    %v769 = vld [vmem:[#allocation4 + $0xaf8] sm:$0xff]
    %v770 = vld [vmem:[#allocation4 + $0xb00] sm:$0xff]
    %v771 = vld [vmem:[#allocation4 + $0xb08] sm:$0xff]
    %v772 = vld [vmem:[#allocation4 + $0xb10] sm:$0xff]
    %v773 = vld [vmem:[#allocation4 + $0xb18] sm:$0xff]
    %v774 = vld [vmem:[#allocation4 + $0xb20] sm:$0xff]
    %v775 = vld [vmem:[#allocation4 + $0xb28] sm:$0xff]
    %v776 = vld [vmem:[#allocation4 + $0xb30] sm:$0xff]
    %v777 = vld [vmem:[#allocation4 + $0xb38] sm:$0xff]
    %v778 = vld [vmem:[#allocation4 + $0xb40] sm:$0xff]
    %v779 = vld [vmem:[#allocation4 + $0xb48] sm:$0xff]
    %v780 = vld [vmem:[#allocation4 + $0xb50] sm:$0xff]
    %v781 = vld [vmem:[#allocation4 + $0xb58] sm:$0xff]
    %v782 = vld [vmem:[#allocation4 + $0xb60] sm:$0xff]
    %v783 = vld [vmem:[#allocation4 + $0xb68] sm:$0xff]
    %v784 = vld [vmem:[#allocation4 + $0xb70] sm:$0xff]
    %v785 = vld [vmem:[#allocation4 + $0xb78] sm:$0xff]
    %v786 = vld [vmem:[#allocation4 + $0xb80] sm:$0xff]
    %v787 = vld [vmem:[#allocation4 + $0xb88] sm:$0xff]
    %v788 = vld [vmem:[#allocation4 + $0xb90] sm:$0xff]
    %v789 = vld [vmem:[#allocation4 + $0xb98] sm:$0xff]
    %v790 = vld [vmem:[#allocation4 + $0xba0] sm:$0xff]
    %v791 = vld [vmem:[#allocation4 + $0xba8] sm:$0xff]
    %v792 = vld [vmem:[#allocation4 + $0xbb0] sm:$0xff]
    %v793 = vld [vmem:[#allocation4 + $0xbb8] sm:$0xff]
    %v794 = vld [vmem:[#allocation4 + $0xbc0] sm:$0xff]
    %v795 = vld [vmem:[#allocation4 + $0xbc8] sm:$0xff]
    %v796 = vld [vmem:[#allocation4 + $0xbd0] sm:$0xff]
    %v797 = vld [vmem:[#allocation4 + $0xbd8] sm:$0xff]
    %v798 = vld [vmem:[#allocation4 + $0xbe0] sm:$0xff]
    %v799 = vld [vmem:[#allocation4 + $0xbe8] sm:$0xff]
    %v800 = vld [vmem:[#allocation4 + $0xbf0] sm:$0xff]
    %v801 = vld [vmem:[#allocation4 + $0xbf8] sm:$0xff]
    %v802 = vld [vmem:[#allocation4 + $0xc00] sm:$0xff]
    %v803 = vld [vmem:[#allocation4 + $0xc08] sm:$0xff]
    %v804 = vld [vmem:[#allocation4 + $0xc10] sm:$0xff]
    %v805 = vld [vmem:[#allocation4 + $0xc18] sm:$0xff]
    %v806 = vld [vmem:[#allocation4 + $0xc20] sm:$0xff]
    %v807 = vld [vmem:[#allocation4 + $0xc28] sm:$0xff]
    %v808 = vld [vmem:[#allocation4 + $0xc30] sm:$0xff]
    %v809 = vld [vmem:[#allocation4 + $0xc38] sm:$0xff]
    %v810 = vld [vmem:[#allocation4 + $0xc40] sm:$0xff]
    %v811 = vld [vmem:[#allocation4 + $0xc48] sm:$0xff]
    %v812 = vld [vmem:[#allocation4 + $0xc50] sm:$0xff]
    %v813 = vld [vmem:[#allocation4 + $0xc58] sm:$0xff]
    %v814 = vld [vmem:[#allocation4 + $0xc60] sm:$0xff]
    %v815 = vld [vmem:[#allocation4 + $0xc68] sm:$0xff]
    %v816 = vld [vmem:[#allocation4 + $0xc70] sm:$0xff]
    %v817 = vld [vmem:[#allocation4 + $0xc78] sm:$0xff]
    %v818 = vld [vmem:[#allocation4 + $0xc80] sm:$0xff]
    %v819 = vld [vmem:[#allocation4 + $0xc88] sm:$0xff]
    %v820 = vld [vmem:[#allocation4 + $0xc90] sm:$0xff]
    %v821 = vld [vmem:[#allocation4 + $0xc98] sm:$0xff]
    %v822 = vld [vmem:[#allocation4 + $0xca0] sm:$0xff]
    %v823 = vld [vmem:[#allocation4 + $0xca8] sm:$0xff]
    %v824 = vld [vmem:[#allocation4 + $0xcb0] sm:$0xff]
    %v825 = vld [vmem:[#allocation4 + $0xcb8] sm:$0xff]
    %v826 = vld [vmem:[#allocation4 + $0xcc0] sm:$0xff]
    %v827 = vld [vmem:[#allocation4 + $0xcc8] sm:$0xff]
    %v828 = vld [vmem:[#allocation4 + $0xcd0] sm:$0xff]
    %v829 = vld [vmem:[#allocation4 + $0xcd8] sm:$0xff]
    %v830 = vld [vmem:[#allocation4 + $0xce0] sm:$0xff]
    %v831 = vld [vmem:[#allocation4 + $0xce8] sm:$0xff]
    %v832 = vld [vmem:[#allocation4 + $0xcf0] sm:$0xff]
    %v833 = vld [vmem:[#allocation4 + $0xcf8] sm:$0xff]
    %v834 = vld [vmem:[#allocation4 + $0xd00] sm:$0xff]
    %v835 = vld [vmem:[#allocation4 + $0xd08] sm:$0xff]
    %v836 = vld [vmem:[#allocation4 + $0xd10] sm:$0xff]
    %v837 = vld [vmem:[#allocation4 + $0xd18] sm:$0xff]
    %v838 = vld [vmem:[#allocation4 + $0xd20] sm:$0xff]
    %v839 = vld [vmem:[#allocation4 + $0xd28] sm:$0xff]
    %v840 = vld [vmem:[#allocation4 + $0xd30] sm:$0xff]
    %v841 = vld [vmem:[#allocation4 + $0xd38] sm:$0xff]
    %v842 = vld [vmem:[#allocation4 + $0xd40] sm:$0xff]
    %v843 = vld [vmem:[#allocation4 + $0xd48] sm:$0xff]
    %v844 = vld [vmem:[#allocation4 + $0xd50] sm:$0xff]
    %v845 = vld [vmem:[#allocation4 + $0xd58] sm:$0xff]
    %v846 = vld [vmem:[#allocation4 + $0xd60] sm:$0xff]
    %v847 = vld [vmem:[#allocation4 + $0xd68] sm:$0xff]
    %v848 = vld [vmem:[#allocation4 + $0xd70] sm:$0xff]
    %v849 = vld [vmem:[#allocation4 + $0xd78] sm:$0xff]
    %v850 = vld [vmem:[#allocation4 + $0xd80] sm:$0xff]
    %v851 = vld [vmem:[#allocation4 + $0xd88] sm:$0xff]
    %v852 = vld [vmem:[#allocation4 + $0xd90] sm:$0xff]
    %v853 = vld [vmem:[#allocation4 + $0xd98] sm:$0xff]
    %v854 = vld [vmem:[#allocation4 + $0xda0] sm:$0xff]
    %v855 = vld [vmem:[#allocation4 + $0xda8] sm:$0xff]
    %v856 = vld [vmem:[#allocation4 + $0xdb0] sm:$0xff]
    %v857 = vld [vmem:[#allocation4 + $0xdb8] sm:$0xff]
    %v858 = vld [vmem:[#allocation4 + $0xdc0] sm:$0xff]
    %v859 = vld [vmem:[#allocation4 + $0xdc8] sm:$0xff]
    %v860 = vld [vmem:[#allocation4 + $0xdd0] sm:$0xff]
    %v861 = vld [vmem:[#allocation4 + $0xdd8] sm:$0xff]
    %v862 = vld [vmem:[#allocation4 + $0xde0] sm:$0xff]
    %v863 = vld [vmem:[#allocation4 + $0xde8] sm:$0xff]
    %v864 = vld [vmem:[#allocation4 + $0xdf0] sm:$0xff]
    %v865 = vld [vmem:[#allocation4 + $0xdf8] sm:$0xff]
    %v866 = vld [vmem:[#allocation4 + $0xe00] sm:$0xff]
    %v867 = vld [vmem:[#allocation4 + $0xe08] sm:$0xff]
    %v868 = vld [vmem:[#allocation4 + $0xe10] sm:$0xff]
    %v869 = vld [vmem:[#allocation4 + $0xe18] sm:$0xff]
    %v870 = vld [vmem:[#allocation4 + $0xe20] sm:$0xff]
    %v871 = vld [vmem:[#allocation4 + $0xe28] sm:$0xff]
    %v872 = vld [vmem:[#allocation4 + $0xe30] sm:$0xff]
    %v873 = vld [vmem:[#allocation4 + $0xe38] sm:$0xff]
    %v874 = vld [vmem:[#allocation4 + $0xe40] sm:$0xff]
    %v875 = vld [vmem:[#allocation4 + $0xe48] sm:$0xff]
    %v876 = vld [vmem:[#allocation4 + $0xe50] sm:$0xff]
    %v877 = vld [vmem:[#allocation4 + $0xe58] sm:$0xff]
    %v878 = vld [vmem:[#allocation4 + $0xe60] sm:$0xff]
    %v879 = vld [vmem:[#allocation4 + $0xe68] sm:$0xff]
    %v880 = vld [vmem:[#allocation4 + $0xe70] sm:$0xff]
    %v881 = vld [vmem:[#allocation4 + $0xe78] sm:$0xff]
    %v882 = vld [vmem:[#allocation4 + $0xe80] sm:$0xff]
    %v883 = vld [vmem:[#allocation4 + $0xe88] sm:$0xff]
    %v884 = vld [vmem:[#allocation4 + $0xe90] sm:$0xff]
    %v885 = vld [vmem:[#allocation4 + $0xe98] sm:$0xff]
    %v886 = vld [vmem:[#allocation4 + $0xea0] sm:$0xff]
    %v887 = vld [vmem:[#allocation4 + $0xea8] sm:$0xff]
    %v888 = vld [vmem:[#allocation4 + $0xeb0] sm:$0xff]
    %v889 = vld [vmem:[#allocation4 + $0xeb8] sm:$0xff]
    %v890 = vld [vmem:[#allocation4 + $0xec0] sm:$0xff]
    %v891 = vld [vmem:[#allocation4 + $0xec8] sm:$0xff]
    %v892 = vld [vmem:[#allocation4 + $0xed0] sm:$0xff]
    %v893 = vld [vmem:[#allocation4 + $0xed8] sm:$0xff]
    %v894 = vld [vmem:[#allocation4 + $0xee0] sm:$0xff]
    %v895 = vld [vmem:[#allocation4 + $0xee8] sm:$0xff]
    %v896 = vld [vmem:[#allocation4 + $0xef0] sm:$0xff]
    %v897 = vld [vmem:[#allocation4 + $0xef8] sm:$0xff]
    %v898 = vld [vmem:[#allocation4 + $0xf00] sm:$0xff]
    %v899 = vld [vmem:[#allocation4 + $0xf08] sm:$0xff]
    %v900 = vld [vmem:[#allocation4 + $0xf10] sm:$0xff]
    %v901 = vld [vmem:[#allocation4 + $0xf18] sm:$0xff]
    %v902 = vld [vmem:[#allocation4 + $0xf20] sm:$0xff]
    %v903 = vld [vmem:[#allocation4 + $0xf28] sm:$0xff]
    %v904 = vld [vmem:[#allocation4 + $0xf30] sm:$0xff]
    %v905 = vld [vmem:[#allocation4 + $0xf38] sm:$0xff]
    %v906 = vld [vmem:[#allocation4 + $0xf40] sm:$0xff]
    %v907 = vld [vmem:[#allocation4 + $0xf48] sm:$0xff]
    %v908 = vld [vmem:[#allocation4 + $0xf50] sm:$0xff]
    %v909 = vld [vmem:[#allocation4 + $0xf58] sm:$0xff]
    %v910 = vld [vmem:[#allocation4 + $0xf60] sm:$0xff]
    %v911 = vld [vmem:[#allocation4 + $0xf68] sm:$0xff]
    %v912 = vld [vmem:[#allocation4 + $0xf70] sm:$0xff]
    %v913 = vld [vmem:[#allocation4 + $0xf78] sm:$0xff]
    %v914 = vld [vmem:[#allocation4 + $0xf80] sm:$0xff]
    %v915 = vld [vmem:[#allocation4 + $0xf88] sm:$0xff]
    %v916 = vld [vmem:[#allocation4 + $0xf90] sm:$0xff]
    %v917 = vld [vmem:[#allocation4 + $0xf98] sm:$0xff]
    %v918 = vld [vmem:[#allocation4 + $0xfa0] sm:$0xff]
    %v919 = vld [vmem:[#allocation4 + $0xfa8] sm:$0xff]
    %v920 = vld [vmem:[#allocation4 + $0xfb0] sm:$0xff]
    %v921 = vld [vmem:[#allocation4 + $0xfb8] sm:$0xff]
    %v922 = vld [vmem:[#allocation4 + $0xfc0] sm:$0xff]
    %v923 = vld [vmem:[#allocation4 + $0xfc8] sm:$0xff]
    %v924 = vld [vmem:[#allocation4 + $0xfd0] sm:$0xff]
    %v925 = vld [vmem:[#allocation4 + $0xfd8] sm:$0xff]
    %v926 = vld [vmem:[#allocation4 + $0xfe0] sm:$0xff]
    %v927 = vld [vmem:[#allocation4 + $0xfe8] sm:$0xff]
    %v928 = vld [vmem:[#allocation4 + $0xff0] sm:$0xff]
    %v929 = vld [vmem:[#allocation4 + $0xff8] sm:$0xff]
    %v930 = vld [vmem:[#allocation4 + $0x1000] sm:$0xff]
    %v931 = vld [vmem:[#allocation4 + $0x1008] sm:$0xff]
    %v932 = vld [vmem:[#allocation4 + $0x1010] sm:$0xff]
    %v933 = vld [vmem:[#allocation4 + $0x1018] sm:$0xff]
    %v934 = vld [vmem:[#allocation4 + $0x1020] sm:$0xff]
    %v935 = vld [vmem:[#allocation4 + $0x1028] sm:$0xff]
    %v936 = vld [vmem:[#allocation4 + $0x1030] sm:$0xff]
    %v937 = vld [vmem:[#allocation4 + $0x1038] sm:$0xff]
    %v938 = vld [vmem:[#allocation4 + $0x1040] sm:$0xff]
    %v939 = vld [vmem:[#allocation4 + $0x1048] sm:$0xff]
    %v940 = vld [vmem:[#allocation4 + $0x1050] sm:$0xff]
    %v941 = vld [vmem:[#allocation4 + $0x1058] sm:$0xff]
    %v942 = vld [vmem:[#allocation4 + $0x1060] sm:$0xff]
    %v943 = vld [vmem:[#allocation4 + $0x1068] sm:$0xff]
    %v944 = vld [vmem:[#allocation4 + $0x1070] sm:$0xff]
    %v945 = vld [vmem:[#allocation4 + $0x1078] sm:$0xff]
    %v946 = vld [vmem:[#allocation4 + $0x1080] sm:$0xff]
    %v947 = vld [vmem:[#allocation4 + $0x1088] sm:$0xff]
    %v948 = vld [vmem:[#allocation4 + $0x1090] sm:$0xff]
    %v949 = vld [vmem:[#allocation4 + $0x1098] sm:$0xff]
    %v950 = vld [vmem:[#allocation4 + $0x10a0] sm:$0xff]
    %v951 = vld [vmem:[#allocation4 + $0x10a8] sm:$0xff]
    %v952 = vld [vmem:[#allocation4 + $0x10b0] sm:$0xff]
    %v953 = vld [vmem:[#allocation4 + $0x10b8] sm:$0xff]
    %v954 = vld [vmem:[#allocation4 + $0x10c0] sm:$0xff]
    %v955 = vld [vmem:[#allocation4 + $0x10c8] sm:$0xff]
    %v956 = vld [vmem:[#allocation4 + $0x10d0] sm:$0xff]
    %v957 = vld [vmem:[#allocation4 + $0x10d8] sm:$0xff]
    %v958 = vld [vmem:[#allocation4 + $0x10e0] sm:$0xff]
    %v959 = vld [vmem:[#allocation4 + $0x10e8] sm:$0xff]
    %v960 = vld [vmem:[#allocation4 + $0x10f0] sm:$0xff]
    %v961 = vld [vmem:[#allocation4 + $0x10f8] sm:$0xff]
    %v962 = vld [vmem:[#allocation4 + $0x1100] sm:$0xff]
    %v963 = vld [vmem:[#allocation4 + $0x1108] sm:$0xff]
    %v964 = vld [vmem:[#allocation4 + $0x1110] sm:$0xff]
    %v965 = vld [vmem:[#allocation4 + $0x1118] sm:$0xff]
    %v966 = vld [vmem:[#allocation4 + $0x1120] sm:$0xff]
    %v967 = vld [vmem:[#allocation4 + $0x1128] sm:$0xff]
    %v968 = vld [vmem:[#allocation4 + $0x1130] sm:$0xff]
    %v969 = vld [vmem:[#allocation4 + $0x1138] sm:$0xff]
    %v970 = vld [vmem:[#allocation4 + $0x1140] sm:$0xff]
    %v971 = vld [vmem:[#allocation4 + $0x1148] sm:$0xff]
    %v972 = vld [vmem:[#allocation4 + $0x1150] sm:$0xff]
    %v973 = vld [vmem:[#allocation4 + $0x1158] sm:$0xff]
    %v974 = vld [vmem:[#allocation4 + $0x1160] sm:$0xff]
    %v975 = vld [vmem:[#allocation4 + $0x1168] sm:$0xff]
    %v976 = vld [vmem:[#allocation4 + $0x1170] sm:$0xff]
    %v977 = vld [vmem:[#allocation4 + $0x1178] sm:$0xff]
    %v978 = vld [vmem:[#allocation4 + $0x1180] sm:$0xff]
    %v979 = vld [vmem:[#allocation4 + $0x1188] sm:$0xff]
    %v980 = vld [vmem:[#allocation4 + $0x1190] sm:$0xff]
    %v981 = vld [vmem:[#allocation4 + $0x1198] sm:$0xff]
    %v982 = vld [vmem:[#allocation4 + $0x11a0] sm:$0xff]
    %v983 = vld [vmem:[#allocation4 + $0x11a8] sm:$0xff]
    %v984 = vld [vmem:[#allocation4 + $0x11b0] sm:$0xff]
    %v985 = vld [vmem:[#allocation4 + $0x11b8] sm:$0xff]
    %v986 = vld [vmem:[#allocation4 + $0x11c0] sm:$0xff]
    %v987 = vld [vmem:[#allocation4 + $0x11c8] sm:$0xff]
    %v988 = vld [vmem:[#allocation4 + $0x11d0] sm:$0xff]
    %v989 = vld [vmem:[#allocation4 + $0x11d8] sm:$0xff]
    %v990 = vld [vmem:[#allocation4 + $0x11e0] sm:$0xff]
    %v991 = vld [vmem:[#allocation4 + $0x11e8] sm:$0xff]
    %v992 = vld [vmem:[#allocation4 + $0x11f0] sm:$0xff]
    %v993 = vld [vmem:[#allocation4 + $0x11f8] sm:$0xff]
    %v994 = vld [vmem:[#allocation4 + $0x1200] sm:$0xff]
    %v995 = vld [vmem:[#allocation4 + $0x1208] sm:$0xff]
    %v996 = vld [vmem:[#allocation4 + $0x1210] sm:$0xff]
    %v997 = vld [vmem:[#allocation4 + $0x1218] sm:$0xff]
    %v998 = vld [vmem:[#allocation4 + $0x1220] sm:$0xff]
    %v999 = vld [vmem:[#allocation4 + $0x1228] sm:$0xff]
    %v1000 = vld [vmem:[#allocation4 + $0x1230] sm:$0xff]
    %v1001 = vld [vmem:[#allocation4 + $0x1238] sm:$0xff]
    %v1002 = vld [vmem:[#allocation4 + $0x1240] sm:$0xff]
    %v1003 = vld [vmem:[#allocation4 + $0x1248] sm:$0xff]
    %v1004 = vld [vmem:[#allocation4 + $0x1250] sm:$0xff]
    %v1005 = vld [vmem:[#allocation4 + $0x1258] sm:$0xff]
    %v1006 = vld [vmem:[#allocation4 + $0x1260] sm:$0xff]
    %v1007 = vld [vmem:[#allocation4 + $0x1268] sm:$0xff]
    %v1008 = vld [vmem:[#allocation4 + $0x1270] sm:$0xff]
    %v1009 = vld [vmem:[#allocation4 + $0x1278] sm:$0xff]
    %v1010 = vld [vmem:[#allocation4 + $0x1280] sm:$0xff]
    %v1011 = vld [vmem:[#allocation4 + $0x1288] sm:$0xff]
    %v1012 = vld [vmem:[#allocation4 + $0x1290] sm:$0xff]
    %v1013 = vld [vmem:[#allocation4 + $0x1298] sm:$0xff]
    %v1014 = vld [vmem:[#allocation4 + $0x12a0] sm:$0xff]
    %v1015 = vld [vmem:[#allocation4 + $0x12a8] sm:$0xff]
    %v1016 = vld [vmem:[#allocation4 + $0x12b0] sm:$0xff]
    %v1017 = vld [vmem:[#allocation4 + $0x12b8] sm:$0xff]
    %v1018 = vld [vmem:[#allocation4 + $0x12c0] sm:$0xff]
    %v1019 = vld [vmem:[#allocation4 + $0x12c8] sm:$0xff]
    %v1020 = vld [vmem:[#allocation4 + $0x12d0] sm:$0xff]
    %v1021 = vld [vmem:[#allocation4 + $0x12d8] sm:$0xff]
    %v1022 = vld [vmem:[#allocation4 + $0x12e0] sm:$0xff]
    %v1023 = vld [vmem:[#allocation4 + $0x12e8] sm:$0xff]
    %v1024 = vld [vmem:[#allocation4 + $0x12f0] sm:$0xff]
    %v1025 = vld [vmem:[#allocation4 + $0x12f8] sm:$0xff]
    %v1026 = vld [vmem:[#allocation4 + $0x1300] sm:$0xff]
    %v1027 = vld [vmem:[#allocation4 + $0x1308] sm:$0xff]
    %v1028 = vld [vmem:[#allocation4 + $0x1310] sm:$0xff]
    %v1029 = vld [vmem:[#allocation4 + $0x1318] sm:$0xff]
    %v1030 = vld [vmem:[#allocation4 + $0x1320] sm:$0xff]
    %v1031 = vld [vmem:[#allocation4 + $0x1328] sm:$0xff]
    %v1032 = vld [vmem:[#allocation4 + $0x1330] sm:$0xff]
    %v1033 = vld [vmem:[#allocation4 + $0x1338] sm:$0xff]
    %v1034 = vld [vmem:[#allocation4 + $0x1340] sm:$0xff]
    %v1035 = vld [vmem:[#allocation4 + $0x1348] sm:$0xff]
    %v1036 = vld [vmem:[#allocation4 + $0x1350] sm:$0xff]
    %v1037 = vld [vmem:[#allocation4 + $0x1358] sm:$0xff]
    %v1038 = vld [vmem:[#allocation4 + $0x1360] sm:$0xff]
    %v1039 = vld [vmem:[#allocation4 + $0x1368] sm:$0xff]
    %v1040 = vld [vmem:[#allocation4 + $0x1370] sm:$0xff]
    %v1041 = vld [vmem:[#allocation4 + $0x1378] sm:$0xff]
    %v1042 = vld [vmem:[#allocation4 + $0x1380] sm:$0xff]
    %v1043 = vld [vmem:[#allocation4 + $0x1388] sm:$0xff]
    %v1044 = vld [vmem:[#allocation4 + $0x1390] sm:$0xff]
    %v1045 = vld [vmem:[#allocation4 + $0x1398] sm:$0xff]
    %v1046 = vld [vmem:[#allocation4 + $0x13a0] sm:$0xff]
    %v1047 = vld [vmem:[#allocation4 + $0x13a8] sm:$0xff]
    %v1048 = vld [vmem:[#allocation4 + $0x13b0] sm:$0xff]
    %v1049 = vld [vmem:[#allocation4 + $0x13b8] sm:$0xff]
    %v1050 = vld [vmem:[#allocation4 + $0x13c0] sm:$0xff]
    %v1051 = vld [vmem:[#allocation4 + $0x13c8] sm:$0xff]
    %v1052 = vld [vmem:[#allocation4 + $0x13d0] sm:$0xff]
    %v1053 = vld [vmem:[#allocation4 + $0x13d8] sm:$0xff]
    %v1054 = vld [vmem:[#allocation4 + $0x13e0] sm:$0xff]
    %v1055 = vld [vmem:[#allocation4 + $0x13e8] sm:$0xff]
    %v1056 = vld [vmem:[#allocation4 + $0x13f0] sm:$0xff]
    %v1057 = vld [vmem:[#allocation4 + $0x13f8] sm:$0xff]
    %v1058 = vld [vmem:[#allocation4 + $0x1400] sm:$0xff]
    %v1059 = vld [vmem:[#allocation4 + $0x1408] sm:$0xff]
    %v1060 = vld [vmem:[#allocation4 + $0x1410] sm:$0xff]
    %v1061 = vld [vmem:[#allocation4 + $0x1418] sm:$0xff]
    %v1062 = vld [vmem:[#allocation4 + $0x1420] sm:$0xff]
    %v1063 = vld [vmem:[#allocation4 + $0x1428] sm:$0xff]
    %v1064 = vld [vmem:[#allocation4 + $0x1430] sm:$0xff]
    %v1065 = vld [vmem:[#allocation4 + $0x1438] sm:$0xff]
    %v1066 = vld [vmem:[#allocation4 + $0x1440] sm:$0xff]
    %v1067 = vld [vmem:[#allocation4 + $0x1448] sm:$0xff]
    %v1068 = vld [vmem:[#allocation4 + $0x1450] sm:$0xff]
    %v1069 = vld [vmem:[#allocation4 + $0x1458] sm:$0xff]
    %v1070 = vld [vmem:[#allocation4 + $0x1460] sm:$0xff]
    %v1071 = vld [vmem:[#allocation4 + $0x1468] sm:$0xff]
    %v1072 = vld [vmem:[#allocation4 + $0x1470] sm:$0xff]
    %v1073 = vld [vmem:[#allocation4 + $0x1478] sm:$0xff]
    %v1074 = vld [vmem:[#allocation4 + $0x1480] sm:$0xff]
    %v1075 = vld [vmem:[#allocation4 + $0x1488] sm:$0xff]
    %v1076 = vld [vmem:[#allocation4 + $0x1490] sm:$0xff]
    %v1077 = vld [vmem:[#allocation4 + $0x1498] sm:$0xff]
    %v1078 = vld [vmem:[#allocation4 + $0x14a0] sm:$0xff]
    %v1079 = vld [vmem:[#allocation4 + $0x14a8] sm:$0xff]
    %v1080 = vld [vmem:[#allocation4 + $0x14b0] sm:$0xff]
    %v1081 = vld [vmem:[#allocation4 + $0x14b8] sm:$0xff]
    %v1082 = vld [vmem:[#allocation4 + $0x14c0] sm:$0xff]
    %v1083 = vld [vmem:[#allocation4 + $0x14c8] sm:$0xff]
    %v1084 = vld [vmem:[#allocation4 + $0x14d0] sm:$0xff]
    %v1085 = vld [vmem:[#allocation4 + $0x14d8] sm:$0xff]
    %v1086 = vld [vmem:[#allocation4 + $0x14e0] sm:$0xff]
    %v1087 = vld [vmem:[#allocation4 + $0x14e8] sm:$0xff]
    %v1088 = vld [vmem:[#allocation4 + $0x14f0] sm:$0xff]
    %v1089 = vld [vmem:[#allocation4 + $0x14f8] sm:$0xff]
    %v1090 = vld [vmem:[#allocation4 + $0x1500] sm:$0xff]
    %v1091 = vld [vmem:[#allocation4 + $0x1508] sm:$0xff]
    %v1092 = vld [vmem:[#allocation4 + $0x1510] sm:$0xff]
    %v1093 = vld [vmem:[#allocation4 + $0x1518] sm:$0xff]
    %v1094 = vld [vmem:[#allocation4 + $0x1520] sm:$0xff]
    %v1095 = vld [vmem:[#allocation4 + $0x1528] sm:$0xff]
    %v1096 = vld [vmem:[#allocation4 + $0x1530] sm:$0xff]
    %v1097 = vld [vmem:[#allocation4 + $0x1538] sm:$0xff]
    %v1098 = vld [vmem:[#allocation4 + $0x1540] sm:$0xff]
    %v1099 = vld [vmem:[#allocation4 + $0x1548] sm:$0xff]
    %v1100 = vld [vmem:[#allocation4 + $0x1550] sm:$0xff]
    %v1101 = vld [vmem:[#allocation4 + $0x1558] sm:$0xff]
    %v1102 = vld [vmem:[#allocation4 + $0x1560] sm:$0xff]
    %v1103 = vld [vmem:[#allocation4 + $0x1568] sm:$0xff]
    %v1104 = vld [vmem:[#allocation4 + $0x1570] sm:$0xff]
    %v1105 = vld [vmem:[#allocation4 + $0x1578] sm:$0xff]
    %v1106 = vld [vmem:[#allocation4 + $0x1580] sm:$0xff]
    %v1107 = vld [vmem:[#allocation4 + $0x1588] sm:$0xff]
    %v1108 = vld [vmem:[#allocation4 + $0x1590] sm:$0xff]
    %v1109 = vld [vmem:[#allocation4 + $0x1598] sm:$0xff]
    %v1110 = vld [vmem:[#allocation4 + $0x15a0] sm:$0xff]
    %v1111 = vld [vmem:[#allocation4 + $0x15a8] sm:$0xff]
    %v1112 = vld [vmem:[#allocation4 + $0x15b0] sm:$0xff]
    %v1113 = vld [vmem:[#allocation4 + $0x15b8] sm:$0xff]
    %v1114 = vld [vmem:[#allocation4 + $0x15c0] sm:$0xff]
    %v1115 = vld [vmem:[#allocation4 + $0x15c8] sm:$0xff]
    %v1116 = vld [vmem:[#allocation4 + $0x15d0] sm:$0xff]
    %v1117 = vld [vmem:[#allocation4 + $0x15d8] sm:$0xff]
    %v1118 = vld [vmem:[#allocation4 + $0x15e0] sm:$0xff]
    %v1119 = vld [vmem:[#allocation4 + $0x15e8] sm:$0xff]
    %v1120 = vld [vmem:[#allocation4 + $0x15f0] sm:$0xff]
    %v1121 = vld [vmem:[#allocation4 + $0x15f8] sm:$0xff]
    %v1122 = vld [vmem:[#allocation4 + $0x1600] sm:$0xff]
    %v1123 = vld [vmem:[#allocation4 + $0x1608] sm:$0xff]
    %v1124 = vld [vmem:[#allocation4 + $0x1610] sm:$0xff]
    %v1125 = vld [vmem:[#allocation4 + $0x1618] sm:$0xff]
    %v1126 = vld [vmem:[#allocation4 + $0x1620] sm:$0xff]
    %v1127 = vld [vmem:[#allocation4 + $0x1628] sm:$0xff]
    %v1128 = vld [vmem:[#allocation4 + $0x1630] sm:$0xff]
    %v1129 = vld [vmem:[#allocation4 + $0x1638] sm:$0xff]
    %v1130 = vld [vmem:[#allocation4 + $0x1640] sm:$0xff]
    %v1131 = vld [vmem:[#allocation4 + $0x1648] sm:$0xff]
    %v1132 = vld [vmem:[#allocation4 + $0x1650] sm:$0xff]
    %v1133 = vld [vmem:[#allocation4 + $0x1658] sm:$0xff]
    %v1134 = vld [vmem:[#allocation4 + $0x1660] sm:$0xff]
    %v1135 = vld [vmem:[#allocation4 + $0x1668] sm:$0xff]
    %v1136 = vld [vmem:[#allocation4 + $0x1670] sm:$0xff]
    %v1137 = vld [vmem:[#allocation4 + $0x1678] sm:$0xff]
    %v1138 = vld [vmem:[#allocation4 + $0x1680] sm:$0xff]
    %v1139 = vld [vmem:[#allocation4 + $0x1688] sm:$0xff]
    %v1140 = vld [vmem:[#allocation4 + $0x1690] sm:$0xff]
    %v1141 = vld [vmem:[#allocation4 + $0x1698] sm:$0xff]
    %v1142 = vld [vmem:[#allocation4 + $0x16a0] sm:$0xff]
    %v1143 = vld [vmem:[#allocation4 + $0x16a8] sm:$0xff]
    %v1144 = vld [vmem:[#allocation4 + $0x16b0] sm:$0xff]
    %v1145 = vld [vmem:[#allocation4 + $0x16b8] sm:$0xff]
    %v1146 = vld [vmem:[#allocation4 + $0x16c0] sm:$0xff]
    %v1147 = vld [vmem:[#allocation4 + $0x16c8] sm:$0xff]
    %v1148 = vld [vmem:[#allocation4 + $0x16d0] sm:$0xff]
    %v1149 = vld [vmem:[#allocation4 + $0x16d8] sm:$0xff]
    %v1150 = vld [vmem:[#allocation4 + $0x16e0] sm:$0xff]
    %v1151 = vld [vmem:[#allocation4 + $0x16e8] sm:$0xff]
    %v1152 = vld [vmem:[#allocation4 + $0x16f0] sm:$0xff]
    %v1153 = vld [vmem:[#allocation4 + $0x16f8] sm:$0xff]
    %v1154 = vld [vmem:[#allocation4 + $0x1700] sm:$0xff]
    %v1155 = vld [vmem:[#allocation4 + $0x1708] sm:$0xff]
    %v1156 = vld [vmem:[#allocation4 + $0x1710] sm:$0xff]
    %v1157 = vld [vmem:[#allocation4 + $0x1718] sm:$0xff]
    %v1158 = vld [vmem:[#allocation4 + $0x1720] sm:$0xff]
    %v1159 = vld [vmem:[#allocation4 + $0x1728] sm:$0xff]
    %v1160 = vld [vmem:[#allocation4 + $0x1730] sm:$0xff]
    %v1161 = vld [vmem:[#allocation4 + $0x1738] sm:$0xff]
    %v1162 = vld [vmem:[#allocation4 + $0x1740] sm:$0xff]
    %v1163 = vld [vmem:[#allocation4 + $0x1748] sm:$0xff]
    %v1164 = vld [vmem:[#allocation4 + $0x1750] sm:$0xff]
    %v1165 = vld [vmem:[#allocation4 + $0x1758] sm:$0xff]
    %v1166 = vld [vmem:[#allocation4 + $0x1760] sm:$0xff]
    %v1167 = vld [vmem:[#allocation4 + $0x1768] sm:$0xff]
    %v1168 = vld [vmem:[#allocation4 + $0x1770] sm:$0xff]
    %v1169 = vld [vmem:[#allocation4 + $0x1778] sm:$0xff]
    %v1170 = vld [vmem:[#allocation4 + $0x1780] sm:$0xff]
    %v1171 = vld [vmem:[#allocation4 + $0x1788] sm:$0xff]
    %v1172 = vld [vmem:[#allocation4 + $0x1790] sm:$0xff]
    %v1173 = vld [vmem:[#allocation4 + $0x1798] sm:$0xff]
    %v1174 = vld [vmem:[#allocation4 + $0x17a0] sm:$0xff]
    %v1175 = vld [vmem:[#allocation4 + $0x17a8] sm:$0xff]
    %v1176 = vld [vmem:[#allocation4 + $0x17b0] sm:$0xff]
    %v1177 = vld [vmem:[#allocation4 + $0x17b8] sm:$0xff]
    %v1178 = vld [vmem:[#allocation4 + $0x17c0] sm:$0xff]
    %v1179 = vld [vmem:[#allocation4 + $0x17c8] sm:$0xff]
    %v1180 = vld [vmem:[#allocation4 + $0x17d0] sm:$0xff]
    %v1181 = vld [vmem:[#allocation4 + $0x17d8] sm:$0xff]
    %v1182 = vld [vmem:[#allocation4 + $0x17e0] sm:$0xff]
    %v1183 = vld [vmem:[#allocation4 + $0x17e8] sm:$0xff]
    %v1184 = vld [vmem:[#allocation4 + $0x17f0] sm:$0xff]
    %v1185 = vld [vmem:[#allocation4 + $0x17f8] sm:$0xff]
    %v1186 = vld [vmem:[#allocation4 + $0x1800] sm:$0xff]
    %v1187 = vld [vmem:[#allocation4 + $0x1808] sm:$0xff]
    %v1188 = vld [vmem:[#allocation4 + $0x1810] sm:$0xff]
    %v1189 = vld [vmem:[#allocation4 + $0x1818] sm:$0xff]
    %v1190 = vld [vmem:[#allocation4 + $0x1820] sm:$0xff]
    %v1191 = vld [vmem:[#allocation4 + $0x1828] sm:$0xff]
    %v1192 = vld [vmem:[#allocation4 + $0x1830] sm:$0xff]
    %v1193 = vld [vmem:[#allocation4 + $0x1838] sm:$0xff]
    %v1194 = vld [vmem:[#allocation4 + $0x1840] sm:$0xff]
    %v1195 = vld [vmem:[#allocation4 + $0x1848] sm:$0xff]
    %v1196 = vld [vmem:[#allocation4 + $0x1850] sm:$0xff]
    %v1197 = vld [vmem:[#allocation4 + $0x1858] sm:$0xff]
    %v1198 = vld [vmem:[#allocation4 + $0x1860] sm:$0xff]
    %v1199 = vld [vmem:[#allocation4 + $0x1868] sm:$0xff]
    %v1200 = vld [vmem:[#allocation4 + $0x1870] sm:$0xff]
    %v1201 = vld [vmem:[#allocation4 + $0x1878] sm:$0xff]
    %v1202 = vld [vmem:[#allocation4 + $0x1880] sm:$0xff]
    %v1203 = vld [vmem:[#allocation4 + $0x1888] sm:$0xff]
    %v1204 = vld [vmem:[#allocation4 + $0x1890] sm:$0xff]
    %v1205 = vld [vmem:[#allocation4 + $0x1898] sm:$0xff]
    %v1206 = vld [vmem:[#allocation4 + $0x18a0] sm:$0xff]
    %v1207 = vld [vmem:[#allocation4 + $0x18a8] sm:$0xff]
    %v1208 = vld [vmem:[#allocation4 + $0x18b0] sm:$0xff]
    %v1209 = vld [vmem:[#allocation4 + $0x18b8] sm:$0xff]
    %v1210 = vld [vmem:[#allocation4 + $0x18c0] sm:$0xff]
    %v1211 = vld [vmem:[#allocation4 + $0x18c8] sm:$0xff]
    %v1212 = vld [vmem:[#allocation4 + $0x18d0] sm:$0xff]
    %v1213 = vld [vmem:[#allocation4 + $0x18d8] sm:$0xff]
    %v1214 = vld [vmem:[#allocation4 + $0x18e0] sm:$0xff]
    %v1215 = vld [vmem:[#allocation4 + $0x18e8] sm:$0xff]
    %v1216 = vld [vmem:[#allocation4 + $0x18f0] sm:$0xff]
    %v1217 = vld [vmem:[#allocation4 + $0x18f8] sm:$0xff]
    %v1218 = vld [vmem:[#allocation4 + $0x1900] sm:$0xff]
    %v1219 = vld [vmem:[#allocation4 + $0x1908] sm:$0xff]
    %v1220 = vld [vmem:[#allocation4 + $0x1910] sm:$0xff]
    %v1221 = vld [vmem:[#allocation4 + $0x1918] sm:$0xff]
    %v1222 = vld [vmem:[#allocation4 + $0x1920] sm:$0xff]
    %v1223 = vld [vmem:[#allocation4 + $0x1928] sm:$0xff]
    %v1224 = vld [vmem:[#allocation4 + $0x1930] sm:$0xff]
    %v1225 = vld [vmem:[#allocation4 + $0x1938] sm:$0xff]
    %v1226 = vld [vmem:[#allocation4 + $0x1940] sm:$0xff]
    %v1227 = vld [vmem:[#allocation4 + $0x1948] sm:$0xff]
    %v1228 = vld [vmem:[#allocation4 + $0x1950] sm:$0xff]
    %v1229 = vld [vmem:[#allocation4 + $0x1958] sm:$0xff]
    %v1230 = vld [vmem:[#allocation4 + $0x1960] sm:$0xff]
    %v1231 = vld [vmem:[#allocation4 + $0x1968] sm:$0xff]
    %v1232 = vld [vmem:[#allocation4 + $0x1970] sm:$0xff]
    %v1233 = vld [vmem:[#allocation4 + $0x1978] sm:$0xff]
    %v1234 = vld [vmem:[#allocation4 + $0x1980] sm:$0xff]
    %v1235 = vld [vmem:[#allocation4 + $0x1988] sm:$0xff]
    %v1236 = vld [vmem:[#allocation4 + $0x1990] sm:$0xff]
    %v1237 = vld [vmem:[#allocation4 + $0x1998] sm:$0xff]
    %v1238 = vld [vmem:[#allocation4 + $0x19a0] sm:$0xff]
    %v1239 = vld [vmem:[#allocation4 + $0x19a8] sm:$0xff]
    %v1240 = vld [vmem:[#allocation4 + $0x19b0] sm:$0xff]
    %v1241 = vld [vmem:[#allocation4 + $0x19b8] sm:$0xff]
    %v1242 = vld [vmem:[#allocation4 + $0x19c0] sm:$0xff]
    %v1243 = vld [vmem:[#allocation4 + $0x19c8] sm:$0xff]
    %v1244 = vld [vmem:[#allocation4 + $0x19d0] sm:$0xff]
    %v1245 = vld [vmem:[#allocation4 + $0x19d8] sm:$0xff]
    %v1246 = vld [vmem:[#allocation4 + $0x19e0] sm:$0xff]
    %v1247 = vld [vmem:[#allocation4 + $0x19e8] sm:$0xff]
    %v1248 = vld [vmem:[#allocation4 + $0x19f0] sm:$0xff]
    %v1249 = vld [vmem:[#allocation4 + $0x19f8] sm:$0xff]
    %v1250 = vld [vmem:[#allocation4 + $0x1a00] sm:$0xff]
    %v1251 = vld [vmem:[#allocation4 + $0x1a08] sm:$0xff]
    %v1252 = vld [vmem:[#allocation4 + $0x1a10] sm:$0xff]
    %v1253 = vld [vmem:[#allocation4 + $0x1a18] sm:$0xff]
    %v1254 = vld [vmem:[#allocation4 + $0x1a20] sm:$0xff]
    %v1255 = vld [vmem:[#allocation4 + $0x1a28] sm:$0xff]
    %v1256 = vld [vmem:[#allocation4 + $0x1a30] sm:$0xff]
    %v1257 = vld [vmem:[#allocation4 + $0x1a38] sm:$0xff]
    %v1258 = vld [vmem:[#allocation4 + $0x1a40] sm:$0xff]
    %v1259 = vld [vmem:[#allocation4 + $0x1a48] sm:$0xff]
    %v1260 = vld [vmem:[#allocation4 + $0x1a50] sm:$0xff]
    %v1261 = vld [vmem:[#allocation4 + $0x1a58] sm:$0xff]
    %v1262 = vld [vmem:[#allocation4 + $0x1a60] sm:$0xff]
    %v1263 = vld [vmem:[#allocation4 + $0x1a68] sm:$0xff]
    %v1264 = vld [vmem:[#allocation4 + $0x1a70] sm:$0xff]
    %v1265 = vld [vmem:[#allocation4 + $0x1a78] sm:$0xff]
    %v1266 = vld [vmem:[#allocation4 + $0x1a80] sm:$0xff]
    %v1267 = vld [vmem:[#allocation4 + $0x1a88] sm:$0xff]
    %v1268 = vld [vmem:[#allocation4 + $0x1a90] sm:$0xff]
    %v1269 = vld [vmem:[#allocation4 + $0x1a98] sm:$0xff]
    %v1270 = vld [vmem:[#allocation4 + $0x1aa0] sm:$0xff]
    %v1271 = vld [vmem:[#allocation4 + $0x1aa8] sm:$0xff]
    %v1272 = vld [vmem:[#allocation4 + $0x1ab0] sm:$0xff]
    %v1273 = vld [vmem:[#allocation4 + $0x1ab8] sm:$0xff]
    %v1274 = vld [vmem:[#allocation4 + $0x1ac0] sm:$0xff]
    %v1275 = vld [vmem:[#allocation4 + $0x1ac8] sm:$0xff]
    %v1276 = vld [vmem:[#allocation4 + $0x1ad0] sm:$0xff]
    %v1277 = vld [vmem:[#allocation4 + $0x1ad8] sm:$0xff]
    %v1278 = vld [vmem:[#allocation4 + $0x1ae0] sm:$0xff]
    %v1279 = vld [vmem:[#allocation4 + $0x1ae8] sm:$0xff]
    %v1280 = vld [vmem:[#allocation4 + $0x1af0] sm:$0xff]
    %v1281 = vld [vmem:[#allocation4 + $0x1af8] sm:$0xff]
    %v1282 = vld [vmem:[#allocation4 + $0x1b00] sm:$0xff]
    %v1283 = vld [vmem:[#allocation4 + $0x1b08] sm:$0xff]
    %v1284 = vld [vmem:[#allocation4 + $0x1b10] sm:$0xff]
    %v1285 = vld [vmem:[#allocation4 + $0x1b18] sm:$0xff]
    %v1286 = vld [vmem:[#allocation4 + $0x1b20] sm:$0xff]
    %v1287 = vld [vmem:[#allocation4 + $0x1b28] sm:$0xff]
    %v1288 = vld [vmem:[#allocation4 + $0x1b30] sm:$0xff]
    %v1289 = vld [vmem:[#allocation4 + $0x1b38] sm:$0xff]
    %v1290 = vld [vmem:[#allocation4 + $0x1b40] sm:$0xff]
    %v1291 = vld [vmem:[#allocation4 + $0x1b48] sm:$0xff]
    %v1292 = vld [vmem:[#allocation4 + $0x1b50] sm:$0xff]
    %v1293 = vld [vmem:[#allocation4 + $0x1b58] sm:$0xff]
    %v1294 = vld [vmem:[#allocation4 + $0x1b60] sm:$0xff]
    %v1295 = vld [vmem:[#allocation4 + $0x1b68] sm:$0xff]
    %v1296 = vld [vmem:[#allocation4 + $0x1b70] sm:$0xff]
    %v1297 = vld [vmem:[#allocation4 + $0x1b78] sm:$0xff]
    %v1298 = vld [vmem:[#allocation4 + $0x1b80] sm:$0xff]
    %v1299 = vld [vmem:[#allocation4 + $0x1b88] sm:$0xff]
    %v1300 = vld [vmem:[#allocation4 + $0x1b90] sm:$0xff]
    %v1301 = vld [vmem:[#allocation4 + $0x1b98] sm:$0xff]
    %v1302 = vld [vmem:[#allocation4 + $0x1ba0] sm:$0xff]
    %v1303 = vld [vmem:[#allocation4 + $0x1ba8] sm:$0xff]
    %v1304 = vld [vmem:[#allocation4 + $0x1bb0] sm:$0xff]
    %v1305 = vld [vmem:[#allocation4 + $0x1bb8] sm:$0xff]
    %v1306 = vld [vmem:[#allocation4 + $0x1bc0] sm:$0xff]
    %v1307 = vld [vmem:[#allocation4 + $0x1bc8] sm:$0xff]
    %v1308 = vld [vmem:[#allocation4 + $0x1bd0] sm:$0xff]
    %v1309 = vld [vmem:[#allocation4 + $0x1bd8] sm:$0xff]
    %v1310 = vld [vmem:[#allocation4 + $0x1be0] sm:$0xff]
    %v1311 = vld [vmem:[#allocation4 + $0x1be8] sm:$0xff]
    %v1312 = vld [vmem:[#allocation4 + $0x1bf0] sm:$0xff]
    %v1313 = vld [vmem:[#allocation4 + $0x1bf8] sm:$0xff]
    %v1314 = vld [vmem:[#allocation4 + $0x1c00] sm:$0xff]
    %v1315 = vld [vmem:[#allocation4 + $0x1c08] sm:$0xff]
    %v1316 = vld [vmem:[#allocation4 + $0x1c10] sm:$0xff]
    %v1317 = vld [vmem:[#allocation4 + $0x1c18] sm:$0xff]
    %v1318 = vld [vmem:[#allocation4 + $0x1c20] sm:$0xff]
    %v1319 = vld [vmem:[#allocation4 + $0x1c28] sm:$0xff]
    %v1320 = vld [vmem:[#allocation4 + $0x1c30] sm:$0xff]
    %v1321 = vld [vmem:[#allocation4 + $0x1c38] sm:$0xff]
    %v1322 = vld [vmem:[#allocation4 + $0x1c40] sm:$0xff]
    %v1323 = vld [vmem:[#allocation4 + $0x1c48] sm:$0xff]
    %v1324 = vld [vmem:[#allocation4 + $0x1c50] sm:$0xff]
    %v1325 = vld [vmem:[#allocation4 + $0x1c58] sm:$0xff]
    %v1326 = vld [vmem:[#allocation4 + $0x1c60] sm:$0xff]
    %v1327 = vld [vmem:[#allocation4 + $0x1c68] sm:$0xff]
    %v1328 = vld [vmem:[#allocation4 + $0x1c70] sm:$0xff]
    %v1329 = vld [vmem:[#allocation4 + $0x1c78] sm:$0xff]
    %v1330 = vld [vmem:[#allocation4 + $0x1c80] sm:$0xff]
    %v1331 = vld [vmem:[#allocation4 + $0x1c88] sm:$0xff]
    %v1332 = vld [vmem:[#allocation4 + $0x1c90] sm:$0xff]
    %v1333 = vld [vmem:[#allocation4 + $0x1c98] sm:$0xff]
    %v1334 = vld [vmem:[#allocation4 + $0x1ca0] sm:$0xff]
    %v1335 = vld [vmem:[#allocation4 + $0x1ca8] sm:$0xff]
    %v1336 = vld [vmem:[#allocation4 + $0x1cb0] sm:$0xff]
    %v1337 = vld [vmem:[#allocation4 + $0x1cb8] sm:$0xff]
    %v1338 = vld [vmem:[#allocation4 + $0x1cc0] sm:$0xff]
    %v1339 = vld [vmem:[#allocation4 + $0x1cc8] sm:$0xff]
    %v1340 = vld [vmem:[#allocation4 + $0x1cd0] sm:$0xff]
    %v1341 = vld [vmem:[#allocation4 + $0x1cd8] sm:$0xff]
    %v1342 = vld [vmem:[#allocation4 + $0x1ce0] sm:$0xff]
    %v1343 = vld [vmem:[#allocation4 + $0x1ce8] sm:$0xff]
    %v1344 = vld [vmem:[#allocation4 + $0x1cf0] sm:$0xff]
    %v1345 = vld [vmem:[#allocation4 + $0x1cf8] sm:$0xff]
    %v1346 = vld [vmem:[#allocation4 + $0x1d00] sm:$0xff]
    %v1347 = vld [vmem:[#allocation4 + $0x1d08] sm:$0xff]
    %v1348 = vld [vmem:[#allocation4 + $0x1d10] sm:$0xff]
    %v1349 = vld [vmem:[#allocation4 + $0x1d18] sm:$0xff]
    %v1350 = vld [vmem:[#allocation4 + $0x1d20] sm:$0xff]
    %v1351 = vld [vmem:[#allocation4 + $0x1d28] sm:$0xff]
    %v1352 = vld [vmem:[#allocation4 + $0x1d30] sm:$0xff]
    %v1353 = vld [vmem:[#allocation4 + $0x1d38] sm:$0xff]
    %v1354 = vld [vmem:[#allocation4 + $0x1d40] sm:$0xff]
    %v1355 = vld [vmem:[#allocation4 + $0x1d48] sm:$0xff]
    %v1356 = vld [vmem:[#allocation4 + $0x1d50] sm:$0xff]
    %v1357 = vld [vmem:[#allocation4 + $0x1d58] sm:$0xff]
    %v1358 = vld [vmem:[#allocation4 + $0x1d60] sm:$0xff]
    %v1359 = vld [vmem:[#allocation4 + $0x1d68] sm:$0xff]
    %v1360 = vld [vmem:[#allocation4 + $0x1d70] sm:$0xff]
    %v1361 = vld [vmem:[#allocation4 + $0x1d78] sm:$0xff]
    %v1362 = vld [vmem:[#allocation4 + $0x1d80] sm:$0xff]
    %v1363 = vld [vmem:[#allocation4 + $0x1d88] sm:$0xff]
    %v1364 = vld [vmem:[#allocation4 + $0x1d90] sm:$0xff]
    %v1365 = vld [vmem:[#allocation4 + $0x1d98] sm:$0xff]
    %v1366 = vld [vmem:[#allocation4 + $0x1da0] sm:$0xff]
    %v1367 = vld [vmem:[#allocation4 + $0x1da8] sm:$0xff]
    %v1368 = vld [vmem:[#allocation4 + $0x1db0] sm:$0xff]
    %v1369 = vld [vmem:[#allocation4 + $0x1db8] sm:$0xff]
    %v1370 = vld [vmem:[#allocation4 + $0x1dc0] sm:$0xff]
    %v1371 = vld [vmem:[#allocation4 + $0x1dc8] sm:$0xff]
    %v1372 = vld [vmem:[#allocation4 + $0x1dd0] sm:$0xff]
    %v1373 = vld [vmem:[#allocation4 + $0x1dd8] sm:$0xff]
    %v1374 = vld [vmem:[#allocation4 + $0x1de0] sm:$0xff]
    %v1375 = vld [vmem:[#allocation4 + $0x1de8] sm:$0xff]
    %v1376 = vld [vmem:[#allocation4 + $0x1df0] sm:$0xff]
    %v1377 = vld [vmem:[#allocation4 + $0x1df8] sm:$0xff]
    %v1378 = vld [vmem:[#allocation4 + $0x1e00] sm:$0xff]
    %v1379 = vld [vmem:[#allocation4 + $0x1e08] sm:$0xff]
    %v1380 = vld [vmem:[#allocation4 + $0x1e10] sm:$0xff]
    %v1381 = vld [vmem:[#allocation4 + $0x1e18] sm:$0xff]
    %v1382 = vld [vmem:[#allocation4 + $0x1e20] sm:$0xff]
    %v1383 = vld [vmem:[#allocation4 + $0x1e28] sm:$0xff]
    %v1384 = vld [vmem:[#allocation4 + $0x1e30] sm:$0xff]
    %v1385 = vld [vmem:[#allocation4 + $0x1e38] sm:$0xff]
    %v1386 = vld [vmem:[#allocation4 + $0x1e40] sm:$0xff]
    %v1387 = vld [vmem:[#allocation4 + $0x1e48] sm:$0xff]
    %v1388 = vld [vmem:[#allocation4 + $0x1e50] sm:$0xff]
    %v1389 = vld [vmem:[#allocation4 + $0x1e58] sm:$0xff]
    %v1390 = vld [vmem:[#allocation4 + $0x1e60] sm:$0xff]
    %v1391 = vld [vmem:[#allocation4 + $0x1e68] sm:$0xff]
    %v1392 = vld [vmem:[#allocation4 + $0x1e70] sm:$0xff]
    %v1393 = vld [vmem:[#allocation4 + $0x1e78] sm:$0xff]
    %v1394 = vld [vmem:[#allocation4 + $0x1e80] sm:$0xff]
    %v1395 = vld [vmem:[#allocation4 + $0x1e88] sm:$0xff]
    %v1396 = vld [vmem:[#allocation4 + $0x1e90] sm:$0xff]
    %v1397 = vld [vmem:[#allocation4 + $0x1e98] sm:$0xff]
    %v1398 = vld [vmem:[#allocation4 + $0x1ea0] sm:$0xff]
    %v1399 = vld [vmem:[#allocation4 + $0x1ea8] sm:$0xff]
    %v1400 = vld [vmem:[#allocation4 + $0x1eb0] sm:$0xff]
    %v1401 = vld [vmem:[#allocation4 + $0x1eb8] sm:$0xff]
    %v1402 = vld [vmem:[#allocation4 + $0x1ec0] sm:$0xff]
    %v1403 = vld [vmem:[#allocation4 + $0x1ec8] sm:$0xff]
    %v1404 = vld [vmem:[#allocation4 + $0x1ed0] sm:$0xff]
    %v1405 = vld [vmem:[#allocation4 + $0x1ed8] sm:$0xff]
    %v1406 = vld [vmem:[#allocation4 + $0x1ee0] sm:$0xff]
    %v1407 = vld [vmem:[#allocation4 + $0x1ee8] sm:$0xff]
    %v1408 = vld [vmem:[#allocation4 + $0x1ef0] sm:$0xff]
    %v1409 = vld [vmem:[#allocation4 + $0x1ef8] sm:$0xff]
    %v1410 = vld [vmem:[#allocation4 + $0x1f00] sm:$0xff]
    %v1411 = vld [vmem:[#allocation4 + $0x1f08] sm:$0xff]
    %v1412 = vld [vmem:[#allocation4 + $0x1f10] sm:$0xff]
    %v1413 = vld [vmem:[#allocation4 + $0x1f18] sm:$0xff]
    %v1414 = vld [vmem:[#allocation4 + $0x1f20] sm:$0xff]
    %v1415 = vld [vmem:[#allocation4 + $0x1f28] sm:$0xff]
    %v1416 = vld [vmem:[#allocation4 + $0x1f30] sm:$0xff]
    %v1417 = vld [vmem:[#allocation4 + $0x1f38] sm:$0xff]
    %v1418 = vld [vmem:[#allocation4 + $0x1f40] sm:$0xff]
    %v1419 = vld [vmem:[#allocation4 + $0x1f48] sm:$0xff]
    %v1420 = vld [vmem:[#allocation4 + $0x1f50] sm:$0xff]
    %v1421 = vld [vmem:[#allocation4 + $0x1f58] sm:$0xff]
    %v1422 = vld [vmem:[#allocation4 + $0x1f60] sm:$0xff]
    %v1423 = vld [vmem:[#allocation4 + $0x1f68] sm:$0xff]
    %v1424 = vld [vmem:[#allocation4 + $0x1f70] sm:$0xff]
    %v1425 = vld [vmem:[#allocation4 + $0x1f78] sm:$0xff]
    %v1426 = vld [vmem:[#allocation4 + $0x1f80] sm:$0xff]
    %v1427 = vld [vmem:[#allocation4 + $0x1f88] sm:$0xff]
    %v1428 = vld [vmem:[#allocation4 + $0x1f90] sm:$0xff]
    %v1429 = vld [vmem:[#allocation4 + $0x1f98] sm:$0xff]
    %v1430 = vld [vmem:[#allocation4 + $0x1fa0] sm:$0xff]
    %v1431 = vld [vmem:[#allocation4 + $0x1fa8] sm:$0xff]
    %v1432 = vld [vmem:[#allocation4 + $0x1fb0] sm:$0xff]
    %v1433 = vld [vmem:[#allocation4 + $0x1fb8] sm:$0xff]
    %v1434 = vld [vmem:[#allocation4 + $0x1fc0] sm:$0xff]
    %v1435 = vld [vmem:[#allocation4 + $0x1fc8] sm:$0xff]
    %v1436 = vld [vmem:[#allocation4 + $0x1fd0] sm:$0xff]
    %v1437 = vld [vmem:[#allocation4 + $0x1fd8] sm:$0xff]
    %v1438 = vld [vmem:[#allocation4 + $0x1fe0] sm:$0xff]
    %v1439 = vld [vmem:[#allocation4 + $0x1fe8] sm:$0xff]
    %v1440 = vld [vmem:[#allocation4 + $0x1ff0] sm:$0xff]
    %v1441 = vld [vmem:[#allocation4 + $0x1ff8] sm:$0xff]
    %v2466 = vunpack.c.l.b16 %v418
    %v2467 = vunpack.c.h.b16 %v418
    %v2468 = vunpack.c.l.b16 %v419
    %v2469 = vunpack.c.h.b16 %v419
    %v2470 = vunpack.c.l.b16 %v420
    %v2471 = vunpack.c.h.b16 %v420
    %v2472 = vunpack.c.l.b16 %v421
    %v2473 = vunpack.c.h.b16 %v421
    %v2474 = vunpack.c.l.b16 %v422
    %v2475 = vunpack.c.h.b16 %v422
    %v2476 = vunpack.c.l.b16 %v423
    %v2477 = vunpack.c.h.b16 %v423
    %v2478 = vunpack.c.l.b16 %v424
    %v2479 = vunpack.c.h.b16 %v424
    %v2480 = vunpack.c.l.b16 %v425
    %v2481 = vunpack.c.h.b16 %v425
    %v2482 = vunpack.c.l.b16 %v426
    %v2483 = vunpack.c.h.b16 %v426
    %v2484 = vunpack.c.l.b16 %v427
    %v2485 = vunpack.c.h.b16 %v427
    %v2486 = vunpack.c.l.b16 %v428
    %v2487 = vunpack.c.h.b16 %v428
    %v2488 = vunpack.c.l.b16 %v429
    %v2489 = vunpack.c.h.b16 %v429
    %v2490 = vunpack.c.l.b16 %v430
    %v2491 = vunpack.c.h.b16 %v430
    %v2492 = vunpack.c.l.b16 %v431
    %v2493 = vunpack.c.h.b16 %v431
    %v2494 = vunpack.c.l.b16 %v432
    %v2495 = vunpack.c.h.b16 %v432
    %v2496 = vunpack.c.l.b16 %v433
    %v2497 = vunpack.c.h.b16 %v433
    %v2498 = vunpack.c.l.b16 %v434
    %v2499 = vunpack.c.h.b16 %v434
    %v2500 = vunpack.c.l.b16 %v435
    %v2501 = vunpack.c.h.b16 %v435
    %v2502 = vunpack.c.l.b16 %v436
    %v2503 = vunpack.c.h.b16 %v436
    %v2504 = vunpack.c.l.b16 %v437
    %v2505 = vunpack.c.h.b16 %v437
    %v2506 = vunpack.c.l.b16 %v438
    %v2507 = vunpack.c.h.b16 %v438
    %v2508 = vunpack.c.l.b16 %v439
    %v2509 = vunpack.c.h.b16 %v439
    %v2510 = vunpack.c.l.b16 %v440
    %v2511 = vunpack.c.h.b16 %v440
    %v2512 = vunpack.c.l.b16 %v441
    %v2513 = vunpack.c.h.b16 %v441
    %v2514 = vunpack.c.l.b16 %v442
    %v2515 = vunpack.c.h.b16 %v442
    %v2516 = vunpack.c.l.b16 %v443
    %v2517 = vunpack.c.h.b16 %v443
    %v2518 = vunpack.c.l.b16 %v444
    %v2519 = vunpack.c.h.b16 %v444
    %v2520 = vunpack.c.l.b16 %v445
    %v2521 = vunpack.c.h.b16 %v445
    %v2522 = vunpack.c.l.b16 %v446
    %v2523 = vunpack.c.h.b16 %v446
    %v2524 = vunpack.c.l.b16 %v447
    %v2525 = vunpack.c.h.b16 %v447
    %v2526 = vunpack.c.l.b16 %v448
    %v2527 = vunpack.c.h.b16 %v448
    %v2528 = vunpack.c.l.b16 %v449
    %v2529 = vunpack.c.h.b16 %v449
    %v2530 = vunpack.c.l.b16 %v450
    %v2531 = vunpack.c.h.b16 %v450
    %v2532 = vunpack.c.l.b16 %v451
    %v2533 = vunpack.c.h.b16 %v451
    %v2534 = vunpack.c.l.b16 %v452
    %v2535 = vunpack.c.h.b16 %v452
    %v2536 = vunpack.c.l.b16 %v453
    %v2537 = vunpack.c.h.b16 %v453
    %v2538 = vunpack.c.l.b16 %v454
    %v2539 = vunpack.c.h.b16 %v454
    %v2540 = vunpack.c.l.b16 %v455
    %v2541 = vunpack.c.h.b16 %v455
    %v2542 = vunpack.c.l.b16 %v456
    %v2543 = vunpack.c.h.b16 %v456
    %v2544 = vunpack.c.l.b16 %v457
    %v2545 = vunpack.c.h.b16 %v457
    %v2546 = vunpack.c.l.b16 %v458
    %v2547 = vunpack.c.h.b16 %v458
    %v2548 = vunpack.c.l.b16 %v459
    %v2549 = vunpack.c.h.b16 %v459
    %v2550 = vunpack.c.l.b16 %v460
    %v2551 = vunpack.c.h.b16 %v460
    %v2552 = vunpack.c.l.b16 %v461
    %v2553 = vunpack.c.h.b16 %v461
    %v2554 = vunpack.c.l.b16 %v462
    %v2555 = vunpack.c.h.b16 %v462
    %v2556 = vunpack.c.l.b16 %v463
    %v2557 = vunpack.c.h.b16 %v463
    %v2558 = vunpack.c.l.b16 %v464
    %v2559 = vunpack.c.h.b16 %v464
    %v2560 = vunpack.c.l.b16 %v465
    %v2561 = vunpack.c.h.b16 %v465
    %v2562 = vunpack.c.l.b16 %v466
    %v2563 = vunpack.c.h.b16 %v466
    %v2564 = vunpack.c.l.b16 %v467
    %v2565 = vunpack.c.h.b16 %v467
    %v2566 = vunpack.c.l.b16 %v468
    %v2567 = vunpack.c.h.b16 %v468
    %v2568 = vunpack.c.l.b16 %v469
    %v2569 = vunpack.c.h.b16 %v469
    %v2570 = vunpack.c.l.b16 %v470
    %v2571 = vunpack.c.h.b16 %v470
    %v2572 = vunpack.c.l.b16 %v471
    %v2573 = vunpack.c.h.b16 %v471
    %v2574 = vunpack.c.l.b16 %v472
    %v2575 = vunpack.c.h.b16 %v472
    %v2576 = vunpack.c.l.b16 %v473
    %v2577 = vunpack.c.h.b16 %v473
    %v2578 = vunpack.c.l.b16 %v474
    %v2579 = vunpack.c.h.b16 %v474
    %v2580 = vunpack.c.l.b16 %v475
    %v2581 = vunpack.c.h.b16 %v475
    %v2582 = vunpack.c.l.b16 %v476
    %v2583 = vunpack.c.h.b16 %v476
    %v2584 = vunpack.c.l.b16 %v477
    %v2585 = vunpack.c.h.b16 %v477
    %v2586 = vunpack.c.l.b16 %v478
    %v2587 = vunpack.c.h.b16 %v478
    %v2588 = vunpack.c.l.b16 %v479
    %v2589 = vunpack.c.h.b16 %v479
    %v2590 = vunpack.c.l.b16 %v480
    %v2591 = vunpack.c.h.b16 %v480
    %v2592 = vunpack.c.l.b16 %v481
    %v2593 = vunpack.c.h.b16 %v481
    %v2594 = vunpack.c.l.b16 %v482
    %v2595 = vunpack.c.h.b16 %v482
    %v2596 = vunpack.c.l.b16 %v483
    %v2597 = vunpack.c.h.b16 %v483
    %v2598 = vunpack.c.l.b16 %v484
    %v2599 = vunpack.c.h.b16 %v484
    %v2600 = vunpack.c.l.b16 %v485
    %v2601 = vunpack.c.h.b16 %v485
    %v2602 = vunpack.c.l.b16 %v486
    %v2603 = vunpack.c.h.b16 %v486
    %v2604 = vunpack.c.l.b16 %v487
    %v2605 = vunpack.c.h.b16 %v487
    %v2606 = vunpack.c.l.b16 %v488
    %v2607 = vunpack.c.h.b16 %v488
    %v2608 = vunpack.c.l.b16 %v489
    %v2609 = vunpack.c.h.b16 %v489
    %v2610 = vunpack.c.l.b16 %v490
    %v2611 = vunpack.c.h.b16 %v490
    %v2612 = vunpack.c.l.b16 %v491
    %v2613 = vunpack.c.h.b16 %v491
    %v2614 = vunpack.c.l.b16 %v492
    %v2615 = vunpack.c.h.b16 %v492
    %v2616 = vunpack.c.l.b16 %v493
    %v2617 = vunpack.c.h.b16 %v493
    %v2618 = vunpack.c.l.b16 %v494
    %v2619 = vunpack.c.h.b16 %v494
    %v2620 = vunpack.c.l.b16 %v495
    %v2621 = vunpack.c.h.b16 %v495
    %v2622 = vunpack.c.l.b16 %v496
    %v2623 = vunpack.c.h.b16 %v496
    %v2624 = vunpack.c.l.b16 %v497
    %v2625 = vunpack.c.h.b16 %v497
    %v2626 = vunpack.c.l.b16 %v498
    %v2627 = vunpack.c.h.b16 %v498
    %v2628 = vunpack.c.l.b16 %v499
    %v2629 = vunpack.c.h.b16 %v499
    %v2630 = vunpack.c.l.b16 %v500
    %v2631 = vunpack.c.h.b16 %v500
    %v2632 = vunpack.c.l.b16 %v501
    %v2633 = vunpack.c.h.b16 %v501
    %v2634 = vunpack.c.l.b16 %v502
    %v2635 = vunpack.c.h.b16 %v502
    %v2636 = vunpack.c.l.b16 %v503
    %v2637 = vunpack.c.h.b16 %v503
    %v2638 = vunpack.c.l.b16 %v504
    %v2639 = vunpack.c.h.b16 %v504
    %v2640 = vunpack.c.l.b16 %v505
    %v2641 = vunpack.c.h.b16 %v505
    %v2642 = vunpack.c.l.b16 %v506
    %v2643 = vunpack.c.h.b16 %v506
    %v2644 = vunpack.c.l.b16 %v507
    %v2645 = vunpack.c.h.b16 %v507
    %v2646 = vunpack.c.l.b16 %v508
    %v2647 = vunpack.c.h.b16 %v508
    %v2648 = vunpack.c.l.b16 %v509
    %v2649 = vunpack.c.h.b16 %v509
    %v2650 = vunpack.c.l.b16 %v510
    %v2651 = vunpack.c.h.b16 %v510
    %v2652 = vunpack.c.l.b16 %v511
    %v2653 = vunpack.c.h.b16 %v511
    %v2654 = vunpack.c.l.b16 %v512
    %v2655 = vunpack.c.h.b16 %v512
    %v2656 = vunpack.c.l.b16 %v513
    %v2657 = vunpack.c.h.b16 %v513
    %v2658 = vunpack.c.l.b16 %v514
    %v2659 = vunpack.c.h.b16 %v514
    %v2660 = vunpack.c.l.b16 %v515
    %v2661 = vunpack.c.h.b16 %v515
    %v2662 = vunpack.c.l.b16 %v516
    %v2663 = vunpack.c.h.b16 %v516
    %v2664 = vunpack.c.l.b16 %v517
    %v2665 = vunpack.c.h.b16 %v517
    %v2666 = vunpack.c.l.b16 %v518
    %v2667 = vunpack.c.h.b16 %v518
    %v2668 = vunpack.c.l.b16 %v519
    %v2669 = vunpack.c.h.b16 %v519
    %v2670 = vunpack.c.l.b16 %v520
    %v2671 = vunpack.c.h.b16 %v520
    %v2672 = vunpack.c.l.b16 %v521
    %v2673 = vunpack.c.h.b16 %v521
    %v2674 = vunpack.c.l.b16 %v522
    %v2675 = vunpack.c.h.b16 %v522
    %v2676 = vunpack.c.l.b16 %v523
    %v2677 = vunpack.c.h.b16 %v523
    %v2678 = vunpack.c.l.b16 %v524
    %v2679 = vunpack.c.h.b16 %v524
    %v2680 = vunpack.c.l.b16 %v525
    %v2681 = vunpack.c.h.b16 %v525
    %v2682 = vunpack.c.l.b16 %v526
    %v2683 = vunpack.c.h.b16 %v526
    %v2684 = vunpack.c.l.b16 %v527
    %v2685 = vunpack.c.h.b16 %v527
    %v2686 = vunpack.c.l.b16 %v528
    %v2687 = vunpack.c.h.b16 %v528
    %v2688 = vunpack.c.l.b16 %v529
    %v2689 = vunpack.c.h.b16 %v529
    %v2690 = vunpack.c.l.b16 %v530
    %v2691 = vunpack.c.h.b16 %v530
    %v2692 = vunpack.c.l.b16 %v531
    %v2693 = vunpack.c.h.b16 %v531
    %v2694 = vunpack.c.l.b16 %v532
    %v2695 = vunpack.c.h.b16 %v532
    %v2696 = vunpack.c.l.b16 %v533
    %v2697 = vunpack.c.h.b16 %v533
    %v2698 = vunpack.c.l.b16 %v534
    %v2699 = vunpack.c.h.b16 %v534
    %v2700 = vunpack.c.l.b16 %v535
    %v2701 = vunpack.c.h.b16 %v535
    %v2702 = vunpack.c.l.b16 %v536
    %v2703 = vunpack.c.h.b16 %v536
    %v2704 = vunpack.c.l.b16 %v537
    %v2705 = vunpack.c.h.b16 %v537
    %v2706 = vunpack.c.l.b16 %v538
    %v2707 = vunpack.c.h.b16 %v538
    %v2708 = vunpack.c.l.b16 %v539
    %v2709 = vunpack.c.h.b16 %v539
    %v2710 = vunpack.c.l.b16 %v540
    %v2711 = vunpack.c.h.b16 %v540
    %v2712 = vunpack.c.l.b16 %v541
    %v2713 = vunpack.c.h.b16 %v541
    %v2714 = vunpack.c.l.b16 %v542
    %v2715 = vunpack.c.h.b16 %v542
    %v2716 = vunpack.c.l.b16 %v543
    %v2717 = vunpack.c.h.b16 %v543
    %v2718 = vunpack.c.l.b16 %v544
    %v2719 = vunpack.c.h.b16 %v544
    %v2720 = vunpack.c.l.b16 %v545
    %v2721 = vunpack.c.h.b16 %v545
    %v2722 = vunpack.c.l.b16 %v546
    %v2723 = vunpack.c.h.b16 %v546
    %v2724 = vunpack.c.l.b16 %v547
    %v2725 = vunpack.c.h.b16 %v547
    %v2726 = vunpack.c.l.b16 %v548
    %v2727 = vunpack.c.h.b16 %v548
    %v2728 = vunpack.c.l.b16 %v549
    %v2729 = vunpack.c.h.b16 %v549
    %v2730 = vunpack.c.l.b16 %v550
    %v2731 = vunpack.c.h.b16 %v550
    %v2732 = vunpack.c.l.b16 %v551
    %v2733 = vunpack.c.h.b16 %v551
    %v2734 = vunpack.c.l.b16 %v552
    %v2735 = vunpack.c.h.b16 %v552
    %v2736 = vunpack.c.l.b16 %v553
    %v2737 = vunpack.c.h.b16 %v553
    %v2738 = vunpack.c.l.b16 %v554
    %v2739 = vunpack.c.h.b16 %v554
    %v2740 = vunpack.c.l.b16 %v555
    %v2741 = vunpack.c.h.b16 %v555
    %v2742 = vunpack.c.l.b16 %v556
    %v2743 = vunpack.c.h.b16 %v556
    %v2744 = vunpack.c.l.b16 %v557
    %v2745 = vunpack.c.h.b16 %v557
    %v2746 = vunpack.c.l.b16 %v558
    %v2747 = vunpack.c.h.b16 %v558
    %v2748 = vunpack.c.l.b16 %v559
    %v2749 = vunpack.c.h.b16 %v559
    %v2750 = vunpack.c.l.b16 %v560
    %v2751 = vunpack.c.h.b16 %v560
    %v2752 = vunpack.c.l.b16 %v561
    %v2753 = vunpack.c.h.b16 %v561
    %v2754 = vunpack.c.l.b16 %v562
    %v2755 = vunpack.c.h.b16 %v562
    %v2756 = vunpack.c.l.b16 %v563
    %v2757 = vunpack.c.h.b16 %v563
    %v2758 = vunpack.c.l.b16 %v564
    %v2759 = vunpack.c.h.b16 %v564
    %v2760 = vunpack.c.l.b16 %v565
    %v2761 = vunpack.c.h.b16 %v565
    %v2762 = vunpack.c.l.b16 %v566
    %v2763 = vunpack.c.h.b16 %v566
    %v2764 = vunpack.c.l.b16 %v567
    %v2765 = vunpack.c.h.b16 %v567
    %v2766 = vunpack.c.l.b16 %v568
    %v2767 = vunpack.c.h.b16 %v568
    %v2768 = vunpack.c.l.b16 %v569
    %v2769 = vunpack.c.h.b16 %v569
    %v2770 = vunpack.c.l.b16 %v570
    %v2771 = vunpack.c.h.b16 %v570
    %v2772 = vunpack.c.l.b16 %v571
    %v2773 = vunpack.c.h.b16 %v571
    %v2774 = vunpack.c.l.b16 %v572
    %v2775 = vunpack.c.h.b16 %v572
    %v2776 = vunpack.c.l.b16 %v573
    %v2777 = vunpack.c.h.b16 %v573
    %v2778 = vunpack.c.l.b16 %v574
    %v2779 = vunpack.c.h.b16 %v574
    %v2780 = vunpack.c.l.b16 %v575
    %v2781 = vunpack.c.h.b16 %v575
    %v2782 = vunpack.c.l.b16 %v576
    %v2783 = vunpack.c.h.b16 %v576
    %v2784 = vunpack.c.l.b16 %v577
    %v2785 = vunpack.c.h.b16 %v577
    %v2786 = vunpack.c.l.b16 %v578
    %v2787 = vunpack.c.h.b16 %v578
    %v2788 = vunpack.c.l.b16 %v579
    %v2789 = vunpack.c.h.b16 %v579
    %v2790 = vunpack.c.l.b16 %v580
    %v2791 = vunpack.c.h.b16 %v580
    %v2792 = vunpack.c.l.b16 %v581
    %v2793 = vunpack.c.h.b16 %v581
    %v2794 = vunpack.c.l.b16 %v582
    %v2795 = vunpack.c.h.b16 %v582
    %v2796 = vunpack.c.l.b16 %v583
    %v2797 = vunpack.c.h.b16 %v583
    %v2798 = vunpack.c.l.b16 %v584
    %v2799 = vunpack.c.h.b16 %v584
    %v2800 = vunpack.c.l.b16 %v585
    %v2801 = vunpack.c.h.b16 %v585
    %v2802 = vunpack.c.l.b16 %v586
    %v2803 = vunpack.c.h.b16 %v586
    %v2804 = vunpack.c.l.b16 %v587
    %v2805 = vunpack.c.h.b16 %v587
    %v2806 = vunpack.c.l.b16 %v588
    %v2807 = vunpack.c.h.b16 %v588
    %v2808 = vunpack.c.l.b16 %v589
    %v2809 = vunpack.c.h.b16 %v589
    %v2810 = vunpack.c.l.b16 %v590
    %v2811 = vunpack.c.h.b16 %v590
    %v2812 = vunpack.c.l.b16 %v591
    %v2813 = vunpack.c.h.b16 %v591
    %v2814 = vunpack.c.l.b16 %v592
    %v2815 = vunpack.c.h.b16 %v592
    %v2816 = vunpack.c.l.b16 %v593
    %v2817 = vunpack.c.h.b16 %v593
    %v2818 = vunpack.c.l.b16 %v594
    %v2819 = vunpack.c.h.b16 %v594
    %v2820 = vunpack.c.l.b16 %v595
    %v2821 = vunpack.c.h.b16 %v595
    %v2822 = vunpack.c.l.b16 %v596
    %v2823 = vunpack.c.h.b16 %v596
    %v2824 = vunpack.c.l.b16 %v597
    %v2825 = vunpack.c.h.b16 %v597
    %v2826 = vunpack.c.l.b16 %v598
    %v2827 = vunpack.c.h.b16 %v598
    %v2828 = vunpack.c.l.b16 %v599
    %v2829 = vunpack.c.h.b16 %v599
    %v2830 = vunpack.c.l.b16 %v600
    %v2831 = vunpack.c.h.b16 %v600
    %v2832 = vunpack.c.l.b16 %v601
    %v2833 = vunpack.c.h.b16 %v601
    %v2834 = vunpack.c.l.b16 %v602
    %v2835 = vunpack.c.h.b16 %v602
    %v2836 = vunpack.c.l.b16 %v603
    %v2837 = vunpack.c.h.b16 %v603
    %v2838 = vunpack.c.l.b16 %v604
    %v2839 = vunpack.c.h.b16 %v604
    %v2840 = vunpack.c.l.b16 %v605
    %v2841 = vunpack.c.h.b16 %v605
    %v2842 = vunpack.c.l.b16 %v606
    %v2843 = vunpack.c.h.b16 %v606
    %v2844 = vunpack.c.l.b16 %v607
    %v2845 = vunpack.c.h.b16 %v607
    %v2846 = vunpack.c.l.b16 %v608
    %v2847 = vunpack.c.h.b16 %v608
    %v2848 = vunpack.c.l.b16 %v609
    %v2849 = vunpack.c.h.b16 %v609
    %v2850 = vunpack.c.l.b16 %v610
    %v2851 = vunpack.c.h.b16 %v610
    %v2852 = vunpack.c.l.b16 %v611
    %v2853 = vunpack.c.h.b16 %v611
    %v2854 = vunpack.c.l.b16 %v612
    %v2855 = vunpack.c.h.b16 %v612
    %v2856 = vunpack.c.l.b16 %v613
    %v2857 = vunpack.c.h.b16 %v613
    %v2858 = vunpack.c.l.b16 %v614
    %v2859 = vunpack.c.h.b16 %v614
    %v2860 = vunpack.c.l.b16 %v615
    %v2861 = vunpack.c.h.b16 %v615
    %v2862 = vunpack.c.l.b16 %v616
    %v2863 = vunpack.c.h.b16 %v616
    %v2864 = vunpack.c.l.b16 %v617
    %v2865 = vunpack.c.h.b16 %v617
    %v2866 = vunpack.c.l.b16 %v618
    %v2867 = vunpack.c.h.b16 %v618
    %v2868 = vunpack.c.l.b16 %v619
    %v2869 = vunpack.c.h.b16 %v619
    %v2870 = vunpack.c.l.b16 %v620
    %v2871 = vunpack.c.h.b16 %v620
    %v2872 = vunpack.c.l.b16 %v621
    %v2873 = vunpack.c.h.b16 %v621
    %v2874 = vunpack.c.l.b16 %v622
    %v2875 = vunpack.c.h.b16 %v622
    %v2876 = vunpack.c.l.b16 %v623
    %v2877 = vunpack.c.h.b16 %v623
    %v2878 = vunpack.c.l.b16 %v624
    %v2879 = vunpack.c.h.b16 %v624
    %v2880 = vunpack.c.l.b16 %v625
    %v2881 = vunpack.c.h.b16 %v625
    %v2882 = vunpack.c.l.b16 %v626
    %v2883 = vunpack.c.h.b16 %v626
    %v2884 = vunpack.c.l.b16 %v627
    %v2885 = vunpack.c.h.b16 %v627
    %v2886 = vunpack.c.l.b16 %v628
    %v2887 = vunpack.c.h.b16 %v628
    %v2888 = vunpack.c.l.b16 %v629
    %v2889 = vunpack.c.h.b16 %v629
    %v2890 = vunpack.c.l.b16 %v630
    %v2891 = vunpack.c.h.b16 %v630
    %v2892 = vunpack.c.l.b16 %v631
    %v2893 = vunpack.c.h.b16 %v631
    %v2894 = vunpack.c.l.b16 %v632
    %v2895 = vunpack.c.h.b16 %v632
    %v2896 = vunpack.c.l.b16 %v633
    %v2897 = vunpack.c.h.b16 %v633
    %v2898 = vunpack.c.l.b16 %v634
    %v2899 = vunpack.c.h.b16 %v634
    %v2900 = vunpack.c.l.b16 %v635
    %v2901 = vunpack.c.h.b16 %v635
    %v2902 = vunpack.c.l.b16 %v636
    %v2903 = vunpack.c.h.b16 %v636
    %v2904 = vunpack.c.l.b16 %v637
    %v2905 = vunpack.c.h.b16 %v637
    %v2906 = vunpack.c.l.b16 %v638
    %v2907 = vunpack.c.h.b16 %v638
    %v2908 = vunpack.c.l.b16 %v639
    %v2909 = vunpack.c.h.b16 %v639
    %v2910 = vunpack.c.l.b16 %v640
    %v2911 = vunpack.c.h.b16 %v640
    %v2912 = vunpack.c.l.b16 %v641
    %v2913 = vunpack.c.h.b16 %v641
    %v2914 = vunpack.c.l.b16 %v642
    %v2915 = vunpack.c.h.b16 %v642
    %v2916 = vunpack.c.l.b16 %v643
    %v2917 = vunpack.c.h.b16 %v643
    %v2918 = vunpack.c.l.b16 %v644
    %v2919 = vunpack.c.h.b16 %v644
    %v2920 = vunpack.c.l.b16 %v645
    %v2921 = vunpack.c.h.b16 %v645
    %v2922 = vunpack.c.l.b16 %v646
    %v2923 = vunpack.c.h.b16 %v646
    %v2924 = vunpack.c.l.b16 %v647
    %v2925 = vunpack.c.h.b16 %v647
    %v2926 = vunpack.c.l.b16 %v648
    %v2927 = vunpack.c.h.b16 %v648
    %v2928 = vunpack.c.l.b16 %v649
    %v2929 = vunpack.c.h.b16 %v649
    %v2930 = vunpack.c.l.b16 %v650
    %v2931 = vunpack.c.h.b16 %v650
    %v2932 = vunpack.c.l.b16 %v651
    %v2933 = vunpack.c.h.b16 %v651
    %v2934 = vunpack.c.l.b16 %v652
    %v2935 = vunpack.c.h.b16 %v652
    %v2936 = vunpack.c.l.b16 %v653
    %v2937 = vunpack.c.h.b16 %v653
    %v2938 = vunpack.c.l.b16 %v654
    %v2939 = vunpack.c.h.b16 %v654
    %v2940 = vunpack.c.l.b16 %v655
    %v2941 = vunpack.c.h.b16 %v655
    %v2942 = vunpack.c.l.b16 %v656
    %v2943 = vunpack.c.h.b16 %v656
    %v2944 = vunpack.c.l.b16 %v657
    %v2945 = vunpack.c.h.b16 %v657
    %v2946 = vunpack.c.l.b16 %v658
    %v2947 = vunpack.c.h.b16 %v658
    %v2948 = vunpack.c.l.b16 %v659
    %v2949 = vunpack.c.h.b16 %v659
    %v2950 = vunpack.c.l.b16 %v660
    %v2951 = vunpack.c.h.b16 %v660
    %v2952 = vunpack.c.l.b16 %v661
    %v2953 = vunpack.c.h.b16 %v661
    %v2954 = vunpack.c.l.b16 %v662
    %v2955 = vunpack.c.h.b16 %v662
    %v2956 = vunpack.c.l.b16 %v663
    %v2957 = vunpack.c.h.b16 %v663
    %v2958 = vunpack.c.l.b16 %v664
    %v2959 = vunpack.c.h.b16 %v664
    %v2960 = vunpack.c.l.b16 %v665
    %v2961 = vunpack.c.h.b16 %v665
    %v2962 = vunpack.c.l.b16 %v666
    %v2963 = vunpack.c.h.b16 %v666
    %v2964 = vunpack.c.l.b16 %v667
    %v2965 = vunpack.c.h.b16 %v667
    %v2966 = vunpack.c.l.b16 %v668
    %v2967 = vunpack.c.h.b16 %v668
    %v2968 = vunpack.c.l.b16 %v669
    %v2969 = vunpack.c.h.b16 %v669
    %v2970 = vunpack.c.l.b16 %v670
    %v2971 = vunpack.c.h.b16 %v670
    %v2972 = vunpack.c.l.b16 %v671
    %v2973 = vunpack.c.h.b16 %v671
    %v2974 = vunpack.c.l.b16 %v672
    %v2975 = vunpack.c.h.b16 %v672
    %v2976 = vunpack.c.l.b16 %v673
    %v2977 = vunpack.c.h.b16 %v673
    %v2978 = vunpack.c.l.b16 %v674
    %v2979 = vunpack.c.h.b16 %v674
    %v2980 = vunpack.c.l.b16 %v675
    %v2981 = vunpack.c.h.b16 %v675
    %v2982 = vunpack.c.l.b16 %v676
    %v2983 = vunpack.c.h.b16 %v676
    %v2984 = vunpack.c.l.b16 %v677
    %v2985 = vunpack.c.h.b16 %v677
    %v2986 = vunpack.c.l.b16 %v678
    %v2987 = vunpack.c.h.b16 %v678
    %v2988 = vunpack.c.l.b16 %v679
    %v2989 = vunpack.c.h.b16 %v679
    %v2990 = vunpack.c.l.b16 %v680
    %v2991 = vunpack.c.h.b16 %v680
    %v2992 = vunpack.c.l.b16 %v681
    %v2993 = vunpack.c.h.b16 %v681
    %v2994 = vunpack.c.l.b16 %v682
    %v2995 = vunpack.c.h.b16 %v682
    %v2996 = vunpack.c.l.b16 %v683
    %v2997 = vunpack.c.h.b16 %v683
    %v2998 = vunpack.c.l.b16 %v684
    %v2999 = vunpack.c.h.b16 %v684
    %v3000 = vunpack.c.l.b16 %v685
    %v3001 = vunpack.c.h.b16 %v685
    %v3002 = vunpack.c.l.b16 %v686
    %v3003 = vunpack.c.h.b16 %v686
    %v3004 = vunpack.c.l.b16 %v687
    %v3005 = vunpack.c.h.b16 %v687
    %v3006 = vunpack.c.l.b16 %v688
    %v3007 = vunpack.c.h.b16 %v688
    %v3008 = vunpack.c.l.b16 %v689
    %v3009 = vunpack.c.h.b16 %v689
    %v3010 = vunpack.c.l.b16 %v690
    %v3011 = vunpack.c.h.b16 %v690
    %v3012 = vunpack.c.l.b16 %v691
    %v3013 = vunpack.c.h.b16 %v691
    %v3014 = vunpack.c.l.b16 %v692
    %v3015 = vunpack.c.h.b16 %v692
    %v3016 = vunpack.c.l.b16 %v693
    %v3017 = vunpack.c.h.b16 %v693
    %v3018 = vunpack.c.l.b16 %v694
    %v3019 = vunpack.c.h.b16 %v694
    %v3020 = vunpack.c.l.b16 %v695
    %v3021 = vunpack.c.h.b16 %v695
    %v3022 = vunpack.c.l.b16 %v696
    %v3023 = vunpack.c.h.b16 %v696
    %v3024 = vunpack.c.l.b16 %v697
    %v3025 = vunpack.c.h.b16 %v697
    %v3026 = vunpack.c.l.b16 %v698
    %v3027 = vunpack.c.h.b16 %v698
    %v3028 = vunpack.c.l.b16 %v699
    %v3029 = vunpack.c.h.b16 %v699
    %v3030 = vunpack.c.l.b16 %v700
    %v3031 = vunpack.c.h.b16 %v700
    %v3032 = vunpack.c.l.b16 %v701
    %v3033 = vunpack.c.h.b16 %v701
    %v3034 = vunpack.c.l.b16 %v702
    %v3035 = vunpack.c.h.b16 %v702
    %v3036 = vunpack.c.l.b16 %v703
    %v3037 = vunpack.c.h.b16 %v703
    %v3038 = vunpack.c.l.b16 %v704
    %v3039 = vunpack.c.h.b16 %v704
    %v3040 = vunpack.c.l.b16 %v705
    %v3041 = vunpack.c.h.b16 %v705
    %v3042 = vunpack.c.l.b16 %v706
    %v3043 = vunpack.c.h.b16 %v706
    %v3044 = vunpack.c.l.b16 %v707
    %v3045 = vunpack.c.h.b16 %v707
    %v3046 = vunpack.c.l.b16 %v708
    %v3047 = vunpack.c.h.b16 %v708
    %v3048 = vunpack.c.l.b16 %v709
    %v3049 = vunpack.c.h.b16 %v709
    %v3050 = vunpack.c.l.b16 %v710
    %v3051 = vunpack.c.h.b16 %v710
    %v3052 = vunpack.c.l.b16 %v711
    %v3053 = vunpack.c.h.b16 %v711
    %v3054 = vunpack.c.l.b16 %v712
    %v3055 = vunpack.c.h.b16 %v712
    %v3056 = vunpack.c.l.b16 %v713
    %v3057 = vunpack.c.h.b16 %v713
    %v3058 = vunpack.c.l.b16 %v714
    %v3059 = vunpack.c.h.b16 %v714
    %v3060 = vunpack.c.l.b16 %v715
    %v3061 = vunpack.c.h.b16 %v715
    %v3062 = vunpack.c.l.b16 %v716
    %v3063 = vunpack.c.h.b16 %v716
    %v3064 = vunpack.c.l.b16 %v717
    %v3065 = vunpack.c.h.b16 %v717
    %v3066 = vunpack.c.l.b16 %v718
    %v3067 = vunpack.c.h.b16 %v718
    %v3068 = vunpack.c.l.b16 %v719
    %v3069 = vunpack.c.h.b16 %v719
    %v3070 = vunpack.c.l.b16 %v720
    %v3071 = vunpack.c.h.b16 %v720
    %v3072 = vunpack.c.l.b16 %v721
    %v3073 = vunpack.c.h.b16 %v721
    %v3074 = vunpack.c.l.b16 %v722
    %v3075 = vunpack.c.h.b16 %v722
    %v3076 = vunpack.c.l.b16 %v723
    %v3077 = vunpack.c.h.b16 %v723
    %v3078 = vunpack.c.l.b16 %v724
    %v3079 = vunpack.c.h.b16 %v724
    %v3080 = vunpack.c.l.b16 %v725
    %v3081 = vunpack.c.h.b16 %v725
    %v3082 = vunpack.c.l.b16 %v726
    %v3083 = vunpack.c.h.b16 %v726
    %v3084 = vunpack.c.l.b16 %v727
    %v3085 = vunpack.c.h.b16 %v727
    %v3086 = vunpack.c.l.b16 %v728
    %v3087 = vunpack.c.h.b16 %v728
    %v3088 = vunpack.c.l.b16 %v729
    %v3089 = vunpack.c.h.b16 %v729
    %v3090 = vunpack.c.l.b16 %v730
    %v3091 = vunpack.c.h.b16 %v730
    %v3092 = vunpack.c.l.b16 %v731
    %v3093 = vunpack.c.h.b16 %v731
    %v3094 = vunpack.c.l.b16 %v732
    %v3095 = vunpack.c.h.b16 %v732
    %v3096 = vunpack.c.l.b16 %v733
    %v3097 = vunpack.c.h.b16 %v733
    %v3098 = vunpack.c.l.b16 %v734
    %v3099 = vunpack.c.h.b16 %v734
    %v3100 = vunpack.c.l.b16 %v735
    %v3101 = vunpack.c.h.b16 %v735
    %v3102 = vunpack.c.l.b16 %v736
    %v3103 = vunpack.c.h.b16 %v736
    %v3104 = vunpack.c.l.b16 %v737
    %v3105 = vunpack.c.h.b16 %v737
    %v3106 = vunpack.c.l.b16 %v738
    %v3107 = vunpack.c.h.b16 %v738
    %v3108 = vunpack.c.l.b16 %v739
    %v3109 = vunpack.c.h.b16 %v739
    %v3110 = vunpack.c.l.b16 %v740
    %v3111 = vunpack.c.h.b16 %v740
    %v3112 = vunpack.c.l.b16 %v741
    %v3113 = vunpack.c.h.b16 %v741
    %v3114 = vunpack.c.l.b16 %v742
    %v3115 = vunpack.c.h.b16 %v742
    %v3116 = vunpack.c.l.b16 %v743
    %v3117 = vunpack.c.h.b16 %v743
    %v3118 = vunpack.c.l.b16 %v744
    %v3119 = vunpack.c.h.b16 %v744
    %v3120 = vunpack.c.l.b16 %v745
    %v3121 = vunpack.c.h.b16 %v745
    %v3122 = vunpack.c.l.b16 %v746
    %v3123 = vunpack.c.h.b16 %v746
    %v3124 = vunpack.c.l.b16 %v747
    %v3125 = vunpack.c.h.b16 %v747
    %v3126 = vunpack.c.l.b16 %v748
    %v3127 = vunpack.c.h.b16 %v748
    %v3128 = vunpack.c.l.b16 %v749
    %v3129 = vunpack.c.h.b16 %v749
    %v3130 = vunpack.c.l.b16 %v750
    %v3131 = vunpack.c.h.b16 %v750
    %v3132 = vunpack.c.l.b16 %v751
    %v3133 = vunpack.c.h.b16 %v751
    %v3134 = vunpack.c.l.b16 %v752
    %v3135 = vunpack.c.h.b16 %v752
    %v3136 = vunpack.c.l.b16 %v753
    %v3137 = vunpack.c.h.b16 %v753
    %v3138 = vunpack.c.l.b16 %v754
    %v3139 = vunpack.c.h.b16 %v754
    %v3140 = vunpack.c.l.b16 %v755
    %v3141 = vunpack.c.h.b16 %v755
    %v3142 = vunpack.c.l.b16 %v756
    %v3143 = vunpack.c.h.b16 %v756
    %v3144 = vunpack.c.l.b16 %v757
    %v3145 = vunpack.c.h.b16 %v757
    %v3146 = vunpack.c.l.b16 %v758
    %v3147 = vunpack.c.h.b16 %v758
    %v3148 = vunpack.c.l.b16 %v759
    %v3149 = vunpack.c.h.b16 %v759
    %v3150 = vunpack.c.l.b16 %v760
    %v3151 = vunpack.c.h.b16 %v760
    %v3152 = vunpack.c.l.b16 %v761
    %v3153 = vunpack.c.h.b16 %v761
    %v3154 = vunpack.c.l.b16 %v762
    %v3155 = vunpack.c.h.b16 %v762
    %v3156 = vunpack.c.l.b16 %v763
    %v3157 = vunpack.c.h.b16 %v763
    %v3158 = vunpack.c.l.b16 %v764
    %v3159 = vunpack.c.h.b16 %v764
    %v3160 = vunpack.c.l.b16 %v765
    %v3161 = vunpack.c.h.b16 %v765
    %v3162 = vunpack.c.l.b16 %v766
    %v3163 = vunpack.c.h.b16 %v766
    %v3164 = vunpack.c.l.b16 %v767
    %v3165 = vunpack.c.h.b16 %v767
    %v3166 = vunpack.c.l.b16 %v768
    %v3167 = vunpack.c.h.b16 %v768
    %v3168 = vunpack.c.l.b16 %v769
    %v3169 = vunpack.c.h.b16 %v769
    %v3170 = vunpack.c.l.b16 %v770
    %v3171 = vunpack.c.h.b16 %v770
    %v3172 = vunpack.c.l.b16 %v771
    %v3173 = vunpack.c.h.b16 %v771
    %v3174 = vunpack.c.l.b16 %v772
    %v3175 = vunpack.c.h.b16 %v772
    %v3176 = vunpack.c.l.b16 %v773
    %v3177 = vunpack.c.h.b16 %v773
    %v3178 = vunpack.c.l.b16 %v774
    %v3179 = vunpack.c.h.b16 %v774
    %v3180 = vunpack.c.l.b16 %v775
    %v3181 = vunpack.c.h.b16 %v775
    %v3182 = vunpack.c.l.b16 %v776
    %v3183 = vunpack.c.h.b16 %v776
    %v3184 = vunpack.c.l.b16 %v777
    %v3185 = vunpack.c.h.b16 %v777
    %v3186 = vunpack.c.l.b16 %v778
    %v3187 = vunpack.c.h.b16 %v778
    %v3188 = vunpack.c.l.b16 %v779
    %v3189 = vunpack.c.h.b16 %v779
    %v3190 = vunpack.c.l.b16 %v780
    %v3191 = vunpack.c.h.b16 %v780
    %v3192 = vunpack.c.l.b16 %v781
    %v3193 = vunpack.c.h.b16 %v781
    %v3194 = vunpack.c.l.b16 %v782
    %v3195 = vunpack.c.h.b16 %v782
    %v3196 = vunpack.c.l.b16 %v783
    %v3197 = vunpack.c.h.b16 %v783
    %v3198 = vunpack.c.l.b16 %v784
    %v3199 = vunpack.c.h.b16 %v784
    %v3200 = vunpack.c.l.b16 %v785
    %v3201 = vunpack.c.h.b16 %v785
    %v3202 = vunpack.c.l.b16 %v786
    %v3203 = vunpack.c.h.b16 %v786
    %v3204 = vunpack.c.l.b16 %v787
    %v3205 = vunpack.c.h.b16 %v787
    %v3206 = vunpack.c.l.b16 %v788
    %v3207 = vunpack.c.h.b16 %v788
    %v3208 = vunpack.c.l.b16 %v789
    %v3209 = vunpack.c.h.b16 %v789
    %v3210 = vunpack.c.l.b16 %v790
    %v3211 = vunpack.c.h.b16 %v790
    %v3212 = vunpack.c.l.b16 %v791
    %v3213 = vunpack.c.h.b16 %v791
    %v3214 = vunpack.c.l.b16 %v792
    %v3215 = vunpack.c.h.b16 %v792
    %v3216 = vunpack.c.l.b16 %v793
    %v3217 = vunpack.c.h.b16 %v793
    %v3218 = vunpack.c.l.b16 %v794
    %v3219 = vunpack.c.h.b16 %v794
    %v3220 = vunpack.c.l.b16 %v795
    %v3221 = vunpack.c.h.b16 %v795
    %v3222 = vunpack.c.l.b16 %v796
    %v3223 = vunpack.c.h.b16 %v796
    %v3224 = vunpack.c.l.b16 %v797
    %v3225 = vunpack.c.h.b16 %v797
    %v3226 = vunpack.c.l.b16 %v798
    %v3227 = vunpack.c.h.b16 %v798
    %v3228 = vunpack.c.l.b16 %v799
    %v3229 = vunpack.c.h.b16 %v799
    %v3230 = vunpack.c.l.b16 %v800
    %v3231 = vunpack.c.h.b16 %v800
    %v3232 = vunpack.c.l.b16 %v801
    %v3233 = vunpack.c.h.b16 %v801
    %v3234 = vunpack.c.l.b16 %v802
    %v3235 = vunpack.c.h.b16 %v802
    %v3236 = vunpack.c.l.b16 %v803
    %v3237 = vunpack.c.h.b16 %v803
    %v3238 = vunpack.c.l.b16 %v804
    %v3239 = vunpack.c.h.b16 %v804
    %v3240 = vunpack.c.l.b16 %v805
    %v3241 = vunpack.c.h.b16 %v805
    %v3242 = vunpack.c.l.b16 %v806
    %v3243 = vunpack.c.h.b16 %v806
    %v3244 = vunpack.c.l.b16 %v807
    %v3245 = vunpack.c.h.b16 %v807
    %v3246 = vunpack.c.l.b16 %v808
    %v3247 = vunpack.c.h.b16 %v808
    %v3248 = vunpack.c.l.b16 %v809
    %v3249 = vunpack.c.h.b16 %v809
    %v3250 = vunpack.c.l.b16 %v810
    %v3251 = vunpack.c.h.b16 %v810
    %v3252 = vunpack.c.l.b16 %v811
    %v3253 = vunpack.c.h.b16 %v811
    %v3254 = vunpack.c.l.b16 %v812
    %v3255 = vunpack.c.h.b16 %v812
    %v3256 = vunpack.c.l.b16 %v813
    %v3257 = vunpack.c.h.b16 %v813
    %v3258 = vunpack.c.l.b16 %v814
    %v3259 = vunpack.c.h.b16 %v814
    %v3260 = vunpack.c.l.b16 %v815
    %v3261 = vunpack.c.h.b16 %v815
    %v3262 = vunpack.c.l.b16 %v816
    %v3263 = vunpack.c.h.b16 %v816
    %v3264 = vunpack.c.l.b16 %v817
    %v3265 = vunpack.c.h.b16 %v817
    %v3266 = vunpack.c.l.b16 %v818
    %v3267 = vunpack.c.h.b16 %v818
    %v3268 = vunpack.c.l.b16 %v819
    %v3269 = vunpack.c.h.b16 %v819
    %v3270 = vunpack.c.l.b16 %v820
    %v3271 = vunpack.c.h.b16 %v820
    %v3272 = vunpack.c.l.b16 %v821
    %v3273 = vunpack.c.h.b16 %v821
    %v3274 = vunpack.c.l.b16 %v822
    %v3275 = vunpack.c.h.b16 %v822
    %v3276 = vunpack.c.l.b16 %v823
    %v3277 = vunpack.c.h.b16 %v823
    %v3278 = vunpack.c.l.b16 %v824
    %v3279 = vunpack.c.h.b16 %v824
    %v3280 = vunpack.c.l.b16 %v825
    %v3281 = vunpack.c.h.b16 %v825
    %v3282 = vunpack.c.l.b16 %v826
    %v3283 = vunpack.c.h.b16 %v826
    %v3284 = vunpack.c.l.b16 %v827
    %v3285 = vunpack.c.h.b16 %v827
    %v3286 = vunpack.c.l.b16 %v828
    %v3287 = vunpack.c.h.b16 %v828
    %v3288 = vunpack.c.l.b16 %v829
    %v3289 = vunpack.c.h.b16 %v829
    %v3290 = vunpack.c.l.b16 %v830
    %v3291 = vunpack.c.h.b16 %v830
    %v3292 = vunpack.c.l.b16 %v831
    %v3293 = vunpack.c.h.b16 %v831
    %v3294 = vunpack.c.l.b16 %v832
    %v3295 = vunpack.c.h.b16 %v832
    %v3296 = vunpack.c.l.b16 %v833
    %v3297 = vunpack.c.h.b16 %v833
    %v3298 = vunpack.c.l.b16 %v834
    %v3299 = vunpack.c.h.b16 %v834
    %v3300 = vunpack.c.l.b16 %v835
    %v3301 = vunpack.c.h.b16 %v835
    %v3302 = vunpack.c.l.b16 %v836
    %v3303 = vunpack.c.h.b16 %v836
    %v3304 = vunpack.c.l.b16 %v837
    %v3305 = vunpack.c.h.b16 %v837
    %v3306 = vunpack.c.l.b16 %v838
    %v3307 = vunpack.c.h.b16 %v838
    %v3308 = vunpack.c.l.b16 %v839
    %v3309 = vunpack.c.h.b16 %v839
    %v3310 = vunpack.c.l.b16 %v840
    %v3311 = vunpack.c.h.b16 %v840
    %v3312 = vunpack.c.l.b16 %v841
    %v3313 = vunpack.c.h.b16 %v841
    %v3314 = vunpack.c.l.b16 %v842
    %v3315 = vunpack.c.h.b16 %v842
    %v3316 = vunpack.c.l.b16 %v843
    %v3317 = vunpack.c.h.b16 %v843
    %v3318 = vunpack.c.l.b16 %v844
    %v3319 = vunpack.c.h.b16 %v844
    %v3320 = vunpack.c.l.b16 %v845
    %v3321 = vunpack.c.h.b16 %v845
    %v3322 = vunpack.c.l.b16 %v846
    %v3323 = vunpack.c.h.b16 %v846
    %v3324 = vunpack.c.l.b16 %v847
    %v3325 = vunpack.c.h.b16 %v847
    %v3326 = vunpack.c.l.b16 %v848
    %v3327 = vunpack.c.h.b16 %v848
    %v3328 = vunpack.c.l.b16 %v849
    %v3329 = vunpack.c.h.b16 %v849
    %v3330 = vunpack.c.l.b16 %v850
    %v3331 = vunpack.c.h.b16 %v850
    %v3332 = vunpack.c.l.b16 %v851
    %v3333 = vunpack.c.h.b16 %v851
    %v3334 = vunpack.c.l.b16 %v852
    %v3335 = vunpack.c.h.b16 %v852
    %v3336 = vunpack.c.l.b16 %v853
    %v3337 = vunpack.c.h.b16 %v853
    %v3338 = vunpack.c.l.b16 %v854
    %v3339 = vunpack.c.h.b16 %v854
    %v3340 = vunpack.c.l.b16 %v855
    %v3341 = vunpack.c.h.b16 %v855
    %v3342 = vunpack.c.l.b16 %v856
    %v3343 = vunpack.c.h.b16 %v856
    %v3344 = vunpack.c.l.b16 %v857
    %v3345 = vunpack.c.h.b16 %v857
    %v3346 = vunpack.c.l.b16 %v858
    %v3347 = vunpack.c.h.b16 %v858
    %v3348 = vunpack.c.l.b16 %v859
    %v3349 = vunpack.c.h.b16 %v859
    %v3350 = vunpack.c.l.b16 %v860
    %v3351 = vunpack.c.h.b16 %v860
    %v3352 = vunpack.c.l.b16 %v861
    %v3353 = vunpack.c.h.b16 %v861
    %v3354 = vunpack.c.l.b16 %v862
    %v3355 = vunpack.c.h.b16 %v862
    %v3356 = vunpack.c.l.b16 %v863
    %v3357 = vunpack.c.h.b16 %v863
    %v3358 = vunpack.c.l.b16 %v864
    %v3359 = vunpack.c.h.b16 %v864
    %v3360 = vunpack.c.l.b16 %v865
    %v3361 = vunpack.c.h.b16 %v865
    %v3362 = vunpack.c.l.b16 %v866
    %v3363 = vunpack.c.h.b16 %v866
    %v3364 = vunpack.c.l.b16 %v867
    %v3365 = vunpack.c.h.b16 %v867
    %v3366 = vunpack.c.l.b16 %v868
    %v3367 = vunpack.c.h.b16 %v868
    %v3368 = vunpack.c.l.b16 %v869
    %v3369 = vunpack.c.h.b16 %v869
    %v3370 = vunpack.c.l.b16 %v870
    %v3371 = vunpack.c.h.b16 %v870
    %v3372 = vunpack.c.l.b16 %v871
    %v3373 = vunpack.c.h.b16 %v871
    %v3374 = vunpack.c.l.b16 %v872
    %v3375 = vunpack.c.h.b16 %v872
    %v3376 = vunpack.c.l.b16 %v873
    %v3377 = vunpack.c.h.b16 %v873
    %v3378 = vunpack.c.l.b16 %v874
    %v3379 = vunpack.c.h.b16 %v874
    %v3380 = vunpack.c.l.b16 %v875
    %v3381 = vunpack.c.h.b16 %v875
    %v3382 = vunpack.c.l.b16 %v876
    %v3383 = vunpack.c.h.b16 %v876
    %v3384 = vunpack.c.l.b16 %v877
    %v3385 = vunpack.c.h.b16 %v877
    %v3386 = vunpack.c.l.b16 %v878
    %v3387 = vunpack.c.h.b16 %v878
    %v3388 = vunpack.c.l.b16 %v879
    %v3389 = vunpack.c.h.b16 %v879
    %v3390 = vunpack.c.l.b16 %v880
    %v3391 = vunpack.c.h.b16 %v880
    %v3392 = vunpack.c.l.b16 %v881
    %v3393 = vunpack.c.h.b16 %v881
    %v3394 = vunpack.c.l.b16 %v882
    %v3395 = vunpack.c.h.b16 %v882
    %v3396 = vunpack.c.l.b16 %v883
    %v3397 = vunpack.c.h.b16 %v883
    %v3398 = vunpack.c.l.b16 %v884
    %v3399 = vunpack.c.h.b16 %v884
    %v3400 = vunpack.c.l.b16 %v885
    %v3401 = vunpack.c.h.b16 %v885
    %v3402 = vunpack.c.l.b16 %v886
    %v3403 = vunpack.c.h.b16 %v886
    %v3404 = vunpack.c.l.b16 %v887
    %v3405 = vunpack.c.h.b16 %v887
    %v3406 = vunpack.c.l.b16 %v888
    %v3407 = vunpack.c.h.b16 %v888
    %v3408 = vunpack.c.l.b16 %v889
    %v3409 = vunpack.c.h.b16 %v889
    %v3410 = vunpack.c.l.b16 %v890
    %v3411 = vunpack.c.h.b16 %v890
    %v3412 = vunpack.c.l.b16 %v891
    %v3413 = vunpack.c.h.b16 %v891
    %v3414 = vunpack.c.l.b16 %v892
    %v3415 = vunpack.c.h.b16 %v892
    %v3416 = vunpack.c.l.b16 %v893
    %v3417 = vunpack.c.h.b16 %v893
    %v3418 = vunpack.c.l.b16 %v894
    %v3419 = vunpack.c.h.b16 %v894
    %v3420 = vunpack.c.l.b16 %v895
    %v3421 = vunpack.c.h.b16 %v895
    %v3422 = vunpack.c.l.b16 %v896
    %v3423 = vunpack.c.h.b16 %v896
    %v3424 = vunpack.c.l.b16 %v897
    %v3425 = vunpack.c.h.b16 %v897
    %v3426 = vunpack.c.l.b16 %v898
    %v3427 = vunpack.c.h.b16 %v898
    %v3428 = vunpack.c.l.b16 %v899
    %v3429 = vunpack.c.h.b16 %v899
    %v3430 = vunpack.c.l.b16 %v900
    %v3431 = vunpack.c.h.b16 %v900
    %v3432 = vunpack.c.l.b16 %v901
    %v3433 = vunpack.c.h.b16 %v901
    %v3434 = vunpack.c.l.b16 %v902
    %v3435 = vunpack.c.h.b16 %v902
    %v3436 = vunpack.c.l.b16 %v903
    %v3437 = vunpack.c.h.b16 %v903
    %v3438 = vunpack.c.l.b16 %v904
    %v3439 = vunpack.c.h.b16 %v904
    %v3440 = vunpack.c.l.b16 %v905
    %v3441 = vunpack.c.h.b16 %v905
    %v3442 = vunpack.c.l.b16 %v906
    %v3443 = vunpack.c.h.b16 %v906
    %v3444 = vunpack.c.l.b16 %v907
    %v3445 = vunpack.c.h.b16 %v907
    %v3446 = vunpack.c.l.b16 %v908
    %v3447 = vunpack.c.h.b16 %v908
    %v3448 = vunpack.c.l.b16 %v909
    %v3449 = vunpack.c.h.b16 %v909
    %v3450 = vunpack.c.l.b16 %v910
    %v3451 = vunpack.c.h.b16 %v910
    %v3452 = vunpack.c.l.b16 %v911
    %v3453 = vunpack.c.h.b16 %v911
    %v3454 = vunpack.c.l.b16 %v912
    %v3455 = vunpack.c.h.b16 %v912
    %v3456 = vunpack.c.l.b16 %v913
    %v3457 = vunpack.c.h.b16 %v913
    %v3458 = vunpack.c.l.b16 %v914
    %v3459 = vunpack.c.h.b16 %v914
    %v3460 = vunpack.c.l.b16 %v915
    %v3461 = vunpack.c.h.b16 %v915
    %v3462 = vunpack.c.l.b16 %v916
    %v3463 = vunpack.c.h.b16 %v916
    %v3464 = vunpack.c.l.b16 %v917
    %v3465 = vunpack.c.h.b16 %v917
    %v3466 = vunpack.c.l.b16 %v918
    %v3467 = vunpack.c.h.b16 %v918
    %v3468 = vunpack.c.l.b16 %v919
    %v3469 = vunpack.c.h.b16 %v919
    %v3470 = vunpack.c.l.b16 %v920
    %v3471 = vunpack.c.h.b16 %v920
    %v3472 = vunpack.c.l.b16 %v921
    %v3473 = vunpack.c.h.b16 %v921
    %v3474 = vunpack.c.l.b16 %v922
    %v3475 = vunpack.c.h.b16 %v922
    %v3476 = vunpack.c.l.b16 %v923
    %v3477 = vunpack.c.h.b16 %v923
    %v3478 = vunpack.c.l.b16 %v924
    %v3479 = vunpack.c.h.b16 %v924
    %v3480 = vunpack.c.l.b16 %v925
    %v3481 = vunpack.c.h.b16 %v925
    %v3482 = vunpack.c.l.b16 %v926
    %v3483 = vunpack.c.h.b16 %v926
    %v3484 = vunpack.c.l.b16 %v927
    %v3485 = vunpack.c.h.b16 %v927
    %v3486 = vunpack.c.l.b16 %v928
    %v3487 = vunpack.c.h.b16 %v928
    %v3488 = vunpack.c.l.b16 %v929
    %v3489 = vunpack.c.h.b16 %v929
    %v3490 = vunpack.c.l.b16 %v930
    %v3491 = vunpack.c.h.b16 %v930
    %v3492 = vunpack.c.l.b16 %v931
    %v3493 = vunpack.c.h.b16 %v931
    %v3494 = vunpack.c.l.b16 %v932
    %v3495 = vunpack.c.h.b16 %v932
    %v3496 = vunpack.c.l.b16 %v933
    %v3497 = vunpack.c.h.b16 %v933
    %v3498 = vunpack.c.l.b16 %v934
    %v3499 = vunpack.c.h.b16 %v934
    %v3500 = vunpack.c.l.b16 %v935
    %v3501 = vunpack.c.h.b16 %v935
    %v3502 = vunpack.c.l.b16 %v936
    %v3503 = vunpack.c.h.b16 %v936
    %v3504 = vunpack.c.l.b16 %v937
    %v3505 = vunpack.c.h.b16 %v937
    %v3506 = vunpack.c.l.b16 %v938
    %v3507 = vunpack.c.h.b16 %v938
    %v3508 = vunpack.c.l.b16 %v939
    %v3509 = vunpack.c.h.b16 %v939
    %v3510 = vunpack.c.l.b16 %v940
    %v3511 = vunpack.c.h.b16 %v940
    %v3512 = vunpack.c.l.b16 %v941
    %v3513 = vunpack.c.h.b16 %v941
    %v3514 = vunpack.c.l.b16 %v942
    %v3515 = vunpack.c.h.b16 %v942
    %v3516 = vunpack.c.l.b16 %v943
    %v3517 = vunpack.c.h.b16 %v943
    %v3518 = vunpack.c.l.b16 %v944
    %v3519 = vunpack.c.h.b16 %v944
    %v3520 = vunpack.c.l.b16 %v945
    %v3521 = vunpack.c.h.b16 %v945
    %v3522 = vunpack.c.l.b16 %v946
    %v3523 = vunpack.c.h.b16 %v946
    %v3524 = vunpack.c.l.b16 %v947
    %v3525 = vunpack.c.h.b16 %v947
    %v3526 = vunpack.c.l.b16 %v948
    %v3527 = vunpack.c.h.b16 %v948
    %v3528 = vunpack.c.l.b16 %v949
    %v3529 = vunpack.c.h.b16 %v949
    %v3530 = vunpack.c.l.b16 %v950
    %v3531 = vunpack.c.h.b16 %v950
    %v3532 = vunpack.c.l.b16 %v951
    %v3533 = vunpack.c.h.b16 %v951
    %v3534 = vunpack.c.l.b16 %v952
    %v3535 = vunpack.c.h.b16 %v952
    %v3536 = vunpack.c.l.b16 %v953
    %v3537 = vunpack.c.h.b16 %v953
    %v3538 = vunpack.c.l.b16 %v954
    %v3539 = vunpack.c.h.b16 %v954
    %v3540 = vunpack.c.l.b16 %v955
    %v3541 = vunpack.c.h.b16 %v955
    %v3542 = vunpack.c.l.b16 %v956
    %v3543 = vunpack.c.h.b16 %v956
    %v3544 = vunpack.c.l.b16 %v957
    %v3545 = vunpack.c.h.b16 %v957
    %v3546 = vunpack.c.l.b16 %v958
    %v3547 = vunpack.c.h.b16 %v958
    %v3548 = vunpack.c.l.b16 %v959
    %v3549 = vunpack.c.h.b16 %v959
    %v3550 = vunpack.c.l.b16 %v960
    %v3551 = vunpack.c.h.b16 %v960
    %v3552 = vunpack.c.l.b16 %v961
    %v3553 = vunpack.c.h.b16 %v961
    %v3554 = vunpack.c.l.b16 %v962
    %v3555 = vunpack.c.h.b16 %v962
    %v3556 = vunpack.c.l.b16 %v963
    %v3557 = vunpack.c.h.b16 %v963
    %v3558 = vunpack.c.l.b16 %v964
    %v3559 = vunpack.c.h.b16 %v964
    %v3560 = vunpack.c.l.b16 %v965
    %v3561 = vunpack.c.h.b16 %v965
    %v3562 = vunpack.c.l.b16 %v966
    %v3563 = vunpack.c.h.b16 %v966
    %v3564 = vunpack.c.l.b16 %v967
    %v3565 = vunpack.c.h.b16 %v967
    %v3566 = vunpack.c.l.b16 %v968
    %v3567 = vunpack.c.h.b16 %v968
    %v3568 = vunpack.c.l.b16 %v969
    %v3569 = vunpack.c.h.b16 %v969
    %v3570 = vunpack.c.l.b16 %v970
    %v3571 = vunpack.c.h.b16 %v970
    %v3572 = vunpack.c.l.b16 %v971
    %v3573 = vunpack.c.h.b16 %v971
    %v3574 = vunpack.c.l.b16 %v972
    %v3575 = vunpack.c.h.b16 %v972
    %v3576 = vunpack.c.l.b16 %v973
    %v3577 = vunpack.c.h.b16 %v973
    %v3578 = vunpack.c.l.b16 %v974
    %v3579 = vunpack.c.h.b16 %v974
    %v3580 = vunpack.c.l.b16 %v975
    %v3581 = vunpack.c.h.b16 %v975
    %v3582 = vunpack.c.l.b16 %v976
    %v3583 = vunpack.c.h.b16 %v976
    %v3584 = vunpack.c.l.b16 %v977
    %v3585 = vunpack.c.h.b16 %v977
    %v3586 = vunpack.c.l.b16 %v978
    %v3587 = vunpack.c.h.b16 %v978
    %v3588 = vunpack.c.l.b16 %v979
    %v3589 = vunpack.c.h.b16 %v979
    %v3590 = vunpack.c.l.b16 %v980
    %v3591 = vunpack.c.h.b16 %v980
    %v3592 = vunpack.c.l.b16 %v981
    %v3593 = vunpack.c.h.b16 %v981
    %v3594 = vunpack.c.l.b16 %v982
    %v3595 = vunpack.c.h.b16 %v982
    %v3596 = vunpack.c.l.b16 %v983
    %v3597 = vunpack.c.h.b16 %v983
    %v3598 = vunpack.c.l.b16 %v984
    %v3599 = vunpack.c.h.b16 %v984
    %v3600 = vunpack.c.l.b16 %v985
    %v3601 = vunpack.c.h.b16 %v985
    %v3602 = vunpack.c.l.b16 %v986
    %v3603 = vunpack.c.h.b16 %v986
    %v3604 = vunpack.c.l.b16 %v987
    %v3605 = vunpack.c.h.b16 %v987
    %v3606 = vunpack.c.l.b16 %v988
    %v3607 = vunpack.c.h.b16 %v988
    %v3608 = vunpack.c.l.b16 %v989
    %v3609 = vunpack.c.h.b16 %v989
    %v3610 = vunpack.c.l.b16 %v990
    %v3611 = vunpack.c.h.b16 %v990
    %v3612 = vunpack.c.l.b16 %v991
    %v3613 = vunpack.c.h.b16 %v991
    %v3614 = vunpack.c.l.b16 %v992
    %v3615 = vunpack.c.h.b16 %v992
    %v3616 = vunpack.c.l.b16 %v993
    %v3617 = vunpack.c.h.b16 %v993
    %v3618 = vunpack.c.l.b16 %v994
    %v3619 = vunpack.c.h.b16 %v994
    %v3620 = vunpack.c.l.b16 %v995
    %v3621 = vunpack.c.h.b16 %v995
    %v3622 = vunpack.c.l.b16 %v996
    %v3623 = vunpack.c.h.b16 %v996
    %v3624 = vunpack.c.l.b16 %v997
    %v3625 = vunpack.c.h.b16 %v997
    %v3626 = vunpack.c.l.b16 %v998
    %v3627 = vunpack.c.h.b16 %v998
    %v3628 = vunpack.c.l.b16 %v999
    %v3629 = vunpack.c.h.b16 %v999
    %v3630 = vunpack.c.l.b16 %v1000
    %v3631 = vunpack.c.h.b16 %v1000
    %v3632 = vunpack.c.l.b16 %v1001
    %v3633 = vunpack.c.h.b16 %v1001
    %v3634 = vunpack.c.l.b16 %v1002
    %v3635 = vunpack.c.h.b16 %v1002
    %v3636 = vunpack.c.l.b16 %v1003
    %v3637 = vunpack.c.h.b16 %v1003
    %v3638 = vunpack.c.l.b16 %v1004
    %v3639 = vunpack.c.h.b16 %v1004
    %v3640 = vunpack.c.l.b16 %v1005
    %v3641 = vunpack.c.h.b16 %v1005
    %v3642 = vunpack.c.l.b16 %v1006
    %v3643 = vunpack.c.h.b16 %v1006
    %v3644 = vunpack.c.l.b16 %v1007
    %v3645 = vunpack.c.h.b16 %v1007
    %v3646 = vunpack.c.l.b16 %v1008
    %v3647 = vunpack.c.h.b16 %v1008
    %v3648 = vunpack.c.l.b16 %v1009
    %v3649 = vunpack.c.h.b16 %v1009
    %v3650 = vunpack.c.l.b16 %v1010
    %v3651 = vunpack.c.h.b16 %v1010
    %v3652 = vunpack.c.l.b16 %v1011
    %v3653 = vunpack.c.h.b16 %v1011
    %v3654 = vunpack.c.l.b16 %v1012
    %v3655 = vunpack.c.h.b16 %v1012
    %v3656 = vunpack.c.l.b16 %v1013
    %v3657 = vunpack.c.h.b16 %v1013
    %v3658 = vunpack.c.l.b16 %v1014
    %v3659 = vunpack.c.h.b16 %v1014
    %v3660 = vunpack.c.l.b16 %v1015
    %v3661 = vunpack.c.h.b16 %v1015
    %v3662 = vunpack.c.l.b16 %v1016
    %v3663 = vunpack.c.h.b16 %v1016
    %v3664 = vunpack.c.l.b16 %v1017
    %v3665 = vunpack.c.h.b16 %v1017
    %v3666 = vunpack.c.l.b16 %v1018
    %v3667 = vunpack.c.h.b16 %v1018
    %v3668 = vunpack.c.l.b16 %v1019
    %v3669 = vunpack.c.h.b16 %v1019
    %v3670 = vunpack.c.l.b16 %v1020
    %v3671 = vunpack.c.h.b16 %v1020
    %v3672 = vunpack.c.l.b16 %v1021
    %v3673 = vunpack.c.h.b16 %v1021
    %v3674 = vunpack.c.l.b16 %v1022
    %v3675 = vunpack.c.h.b16 %v1022
    %v3676 = vunpack.c.l.b16 %v1023
    %v3677 = vunpack.c.h.b16 %v1023
    %v3678 = vunpack.c.l.b16 %v1024
    %v3679 = vunpack.c.h.b16 %v1024
    %v3680 = vunpack.c.l.b16 %v1025
    %v3681 = vunpack.c.h.b16 %v1025
    %v3682 = vunpack.c.l.b16 %v1026
    %v3683 = vunpack.c.h.b16 %v1026
    %v3684 = vunpack.c.l.b16 %v1027
    %v3685 = vunpack.c.h.b16 %v1027
    %v3686 = vunpack.c.l.b16 %v1028
    %v3687 = vunpack.c.h.b16 %v1028
    %v3688 = vunpack.c.l.b16 %v1029
    %v3689 = vunpack.c.h.b16 %v1029
    %v3690 = vunpack.c.l.b16 %v1030
    %v3691 = vunpack.c.h.b16 %v1030
    %v3692 = vunpack.c.l.b16 %v1031
    %v3693 = vunpack.c.h.b16 %v1031
    %v3694 = vunpack.c.l.b16 %v1032
    %v3695 = vunpack.c.h.b16 %v1032
    %v3696 = vunpack.c.l.b16 %v1033
    %v3697 = vunpack.c.h.b16 %v1033
    %v3698 = vunpack.c.l.b16 %v1034
    %v3699 = vunpack.c.h.b16 %v1034
    %v3700 = vunpack.c.l.b16 %v1035
    %v3701 = vunpack.c.h.b16 %v1035
    %v3702 = vunpack.c.l.b16 %v1036
    %v3703 = vunpack.c.h.b16 %v1036
    %v3704 = vunpack.c.l.b16 %v1037
    %v3705 = vunpack.c.h.b16 %v1037
    %v3706 = vunpack.c.l.b16 %v1038
    %v3707 = vunpack.c.h.b16 %v1038
    %v3708 = vunpack.c.l.b16 %v1039
    %v3709 = vunpack.c.h.b16 %v1039
    %v3710 = vunpack.c.l.b16 %v1040
    %v3711 = vunpack.c.h.b16 %v1040
    %v3712 = vunpack.c.l.b16 %v1041
    %v3713 = vunpack.c.h.b16 %v1041
    %v3714 = vunpack.c.l.b16 %v1042
    %v3715 = vunpack.c.h.b16 %v1042
    %v3716 = vunpack.c.l.b16 %v1043
    %v3717 = vunpack.c.h.b16 %v1043
    %v3718 = vunpack.c.l.b16 %v1044
    %v3719 = vunpack.c.h.b16 %v1044
    %v3720 = vunpack.c.l.b16 %v1045
    %v3721 = vunpack.c.h.b16 %v1045
    %v3722 = vunpack.c.l.b16 %v1046
    %v3723 = vunpack.c.h.b16 %v1046
    %v3724 = vunpack.c.l.b16 %v1047
    %v3725 = vunpack.c.h.b16 %v1047
    %v3726 = vunpack.c.l.b16 %v1048
    %v3727 = vunpack.c.h.b16 %v1048
    %v3728 = vunpack.c.l.b16 %v1049
    %v3729 = vunpack.c.h.b16 %v1049
    %v3730 = vunpack.c.l.b16 %v1050
    %v3731 = vunpack.c.h.b16 %v1050
    %v3732 = vunpack.c.l.b16 %v1051
    %v3733 = vunpack.c.h.b16 %v1051
    %v3734 = vunpack.c.l.b16 %v1052
    %v3735 = vunpack.c.h.b16 %v1052
    %v3736 = vunpack.c.l.b16 %v1053
    %v3737 = vunpack.c.h.b16 %v1053
    %v3738 = vunpack.c.l.b16 %v1054
    %v3739 = vunpack.c.h.b16 %v1054
    %v3740 = vunpack.c.l.b16 %v1055
    %v3741 = vunpack.c.h.b16 %v1055
    %v3742 = vunpack.c.l.b16 %v1056
    %v3743 = vunpack.c.h.b16 %v1056
    %v3744 = vunpack.c.l.b16 %v1057
    %v3745 = vunpack.c.h.b16 %v1057
    %v3746 = vunpack.c.l.b16 %v1058
    %v3747 = vunpack.c.h.b16 %v1058
    %v3748 = vunpack.c.l.b16 %v1059
    %v3749 = vunpack.c.h.b16 %v1059
    %v3750 = vunpack.c.l.b16 %v1060
    %v3751 = vunpack.c.h.b16 %v1060
    %v3752 = vunpack.c.l.b16 %v1061
    %v3753 = vunpack.c.h.b16 %v1061
    %v3754 = vunpack.c.l.b16 %v1062
    %v3755 = vunpack.c.h.b16 %v1062
    %v3756 = vunpack.c.l.b16 %v1063
    %v3757 = vunpack.c.h.b16 %v1063
    %v3758 = vunpack.c.l.b16 %v1064
    %v3759 = vunpack.c.h.b16 %v1064
    %v3760 = vunpack.c.l.b16 %v1065
    %v3761 = vunpack.c.h.b16 %v1065
    %v3762 = vunpack.c.l.b16 %v1066
    %v3763 = vunpack.c.h.b16 %v1066
    %v3764 = vunpack.c.l.b16 %v1067
    %v3765 = vunpack.c.h.b16 %v1067
    %v3766 = vunpack.c.l.b16 %v1068
    %v3767 = vunpack.c.h.b16 %v1068
    %v3768 = vunpack.c.l.b16 %v1069
    %v3769 = vunpack.c.h.b16 %v1069
    %v3770 = vunpack.c.l.b16 %v1070
    %v3771 = vunpack.c.h.b16 %v1070
    %v3772 = vunpack.c.l.b16 %v1071
    %v3773 = vunpack.c.h.b16 %v1071
    %v3774 = vunpack.c.l.b16 %v1072
    %v3775 = vunpack.c.h.b16 %v1072
    %v3776 = vunpack.c.l.b16 %v1073
    %v3777 = vunpack.c.h.b16 %v1073
    %v3778 = vunpack.c.l.b16 %v1074
    %v3779 = vunpack.c.h.b16 %v1074
    %v3780 = vunpack.c.l.b16 %v1075
    %v3781 = vunpack.c.h.b16 %v1075
    %v3782 = vunpack.c.l.b16 %v1076
    %v3783 = vunpack.c.h.b16 %v1076
    %v3784 = vunpack.c.l.b16 %v1077
    %v3785 = vunpack.c.h.b16 %v1077
    %v3786 = vunpack.c.l.b16 %v1078
    %v3787 = vunpack.c.h.b16 %v1078
    %v3788 = vunpack.c.l.b16 %v1079
    %v3789 = vunpack.c.h.b16 %v1079
    %v3790 = vunpack.c.l.b16 %v1080
    %v3791 = vunpack.c.h.b16 %v1080
    %v3792 = vunpack.c.l.b16 %v1081
    %v3793 = vunpack.c.h.b16 %v1081
    %v3794 = vunpack.c.l.b16 %v1082
    %v3795 = vunpack.c.h.b16 %v1082
    %v3796 = vunpack.c.l.b16 %v1083
    %v3797 = vunpack.c.h.b16 %v1083
    %v3798 = vunpack.c.l.b16 %v1084
    %v3799 = vunpack.c.h.b16 %v1084
    %v3800 = vunpack.c.l.b16 %v1085
    %v3801 = vunpack.c.h.b16 %v1085
    %v3802 = vunpack.c.l.b16 %v1086
    %v3803 = vunpack.c.h.b16 %v1086
    %v3804 = vunpack.c.l.b16 %v1087
    %v3805 = vunpack.c.h.b16 %v1087
    %v3806 = vunpack.c.l.b16 %v1088
    %v3807 = vunpack.c.h.b16 %v1088
    %v3808 = vunpack.c.l.b16 %v1089
    %v3809 = vunpack.c.h.b16 %v1089
    %v3810 = vunpack.c.l.b16 %v1090
    %v3811 = vunpack.c.h.b16 %v1090
    %v3812 = vunpack.c.l.b16 %v1091
    %v3813 = vunpack.c.h.b16 %v1091
    %v3814 = vunpack.c.l.b16 %v1092
    %v3815 = vunpack.c.h.b16 %v1092
    %v3816 = vunpack.c.l.b16 %v1093
    %v3817 = vunpack.c.h.b16 %v1093
    %v3818 = vunpack.c.l.b16 %v1094
    %v3819 = vunpack.c.h.b16 %v1094
    %v3820 = vunpack.c.l.b16 %v1095
    %v3821 = vunpack.c.h.b16 %v1095
    %v3822 = vunpack.c.l.b16 %v1096
    %v3823 = vunpack.c.h.b16 %v1096
    %v3824 = vunpack.c.l.b16 %v1097
    %v3825 = vunpack.c.h.b16 %v1097
    %v3826 = vunpack.c.l.b16 %v1098
    %v3827 = vunpack.c.h.b16 %v1098
    %v3828 = vunpack.c.l.b16 %v1099
    %v3829 = vunpack.c.h.b16 %v1099
    %v3830 = vunpack.c.l.b16 %v1100
    %v3831 = vunpack.c.h.b16 %v1100
    %v3832 = vunpack.c.l.b16 %v1101
    %v3833 = vunpack.c.h.b16 %v1101
    %v3834 = vunpack.c.l.b16 %v1102
    %v3835 = vunpack.c.h.b16 %v1102
    %v3836 = vunpack.c.l.b16 %v1103
    %v3837 = vunpack.c.h.b16 %v1103
    %v3838 = vunpack.c.l.b16 %v1104
    %v3839 = vunpack.c.h.b16 %v1104
    %v3840 = vunpack.c.l.b16 %v1105
    %v3841 = vunpack.c.h.b16 %v1105
    %v3842 = vunpack.c.l.b16 %v1106
    %v3843 = vunpack.c.h.b16 %v1106
    %v3844 = vunpack.c.l.b16 %v1107
    %v3845 = vunpack.c.h.b16 %v1107
    %v3846 = vunpack.c.l.b16 %v1108
    %v3847 = vunpack.c.h.b16 %v1108
    %v3848 = vunpack.c.l.b16 %v1109
    %v3849 = vunpack.c.h.b16 %v1109
    %v3850 = vunpack.c.l.b16 %v1110
    %v3851 = vunpack.c.h.b16 %v1110
    %v3852 = vunpack.c.l.b16 %v1111
    %v3853 = vunpack.c.h.b16 %v1111
    %v3854 = vunpack.c.l.b16 %v1112
    %v3855 = vunpack.c.h.b16 %v1112
    %v3856 = vunpack.c.l.b16 %v1113
    %v3857 = vunpack.c.h.b16 %v1113
    %v3858 = vunpack.c.l.b16 %v1114
    %v3859 = vunpack.c.h.b16 %v1114
    %v3860 = vunpack.c.l.b16 %v1115
    %v3861 = vunpack.c.h.b16 %v1115
    %v3862 = vunpack.c.l.b16 %v1116
    %v3863 = vunpack.c.h.b16 %v1116
    %v3864 = vunpack.c.l.b16 %v1117
    %v3865 = vunpack.c.h.b16 %v1117
    %v3866 = vunpack.c.l.b16 %v1118
    %v3867 = vunpack.c.h.b16 %v1118
    %v3868 = vunpack.c.l.b16 %v1119
    %v3869 = vunpack.c.h.b16 %v1119
    %v3870 = vunpack.c.l.b16 %v1120
    %v3871 = vunpack.c.h.b16 %v1120
    %v3872 = vunpack.c.l.b16 %v1121
    %v3873 = vunpack.c.h.b16 %v1121
    %v3874 = vunpack.c.l.b16 %v1122
    %v3875 = vunpack.c.h.b16 %v1122
    %v3876 = vunpack.c.l.b16 %v1123
    %v3877 = vunpack.c.h.b16 %v1123
    %v3878 = vunpack.c.l.b16 %v1124
    %v3879 = vunpack.c.h.b16 %v1124
    %v3880 = vunpack.c.l.b16 %v1125
    %v3881 = vunpack.c.h.b16 %v1125
    %v3882 = vunpack.c.l.b16 %v1126
    %v3883 = vunpack.c.h.b16 %v1126
    %v3884 = vunpack.c.l.b16 %v1127
    %v3885 = vunpack.c.h.b16 %v1127
    %v3886 = vunpack.c.l.b16 %v1128
    %v3887 = vunpack.c.h.b16 %v1128
    %v3888 = vunpack.c.l.b16 %v1129
    %v3889 = vunpack.c.h.b16 %v1129
    %v3890 = vunpack.c.l.b16 %v1130
    %v3891 = vunpack.c.h.b16 %v1130
    %v3892 = vunpack.c.l.b16 %v1131
    %v3893 = vunpack.c.h.b16 %v1131
    %v3894 = vunpack.c.l.b16 %v1132
    %v3895 = vunpack.c.h.b16 %v1132
    %v3896 = vunpack.c.l.b16 %v1133
    %v3897 = vunpack.c.h.b16 %v1133
    %v3898 = vunpack.c.l.b16 %v1134
    %v3899 = vunpack.c.h.b16 %v1134
    %v3900 = vunpack.c.l.b16 %v1135
    %v3901 = vunpack.c.h.b16 %v1135
    %v3902 = vunpack.c.l.b16 %v1136
    %v3903 = vunpack.c.h.b16 %v1136
    %v3904 = vunpack.c.l.b16 %v1137
    %v3905 = vunpack.c.h.b16 %v1137
    %v3906 = vunpack.c.l.b16 %v1138
    %v3907 = vunpack.c.h.b16 %v1138
    %v3908 = vunpack.c.l.b16 %v1139
    %v3909 = vunpack.c.h.b16 %v1139
    %v3910 = vunpack.c.l.b16 %v1140
    %v3911 = vunpack.c.h.b16 %v1140
    %v3912 = vunpack.c.l.b16 %v1141
    %v3913 = vunpack.c.h.b16 %v1141
    %v3914 = vunpack.c.l.b16 %v1142
    %v3915 = vunpack.c.h.b16 %v1142
    %v3916 = vunpack.c.l.b16 %v1143
    %v3917 = vunpack.c.h.b16 %v1143
    %v3918 = vunpack.c.l.b16 %v1144
    %v3919 = vunpack.c.h.b16 %v1144
    %v3920 = vunpack.c.l.b16 %v1145
    %v3921 = vunpack.c.h.b16 %v1145
    %v3922 = vunpack.c.l.b16 %v1146
    %v3923 = vunpack.c.h.b16 %v1146
    %v3924 = vunpack.c.l.b16 %v1147
    %v3925 = vunpack.c.h.b16 %v1147
    %v3926 = vunpack.c.l.b16 %v1148
    %v3927 = vunpack.c.h.b16 %v1148
    %v3928 = vunpack.c.l.b16 %v1149
    %v3929 = vunpack.c.h.b16 %v1149
    %v3930 = vunpack.c.l.b16 %v1150
    %v3931 = vunpack.c.h.b16 %v1150
    %v3932 = vunpack.c.l.b16 %v1151
    %v3933 = vunpack.c.h.b16 %v1151
    %v3934 = vunpack.c.l.b16 %v1152
    %v3935 = vunpack.c.h.b16 %v1152
    %v3936 = vunpack.c.l.b16 %v1153
    %v3937 = vunpack.c.h.b16 %v1153
    %v3938 = vunpack.c.l.b16 %v1154
    %v3939 = vunpack.c.h.b16 %v1154
    %v3940 = vunpack.c.l.b16 %v1155
    %v3941 = vunpack.c.h.b16 %v1155
    %v3942 = vunpack.c.l.b16 %v1156
    %v3943 = vunpack.c.h.b16 %v1156
    %v3944 = vunpack.c.l.b16 %v1157
    %v3945 = vunpack.c.h.b16 %v1157
    %v3946 = vunpack.c.l.b16 %v1158
    %v3947 = vunpack.c.h.b16 %v1158
    %v3948 = vunpack.c.l.b16 %v1159
    %v3949 = vunpack.c.h.b16 %v1159
    %v3950 = vunpack.c.l.b16 %v1160
    %v3951 = vunpack.c.h.b16 %v1160
    %v3952 = vunpack.c.l.b16 %v1161
    %v3953 = vunpack.c.h.b16 %v1161
    %v3954 = vunpack.c.l.b16 %v1162
    %v3955 = vunpack.c.h.b16 %v1162
    %v3956 = vunpack.c.l.b16 %v1163
    %v3957 = vunpack.c.h.b16 %v1163
    %v3958 = vunpack.c.l.b16 %v1164
    %v3959 = vunpack.c.h.b16 %v1164
    %v3960 = vunpack.c.l.b16 %v1165
    %v3961 = vunpack.c.h.b16 %v1165
    %v3962 = vunpack.c.l.b16 %v1166
    %v3963 = vunpack.c.h.b16 %v1166
    %v3964 = vunpack.c.l.b16 %v1167
    %v3965 = vunpack.c.h.b16 %v1167
    %v3966 = vunpack.c.l.b16 %v1168
    %v3967 = vunpack.c.h.b16 %v1168
    %v3968 = vunpack.c.l.b16 %v1169
    %v3969 = vunpack.c.h.b16 %v1169
    %v3970 = vunpack.c.l.b16 %v1170
    %v3971 = vunpack.c.h.b16 %v1170
    %v3972 = vunpack.c.l.b16 %v1171
    %v3973 = vunpack.c.h.b16 %v1171
    %v3974 = vunpack.c.l.b16 %v1172
    %v3975 = vunpack.c.h.b16 %v1172
    %v3976 = vunpack.c.l.b16 %v1173
    %v3977 = vunpack.c.h.b16 %v1173
    %v3978 = vunpack.c.l.b16 %v1174
    %v3979 = vunpack.c.h.b16 %v1174
    %v3980 = vunpack.c.l.b16 %v1175
    %v3981 = vunpack.c.h.b16 %v1175
    %v3982 = vunpack.c.l.b16 %v1176
    %v3983 = vunpack.c.h.b16 %v1176
    %v3984 = vunpack.c.l.b16 %v1177
    %v3985 = vunpack.c.h.b16 %v1177
    %v3986 = vunpack.c.l.b16 %v1178
    %v3987 = vunpack.c.h.b16 %v1178
    %v3988 = vunpack.c.l.b16 %v1179
    %v3989 = vunpack.c.h.b16 %v1179
    %v3990 = vunpack.c.l.b16 %v1180
    %v3991 = vunpack.c.h.b16 %v1180
    %v3992 = vunpack.c.l.b16 %v1181
    %v3993 = vunpack.c.h.b16 %v1181
    %v3994 = vunpack.c.l.b16 %v1182
    %v3995 = vunpack.c.h.b16 %v1182
    %v3996 = vunpack.c.l.b16 %v1183
    %v3997 = vunpack.c.h.b16 %v1183
    %v3998 = vunpack.c.l.b16 %v1184
    %v3999 = vunpack.c.h.b16 %v1184
    %v4000 = vunpack.c.l.b16 %v1185
    %v4001 = vunpack.c.h.b16 %v1185
    %v4002 = vunpack.c.l.b16 %v1186
    %v4003 = vunpack.c.h.b16 %v1186
    %v4004 = vunpack.c.l.b16 %v1187
    %v4005 = vunpack.c.h.b16 %v1187
    %v4006 = vunpack.c.l.b16 %v1188
    %v4007 = vunpack.c.h.b16 %v1188
    %v4008 = vunpack.c.l.b16 %v1189
    %v4009 = vunpack.c.h.b16 %v1189
    %v4010 = vunpack.c.l.b16 %v1190
    %v4011 = vunpack.c.h.b16 %v1190
    %v4012 = vunpack.c.l.b16 %v1191
    %v4013 = vunpack.c.h.b16 %v1191
    %v4014 = vunpack.c.l.b16 %v1192
    %v4015 = vunpack.c.h.b16 %v1192
    %v4016 = vunpack.c.l.b16 %v1193
    %v4017 = vunpack.c.h.b16 %v1193
    %v4018 = vunpack.c.l.b16 %v1194
    %v4019 = vunpack.c.h.b16 %v1194
    %v4020 = vunpack.c.l.b16 %v1195
    %v4021 = vunpack.c.h.b16 %v1195
    %v4022 = vunpack.c.l.b16 %v1196
    %v4023 = vunpack.c.h.b16 %v1196
    %v4024 = vunpack.c.l.b16 %v1197
    %v4025 = vunpack.c.h.b16 %v1197
    %v4026 = vunpack.c.l.b16 %v1198
    %v4027 = vunpack.c.h.b16 %v1198
    %v4028 = vunpack.c.l.b16 %v1199
    %v4029 = vunpack.c.h.b16 %v1199
    %v4030 = vunpack.c.l.b16 %v1200
    %v4031 = vunpack.c.h.b16 %v1200
    %v4032 = vunpack.c.l.b16 %v1201
    %v4033 = vunpack.c.h.b16 %v1201
    %v4034 = vunpack.c.l.b16 %v1202
    %v4035 = vunpack.c.h.b16 %v1202
    %v4036 = vunpack.c.l.b16 %v1203
    %v4037 = vunpack.c.h.b16 %v1203
    %v4038 = vunpack.c.l.b16 %v1204
    %v4039 = vunpack.c.h.b16 %v1204
    %v4040 = vunpack.c.l.b16 %v1205
    %v4041 = vunpack.c.h.b16 %v1205
    %v4042 = vunpack.c.l.b16 %v1206
    %v4043 = vunpack.c.h.b16 %v1206
    %v4044 = vunpack.c.l.b16 %v1207
    %v4045 = vunpack.c.h.b16 %v1207
    %v4046 = vunpack.c.l.b16 %v1208
    %v4047 = vunpack.c.h.b16 %v1208
    %v4048 = vunpack.c.l.b16 %v1209
    %v4049 = vunpack.c.h.b16 %v1209
    %v4050 = vunpack.c.l.b16 %v1210
    %v4051 = vunpack.c.h.b16 %v1210
    %v4052 = vunpack.c.l.b16 %v1211
    %v4053 = vunpack.c.h.b16 %v1211
    %v4054 = vunpack.c.l.b16 %v1212
    %v4055 = vunpack.c.h.b16 %v1212
    %v4056 = vunpack.c.l.b16 %v1213
    %v4057 = vunpack.c.h.b16 %v1213
    %v4058 = vunpack.c.l.b16 %v1214
    %v4059 = vunpack.c.h.b16 %v1214
    %v4060 = vunpack.c.l.b16 %v1215
    %v4061 = vunpack.c.h.b16 %v1215
    %v4062 = vunpack.c.l.b16 %v1216
    %v4063 = vunpack.c.h.b16 %v1216
    %v4064 = vunpack.c.l.b16 %v1217
    %v4065 = vunpack.c.h.b16 %v1217
    %v4066 = vunpack.c.l.b16 %v1218
    %v4067 = vunpack.c.h.b16 %v1218
    %v4068 = vunpack.c.l.b16 %v1219
    %v4069 = vunpack.c.h.b16 %v1219
    %v4070 = vunpack.c.l.b16 %v1220
    %v4071 = vunpack.c.h.b16 %v1220
    %v4072 = vunpack.c.l.b16 %v1221
    %v4073 = vunpack.c.h.b16 %v1221
    %v4074 = vunpack.c.l.b16 %v1222
    %v4075 = vunpack.c.h.b16 %v1222
    %v4076 = vunpack.c.l.b16 %v1223
    %v4077 = vunpack.c.h.b16 %v1223
    %v4078 = vunpack.c.l.b16 %v1224
    %v4079 = vunpack.c.h.b16 %v1224
    %v4080 = vunpack.c.l.b16 %v1225
    %v4081 = vunpack.c.h.b16 %v1225
    %v4082 = vunpack.c.l.b16 %v1226
    %v4083 = vunpack.c.h.b16 %v1226
    %v4084 = vunpack.c.l.b16 %v1227
    %v4085 = vunpack.c.h.b16 %v1227
    %v4086 = vunpack.c.l.b16 %v1228
    %v4087 = vunpack.c.h.b16 %v1228
    %v4088 = vunpack.c.l.b16 %v1229
    %v4089 = vunpack.c.h.b16 %v1229
    %v4090 = vunpack.c.l.b16 %v1230
    %v4091 = vunpack.c.h.b16 %v1230
    %v4092 = vunpack.c.l.b16 %v1231
    %v4093 = vunpack.c.h.b16 %v1231
    %v4094 = vunpack.c.l.b16 %v1232
    %v4095 = vunpack.c.h.b16 %v1232
    %v4096 = vunpack.c.l.b16 %v1233
    %v4097 = vunpack.c.h.b16 %v1233
    %v4098 = vunpack.c.l.b16 %v1234
    %v4099 = vunpack.c.h.b16 %v1234
    %v4100 = vunpack.c.l.b16 %v1235
    %v4101 = vunpack.c.h.b16 %v1235
    %v4102 = vunpack.c.l.b16 %v1236
    %v4103 = vunpack.c.h.b16 %v1236
    %v4104 = vunpack.c.l.b16 %v1237
    %v4105 = vunpack.c.h.b16 %v1237
    %v4106 = vunpack.c.l.b16 %v1238
    %v4107 = vunpack.c.h.b16 %v1238
    %v4108 = vunpack.c.l.b16 %v1239
    %v4109 = vunpack.c.h.b16 %v1239
    %v4110 = vunpack.c.l.b16 %v1240
    %v4111 = vunpack.c.h.b16 %v1240
    %v4112 = vunpack.c.l.b16 %v1241
    %v4113 = vunpack.c.h.b16 %v1241
    %v4114 = vunpack.c.l.b16 %v1242
    %v4115 = vunpack.c.h.b16 %v1242
    %v4116 = vunpack.c.l.b16 %v1243
    %v4117 = vunpack.c.h.b16 %v1243
    %v4118 = vunpack.c.l.b16 %v1244
    %v4119 = vunpack.c.h.b16 %v1244
    %v4120 = vunpack.c.l.b16 %v1245
    %v4121 = vunpack.c.h.b16 %v1245
    %v4122 = vunpack.c.l.b16 %v1246
    %v4123 = vunpack.c.h.b16 %v1246
    %v4124 = vunpack.c.l.b16 %v1247
    %v4125 = vunpack.c.h.b16 %v1247
    %v4126 = vunpack.c.l.b16 %v1248
    %v4127 = vunpack.c.h.b16 %v1248
    %v4128 = vunpack.c.l.b16 %v1249
    %v4129 = vunpack.c.h.b16 %v1249
    %v4130 = vunpack.c.l.b16 %v1250
    %v4131 = vunpack.c.h.b16 %v1250
    %v4132 = vunpack.c.l.b16 %v1251
    %v4133 = vunpack.c.h.b16 %v1251
    %v4134 = vunpack.c.l.b16 %v1252
    %v4135 = vunpack.c.h.b16 %v1252
    %v4136 = vunpack.c.l.b16 %v1253
    %v4137 = vunpack.c.h.b16 %v1253
    %v4138 = vunpack.c.l.b16 %v1254
    %v4139 = vunpack.c.h.b16 %v1254
    %v4140 = vunpack.c.l.b16 %v1255
    %v4141 = vunpack.c.h.b16 %v1255
    %v4142 = vunpack.c.l.b16 %v1256
    %v4143 = vunpack.c.h.b16 %v1256
    %v4144 = vunpack.c.l.b16 %v1257
    %v4145 = vunpack.c.h.b16 %v1257
    %v4146 = vunpack.c.l.b16 %v1258
    %v4147 = vunpack.c.h.b16 %v1258
    %v4148 = vunpack.c.l.b16 %v1259
    %v4149 = vunpack.c.h.b16 %v1259
    %v4150 = vunpack.c.l.b16 %v1260
    %v4151 = vunpack.c.h.b16 %v1260
    %v4152 = vunpack.c.l.b16 %v1261
    %v4153 = vunpack.c.h.b16 %v1261
    %v4154 = vunpack.c.l.b16 %v1262
    %v4155 = vunpack.c.h.b16 %v1262
    %v4156 = vunpack.c.l.b16 %v1263
    %v4157 = vunpack.c.h.b16 %v1263
    %v4158 = vunpack.c.l.b16 %v1264
    %v4159 = vunpack.c.h.b16 %v1264
    %v4160 = vunpack.c.l.b16 %v1265
    %v4161 = vunpack.c.h.b16 %v1265
    %v4162 = vunpack.c.l.b16 %v1266
    %v4163 = vunpack.c.h.b16 %v1266
    %v4164 = vunpack.c.l.b16 %v1267
    %v4165 = vunpack.c.h.b16 %v1267
    %v4166 = vunpack.c.l.b16 %v1268
    %v4167 = vunpack.c.h.b16 %v1268
    %v4168 = vunpack.c.l.b16 %v1269
    %v4169 = vunpack.c.h.b16 %v1269
    %v4170 = vunpack.c.l.b16 %v1270
    %v4171 = vunpack.c.h.b16 %v1270
    %v4172 = vunpack.c.l.b16 %v1271
    %v4173 = vunpack.c.h.b16 %v1271
    %v4174 = vunpack.c.l.b16 %v1272
    %v4175 = vunpack.c.h.b16 %v1272
    %v4176 = vunpack.c.l.b16 %v1273
    %v4177 = vunpack.c.h.b16 %v1273
    %v4178 = vunpack.c.l.b16 %v1274
    %v4179 = vunpack.c.h.b16 %v1274
    %v4180 = vunpack.c.l.b16 %v1275
    %v4181 = vunpack.c.h.b16 %v1275
    %v4182 = vunpack.c.l.b16 %v1276
    %v4183 = vunpack.c.h.b16 %v1276
    %v4184 = vunpack.c.l.b16 %v1277
    %v4185 = vunpack.c.h.b16 %v1277
    %v4186 = vunpack.c.l.b16 %v1278
    %v4187 = vunpack.c.h.b16 %v1278
    %v4188 = vunpack.c.l.b16 %v1279
    %v4189 = vunpack.c.h.b16 %v1279
    %v4190 = vunpack.c.l.b16 %v1280
    %v4191 = vunpack.c.h.b16 %v1280
    %v4192 = vunpack.c.l.b16 %v1281
    %v4193 = vunpack.c.h.b16 %v1281
    %v4194 = vunpack.c.l.b16 %v1282
    %v4195 = vunpack.c.h.b16 %v1282
    %v4196 = vunpack.c.l.b16 %v1283
    %v4197 = vunpack.c.h.b16 %v1283
    %v4198 = vunpack.c.l.b16 %v1284
    %v4199 = vunpack.c.h.b16 %v1284
    %v4200 = vunpack.c.l.b16 %v1285
    %v4201 = vunpack.c.h.b16 %v1285
    %v4202 = vunpack.c.l.b16 %v1286
    %v4203 = vunpack.c.h.b16 %v1286
    %v4204 = vunpack.c.l.b16 %v1287
    %v4205 = vunpack.c.h.b16 %v1287
    %v4206 = vunpack.c.l.b16 %v1288
    %v4207 = vunpack.c.h.b16 %v1288
    %v4208 = vunpack.c.l.b16 %v1289
    %v4209 = vunpack.c.h.b16 %v1289
    %v4210 = vunpack.c.l.b16 %v1290
    %v4211 = vunpack.c.h.b16 %v1290
    %v4212 = vunpack.c.l.b16 %v1291
    %v4213 = vunpack.c.h.b16 %v1291
    %v4214 = vunpack.c.l.b16 %v1292
    %v4215 = vunpack.c.h.b16 %v1292
    %v4216 = vunpack.c.l.b16 %v1293
    %v4217 = vunpack.c.h.b16 %v1293
    %v4218 = vunpack.c.l.b16 %v1294
    %v4219 = vunpack.c.h.b16 %v1294
    %v4220 = vunpack.c.l.b16 %v1295
    %v4221 = vunpack.c.h.b16 %v1295
    %v4222 = vunpack.c.l.b16 %v1296
    %v4223 = vunpack.c.h.b16 %v1296
    %v4224 = vunpack.c.l.b16 %v1297
    %v4225 = vunpack.c.h.b16 %v1297
    %v4226 = vunpack.c.l.b16 %v1298
    %v4227 = vunpack.c.h.b16 %v1298
    %v4228 = vunpack.c.l.b16 %v1299
    %v4229 = vunpack.c.h.b16 %v1299
    %v4230 = vunpack.c.l.b16 %v1300
    %v4231 = vunpack.c.h.b16 %v1300
    %v4232 = vunpack.c.l.b16 %v1301
    %v4233 = vunpack.c.h.b16 %v1301
    %v4234 = vunpack.c.l.b16 %v1302
    %v4235 = vunpack.c.h.b16 %v1302
    %v4236 = vunpack.c.l.b16 %v1303
    %v4237 = vunpack.c.h.b16 %v1303
    %v4238 = vunpack.c.l.b16 %v1304
    %v4239 = vunpack.c.h.b16 %v1304
    %v4240 = vunpack.c.l.b16 %v1305
    %v4241 = vunpack.c.h.b16 %v1305
    %v4242 = vunpack.c.l.b16 %v1306
    %v4243 = vunpack.c.h.b16 %v1306
    %v4244 = vunpack.c.l.b16 %v1307
    %v4245 = vunpack.c.h.b16 %v1307
    %v4246 = vunpack.c.l.b16 %v1308
    %v4247 = vunpack.c.h.b16 %v1308
    %v4248 = vunpack.c.l.b16 %v1309
    %v4249 = vunpack.c.h.b16 %v1309
    %v4250 = vunpack.c.l.b16 %v1310
    %v4251 = vunpack.c.h.b16 %v1310
    %v4252 = vunpack.c.l.b16 %v1311
    %v4253 = vunpack.c.h.b16 %v1311
    %v4254 = vunpack.c.l.b16 %v1312
    %v4255 = vunpack.c.h.b16 %v1312
    %v4256 = vunpack.c.l.b16 %v1313
    %v4257 = vunpack.c.h.b16 %v1313
    %v4258 = vunpack.c.l.b16 %v1314
    %v4259 = vunpack.c.h.b16 %v1314
    %v4260 = vunpack.c.l.b16 %v1315
    %v4261 = vunpack.c.h.b16 %v1315
    %v4262 = vunpack.c.l.b16 %v1316
    %v4263 = vunpack.c.h.b16 %v1316
    %v4264 = vunpack.c.l.b16 %v1317
    %v4265 = vunpack.c.h.b16 %v1317
    %v4266 = vunpack.c.l.b16 %v1318
    %v4267 = vunpack.c.h.b16 %v1318
    %v4268 = vunpack.c.l.b16 %v1319
    %v4269 = vunpack.c.h.b16 %v1319
    %v4270 = vunpack.c.l.b16 %v1320
    %v4271 = vunpack.c.h.b16 %v1320
    %v4272 = vunpack.c.l.b16 %v1321
    %v4273 = vunpack.c.h.b16 %v1321
    %v4274 = vunpack.c.l.b16 %v1322
    %v4275 = vunpack.c.h.b16 %v1322
    %v4276 = vunpack.c.l.b16 %v1323
    %v4277 = vunpack.c.h.b16 %v1323
    %v4278 = vunpack.c.l.b16 %v1324
    %v4279 = vunpack.c.h.b16 %v1324
    %v4280 = vunpack.c.l.b16 %v1325
    %v4281 = vunpack.c.h.b16 %v1325
    %v4282 = vunpack.c.l.b16 %v1326
    %v4283 = vunpack.c.h.b16 %v1326
    %v4284 = vunpack.c.l.b16 %v1327
    %v4285 = vunpack.c.h.b16 %v1327
    %v4286 = vunpack.c.l.b16 %v1328
    %v4287 = vunpack.c.h.b16 %v1328
    %v4288 = vunpack.c.l.b16 %v1329
    %v4289 = vunpack.c.h.b16 %v1329
    %v4290 = vunpack.c.l.b16 %v1330
    %v4291 = vunpack.c.h.b16 %v1330
    %v4292 = vunpack.c.l.b16 %v1331
    %v4293 = vunpack.c.h.b16 %v1331
    %v4294 = vunpack.c.l.b16 %v1332
    %v4295 = vunpack.c.h.b16 %v1332
    %v4296 = vunpack.c.l.b16 %v1333
    %v4297 = vunpack.c.h.b16 %v1333
    %v4298 = vunpack.c.l.b16 %v1334
    %v4299 = vunpack.c.h.b16 %v1334
    %v4300 = vunpack.c.l.b16 %v1335
    %v4301 = vunpack.c.h.b16 %v1335
    %v4302 = vunpack.c.l.b16 %v1336
    %v4303 = vunpack.c.h.b16 %v1336
    %v4304 = vunpack.c.l.b16 %v1337
    %v4305 = vunpack.c.h.b16 %v1337
    %v4306 = vunpack.c.l.b16 %v1338
    %v4307 = vunpack.c.h.b16 %v1338
    %v4308 = vunpack.c.l.b16 %v1339
    %v4309 = vunpack.c.h.b16 %v1339
    %v4310 = vunpack.c.l.b16 %v1340
    %v4311 = vunpack.c.h.b16 %v1340
    %v4312 = vunpack.c.l.b16 %v1341
    %v4313 = vunpack.c.h.b16 %v1341
    %v4314 = vunpack.c.l.b16 %v1342
    %v4315 = vunpack.c.h.b16 %v1342
    %v4316 = vunpack.c.l.b16 %v1343
    %v4317 = vunpack.c.h.b16 %v1343
    %v4318 = vunpack.c.l.b16 %v1344
    %v4319 = vunpack.c.h.b16 %v1344
    %v4320 = vunpack.c.l.b16 %v1345
    %v4321 = vunpack.c.h.b16 %v1345
    %v4322 = vunpack.c.l.b16 %v1346
    %v4323 = vunpack.c.h.b16 %v1346
    %v4324 = vunpack.c.l.b16 %v1347
    %v4325 = vunpack.c.h.b16 %v1347
    %v4326 = vunpack.c.l.b16 %v1348
    %v4327 = vunpack.c.h.b16 %v1348
    %v4328 = vunpack.c.l.b16 %v1349
    %v4329 = vunpack.c.h.b16 %v1349
    %v4330 = vunpack.c.l.b16 %v1350
    %v4331 = vunpack.c.h.b16 %v1350
    %v4332 = vunpack.c.l.b16 %v1351
    %v4333 = vunpack.c.h.b16 %v1351
    %v4334 = vunpack.c.l.b16 %v1352
    %v4335 = vunpack.c.h.b16 %v1352
    %v4336 = vunpack.c.l.b16 %v1353
    %v4337 = vunpack.c.h.b16 %v1353
    %v4338 = vunpack.c.l.b16 %v1354
    %v4339 = vunpack.c.h.b16 %v1354
    %v4340 = vunpack.c.l.b16 %v1355
    %v4341 = vunpack.c.h.b16 %v1355
    %v4342 = vunpack.c.l.b16 %v1356
    %v4343 = vunpack.c.h.b16 %v1356
    %v4344 = vunpack.c.l.b16 %v1357
    %v4345 = vunpack.c.h.b16 %v1357
    %v4346 = vunpack.c.l.b16 %v1358
    %v4347 = vunpack.c.h.b16 %v1358
    %v4348 = vunpack.c.l.b16 %v1359
    %v4349 = vunpack.c.h.b16 %v1359
    %v4350 = vunpack.c.l.b16 %v1360
    %v4351 = vunpack.c.h.b16 %v1360
    %v4352 = vunpack.c.l.b16 %v1361
    %v4353 = vunpack.c.h.b16 %v1361
    %v4354 = vunpack.c.l.b16 %v1362
    %v4355 = vunpack.c.h.b16 %v1362
    %v4356 = vunpack.c.l.b16 %v1363
    %v4357 = vunpack.c.h.b16 %v1363
    %v4358 = vunpack.c.l.b16 %v1364
    %v4359 = vunpack.c.h.b16 %v1364
    %v4360 = vunpack.c.l.b16 %v1365
    %v4361 = vunpack.c.h.b16 %v1365
    %v4362 = vunpack.c.l.b16 %v1366
    %v4363 = vunpack.c.h.b16 %v1366
    %v4364 = vunpack.c.l.b16 %v1367
    %v4365 = vunpack.c.h.b16 %v1367
    %v4366 = vunpack.c.l.b16 %v1368
    %v4367 = vunpack.c.h.b16 %v1368
    %v4368 = vunpack.c.l.b16 %v1369
    %v4369 = vunpack.c.h.b16 %v1369
    %v4370 = vunpack.c.l.b16 %v1370
    %v4371 = vunpack.c.h.b16 %v1370
    %v4372 = vunpack.c.l.b16 %v1371
    %v4373 = vunpack.c.h.b16 %v1371
    %v4374 = vunpack.c.l.b16 %v1372
    %v4375 = vunpack.c.h.b16 %v1372
    %v4376 = vunpack.c.l.b16 %v1373
    %v4377 = vunpack.c.h.b16 %v1373
    %v4378 = vunpack.c.l.b16 %v1374
    %v4379 = vunpack.c.h.b16 %v1374
    %v4380 = vunpack.c.l.b16 %v1375
    %v4381 = vunpack.c.h.b16 %v1375
    %v4382 = vunpack.c.l.b16 %v1376
    %v4383 = vunpack.c.h.b16 %v1376
    %v4384 = vunpack.c.l.b16 %v1377
    %v4385 = vunpack.c.h.b16 %v1377
    %v4386 = vunpack.c.l.b16 %v1378
    %v4387 = vunpack.c.h.b16 %v1378
    %v4388 = vunpack.c.l.b16 %v1379
    %v4389 = vunpack.c.h.b16 %v1379
    %v4390 = vunpack.c.l.b16 %v1380
    %v4391 = vunpack.c.h.b16 %v1380
    %v4392 = vunpack.c.l.b16 %v1381
    %v4393 = vunpack.c.h.b16 %v1381
    %v4394 = vunpack.c.l.b16 %v1382
    %v4395 = vunpack.c.h.b16 %v1382
    %v4396 = vunpack.c.l.b16 %v1383
    %v4397 = vunpack.c.h.b16 %v1383
    %v4398 = vunpack.c.l.b16 %v1384
    %v4399 = vunpack.c.h.b16 %v1384
    %v4400 = vunpack.c.l.b16 %v1385
    %v4401 = vunpack.c.h.b16 %v1385
    %v4402 = vunpack.c.l.b16 %v1386
    %v4403 = vunpack.c.h.b16 %v1386
    %v4404 = vunpack.c.l.b16 %v1387
    %v4405 = vunpack.c.h.b16 %v1387
    %v4406 = vunpack.c.l.b16 %v1388
    %v4407 = vunpack.c.h.b16 %v1388
    %v4408 = vunpack.c.l.b16 %v1389
    %v4409 = vunpack.c.h.b16 %v1389
    %v4410 = vunpack.c.l.b16 %v1390
    %v4411 = vunpack.c.h.b16 %v1390
    %v4412 = vunpack.c.l.b16 %v1391
    %v4413 = vunpack.c.h.b16 %v1391
    %v4414 = vunpack.c.l.b16 %v1392
    %v4415 = vunpack.c.h.b16 %v1392
    %v4416 = vunpack.c.l.b16 %v1393
    %v4417 = vunpack.c.h.b16 %v1393
    %v4418 = vunpack.c.l.b16 %v1394
    %v4419 = vunpack.c.h.b16 %v1394
    %v4420 = vunpack.c.l.b16 %v1395
    %v4421 = vunpack.c.h.b16 %v1395
    %v4422 = vunpack.c.l.b16 %v1396
    %v4423 = vunpack.c.h.b16 %v1396
    %v4424 = vunpack.c.l.b16 %v1397
    %v4425 = vunpack.c.h.b16 %v1397
    %v4426 = vunpack.c.l.b16 %v1398
    %v4427 = vunpack.c.h.b16 %v1398
    %v4428 = vunpack.c.l.b16 %v1399
    %v4429 = vunpack.c.h.b16 %v1399
    %v4430 = vunpack.c.l.b16 %v1400
    %v4431 = vunpack.c.h.b16 %v1400
    %v4432 = vunpack.c.l.b16 %v1401
    %v4433 = vunpack.c.h.b16 %v1401
    %v4434 = vunpack.c.l.b16 %v1402
    %v4435 = vunpack.c.h.b16 %v1402
    %v4436 = vunpack.c.l.b16 %v1403
    %v4437 = vunpack.c.h.b16 %v1403
    %v4438 = vunpack.c.l.b16 %v1404
    %v4439 = vunpack.c.h.b16 %v1404
    %v4440 = vunpack.c.l.b16 %v1405
    %v4441 = vunpack.c.h.b16 %v1405
    %v4442 = vunpack.c.l.b16 %v1406
    %v4443 = vunpack.c.h.b16 %v1406
    %v4444 = vunpack.c.l.b16 %v1407
    %v4445 = vunpack.c.h.b16 %v1407
    %v4446 = vunpack.c.l.b16 %v1408
    %v4447 = vunpack.c.h.b16 %v1408
    %v4448 = vunpack.c.l.b16 %v1409
    %v4449 = vunpack.c.h.b16 %v1409
    %v4450 = vunpack.c.l.b16 %v1410
    %v4451 = vunpack.c.h.b16 %v1410
    %v4452 = vunpack.c.l.b16 %v1411
    %v4453 = vunpack.c.h.b16 %v1411
    %v4454 = vunpack.c.l.b16 %v1412
    %v4455 = vunpack.c.h.b16 %v1412
    %v4456 = vunpack.c.l.b16 %v1413
    %v4457 = vunpack.c.h.b16 %v1413
    %v4458 = vunpack.c.l.b16 %v1414
    %v4459 = vunpack.c.h.b16 %v1414
    %v4460 = vunpack.c.l.b16 %v1415
    %v4461 = vunpack.c.h.b16 %v1415
    %v4462 = vunpack.c.l.b16 %v1416
    %v4463 = vunpack.c.h.b16 %v1416
    %v4464 = vunpack.c.l.b16 %v1417
    %v4465 = vunpack.c.h.b16 %v1417
    %v4466 = vunpack.c.l.b16 %v1418
    %v4467 = vunpack.c.h.b16 %v1418
    %v4468 = vunpack.c.l.b16 %v1419
    %v4469 = vunpack.c.h.b16 %v1419
    %v4470 = vunpack.c.l.b16 %v1420
    %v4471 = vunpack.c.h.b16 %v1420
    %v4472 = vunpack.c.l.b16 %v1421
    %v4473 = vunpack.c.h.b16 %v1421
    %v4474 = vunpack.c.l.b16 %v1422
    %v4475 = vunpack.c.h.b16 %v1422
    %v4476 = vunpack.c.l.b16 %v1423
    %v4477 = vunpack.c.h.b16 %v1423
    %v4478 = vunpack.c.l.b16 %v1424
    %v4479 = vunpack.c.h.b16 %v1424
    %v4480 = vunpack.c.l.b16 %v1425
    %v4481 = vunpack.c.h.b16 %v1425
    %v4482 = vunpack.c.l.b16 %v1426
    %v4483 = vunpack.c.h.b16 %v1426
    %v4484 = vunpack.c.l.b16 %v1427
    %v4485 = vunpack.c.h.b16 %v1427
    %v4486 = vunpack.c.l.b16 %v1428
    %v4487 = vunpack.c.h.b16 %v1428
    %v4488 = vunpack.c.l.b16 %v1429
    %v4489 = vunpack.c.h.b16 %v1429
    %v4490 = vunpack.c.l.b16 %v1430
    %v4491 = vunpack.c.h.b16 %v1430
    %v4492 = vunpack.c.l.b16 %v1431
    %v4493 = vunpack.c.h.b16 %v1431
    %v4494 = vunpack.c.l.b16 %v1432
    %v4495 = vunpack.c.h.b16 %v1432
    %v4496 = vunpack.c.l.b16 %v1433
    %v4497 = vunpack.c.h.b16 %v1433
    %v4498 = vunpack.c.l.b16 %v1434
    %v4499 = vunpack.c.h.b16 %v1434
    %v4500 = vunpack.c.l.b16 %v1435
    %v4501 = vunpack.c.h.b16 %v1435
    %v4502 = vunpack.c.l.b16 %v1436
    %v4503 = vunpack.c.h.b16 %v1436
    %v4504 = vunpack.c.l.b16 %v1437
    %v4505 = vunpack.c.h.b16 %v1437
    %v4506 = vunpack.c.l.b16 %v1438
    %v4507 = vunpack.c.h.b16 %v1438
    %v4508 = vunpack.c.l.b16 %v1439
    %v4509 = vunpack.c.h.b16 %v1439
    %v4510 = vunpack.c.l.b16 %v1440
    %v4511 = vunpack.c.h.b16 %v1440
    %v4512 = vunpack.c.l.b16 %v1441
    %v4513 = vunpack.c.h.b16 %v1441
    %v4514 = vpack.c.b16 %v2474, %v2466
    %v4515 = vpack.c.b16 %v2475, %v2467
    %v4516 = vpack.c.b16 %v2476, %v2468
    %v4517 = vpack.c.b16 %v2477, %v2469
    %v4518 = vpack.c.b16 %v2478, %v2470
    %v4519 = vpack.c.b16 %v2479, %v2471
    %v4520 = vpack.c.b16 %v2480, %v2472
    %v4521 = vpack.c.b16 %v2481, %v2473
    %v4522 = vpack.c.b16 %v2490, %v2482
    %v4523 = vpack.c.b16 %v2491, %v2483
    %v4524 = vpack.c.b16 %v2492, %v2484
    %v4525 = vpack.c.b16 %v2493, %v2485
    %v4526 = vpack.c.b16 %v2494, %v2486
    %v4527 = vpack.c.b16 %v2495, %v2487
    %v4528 = vpack.c.b16 %v2496, %v2488
    %v4529 = vpack.c.b16 %v2497, %v2489
    %v4530 = vpack.c.b16 %v2506, %v2498
    %v4531 = vpack.c.b16 %v2507, %v2499
    %v4532 = vpack.c.b16 %v2508, %v2500
    %v4533 = vpack.c.b16 %v2509, %v2501
    %v4534 = vpack.c.b16 %v2510, %v2502
    %v4535 = vpack.c.b16 %v2511, %v2503
    %v4536 = vpack.c.b16 %v2512, %v2504
    %v4537 = vpack.c.b16 %v2513, %v2505
    %v4538 = vpack.c.b16 %v2522, %v2514
    %v4539 = vpack.c.b16 %v2523, %v2515
    %v4540 = vpack.c.b16 %v2524, %v2516
    %v4541 = vpack.c.b16 %v2525, %v2517
    %v4542 = vpack.c.b16 %v2526, %v2518
    %v4543 = vpack.c.b16 %v2527, %v2519
    %v4544 = vpack.c.b16 %v2528, %v2520
    %v4545 = vpack.c.b16 %v2529, %v2521
    %v4546 = vpack.c.b16 %v2538, %v2530
    %v4547 = vpack.c.b16 %v2539, %v2531
    %v4548 = vpack.c.b16 %v2540, %v2532
    %v4549 = vpack.c.b16 %v2541, %v2533
    %v4550 = vpack.c.b16 %v2542, %v2534
    %v4551 = vpack.c.b16 %v2543, %v2535
    %v4552 = vpack.c.b16 %v2544, %v2536
    %v4553 = vpack.c.b16 %v2545, %v2537
    %v4554 = vpack.c.b16 %v2554, %v2546
    %v4555 = vpack.c.b16 %v2555, %v2547
    %v4556 = vpack.c.b16 %v2556, %v2548
    %v4557 = vpack.c.b16 %v2557, %v2549
    %v4558 = vpack.c.b16 %v2558, %v2550
    %v4559 = vpack.c.b16 %v2559, %v2551
    %v4560 = vpack.c.b16 %v2560, %v2552
    %v4561 = vpack.c.b16 %v2561, %v2553
    %v4562 = vpack.c.b16 %v2570, %v2562
    %v4563 = vpack.c.b16 %v2571, %v2563
    %v4564 = vpack.c.b16 %v2572, %v2564
    %v4565 = vpack.c.b16 %v2573, %v2565
    %v4566 = vpack.c.b16 %v2574, %v2566
    %v4567 = vpack.c.b16 %v2575, %v2567
    %v4568 = vpack.c.b16 %v2576, %v2568
    %v4569 = vpack.c.b16 %v2577, %v2569
    %v4570 = vpack.c.b16 %v2586, %v2578
    %v4571 = vpack.c.b16 %v2587, %v2579
    %v4572 = vpack.c.b16 %v2588, %v2580
    %v4573 = vpack.c.b16 %v2589, %v2581
    %v4574 = vpack.c.b16 %v2590, %v2582
    %v4575 = vpack.c.b16 %v2591, %v2583
    %v4576 = vpack.c.b16 %v2592, %v2584
    %v4577 = vpack.c.b16 %v2593, %v2585
    %v4578 = vpack.c.b16 %v2602, %v2594
    %v4579 = vpack.c.b16 %v2603, %v2595
    %v4580 = vpack.c.b16 %v2604, %v2596
    %v4581 = vpack.c.b16 %v2605, %v2597
    %v4582 = vpack.c.b16 %v2606, %v2598
    %v4583 = vpack.c.b16 %v2607, %v2599
    %v4584 = vpack.c.b16 %v2608, %v2600
    %v4585 = vpack.c.b16 %v2609, %v2601
    %v4586 = vpack.c.b16 %v2618, %v2610
    %v4587 = vpack.c.b16 %v2619, %v2611
    %v4588 = vpack.c.b16 %v2620, %v2612
    %v4589 = vpack.c.b16 %v2621, %v2613
    %v4590 = vpack.c.b16 %v2622, %v2614
    %v4591 = vpack.c.b16 %v2623, %v2615
    %v4592 = vpack.c.b16 %v2624, %v2616
    %v4593 = vpack.c.b16 %v2625, %v2617
    %v4594 = vpack.c.b16 %v2634, %v2626
    %v4595 = vpack.c.b16 %v2635, %v2627
    %v4596 = vpack.c.b16 %v2636, %v2628
    %v4597 = vpack.c.b16 %v2637, %v2629
    %v4598 = vpack.c.b16 %v2638, %v2630
    %v4599 = vpack.c.b16 %v2639, %v2631
    %v4600 = vpack.c.b16 %v2640, %v2632
    %v4601 = vpack.c.b16 %v2641, %v2633
    %v4602 = vpack.c.b16 %v2650, %v2642
    %v4603 = vpack.c.b16 %v2651, %v2643
    %v4604 = vpack.c.b16 %v2652, %v2644
    %v4605 = vpack.c.b16 %v2653, %v2645
    %v4606 = vpack.c.b16 %v2654, %v2646
    %v4607 = vpack.c.b16 %v2655, %v2647
    %v4608 = vpack.c.b16 %v2656, %v2648
    %v4609 = vpack.c.b16 %v2657, %v2649
    %v4610 = vpack.c.b16 %v2666, %v2658
    %v4611 = vpack.c.b16 %v2667, %v2659
    %v4612 = vpack.c.b16 %v2668, %v2660
    %v4613 = vpack.c.b16 %v2669, %v2661
    %v4614 = vpack.c.b16 %v2670, %v2662
    %v4615 = vpack.c.b16 %v2671, %v2663
    %v4616 = vpack.c.b16 %v2672, %v2664
    %v4617 = vpack.c.b16 %v2673, %v2665
    %v4618 = vpack.c.b16 %v2682, %v2674
    %v4619 = vpack.c.b16 %v2683, %v2675
    %v4620 = vpack.c.b16 %v2684, %v2676
    %v4621 = vpack.c.b16 %v2685, %v2677
    %v4622 = vpack.c.b16 %v2686, %v2678
    %v4623 = vpack.c.b16 %v2687, %v2679
    %v4624 = vpack.c.b16 %v2688, %v2680
    %v4625 = vpack.c.b16 %v2689, %v2681
    %v4626 = vpack.c.b16 %v2698, %v2690
    %v4627 = vpack.c.b16 %v2699, %v2691
    %v4628 = vpack.c.b16 %v2700, %v2692
    %v4629 = vpack.c.b16 %v2701, %v2693
    %v4630 = vpack.c.b16 %v2702, %v2694
    %v4631 = vpack.c.b16 %v2703, %v2695
    %v4632 = vpack.c.b16 %v2704, %v2696
    %v4633 = vpack.c.b16 %v2705, %v2697
    %v4634 = vpack.c.b16 %v2714, %v2706
    %v4635 = vpack.c.b16 %v2715, %v2707
    %v4636 = vpack.c.b16 %v2716, %v2708
    %v4637 = vpack.c.b16 %v2717, %v2709
    %v4638 = vpack.c.b16 %v2718, %v2710
    %v4639 = vpack.c.b16 %v2719, %v2711
    %v4640 = vpack.c.b16 %v2720, %v2712
    %v4641 = vpack.c.b16 %v2721, %v2713
    %v4642 = vpack.c.b16 %v2730, %v2722
    %v4643 = vpack.c.b16 %v2731, %v2723
    %v4644 = vpack.c.b16 %v2732, %v2724
    %v4645 = vpack.c.b16 %v2733, %v2725
    %v4646 = vpack.c.b16 %v2734, %v2726
    %v4647 = vpack.c.b16 %v2735, %v2727
    %v4648 = vpack.c.b16 %v2736, %v2728
    %v4649 = vpack.c.b16 %v2737, %v2729
    %v4650 = vpack.c.b16 %v2746, %v2738
    %v4651 = vpack.c.b16 %v2747, %v2739
    %v4652 = vpack.c.b16 %v2748, %v2740
    %v4653 = vpack.c.b16 %v2749, %v2741
    %v4654 = vpack.c.b16 %v2750, %v2742
    %v4655 = vpack.c.b16 %v2751, %v2743
    %v4656 = vpack.c.b16 %v2752, %v2744
    %v4657 = vpack.c.b16 %v2753, %v2745
    %v4658 = vpack.c.b16 %v2762, %v2754
    %v4659 = vpack.c.b16 %v2763, %v2755
    %v4660 = vpack.c.b16 %v2764, %v2756
    %v4661 = vpack.c.b16 %v2765, %v2757
    %v4662 = vpack.c.b16 %v2766, %v2758
    %v4663 = vpack.c.b16 %v2767, %v2759
    %v4664 = vpack.c.b16 %v2768, %v2760
    %v4665 = vpack.c.b16 %v2769, %v2761
    %v4666 = vpack.c.b16 %v2778, %v2770
    %v4667 = vpack.c.b16 %v2779, %v2771
    %v4668 = vpack.c.b16 %v2780, %v2772
    %v4669 = vpack.c.b16 %v2781, %v2773
    %v4670 = vpack.c.b16 %v2782, %v2774
    %v4671 = vpack.c.b16 %v2783, %v2775
    %v4672 = vpack.c.b16 %v2784, %v2776
    %v4673 = vpack.c.b16 %v2785, %v2777
    %v4674 = vpack.c.b16 %v2794, %v2786
    %v4675 = vpack.c.b16 %v2795, %v2787
    %v4676 = vpack.c.b16 %v2796, %v2788
    %v4677 = vpack.c.b16 %v2797, %v2789
    %v4678 = vpack.c.b16 %v2798, %v2790
    %v4679 = vpack.c.b16 %v2799, %v2791
    %v4680 = vpack.c.b16 %v2800, %v2792
    %v4681 = vpack.c.b16 %v2801, %v2793
    %v4682 = vpack.c.b16 %v2810, %v2802
    %v4683 = vpack.c.b16 %v2811, %v2803
    %v4684 = vpack.c.b16 %v2812, %v2804
    %v4685 = vpack.c.b16 %v2813, %v2805
    %v4686 = vpack.c.b16 %v2814, %v2806
    %v4687 = vpack.c.b16 %v2815, %v2807
    %v4688 = vpack.c.b16 %v2816, %v2808
    %v4689 = vpack.c.b16 %v2817, %v2809
    %v4690 = vpack.c.b16 %v2826, %v2818
    %v4691 = vpack.c.b16 %v2827, %v2819
    %v4692 = vpack.c.b16 %v2828, %v2820
    %v4693 = vpack.c.b16 %v2829, %v2821
    %v4694 = vpack.c.b16 %v2830, %v2822
    %v4695 = vpack.c.b16 %v2831, %v2823
    %v4696 = vpack.c.b16 %v2832, %v2824
    %v4697 = vpack.c.b16 %v2833, %v2825
    %v4698 = vpack.c.b16 %v2842, %v2834
    %v4699 = vpack.c.b16 %v2843, %v2835
    %v4700 = vpack.c.b16 %v2844, %v2836
    %v4701 = vpack.c.b16 %v2845, %v2837
    %v4702 = vpack.c.b16 %v2846, %v2838
    %v4703 = vpack.c.b16 %v2847, %v2839
    %v4704 = vpack.c.b16 %v2848, %v2840
    %v4705 = vpack.c.b16 %v2849, %v2841
    %v4706 = vpack.c.b16 %v2858, %v2850
    %v4707 = vpack.c.b16 %v2859, %v2851
    %v4708 = vpack.c.b16 %v2860, %v2852
    %v4709 = vpack.c.b16 %v2861, %v2853
    %v4710 = vpack.c.b16 %v2862, %v2854
    %v4711 = vpack.c.b16 %v2863, %v2855
    %v4712 = vpack.c.b16 %v2864, %v2856
    %v4713 = vpack.c.b16 %v2865, %v2857
    %v4714 = vpack.c.b16 %v2874, %v2866
    %v4715 = vpack.c.b16 %v2875, %v2867
    %v4716 = vpack.c.b16 %v2876, %v2868
    %v4717 = vpack.c.b16 %v2877, %v2869
    %v4718 = vpack.c.b16 %v2878, %v2870
    %v4719 = vpack.c.b16 %v2879, %v2871
    %v4720 = vpack.c.b16 %v2880, %v2872
    %v4721 = vpack.c.b16 %v2881, %v2873
    %v4722 = vpack.c.b16 %v2890, %v2882
    %v4723 = vpack.c.b16 %v2891, %v2883
    %v4724 = vpack.c.b16 %v2892, %v2884
    %v4725 = vpack.c.b16 %v2893, %v2885
    %v4726 = vpack.c.b16 %v2894, %v2886
    %v4727 = vpack.c.b16 %v2895, %v2887
    %v4728 = vpack.c.b16 %v2896, %v2888
    %v4729 = vpack.c.b16 %v2897, %v2889
    %v4730 = vpack.c.b16 %v2906, %v2898
    %v4731 = vpack.c.b16 %v2907, %v2899
    %v4732 = vpack.c.b16 %v2908, %v2900
    %v4733 = vpack.c.b16 %v2909, %v2901
    %v4734 = vpack.c.b16 %v2910, %v2902
    %v4735 = vpack.c.b16 %v2911, %v2903
    %v4736 = vpack.c.b16 %v2912, %v2904
    %v4737 = vpack.c.b16 %v2913, %v2905
    %v4738 = vpack.c.b16 %v2922, %v2914
    %v4739 = vpack.c.b16 %v2923, %v2915
    %v4740 = vpack.c.b16 %v2924, %v2916
    %v4741 = vpack.c.b16 %v2925, %v2917
    %v4742 = vpack.c.b16 %v2926, %v2918
    %v4743 = vpack.c.b16 %v2927, %v2919
    %v4744 = vpack.c.b16 %v2928, %v2920
    %v4745 = vpack.c.b16 %v2929, %v2921
    %v4746 = vpack.c.b16 %v2938, %v2930
    %v4747 = vpack.c.b16 %v2939, %v2931
    %v4748 = vpack.c.b16 %v2940, %v2932
    %v4749 = vpack.c.b16 %v2941, %v2933
    %v4750 = vpack.c.b16 %v2942, %v2934
    %v4751 = vpack.c.b16 %v2943, %v2935
    %v4752 = vpack.c.b16 %v2944, %v2936
    %v4753 = vpack.c.b16 %v2945, %v2937
    %v4754 = vpack.c.b16 %v2954, %v2946
    %v4755 = vpack.c.b16 %v2955, %v2947
    %v4756 = vpack.c.b16 %v2956, %v2948
    %v4757 = vpack.c.b16 %v2957, %v2949
    %v4758 = vpack.c.b16 %v2958, %v2950
    %v4759 = vpack.c.b16 %v2959, %v2951
    %v4760 = vpack.c.b16 %v2960, %v2952
    %v4761 = vpack.c.b16 %v2961, %v2953
    %v4762 = vpack.c.b16 %v2970, %v2962
    %v4763 = vpack.c.b16 %v2971, %v2963
    %v4764 = vpack.c.b16 %v2972, %v2964
    %v4765 = vpack.c.b16 %v2973, %v2965
    %v4766 = vpack.c.b16 %v2974, %v2966
    %v4767 = vpack.c.b16 %v2975, %v2967
    %v4768 = vpack.c.b16 %v2976, %v2968
    %v4769 = vpack.c.b16 %v2977, %v2969
    %v4770 = vpack.c.b16 %v2986, %v2978
    %v4771 = vpack.c.b16 %v2987, %v2979
    %v4772 = vpack.c.b16 %v2988, %v2980
    %v4773 = vpack.c.b16 %v2989, %v2981
    %v4774 = vpack.c.b16 %v2990, %v2982
    %v4775 = vpack.c.b16 %v2991, %v2983
    %v4776 = vpack.c.b16 %v2992, %v2984
    %v4777 = vpack.c.b16 %v2993, %v2985
    %v4778 = vpack.c.b16 %v3002, %v2994
    %v4779 = vpack.c.b16 %v3003, %v2995
    %v4780 = vpack.c.b16 %v3004, %v2996
    %v4781 = vpack.c.b16 %v3005, %v2997
    %v4782 = vpack.c.b16 %v3006, %v2998
    %v4783 = vpack.c.b16 %v3007, %v2999
    %v4784 = vpack.c.b16 %v3008, %v3000
    %v4785 = vpack.c.b16 %v3009, %v3001
    %v4786 = vpack.c.b16 %v3018, %v3010
    %v4787 = vpack.c.b16 %v3019, %v3011
    %v4788 = vpack.c.b16 %v3020, %v3012
    %v4789 = vpack.c.b16 %v3021, %v3013
    %v4790 = vpack.c.b16 %v3022, %v3014
    %v4791 = vpack.c.b16 %v3023, %v3015
    %v4792 = vpack.c.b16 %v3024, %v3016
    %v4793 = vpack.c.b16 %v3025, %v3017
    %v4794 = vpack.c.b16 %v3034, %v3026
    %v4795 = vpack.c.b16 %v3035, %v3027
    %v4796 = vpack.c.b16 %v3036, %v3028
    %v4797 = vpack.c.b16 %v3037, %v3029
    %v4798 = vpack.c.b16 %v3038, %v3030
    %v4799 = vpack.c.b16 %v3039, %v3031
    %v4800 = vpack.c.b16 %v3040, %v3032
    %v4801 = vpack.c.b16 %v3041, %v3033
    %v4802 = vpack.c.b16 %v3050, %v3042
    %v4803 = vpack.c.b16 %v3051, %v3043
    %v4804 = vpack.c.b16 %v3052, %v3044
    %v4805 = vpack.c.b16 %v3053, %v3045
    %v4806 = vpack.c.b16 %v3054, %v3046
    %v4807 = vpack.c.b16 %v3055, %v3047
    %v4808 = vpack.c.b16 %v3056, %v3048
    %v4809 = vpack.c.b16 %v3057, %v3049
    %v4810 = vpack.c.b16 %v3066, %v3058
    %v4811 = vpack.c.b16 %v3067, %v3059
    %v4812 = vpack.c.b16 %v3068, %v3060
    %v4813 = vpack.c.b16 %v3069, %v3061
    %v4814 = vpack.c.b16 %v3070, %v3062
    %v4815 = vpack.c.b16 %v3071, %v3063
    %v4816 = vpack.c.b16 %v3072, %v3064
    %v4817 = vpack.c.b16 %v3073, %v3065
    %v4818 = vpack.c.b16 %v3082, %v3074
    %v4819 = vpack.c.b16 %v3083, %v3075
    %v4820 = vpack.c.b16 %v3084, %v3076
    %v4821 = vpack.c.b16 %v3085, %v3077
    %v4822 = vpack.c.b16 %v3086, %v3078
    %v4823 = vpack.c.b16 %v3087, %v3079
    %v4824 = vpack.c.b16 %v3088, %v3080
    %v4825 = vpack.c.b16 %v3089, %v3081
    %v4826 = vpack.c.b16 %v3098, %v3090
    %v4827 = vpack.c.b16 %v3099, %v3091
    %v4828 = vpack.c.b16 %v3100, %v3092
    %v4829 = vpack.c.b16 %v3101, %v3093
    %v4830 = vpack.c.b16 %v3102, %v3094
    %v4831 = vpack.c.b16 %v3103, %v3095
    %v4832 = vpack.c.b16 %v3104, %v3096
    %v4833 = vpack.c.b16 %v3105, %v3097
    %v4834 = vpack.c.b16 %v3114, %v3106
    %v4835 = vpack.c.b16 %v3115, %v3107
    %v4836 = vpack.c.b16 %v3116, %v3108
    %v4837 = vpack.c.b16 %v3117, %v3109
    %v4838 = vpack.c.b16 %v3118, %v3110
    %v4839 = vpack.c.b16 %v3119, %v3111
    %v4840 = vpack.c.b16 %v3120, %v3112
    %v4841 = vpack.c.b16 %v3121, %v3113
    %v4842 = vpack.c.b16 %v3130, %v3122
    %v4843 = vpack.c.b16 %v3131, %v3123
    %v4844 = vpack.c.b16 %v3132, %v3124
    %v4845 = vpack.c.b16 %v3133, %v3125
    %v4846 = vpack.c.b16 %v3134, %v3126
    %v4847 = vpack.c.b16 %v3135, %v3127
    %v4848 = vpack.c.b16 %v3136, %v3128
    %v4849 = vpack.c.b16 %v3137, %v3129
    %v4850 = vpack.c.b16 %v3146, %v3138
    %v4851 = vpack.c.b16 %v3147, %v3139
    %v4852 = vpack.c.b16 %v3148, %v3140
    %v4853 = vpack.c.b16 %v3149, %v3141
    %v4854 = vpack.c.b16 %v3150, %v3142
    %v4855 = vpack.c.b16 %v3151, %v3143
    %v4856 = vpack.c.b16 %v3152, %v3144
    %v4857 = vpack.c.b16 %v3153, %v3145
    %v4858 = vpack.c.b16 %v3162, %v3154
    %v4859 = vpack.c.b16 %v3163, %v3155
    %v4860 = vpack.c.b16 %v3164, %v3156
    %v4861 = vpack.c.b16 %v3165, %v3157
    %v4862 = vpack.c.b16 %v3166, %v3158
    %v4863 = vpack.c.b16 %v3167, %v3159
    %v4864 = vpack.c.b16 %v3168, %v3160
    %v4865 = vpack.c.b16 %v3169, %v3161
    %v4866 = vpack.c.b16 %v3178, %v3170
    %v4867 = vpack.c.b16 %v3179, %v3171
    %v4868 = vpack.c.b16 %v3180, %v3172
    %v4869 = vpack.c.b16 %v3181, %v3173
    %v4870 = vpack.c.b16 %v3182, %v3174
    %v4871 = vpack.c.b16 %v3183, %v3175
    %v4872 = vpack.c.b16 %v3184, %v3176
    %v4873 = vpack.c.b16 %v3185, %v3177
    %v4874 = vpack.c.b16 %v3194, %v3186
    %v4875 = vpack.c.b16 %v3195, %v3187
    %v4876 = vpack.c.b16 %v3196, %v3188
    %v4877 = vpack.c.b16 %v3197, %v3189
    %v4878 = vpack.c.b16 %v3198, %v3190
    %v4879 = vpack.c.b16 %v3199, %v3191
    %v4880 = vpack.c.b16 %v3200, %v3192
    %v4881 = vpack.c.b16 %v3201, %v3193
    %v4882 = vpack.c.b16 %v3210, %v3202
    %v4883 = vpack.c.b16 %v3211, %v3203
    %v4884 = vpack.c.b16 %v3212, %v3204
    %v4885 = vpack.c.b16 %v3213, %v3205
    %v4886 = vpack.c.b16 %v3214, %v3206
    %v4887 = vpack.c.b16 %v3215, %v3207
    %v4888 = vpack.c.b16 %v3216, %v3208
    %v4889 = vpack.c.b16 %v3217, %v3209
    %v4890 = vpack.c.b16 %v3226, %v3218
    %v4891 = vpack.c.b16 %v3227, %v3219
    %v4892 = vpack.c.b16 %v3228, %v3220
    %v4893 = vpack.c.b16 %v3229, %v3221
    %v4894 = vpack.c.b16 %v3230, %v3222
    %v4895 = vpack.c.b16 %v3231, %v3223
    %v4896 = vpack.c.b16 %v3232, %v3224
    %v4897 = vpack.c.b16 %v3233, %v3225
    %v4898 = vpack.c.b16 %v3242, %v3234
    %v4899 = vpack.c.b16 %v3243, %v3235
    %v4900 = vpack.c.b16 %v3244, %v3236
    %v4901 = vpack.c.b16 %v3245, %v3237
    %v4902 = vpack.c.b16 %v3246, %v3238
    %v4903 = vpack.c.b16 %v3247, %v3239
    %v4904 = vpack.c.b16 %v3248, %v3240
    %v4905 = vpack.c.b16 %v3249, %v3241
    %v4906 = vpack.c.b16 %v3258, %v3250
    %v4907 = vpack.c.b16 %v3259, %v3251
    %v4908 = vpack.c.b16 %v3260, %v3252
    %v4909 = vpack.c.b16 %v3261, %v3253
    %v4910 = vpack.c.b16 %v3262, %v3254
    %v4911 = vpack.c.b16 %v3263, %v3255
    %v4912 = vpack.c.b16 %v3264, %v3256
    %v4913 = vpack.c.b16 %v3265, %v3257
    %v4914 = vpack.c.b16 %v3274, %v3266
    %v4915 = vpack.c.b16 %v3275, %v3267
    %v4916 = vpack.c.b16 %v3276, %v3268
    %v4917 = vpack.c.b16 %v3277, %v3269
    %v4918 = vpack.c.b16 %v3278, %v3270
    %v4919 = vpack.c.b16 %v3279, %v3271
    %v4920 = vpack.c.b16 %v3280, %v3272
    %v4921 = vpack.c.b16 %v3281, %v3273
    %v4922 = vpack.c.b16 %v3290, %v3282
    %v4923 = vpack.c.b16 %v3291, %v3283
    %v4924 = vpack.c.b16 %v3292, %v3284
    %v4925 = vpack.c.b16 %v3293, %v3285
    %v4926 = vpack.c.b16 %v3294, %v3286
    %v4927 = vpack.c.b16 %v3295, %v3287
    %v4928 = vpack.c.b16 %v3296, %v3288
    %v4929 = vpack.c.b16 %v3297, %v3289
    %v4930 = vpack.c.b16 %v3306, %v3298
    %v4931 = vpack.c.b16 %v3307, %v3299
    %v4932 = vpack.c.b16 %v3308, %v3300
    %v4933 = vpack.c.b16 %v3309, %v3301
    %v4934 = vpack.c.b16 %v3310, %v3302
    %v4935 = vpack.c.b16 %v3311, %v3303
    %v4936 = vpack.c.b16 %v3312, %v3304
    %v4937 = vpack.c.b16 %v3313, %v3305
    %v4938 = vpack.c.b16 %v3322, %v3314
    %v4939 = vpack.c.b16 %v3323, %v3315
    %v4940 = vpack.c.b16 %v3324, %v3316
    %v4941 = vpack.c.b16 %v3325, %v3317
    %v4942 = vpack.c.b16 %v3326, %v3318
    %v4943 = vpack.c.b16 %v3327, %v3319
    %v4944 = vpack.c.b16 %v3328, %v3320
    %v4945 = vpack.c.b16 %v3329, %v3321
    %v4946 = vpack.c.b16 %v3338, %v3330
    %v4947 = vpack.c.b16 %v3339, %v3331
    %v4948 = vpack.c.b16 %v3340, %v3332
    %v4949 = vpack.c.b16 %v3341, %v3333
    %v4950 = vpack.c.b16 %v3342, %v3334
    %v4951 = vpack.c.b16 %v3343, %v3335
    %v4952 = vpack.c.b16 %v3344, %v3336
    %v4953 = vpack.c.b16 %v3345, %v3337
    %v4954 = vpack.c.b16 %v3354, %v3346
    %v4955 = vpack.c.b16 %v3355, %v3347
    %v4956 = vpack.c.b16 %v3356, %v3348
    %v4957 = vpack.c.b16 %v3357, %v3349
    %v4958 = vpack.c.b16 %v3358, %v3350
    %v4959 = vpack.c.b16 %v3359, %v3351
    %v4960 = vpack.c.b16 %v3360, %v3352
    %v4961 = vpack.c.b16 %v3361, %v3353
    %v4962 = vpack.c.b16 %v3370, %v3362
    %v4963 = vpack.c.b16 %v3371, %v3363
    %v4964 = vpack.c.b16 %v3372, %v3364
    %v4965 = vpack.c.b16 %v3373, %v3365
    %v4966 = vpack.c.b16 %v3374, %v3366
    %v4967 = vpack.c.b16 %v3375, %v3367
    %v4968 = vpack.c.b16 %v3376, %v3368
    %v4969 = vpack.c.b16 %v3377, %v3369
    %v4970 = vpack.c.b16 %v3386, %v3378
    %v4971 = vpack.c.b16 %v3387, %v3379
    %v4972 = vpack.c.b16 %v3388, %v3380
    %v4973 = vpack.c.b16 %v3389, %v3381
    %v4974 = vpack.c.b16 %v3390, %v3382
    %v4975 = vpack.c.b16 %v3391, %v3383
    %v4976 = vpack.c.b16 %v3392, %v3384
    %v4977 = vpack.c.b16 %v3393, %v3385
    %v4978 = vpack.c.b16 %v3402, %v3394
    %v4979 = vpack.c.b16 %v3403, %v3395
    %v4980 = vpack.c.b16 %v3404, %v3396
    %v4981 = vpack.c.b16 %v3405, %v3397
    %v4982 = vpack.c.b16 %v3406, %v3398
    %v4983 = vpack.c.b16 %v3407, %v3399
    %v4984 = vpack.c.b16 %v3408, %v3400
    %v4985 = vpack.c.b16 %v3409, %v3401
    %v4986 = vpack.c.b16 %v3418, %v3410
    %v4987 = vpack.c.b16 %v3419, %v3411
    %v4988 = vpack.c.b16 %v3420, %v3412
    %v4989 = vpack.c.b16 %v3421, %v3413
    %v4990 = vpack.c.b16 %v3422, %v3414
    %v4991 = vpack.c.b16 %v3423, %v3415
    %v4992 = vpack.c.b16 %v3424, %v3416
    %v4993 = vpack.c.b16 %v3425, %v3417
    %v4994 = vpack.c.b16 %v3434, %v3426
    %v4995 = vpack.c.b16 %v3435, %v3427
    %v4996 = vpack.c.b16 %v3436, %v3428
    %v4997 = vpack.c.b16 %v3437, %v3429
    %v4998 = vpack.c.b16 %v3438, %v3430
    %v4999 = vpack.c.b16 %v3439, %v3431
    %v5000 = vpack.c.b16 %v3440, %v3432
    %v5001 = vpack.c.b16 %v3441, %v3433
    %v5002 = vpack.c.b16 %v3450, %v3442
    %v5003 = vpack.c.b16 %v3451, %v3443
    %v5004 = vpack.c.b16 %v3452, %v3444
    %v5005 = vpack.c.b16 %v3453, %v3445
    %v5006 = vpack.c.b16 %v3454, %v3446
    %v5007 = vpack.c.b16 %v3455, %v3447
    %v5008 = vpack.c.b16 %v3456, %v3448
    %v5009 = vpack.c.b16 %v3457, %v3449
    %v5010 = vpack.c.b16 %v3466, %v3458
    %v5011 = vpack.c.b16 %v3467, %v3459
    %v5012 = vpack.c.b16 %v3468, %v3460
    %v5013 = vpack.c.b16 %v3469, %v3461
    %v5014 = vpack.c.b16 %v3470, %v3462
    %v5015 = vpack.c.b16 %v3471, %v3463
    %v5016 = vpack.c.b16 %v3472, %v3464
    %v5017 = vpack.c.b16 %v3473, %v3465
    %v5018 = vpack.c.b16 %v3482, %v3474
    %v5019 = vpack.c.b16 %v3483, %v3475
    %v5020 = vpack.c.b16 %v3484, %v3476
    %v5021 = vpack.c.b16 %v3485, %v3477
    %v5022 = vpack.c.b16 %v3486, %v3478
    %v5023 = vpack.c.b16 %v3487, %v3479
    %v5024 = vpack.c.b16 %v3488, %v3480
    %v5025 = vpack.c.b16 %v3489, %v3481
    %v5026 = vpack.c.b16 %v3498, %v3490
    %v5027 = vpack.c.b16 %v3499, %v3491
    %v5028 = vpack.c.b16 %v3500, %v3492
    %v5029 = vpack.c.b16 %v3501, %v3493
    %v5030 = vpack.c.b16 %v3502, %v3494
    %v5031 = vpack.c.b16 %v3503, %v3495
    %v5032 = vpack.c.b16 %v3504, %v3496
    %v5033 = vpack.c.b16 %v3505, %v3497
    %v5034 = vpack.c.b16 %v3514, %v3506
    %v5035 = vpack.c.b16 %v3515, %v3507
    %v5036 = vpack.c.b16 %v3516, %v3508
    %v5037 = vpack.c.b16 %v3517, %v3509
    %v5038 = vpack.c.b16 %v3518, %v3510
    %v5039 = vpack.c.b16 %v3519, %v3511
    %v5040 = vpack.c.b16 %v3520, %v3512
    %v5041 = vpack.c.b16 %v3521, %v3513
    %v5042 = vpack.c.b16 %v3530, %v3522
    %v5043 = vpack.c.b16 %v3531, %v3523
    %v5044 = vpack.c.b16 %v3532, %v3524
    %v5045 = vpack.c.b16 %v3533, %v3525
    %v5046 = vpack.c.b16 %v3534, %v3526
    %v5047 = vpack.c.b16 %v3535, %v3527
    %v5048 = vpack.c.b16 %v3536, %v3528
    %v5049 = vpack.c.b16 %v3537, %v3529
    %v5050 = vpack.c.b16 %v3546, %v3538
    %v5051 = vpack.c.b16 %v3547, %v3539
    %v5052 = vpack.c.b16 %v3548, %v3540
    %v5053 = vpack.c.b16 %v3549, %v3541
    %v5054 = vpack.c.b16 %v3550, %v3542
    %v5055 = vpack.c.b16 %v3551, %v3543
    %v5056 = vpack.c.b16 %v3552, %v3544
    %v5057 = vpack.c.b16 %v3553, %v3545
    %v5058 = vpack.c.b16 %v3562, %v3554
    %v5059 = vpack.c.b16 %v3563, %v3555
    %v5060 = vpack.c.b16 %v3564, %v3556
    %v5061 = vpack.c.b16 %v3565, %v3557
    %v5062 = vpack.c.b16 %v3566, %v3558
    %v5063 = vpack.c.b16 %v3567, %v3559
    %v5064 = vpack.c.b16 %v3568, %v3560
    %v5065 = vpack.c.b16 %v3569, %v3561
    %v5066 = vpack.c.b16 %v3578, %v3570
    %v5067 = vpack.c.b16 %v3579, %v3571
    %v5068 = vpack.c.b16 %v3580, %v3572
    %v5069 = vpack.c.b16 %v3581, %v3573
    %v5070 = vpack.c.b16 %v3582, %v3574
    %v5071 = vpack.c.b16 %v3583, %v3575
    %v5072 = vpack.c.b16 %v3584, %v3576
    %v5073 = vpack.c.b16 %v3585, %v3577
    %v5074 = vpack.c.b16 %v3594, %v3586
    %v5075 = vpack.c.b16 %v3595, %v3587
    %v5076 = vpack.c.b16 %v3596, %v3588
    %v5077 = vpack.c.b16 %v3597, %v3589
    %v5078 = vpack.c.b16 %v3598, %v3590
    %v5079 = vpack.c.b16 %v3599, %v3591
    %v5080 = vpack.c.b16 %v3600, %v3592
    %v5081 = vpack.c.b16 %v3601, %v3593
    %v5082 = vpack.c.b16 %v3610, %v3602
    %v5083 = vpack.c.b16 %v3611, %v3603
    %v5084 = vpack.c.b16 %v3612, %v3604
    %v5085 = vpack.c.b16 %v3613, %v3605
    %v5086 = vpack.c.b16 %v3614, %v3606
    %v5087 = vpack.c.b16 %v3615, %v3607
    %v5088 = vpack.c.b16 %v3616, %v3608
    %v5089 = vpack.c.b16 %v3617, %v3609
    %v5090 = vpack.c.b16 %v3626, %v3618
    %v5091 = vpack.c.b16 %v3627, %v3619
    %v5092 = vpack.c.b16 %v3628, %v3620
    %v5093 = vpack.c.b16 %v3629, %v3621
    %v5094 = vpack.c.b16 %v3630, %v3622
    %v5095 = vpack.c.b16 %v3631, %v3623
    %v5096 = vpack.c.b16 %v3632, %v3624
    %v5097 = vpack.c.b16 %v3633, %v3625
    %v5098 = vpack.c.b16 %v3642, %v3634
    %v5099 = vpack.c.b16 %v3643, %v3635
    %v5100 = vpack.c.b16 %v3644, %v3636
    %v5101 = vpack.c.b16 %v3645, %v3637
    %v5102 = vpack.c.b16 %v3646, %v3638
    %v5103 = vpack.c.b16 %v3647, %v3639
    %v5104 = vpack.c.b16 %v3648, %v3640
    %v5105 = vpack.c.b16 %v3649, %v3641
    %v5106 = vpack.c.b16 %v3658, %v3650
    %v5107 = vpack.c.b16 %v3659, %v3651
    %v5108 = vpack.c.b16 %v3660, %v3652
    %v5109 = vpack.c.b16 %v3661, %v3653
    %v5110 = vpack.c.b16 %v3662, %v3654
    %v5111 = vpack.c.b16 %v3663, %v3655
    %v5112 = vpack.c.b16 %v3664, %v3656
    %v5113 = vpack.c.b16 %v3665, %v3657
    %v5114 = vpack.c.b16 %v3674, %v3666
    %v5115 = vpack.c.b16 %v3675, %v3667
    %v5116 = vpack.c.b16 %v3676, %v3668
    %v5117 = vpack.c.b16 %v3677, %v3669
    %v5118 = vpack.c.b16 %v3678, %v3670
    %v5119 = vpack.c.b16 %v3679, %v3671
    %v5120 = vpack.c.b16 %v3680, %v3672
    %v5121 = vpack.c.b16 %v3681, %v3673
    %v5122 = vpack.c.b16 %v3690, %v3682
    %v5123 = vpack.c.b16 %v3691, %v3683
    %v5124 = vpack.c.b16 %v3692, %v3684
    %v5125 = vpack.c.b16 %v3693, %v3685
    %v5126 = vpack.c.b16 %v3694, %v3686
    %v5127 = vpack.c.b16 %v3695, %v3687
    %v5128 = vpack.c.b16 %v3696, %v3688
    %v5129 = vpack.c.b16 %v3697, %v3689
    %v5130 = vpack.c.b16 %v3706, %v3698
    %v5131 = vpack.c.b16 %v3707, %v3699
    %v5132 = vpack.c.b16 %v3708, %v3700
    %v5133 = vpack.c.b16 %v3709, %v3701
    %v5134 = vpack.c.b16 %v3710, %v3702
    %v5135 = vpack.c.b16 %v3711, %v3703
    %v5136 = vpack.c.b16 %v3712, %v3704
    %v5137 = vpack.c.b16 %v3713, %v3705
    %v5138 = vpack.c.b16 %v3722, %v3714
    %v5139 = vpack.c.b16 %v3723, %v3715
    %v5140 = vpack.c.b16 %v3724, %v3716
    %v5141 = vpack.c.b16 %v3725, %v3717
    %v5142 = vpack.c.b16 %v3726, %v3718
    %v5143 = vpack.c.b16 %v3727, %v3719
    %v5144 = vpack.c.b16 %v3728, %v3720
    %v5145 = vpack.c.b16 %v3729, %v3721
    %v5146 = vpack.c.b16 %v3738, %v3730
    %v5147 = vpack.c.b16 %v3739, %v3731
    %v5148 = vpack.c.b16 %v3740, %v3732
    %v5149 = vpack.c.b16 %v3741, %v3733
    %v5150 = vpack.c.b16 %v3742, %v3734
    %v5151 = vpack.c.b16 %v3743, %v3735
    %v5152 = vpack.c.b16 %v3744, %v3736
    %v5153 = vpack.c.b16 %v3745, %v3737
    %v5154 = vpack.c.b16 %v3754, %v3746
    %v5155 = vpack.c.b16 %v3755, %v3747
    %v5156 = vpack.c.b16 %v3756, %v3748
    %v5157 = vpack.c.b16 %v3757, %v3749
    %v5158 = vpack.c.b16 %v3758, %v3750
    %v5159 = vpack.c.b16 %v3759, %v3751
    %v5160 = vpack.c.b16 %v3760, %v3752
    %v5161 = vpack.c.b16 %v3761, %v3753
    %v5162 = vpack.c.b16 %v3770, %v3762
    %v5163 = vpack.c.b16 %v3771, %v3763
    %v5164 = vpack.c.b16 %v3772, %v3764
    %v5165 = vpack.c.b16 %v3773, %v3765
    %v5166 = vpack.c.b16 %v3774, %v3766
    %v5167 = vpack.c.b16 %v3775, %v3767
    %v5168 = vpack.c.b16 %v3776, %v3768
    %v5169 = vpack.c.b16 %v3777, %v3769
    %v5170 = vpack.c.b16 %v3786, %v3778
    %v5171 = vpack.c.b16 %v3787, %v3779
    %v5172 = vpack.c.b16 %v3788, %v3780
    %v5173 = vpack.c.b16 %v3789, %v3781
    %v5174 = vpack.c.b16 %v3790, %v3782
    %v5175 = vpack.c.b16 %v3791, %v3783
    %v5176 = vpack.c.b16 %v3792, %v3784
    %v5177 = vpack.c.b16 %v3793, %v3785
    %v5178 = vpack.c.b16 %v3802, %v3794
    %v5179 = vpack.c.b16 %v3803, %v3795
    %v5180 = vpack.c.b16 %v3804, %v3796
    %v5181 = vpack.c.b16 %v3805, %v3797
    %v5182 = vpack.c.b16 %v3806, %v3798
    %v5183 = vpack.c.b16 %v3807, %v3799
    %v5184 = vpack.c.b16 %v3808, %v3800
    %v5185 = vpack.c.b16 %v3809, %v3801
    %v5186 = vpack.c.b16 %v3818, %v3810
    %v5187 = vpack.c.b16 %v3819, %v3811
    %v5188 = vpack.c.b16 %v3820, %v3812
    %v5189 = vpack.c.b16 %v3821, %v3813
    %v5190 = vpack.c.b16 %v3822, %v3814
    %v5191 = vpack.c.b16 %v3823, %v3815
    %v5192 = vpack.c.b16 %v3824, %v3816
    %v5193 = vpack.c.b16 %v3825, %v3817
    %v5194 = vpack.c.b16 %v3834, %v3826
    %v5195 = vpack.c.b16 %v3835, %v3827
    %v5196 = vpack.c.b16 %v3836, %v3828
    %v5197 = vpack.c.b16 %v3837, %v3829
    %v5198 = vpack.c.b16 %v3838, %v3830
    %v5199 = vpack.c.b16 %v3839, %v3831
    %v5200 = vpack.c.b16 %v3840, %v3832
    %v5201 = vpack.c.b16 %v3841, %v3833
    %v5202 = vpack.c.b16 %v3850, %v3842
    %v5203 = vpack.c.b16 %v3851, %v3843
    %v5204 = vpack.c.b16 %v3852, %v3844
    %v5205 = vpack.c.b16 %v3853, %v3845
    %v5206 = vpack.c.b16 %v3854, %v3846
    %v5207 = vpack.c.b16 %v3855, %v3847
    %v5208 = vpack.c.b16 %v3856, %v3848
    %v5209 = vpack.c.b16 %v3857, %v3849
    %v5210 = vpack.c.b16 %v3866, %v3858
    %v5211 = vpack.c.b16 %v3867, %v3859
    %v5212 = vpack.c.b16 %v3868, %v3860
    %v5213 = vpack.c.b16 %v3869, %v3861
    %v5214 = vpack.c.b16 %v3870, %v3862
    %v5215 = vpack.c.b16 %v3871, %v3863
    %v5216 = vpack.c.b16 %v3872, %v3864
    %v5217 = vpack.c.b16 %v3873, %v3865
    %v5218 = vpack.c.b16 %v3882, %v3874
    %v5219 = vpack.c.b16 %v3883, %v3875
    %v5220 = vpack.c.b16 %v3884, %v3876
    %v5221 = vpack.c.b16 %v3885, %v3877
    %v5222 = vpack.c.b16 %v3886, %v3878
    %v5223 = vpack.c.b16 %v3887, %v3879
    %v5224 = vpack.c.b16 %v3888, %v3880
    %v5225 = vpack.c.b16 %v3889, %v3881
    %v5226 = vpack.c.b16 %v3898, %v3890
    %v5227 = vpack.c.b16 %v3899, %v3891
    %v5228 = vpack.c.b16 %v3900, %v3892
    %v5229 = vpack.c.b16 %v3901, %v3893
    %v5230 = vpack.c.b16 %v3902, %v3894
    %v5231 = vpack.c.b16 %v3903, %v3895
    %v5232 = vpack.c.b16 %v3904, %v3896
    %v5233 = vpack.c.b16 %v3905, %v3897
    %v5234 = vpack.c.b16 %v3914, %v3906
    %v5235 = vpack.c.b16 %v3915, %v3907
    %v5236 = vpack.c.b16 %v3916, %v3908
    %v5237 = vpack.c.b16 %v3917, %v3909
    %v5238 = vpack.c.b16 %v3918, %v3910
    %v5239 = vpack.c.b16 %v3919, %v3911
    %v5240 = vpack.c.b16 %v3920, %v3912
    %v5241 = vpack.c.b16 %v3921, %v3913
    %v5242 = vpack.c.b16 %v3930, %v3922
    %v5243 = vpack.c.b16 %v3931, %v3923
    %v5244 = vpack.c.b16 %v3932, %v3924
    %v5245 = vpack.c.b16 %v3933, %v3925
    %v5246 = vpack.c.b16 %v3934, %v3926
    %v5247 = vpack.c.b16 %v3935, %v3927
    %v5248 = vpack.c.b16 %v3936, %v3928
    %v5249 = vpack.c.b16 %v3937, %v3929
    %v5250 = vpack.c.b16 %v3946, %v3938
    %v5251 = vpack.c.b16 %v3947, %v3939
    %v5252 = vpack.c.b16 %v3948, %v3940
    %v5253 = vpack.c.b16 %v3949, %v3941
    %v5254 = vpack.c.b16 %v3950, %v3942
    %v5255 = vpack.c.b16 %v3951, %v3943
    %v5256 = vpack.c.b16 %v3952, %v3944
    %v5257 = vpack.c.b16 %v3953, %v3945
    %v5258 = vpack.c.b16 %v3962, %v3954
    %v5259 = vpack.c.b16 %v3963, %v3955
    %v5260 = vpack.c.b16 %v3964, %v3956
    %v5261 = vpack.c.b16 %v3965, %v3957
    %v5262 = vpack.c.b16 %v3966, %v3958
    %v5263 = vpack.c.b16 %v3967, %v3959
    %v5264 = vpack.c.b16 %v3968, %v3960
    %v5265 = vpack.c.b16 %v3969, %v3961
    %v5266 = vpack.c.b16 %v3978, %v3970
    %v5267 = vpack.c.b16 %v3979, %v3971
    %v5268 = vpack.c.b16 %v3980, %v3972
    %v5269 = vpack.c.b16 %v3981, %v3973
    %v5270 = vpack.c.b16 %v3982, %v3974
    %v5271 = vpack.c.b16 %v3983, %v3975
    %v5272 = vpack.c.b16 %v3984, %v3976
    %v5273 = vpack.c.b16 %v3985, %v3977
    %v5274 = vpack.c.b16 %v3994, %v3986
    %v5275 = vpack.c.b16 %v3995, %v3987
    %v5276 = vpack.c.b16 %v3996, %v3988
    %v5277 = vpack.c.b16 %v3997, %v3989
    %v5278 = vpack.c.b16 %v3998, %v3990
    %v5279 = vpack.c.b16 %v3999, %v3991
    %v5280 = vpack.c.b16 %v4000, %v3992
    %v5281 = vpack.c.b16 %v4001, %v3993
    %v5282 = vpack.c.b16 %v4010, %v4002
    %v5283 = vpack.c.b16 %v4011, %v4003
    %v5284 = vpack.c.b16 %v4012, %v4004
    %v5285 = vpack.c.b16 %v4013, %v4005
    %v5286 = vpack.c.b16 %v4014, %v4006
    %v5287 = vpack.c.b16 %v4015, %v4007
    %v5288 = vpack.c.b16 %v4016, %v4008
    %v5289 = vpack.c.b16 %v4017, %v4009
    %v5290 = vpack.c.b16 %v4026, %v4018
    %v5291 = vpack.c.b16 %v4027, %v4019
    %v5292 = vpack.c.b16 %v4028, %v4020
    %v5293 = vpack.c.b16 %v4029, %v4021
    %v5294 = vpack.c.b16 %v4030, %v4022
    %v5295 = vpack.c.b16 %v4031, %v4023
    %v5296 = vpack.c.b16 %v4032, %v4024
    %v5297 = vpack.c.b16 %v4033, %v4025
    %v5298 = vpack.c.b16 %v4042, %v4034
    %v5299 = vpack.c.b16 %v4043, %v4035
    %v5300 = vpack.c.b16 %v4044, %v4036
    %v5301 = vpack.c.b16 %v4045, %v4037
    %v5302 = vpack.c.b16 %v4046, %v4038
    %v5303 = vpack.c.b16 %v4047, %v4039
    %v5304 = vpack.c.b16 %v4048, %v4040
    %v5305 = vpack.c.b16 %v4049, %v4041
    %v5306 = vpack.c.b16 %v4058, %v4050
    %v5307 = vpack.c.b16 %v4059, %v4051
    %v5308 = vpack.c.b16 %v4060, %v4052
    %v5309 = vpack.c.b16 %v4061, %v4053
    %v5310 = vpack.c.b16 %v4062, %v4054
    %v5311 = vpack.c.b16 %v4063, %v4055
    %v5312 = vpack.c.b16 %v4064, %v4056
    %v5313 = vpack.c.b16 %v4065, %v4057
    %v5314 = vpack.c.b16 %v4074, %v4066
    %v5315 = vpack.c.b16 %v4075, %v4067
    %v5316 = vpack.c.b16 %v4076, %v4068
    %v5317 = vpack.c.b16 %v4077, %v4069
    %v5318 = vpack.c.b16 %v4078, %v4070
    %v5319 = vpack.c.b16 %v4079, %v4071
    %v5320 = vpack.c.b16 %v4080, %v4072
    %v5321 = vpack.c.b16 %v4081, %v4073
    %v5322 = vpack.c.b16 %v4090, %v4082
    %v5323 = vpack.c.b16 %v4091, %v4083
    %v5324 = vpack.c.b16 %v4092, %v4084
    %v5325 = vpack.c.b16 %v4093, %v4085
    %v5326 = vpack.c.b16 %v4094, %v4086
    %v5327 = vpack.c.b16 %v4095, %v4087
    %v5328 = vpack.c.b16 %v4096, %v4088
    %v5329 = vpack.c.b16 %v4097, %v4089
    %v5330 = vpack.c.b16 %v4106, %v4098
    %v5331 = vpack.c.b16 %v4107, %v4099
    %v5332 = vpack.c.b16 %v4108, %v4100
    %v5333 = vpack.c.b16 %v4109, %v4101
    %v5334 = vpack.c.b16 %v4110, %v4102
    %v5335 = vpack.c.b16 %v4111, %v4103
    %v5336 = vpack.c.b16 %v4112, %v4104
    %v5337 = vpack.c.b16 %v4113, %v4105
    %v5338 = vpack.c.b16 %v4122, %v4114
    %v5339 = vpack.c.b16 %v4123, %v4115
    %v5340 = vpack.c.b16 %v4124, %v4116
    %v5341 = vpack.c.b16 %v4125, %v4117
    %v5342 = vpack.c.b16 %v4126, %v4118
    %v5343 = vpack.c.b16 %v4127, %v4119
    %v5344 = vpack.c.b16 %v4128, %v4120
    %v5345 = vpack.c.b16 %v4129, %v4121
    %v5346 = vpack.c.b16 %v4138, %v4130
    %v5347 = vpack.c.b16 %v4139, %v4131
    %v5348 = vpack.c.b16 %v4140, %v4132
    %v5349 = vpack.c.b16 %v4141, %v4133
    %v5350 = vpack.c.b16 %v4142, %v4134
    %v5351 = vpack.c.b16 %v4143, %v4135
    %v5352 = vpack.c.b16 %v4144, %v4136
    %v5353 = vpack.c.b16 %v4145, %v4137
    %v5354 = vpack.c.b16 %v4154, %v4146
    %v5355 = vpack.c.b16 %v4155, %v4147
    %v5356 = vpack.c.b16 %v4156, %v4148
    %v5357 = vpack.c.b16 %v4157, %v4149
    %v5358 = vpack.c.b16 %v4158, %v4150
    %v5359 = vpack.c.b16 %v4159, %v4151
    %v5360 = vpack.c.b16 %v4160, %v4152
    %v5361 = vpack.c.b16 %v4161, %v4153
    %v5362 = vpack.c.b16 %v4170, %v4162
    %v5363 = vpack.c.b16 %v4171, %v4163
    %v5364 = vpack.c.b16 %v4172, %v4164
    %v5365 = vpack.c.b16 %v4173, %v4165
    %v5366 = vpack.c.b16 %v4174, %v4166
    %v5367 = vpack.c.b16 %v4175, %v4167
    %v5368 = vpack.c.b16 %v4176, %v4168
    %v5369 = vpack.c.b16 %v4177, %v4169
    %v5370 = vpack.c.b16 %v4186, %v4178
    %v5371 = vpack.c.b16 %v4187, %v4179
    %v5372 = vpack.c.b16 %v4188, %v4180
    %v5373 = vpack.c.b16 %v4189, %v4181
    %v5374 = vpack.c.b16 %v4190, %v4182
    %v5375 = vpack.c.b16 %v4191, %v4183
    %v5376 = vpack.c.b16 %v4192, %v4184
    %v5377 = vpack.c.b16 %v4193, %v4185
    %v5378 = vpack.c.b16 %v4202, %v4194
    %v5379 = vpack.c.b16 %v4203, %v4195
    %v5380 = vpack.c.b16 %v4204, %v4196
    %v5381 = vpack.c.b16 %v4205, %v4197
    %v5382 = vpack.c.b16 %v4206, %v4198
    %v5383 = vpack.c.b16 %v4207, %v4199
    %v5384 = vpack.c.b16 %v4208, %v4200
    %v5385 = vpack.c.b16 %v4209, %v4201
    %v5386 = vpack.c.b16 %v4218, %v4210
    %v5387 = vpack.c.b16 %v4219, %v4211
    %v5388 = vpack.c.b16 %v4220, %v4212
    %v5389 = vpack.c.b16 %v4221, %v4213
    %v5390 = vpack.c.b16 %v4222, %v4214
    %v5391 = vpack.c.b16 %v4223, %v4215
    %v5392 = vpack.c.b16 %v4224, %v4216
    %v5393 = vpack.c.b16 %v4225, %v4217
    %v5394 = vpack.c.b16 %v4234, %v4226
    %v5395 = vpack.c.b16 %v4235, %v4227
    %v5396 = vpack.c.b16 %v4236, %v4228
    %v5397 = vpack.c.b16 %v4237, %v4229
    %v5398 = vpack.c.b16 %v4238, %v4230
    %v5399 = vpack.c.b16 %v4239, %v4231
    %v5400 = vpack.c.b16 %v4240, %v4232
    %v5401 = vpack.c.b16 %v4241, %v4233
    %v5402 = vpack.c.b16 %v4250, %v4242
    %v5403 = vpack.c.b16 %v4251, %v4243
    %v5404 = vpack.c.b16 %v4252, %v4244
    %v5405 = vpack.c.b16 %v4253, %v4245
    %v5406 = vpack.c.b16 %v4254, %v4246
    %v5407 = vpack.c.b16 %v4255, %v4247
    %v5408 = vpack.c.b16 %v4256, %v4248
    %v5409 = vpack.c.b16 %v4257, %v4249
    %v5410 = vpack.c.b16 %v4266, %v4258
    %v5411 = vpack.c.b16 %v4267, %v4259
    %v5412 = vpack.c.b16 %v4268, %v4260
    %v5413 = vpack.c.b16 %v4269, %v4261
    %v5414 = vpack.c.b16 %v4270, %v4262
    %v5415 = vpack.c.b16 %v4271, %v4263
    %v5416 = vpack.c.b16 %v4272, %v4264
    %v5417 = vpack.c.b16 %v4273, %v4265
    %v5418 = vpack.c.b16 %v4282, %v4274
    %v5419 = vpack.c.b16 %v4283, %v4275
    %v5420 = vpack.c.b16 %v4284, %v4276
    %v5421 = vpack.c.b16 %v4285, %v4277
    %v5422 = vpack.c.b16 %v4286, %v4278
    %v5423 = vpack.c.b16 %v4287, %v4279
    %v5424 = vpack.c.b16 %v4288, %v4280
    %v5425 = vpack.c.b16 %v4289, %v4281
    %v5426 = vpack.c.b16 %v4298, %v4290
    %v5427 = vpack.c.b16 %v4299, %v4291
    %v5428 = vpack.c.b16 %v4300, %v4292
    %v5429 = vpack.c.b16 %v4301, %v4293
    %v5430 = vpack.c.b16 %v4302, %v4294
    %v5431 = vpack.c.b16 %v4303, %v4295
    %v5432 = vpack.c.b16 %v4304, %v4296
    %v5433 = vpack.c.b16 %v4305, %v4297
    %v5434 = vpack.c.b16 %v4314, %v4306
    %v5435 = vpack.c.b16 %v4315, %v4307
    %v5436 = vpack.c.b16 %v4316, %v4308
    %v5437 = vpack.c.b16 %v4317, %v4309
    %v5438 = vpack.c.b16 %v4318, %v4310
    %v5439 = vpack.c.b16 %v4319, %v4311
    %v5440 = vpack.c.b16 %v4320, %v4312
    %v5441 = vpack.c.b16 %v4321, %v4313
    %v5442 = vpack.c.b16 %v4330, %v4322
    %v5443 = vpack.c.b16 %v4331, %v4323
    %v5444 = vpack.c.b16 %v4332, %v4324
    %v5445 = vpack.c.b16 %v4333, %v4325
    %v5446 = vpack.c.b16 %v4334, %v4326
    %v5447 = vpack.c.b16 %v4335, %v4327
    %v5448 = vpack.c.b16 %v4336, %v4328
    %v5449 = vpack.c.b16 %v4337, %v4329
    %v5450 = vpack.c.b16 %v4346, %v4338
    %v5451 = vpack.c.b16 %v4347, %v4339
    %v5452 = vpack.c.b16 %v4348, %v4340
    %v5453 = vpack.c.b16 %v4349, %v4341
    %v5454 = vpack.c.b16 %v4350, %v4342
    %v5455 = vpack.c.b16 %v4351, %v4343
    %v5456 = vpack.c.b16 %v4352, %v4344
    %v5457 = vpack.c.b16 %v4353, %v4345
    %v5458 = vpack.c.b16 %v4362, %v4354
    %v5459 = vpack.c.b16 %v4363, %v4355
    %v5460 = vpack.c.b16 %v4364, %v4356
    %v5461 = vpack.c.b16 %v4365, %v4357
    %v5462 = vpack.c.b16 %v4366, %v4358
    %v5463 = vpack.c.b16 %v4367, %v4359
    %v5464 = vpack.c.b16 %v4368, %v4360
    %v5465 = vpack.c.b16 %v4369, %v4361
    %v5466 = vpack.c.b16 %v4378, %v4370
    %v5467 = vpack.c.b16 %v4379, %v4371
    %v5468 = vpack.c.b16 %v4380, %v4372
    %v5469 = vpack.c.b16 %v4381, %v4373
    %v5470 = vpack.c.b16 %v4382, %v4374
    %v5471 = vpack.c.b16 %v4383, %v4375
    %v5472 = vpack.c.b16 %v4384, %v4376
    %v5473 = vpack.c.b16 %v4385, %v4377
    %v5474 = vpack.c.b16 %v4394, %v4386
    %v5475 = vpack.c.b16 %v4395, %v4387
    %v5476 = vpack.c.b16 %v4396, %v4388
    %v5477 = vpack.c.b16 %v4397, %v4389
    %v5478 = vpack.c.b16 %v4398, %v4390
    %v5479 = vpack.c.b16 %v4399, %v4391
    %v5480 = vpack.c.b16 %v4400, %v4392
    %v5481 = vpack.c.b16 %v4401, %v4393
    %v5482 = vpack.c.b16 %v4410, %v4402
    %v5483 = vpack.c.b16 %v4411, %v4403
    %v5484 = vpack.c.b16 %v4412, %v4404
    %v5485 = vpack.c.b16 %v4413, %v4405
    %v5486 = vpack.c.b16 %v4414, %v4406
    %v5487 = vpack.c.b16 %v4415, %v4407
    %v5488 = vpack.c.b16 %v4416, %v4408
    %v5489 = vpack.c.b16 %v4417, %v4409
    %v5490 = vpack.c.b16 %v4426, %v4418
    %v5491 = vpack.c.b16 %v4427, %v4419
    %v5492 = vpack.c.b16 %v4428, %v4420
    %v5493 = vpack.c.b16 %v4429, %v4421
    %v5494 = vpack.c.b16 %v4430, %v4422
    %v5495 = vpack.c.b16 %v4431, %v4423
    %v5496 = vpack.c.b16 %v4432, %v4424
    %v5497 = vpack.c.b16 %v4433, %v4425
    %v5498 = vpack.c.b16 %v4442, %v4434
    %v5499 = vpack.c.b16 %v4443, %v4435
    %v5500 = vpack.c.b16 %v4444, %v4436
    %v5501 = vpack.c.b16 %v4445, %v4437
    %v5502 = vpack.c.b16 %v4446, %v4438
    %v5503 = vpack.c.b16 %v4447, %v4439
    %v5504 = vpack.c.b16 %v4448, %v4440
    %v5505 = vpack.c.b16 %v4449, %v4441
    %v5506 = vpack.c.b16 %v4458, %v4450
    %v5507 = vpack.c.b16 %v4459, %v4451
    %v5508 = vpack.c.b16 %v4460, %v4452
    %v5509 = vpack.c.b16 %v4461, %v4453
    %v5510 = vpack.c.b16 %v4462, %v4454
    %v5511 = vpack.c.b16 %v4463, %v4455
    %v5512 = vpack.c.b16 %v4464, %v4456
    %v5513 = vpack.c.b16 %v4465, %v4457
    %v5514 = vpack.c.b16 %v4474, %v4466
    %v5515 = vpack.c.b16 %v4475, %v4467
    %v5516 = vpack.c.b16 %v4476, %v4468
    %v5517 = vpack.c.b16 %v4477, %v4469
    %v5518 = vpack.c.b16 %v4478, %v4470
    %v5519 = vpack.c.b16 %v4479, %v4471
    %v5520 = vpack.c.b16 %v4480, %v4472
    %v5521 = vpack.c.b16 %v4481, %v4473
    %v5522 = vpack.c.b16 %v4490, %v4482
    %v5523 = vpack.c.b16 %v4491, %v4483
    %v5524 = vpack.c.b16 %v4492, %v4484
    %v5525 = vpack.c.b16 %v4493, %v4485
    %v5526 = vpack.c.b16 %v4494, %v4486
    %v5527 = vpack.c.b16 %v4495, %v4487
    %v5528 = vpack.c.b16 %v4496, %v4488
    %v5529 = vpack.c.b16 %v4497, %v4489
    %v5530 = vpack.c.b16 %v4506, %v4498
    %v5531 = vpack.c.b16 %v4507, %v4499
    %v5532 = vpack.c.b16 %v4508, %v4500
    %v5533 = vpack.c.b16 %v4509, %v4501
    %v5534 = vpack.c.b16 %v4510, %v4502
    %v5535 = vpack.c.b16 %v4511, %v4503
    %v5536 = vpack.c.b16 %v4512, %v4504
    %v5537 = vpack.c.b16 %v4513, %v4505
    %6562 = vmatprep.subr.bf16.mxu0 %v4571
    %6563 = vmatpush1.bf16.msra.mxu0 %v4570
    %6564 = vmatprep.subr.bf16.mxu0 %v4563
    %6565 = vmatpush1.bf16.msra.mxu0 %v4562
    %6566 = vmatprep.subr.bf16.mxu0 %v4555
    %6567 = vmatpush1.bf16.msra.mxu0 %v4554
    %6568 = vmatprep.subr.bf16.mxu0 %v4547
    %6569 = vmatpush1.bf16.msra.mxu0 %v4546
    %6570 = vmatprep.subr.bf16.mxu0 %v4539
    %6571 = vmatpush1.bf16.msra.mxu0 %v4538
    %6572 = vmatprep.subr.bf16.mxu0 %v4531
    %6573 = vmatpush1.bf16.msra.mxu0 %v4530
    %6574 = vmatprep.subr.bf16.mxu0 %v4523
    %6575 = vmatpush1.bf16.msra.mxu0 %v4522
    %6576 = vmatprep.subr.bf16.mxu0 %v4515
    %6577 = vmatpush1.bf16.msra.mxu0 %v4514
    %6578 = vmatprep.subr.bf16.mxu0 %v4635
    %6579 = vmatpush2.bf16.msra.mxu0 %v4634
    %6580 = vmatprep.subr.bf16.mxu0 %v4627
    %6581 = vmatpush2.bf16.msra.mxu0 %v4626
    %6582 = vmatprep.subr.bf16.mxu0 %v4619
    %6583 = vmatpush2.bf16.msra.mxu0 %v4618
    %6584 = vmatprep.subr.bf16.mxu0 %v4611
    %6585 = vmatpush2.bf16.msra.mxu0 %v4610
    %6586 = vmatprep.subr.bf16.mxu0 %v4603
    %6587 = vmatpush2.bf16.msra.mxu0 %v4602
    %6588 = vmatprep.subr.bf16.mxu0 %v4595
    %6589 = vmatpush2.bf16.msra.mxu0 %v4594
    %6590 = vmatprep.subr.bf16.mxu0 %v4587
    %6591 = vmatpush2.bf16.msra.mxu0 %v4586
    %6592 = vmatprep.subr.bf16.mxu0 %v4579
    %6593 = vmatpush2.bf16.msra.mxu0 %v4578
    %6594 = vmatprep.mubr.bf16.mxu0 %v403
    %6595 = vmatmul.mubr.bf16.gmra.mxu0 %v402
    %v6596 = vpop.f32.mrf.mxu0
    %v6597 = vadd.f32 0.0, %v6596
    %v6598 = vpop.f32.mrf.mxu0
    %v6599 = vadd.f32 0.0, %v6598
    %v6600 = vpop.f32.mrf.mxu0
    %v6601 = vpop.f32.mrf.mxu0
    %6602 = vdwg.mxu0
    %6603 = vmatprep.subr.bf16.mxu0 %v4699
    %6604 = vmatpush1.bf16.msra.mxu0 %v4698
    %6605 = vmatprep.subr.bf16.mxu0 %v4691
    %6606 = vmatpush1.bf16.msra.mxu0 %v4690
    %6607 = vmatprep.subr.bf16.mxu0 %v4683
    %6608 = vmatpush1.bf16.msra.mxu0 %v4682
    %6609 = vmatprep.subr.bf16.mxu0 %v4675
    %6610 = vmatpush1.bf16.msra.mxu0 %v4674
    %6611 = vmatprep.subr.bf16.mxu0 %v4667
    %6612 = vmatpush1.bf16.msra.mxu0 %v4666
    %6613 = vmatprep.subr.bf16.mxu0 %v4659
    %6614 = vmatpush1.bf16.msra.mxu0 %v4658
    %6615 = vmatprep.subr.bf16.mxu0 %v4651
    %6616 = vmatpush1.bf16.msra.mxu0 %v4650
    %6617 = vmatprep.subr.bf16.mxu0 %v4643
    %6618 = vmatpush1.bf16.msra.mxu0 %v4642
    %6619 = vmatprep.subr.bf16.mxu0 %v4763
    %6620 = vmatpush2.bf16.msra.mxu0 %v4762
    %6621 = vmatprep.subr.bf16.mxu0 %v4755
    %6622 = vmatpush2.bf16.msra.mxu0 %v4754
    %6623 = vmatprep.subr.bf16.mxu0 %v4747
    %6624 = vmatpush2.bf16.msra.mxu0 %v4746
    %6625 = vmatprep.subr.bf16.mxu0 %v4739
    %6626 = vmatpush2.bf16.msra.mxu0 %v4738
    %6627 = vmatprep.subr.bf16.mxu0 %v4731
    %6628 = vmatpush2.bf16.msra.mxu0 %v4730
    %6629 = vmatprep.subr.bf16.mxu0 %v4723
    %6630 = vmatpush2.bf16.msra.mxu0 %v4722
    %6631 = vmatprep.subr.bf16.mxu0 %v4715
    %6632 = vmatpush2.bf16.msra.mxu0 %v4714
    %6633 = vmatprep.subr.bf16.mxu0 %v4707
    %6634 = vmatpush2.bf16.msra.mxu0 %v4706
    %6635 = vmatprep.mubr.bf16.mxu0 %v405
    %6636 = vmatmul.mubr.bf16.gmra.mxu0 %v404
    %v6637 = vpop.f32.mrf.mxu0
    %v6638 = vadd.f32 %v6597, %v6637
    %v6639 = vpop.f32.mrf.mxu0
    %v6640 = vadd.f32 %v6599, %v6639
    %v6641 = vpop.f32.mrf.mxu0
    %v6642 = vpop.f32.mrf.mxu0
    %6643 = vdwg.mxu0
    %6644 = vmatprep.subr.bf16.mxu0 %v4827
    %6645 = vmatpush1.bf16.msra.mxu0 %v4826
    %6646 = vmatprep.subr.bf16.mxu0 %v4819
    %6647 = vmatpush1.bf16.msra.mxu0 %v4818
    %6648 = vmatprep.subr.bf16.mxu0 %v4811
    %6649 = vmatpush1.bf16.msra.mxu0 %v4810
    %6650 = vmatprep.subr.bf16.mxu0 %v4803
    %6651 = vmatpush1.bf16.msra.mxu0 %v4802
    %6652 = vmatprep.subr.bf16.mxu0 %v4795
    %6653 = vmatpush1.bf16.msra.mxu0 %v4794
    %6654 = vmatprep.subr.bf16.mxu0 %v4787
    %6655 = vmatpush1.bf16.msra.mxu0 %v4786
    %6656 = vmatprep.subr.bf16.mxu0 %v4779
    %6657 = vmatpush1.bf16.msra.mxu0 %v4778
    %6658 = vmatprep.subr.bf16.mxu0 %v4771
    %6659 = vmatpush1.bf16.msra.mxu0 %v4770
    %6660 = vmatprep.subr.bf16.mxu0 %v4891
    %6661 = vmatpush2.bf16.msra.mxu0 %v4890
    %6662 = vmatprep.subr.bf16.mxu0 %v4883
    %6663 = vmatpush2.bf16.msra.mxu0 %v4882
    %6664 = vmatprep.subr.bf16.mxu0 %v4875
    %6665 = vmatpush2.bf16.msra.mxu0 %v4874
    %6666 = vmatprep.subr.bf16.mxu0 %v4867
    %6667 = vmatpush2.bf16.msra.mxu0 %v4866
    %6668 = vmatprep.subr.bf16.mxu0 %v4859
    %6669 = vmatpush2.bf16.msra.mxu0 %v4858
    %6670 = vmatprep.subr.bf16.mxu0 %v4851
    %6671 = vmatpush2.bf16.msra.mxu0 %v4850
    %6672 = vmatprep.subr.bf16.mxu0 %v4843
    %6673 = vmatpush2.bf16.msra.mxu0 %v4842
    %6674 = vmatprep.subr.bf16.mxu0 %v4835
    %6675 = vmatpush2.bf16.msra.mxu0 %v4834
    %6676 = vmatprep.mubr.bf16.mxu0 %v407
    %6677 = vmatmul.mubr.bf16.gmra.mxu0 %v406
    %v6678 = vpop.f32.mrf.mxu0
    %v6679 = vadd.f32 %v6638, %v6678
    %v6680 = vpop.f32.mrf.mxu0
    %v6681 = vadd.f32 %v6640, %v6680
    %v6682 = vpop.f32.mrf.mxu0
    %v6683 = vpop.f32.mrf.mxu0
    %6684 = vdwg.mxu0
    %6685 = vmatprep.subr.bf16.mxu0 %v4955
    %6686 = vmatpush1.bf16.msra.mxu0 %v4954
    %6687 = vmatprep.subr.bf16.mxu0 %v4947
    %6688 = vmatpush1.bf16.msra.mxu0 %v4946
    %6689 = vmatprep.subr.bf16.mxu0 %v4939
    %6690 = vmatpush1.bf16.msra.mxu0 %v4938
    %6691 = vmatprep.subr.bf16.mxu0 %v4931
    %6692 = vmatpush1.bf16.msra.mxu0 %v4930
    %6693 = vmatprep.subr.bf16.mxu0 %v4923
    %6694 = vmatpush1.bf16.msra.mxu0 %v4922
    %6695 = vmatprep.subr.bf16.mxu0 %v4915
    %6696 = vmatpush1.bf16.msra.mxu0 %v4914
    %6697 = vmatprep.subr.bf16.mxu0 %v4907
    %6698 = vmatpush1.bf16.msra.mxu0 %v4906
    %6699 = vmatprep.subr.bf16.mxu0 %v4899
    %6700 = vmatpush1.bf16.msra.mxu0 %v4898
    %6701 = vmatprep.subr.bf16.mxu0 %v5019
    %6702 = vmatpush2.bf16.msra.mxu0 %v5018
    %6703 = vmatprep.subr.bf16.mxu0 %v5011
    %6704 = vmatpush2.bf16.msra.mxu0 %v5010
    %6705 = vmatprep.subr.bf16.mxu0 %v5003
    %6706 = vmatpush2.bf16.msra.mxu0 %v5002
    %6707 = vmatprep.subr.bf16.mxu0 %v4995
    %6708 = vmatpush2.bf16.msra.mxu0 %v4994
    %6709 = vmatprep.subr.bf16.mxu0 %v4987
    %6710 = vmatpush2.bf16.msra.mxu0 %v4986
    %6711 = vmatprep.subr.bf16.mxu0 %v4979
    %6712 = vmatpush2.bf16.msra.mxu0 %v4978
    %6713 = vmatprep.subr.bf16.mxu0 %v4971
    %6714 = vmatpush2.bf16.msra.mxu0 %v4970
    %6715 = vmatprep.subr.bf16.mxu0 %v4963
    %6716 = vmatpush2.bf16.msra.mxu0 %v4962
    %6717 = vmatprep.mubr.bf16.mxu0 %v409
    %6718 = vmatmul.mubr.bf16.gmra.mxu0 %v408
    %v6719 = vpop.f32.mrf.mxu0
    %v6720 = vadd.f32 %v6679, %v6719
    %v6721 = vpop.f32.mrf.mxu0
    %v6722 = vadd.f32 %v6681, %v6721
    %v6723 = vpop.f32.mrf.mxu0
    %v6724 = vpop.f32.mrf.mxu0
    %6725 = vdwg.mxu0
    %6726 = vmatprep.subr.bf16.mxu0 %v5083
    %6727 = vmatpush1.bf16.msra.mxu0 %v5082
    %6728 = vmatprep.subr.bf16.mxu0 %v5075
    %6729 = vmatpush1.bf16.msra.mxu0 %v5074
    %6730 = vmatprep.subr.bf16.mxu0 %v5067
    %6731 = vmatpush1.bf16.msra.mxu0 %v5066
    %6732 = vmatprep.subr.bf16.mxu0 %v5059
    %6733 = vmatpush1.bf16.msra.mxu0 %v5058
    %6734 = vmatprep.subr.bf16.mxu0 %v5051
    %6735 = vmatpush1.bf16.msra.mxu0 %v5050
    %6736 = vmatprep.subr.bf16.mxu0 %v5043
    %6737 = vmatpush1.bf16.msra.mxu0 %v5042
    %6738 = vmatprep.subr.bf16.mxu0 %v5035
    %6739 = vmatpush1.bf16.msra.mxu0 %v5034
    %6740 = vmatprep.subr.bf16.mxu0 %v5027
    %6741 = vmatpush1.bf16.msra.mxu0 %v5026
    %6742 = vmatprep.subr.bf16.mxu0 %v5147
    %6743 = vmatpush2.bf16.msra.mxu0 %v5146
    %6744 = vmatprep.subr.bf16.mxu0 %v5139
    %6745 = vmatpush2.bf16.msra.mxu0 %v5138
    %6746 = vmatprep.subr.bf16.mxu0 %v5131
    %6747 = vmatpush2.bf16.msra.mxu0 %v5130
    %6748 = vmatprep.subr.bf16.mxu0 %v5123
    %6749 = vmatpush2.bf16.msra.mxu0 %v5122
    %6750 = vmatprep.subr.bf16.mxu0 %v5115
    %6751 = vmatpush2.bf16.msra.mxu0 %v5114
    %6752 = vmatprep.subr.bf16.mxu0 %v5107
    %6753 = vmatpush2.bf16.msra.mxu0 %v5106
    %6754 = vmatprep.subr.bf16.mxu0 %v5099
    %6755 = vmatpush2.bf16.msra.mxu0 %v5098
    %6756 = vmatprep.subr.bf16.mxu0 %v5091
    %6757 = vmatpush2.bf16.msra.mxu0 %v5090
    %6758 = vmatprep.mubr.bf16.mxu0 %v411
    %6759 = vmatmul.mubr.bf16.gmra.mxu0 %v410
    %v6760 = vpop.f32.mrf.mxu0
    %v6761 = vadd.f32 %v6720, %v6760
    %v6762 = vpop.f32.mrf.mxu0
    %v6763 = vadd.f32 %v6722, %v6762
    %v6764 = vpop.f32.mrf.mxu0
    %v6765 = vpop.f32.mrf.mxu0
    %6766 = vdwg.mxu0
    %6767 = vmatprep.subr.bf16.mxu0 %v5211
    %6768 = vmatpush1.bf16.msra.mxu0 %v5210
    %6769 = vmatprep.subr.bf16.mxu0 %v5203
    %6770 = vmatpush1.bf16.msra.mxu0 %v5202
    %6771 = vmatprep.subr.bf16.mxu0 %v5195
    %6772 = vmatpush1.bf16.msra.mxu0 %v5194
    %6773 = vmatprep.subr.bf16.mxu0 %v5187
    %6774 = vmatpush1.bf16.msra.mxu0 %v5186
    %6775 = vmatprep.subr.bf16.mxu0 %v5179
    %6776 = vmatpush1.bf16.msra.mxu0 %v5178
    %6777 = vmatprep.subr.bf16.mxu0 %v5171
    %6778 = vmatpush1.bf16.msra.mxu0 %v5170
    %6779 = vmatprep.subr.bf16.mxu0 %v5163
    %6780 = vmatpush1.bf16.msra.mxu0 %v5162
    %6781 = vmatprep.subr.bf16.mxu0 %v5155
    %6782 = vmatpush1.bf16.msra.mxu0 %v5154
    %6783 = vmatprep.subr.bf16.mxu0 %v5275
    %6784 = vmatpush2.bf16.msra.mxu0 %v5274
    %6785 = vmatprep.subr.bf16.mxu0 %v5267
    %6786 = vmatpush2.bf16.msra.mxu0 %v5266
    %6787 = vmatprep.subr.bf16.mxu0 %v5259
    %6788 = vmatpush2.bf16.msra.mxu0 %v5258
    %6789 = vmatprep.subr.bf16.mxu0 %v5251
    %6790 = vmatpush2.bf16.msra.mxu0 %v5250
    %6791 = vmatprep.subr.bf16.mxu0 %v5243
    %6792 = vmatpush2.bf16.msra.mxu0 %v5242
    %6793 = vmatprep.subr.bf16.mxu0 %v5235
    %6794 = vmatpush2.bf16.msra.mxu0 %v5234
    %6795 = vmatprep.subr.bf16.mxu0 %v5227
    %6796 = vmatpush2.bf16.msra.mxu0 %v5226
    %6797 = vmatprep.subr.bf16.mxu0 %v5219
    %6798 = vmatpush2.bf16.msra.mxu0 %v5218
    %6799 = vmatprep.mubr.bf16.mxu0 %v413
    %6800 = vmatmul.mubr.bf16.gmra.mxu0 %v412
    %v6801 = vpop.f32.mrf.mxu0
    %v6802 = vadd.f32 %v6761, %v6801
    %v6803 = vpop.f32.mrf.mxu0
    %v6804 = vadd.f32 %v6763, %v6803
    %v6805 = vpop.f32.mrf.mxu0
    %v6806 = vpop.f32.mrf.mxu0
    %6807 = vdwg.mxu0
    %6808 = vmatprep.subr.bf16.mxu0 %v5339
    %6809 = vmatpush1.bf16.msra.mxu0 %v5338
    %6810 = vmatprep.subr.bf16.mxu0 %v5331
    %6811 = vmatpush1.bf16.msra.mxu0 %v5330
    %6812 = vmatprep.subr.bf16.mxu0 %v5323
    %6813 = vmatpush1.bf16.msra.mxu0 %v5322
    %6814 = vmatprep.subr.bf16.mxu0 %v5315
    %6815 = vmatpush1.bf16.msra.mxu0 %v5314
    %6816 = vmatprep.subr.bf16.mxu0 %v5307
    %6817 = vmatpush1.bf16.msra.mxu0 %v5306
    %6818 = vmatprep.subr.bf16.mxu0 %v5299
    %6819 = vmatpush1.bf16.msra.mxu0 %v5298
    %6820 = vmatprep.subr.bf16.mxu0 %v5291
    %6821 = vmatpush1.bf16.msra.mxu0 %v5290
    %6822 = vmatprep.subr.bf16.mxu0 %v5283
    %6823 = vmatpush1.bf16.msra.mxu0 %v5282
    %6824 = vmatprep.subr.bf16.mxu0 %v5403
    %6825 = vmatpush2.bf16.msra.mxu0 %v5402
    %6826 = vmatprep.subr.bf16.mxu0 %v5395
    %6827 = vmatpush2.bf16.msra.mxu0 %v5394
    %6828 = vmatprep.subr.bf16.mxu0 %v5387
    %6829 = vmatpush2.bf16.msra.mxu0 %v5386
    %6830 = vmatprep.subr.bf16.mxu0 %v5379
    %6831 = vmatpush2.bf16.msra.mxu0 %v5378
    %6832 = vmatprep.subr.bf16.mxu0 %v5371
    %6833 = vmatpush2.bf16.msra.mxu0 %v5370
    %6834 = vmatprep.subr.bf16.mxu0 %v5363
    %6835 = vmatpush2.bf16.msra.mxu0 %v5362
    %6836 = vmatprep.subr.bf16.mxu0 %v5355
    %6837 = vmatpush2.bf16.msra.mxu0 %v5354
    %6838 = vmatprep.subr.bf16.mxu0 %v5347
    %6839 = vmatpush2.bf16.msra.mxu0 %v5346
    %6840 = vmatprep.mubr.bf16.mxu0 %v415
    %6841 = vmatmul.mubr.bf16.gmra.mxu0 %v414
    %v6842 = vpop.f32.mrf.mxu0
    %v6843 = vadd.f32 %v6802, %v6842
    %v6844 = vpop.f32.mrf.mxu0
    %v6845 = vadd.f32 %v6804, %v6844
    %v6846 = vpop.f32.mrf.mxu0
    %v6847 = vpop.f32.mrf.mxu0
    %6848 = vdwg.mxu0
    %6849 = vmatprep.subr.bf16.mxu0 %v5467
    %6850 = vmatpush1.bf16.msra.mxu0 %v5466
    %6851 = vmatprep.subr.bf16.mxu0 %v5459
    %6852 = vmatpush1.bf16.msra.mxu0 %v5458
    %6853 = vmatprep.subr.bf16.mxu0 %v5451
    %6854 = vmatpush1.bf16.msra.mxu0 %v5450
    %6855 = vmatprep.subr.bf16.mxu0 %v5443
    %6856 = vmatpush1.bf16.msra.mxu0 %v5442
    %6857 = vmatprep.subr.bf16.mxu0 %v5435
    %6858 = vmatpush1.bf16.msra.mxu0 %v5434
    %6859 = vmatprep.subr.bf16.mxu0 %v5427
    %6860 = vmatpush1.bf16.msra.mxu0 %v5426
    %6861 = vmatprep.subr.bf16.mxu0 %v5419
    %6862 = vmatpush1.bf16.msra.mxu0 %v5418
    %6863 = vmatprep.subr.bf16.mxu0 %v5411
    %6864 = vmatpush1.bf16.msra.mxu0 %v5410
    %6865 = vmatprep.subr.bf16.mxu0 %v5531
    %6866 = vmatpush2.bf16.msra.mxu0 %v5530
    %6867 = vmatprep.subr.bf16.mxu0 %v5523
    %6868 = vmatpush2.bf16.msra.mxu0 %v5522
    %6869 = vmatprep.subr.bf16.mxu0 %v5515
    %6870 = vmatpush2.bf16.msra.mxu0 %v5514
    %6871 = vmatprep.subr.bf16.mxu0 %v5507
    %6872 = vmatpush2.bf16.msra.mxu0 %v5506
    %6873 = vmatprep.subr.bf16.mxu0 %v5499
    %6874 = vmatpush2.bf16.msra.mxu0 %v5498
    %6875 = vmatprep.subr.bf16.mxu0 %v5491
    %6876 = vmatpush2.bf16.msra.mxu0 %v5490
    %6877 = vmatprep.subr.bf16.mxu0 %v5483
    %6878 = vmatpush2.bf16.msra.mxu0 %v5482
    %6879 = vmatprep.subr.bf16.mxu0 %v5475
    %6880 = vmatpush2.bf16.msra.mxu0 %v5474
    %6881 = vmatprep.mubr.bf16.mxu0 %v417
    %6882 = vmatmul.mubr.bf16.gmra.mxu0 %v416
    %v6883 = vpop.f32.mrf.mxu0
    %v6884 = vadd.f32 %v6843, %v6883
    %v6885 = vpop.f32.mrf.mxu0
    %v6886 = vadd.f32 %v6845, %v6885
    %v6887 = vpop.f32.mrf.mxu0
    %v6888 = vpop.f32.mrf.mxu0
    %6889 = vdwg.mxu0
    %6890 = vmatprep.subr.bf16.mxu0 %v4573
    %6891 = vmatpush1.bf16.msra.mxu0 %v4572
    %6892 = vmatprep.subr.bf16.mxu0 %v4565
    %6893 = vmatpush1.bf16.msra.mxu0 %v4564
    %6894 = vmatprep.subr.bf16.mxu0 %v4557
    %6895 = vmatpush1.bf16.msra.mxu0 %v4556
    %6896 = vmatprep.subr.bf16.mxu0 %v4549
    %6897 = vmatpush1.bf16.msra.mxu0 %v4548
    %6898 = vmatprep.subr.bf16.mxu0 %v4541
    %6899 = vmatpush1.bf16.msra.mxu0 %v4540
    %6900 = vmatprep.subr.bf16.mxu0 %v4533
    %6901 = vmatpush1.bf16.msra.mxu0 %v4532
    %6902 = vmatprep.subr.bf16.mxu0 %v4525
    %6903 = vmatpush1.bf16.msra.mxu0 %v4524
    %6904 = vmatprep.subr.bf16.mxu0 %v4517
    %6905 = vmatpush1.bf16.msra.mxu0 %v4516
    %6906 = vmatprep.subr.bf16.mxu0 %v4637
    %6907 = vmatpush2.bf16.msra.mxu0 %v4636
    %6908 = vmatprep.subr.bf16.mxu0 %v4629
    %6909 = vmatpush2.bf16.msra.mxu0 %v4628
    %6910 = vmatprep.subr.bf16.mxu0 %v4621
    %6911 = vmatpush2.bf16.msra.mxu0 %v4620
    %6912 = vmatprep.subr.bf16.mxu0 %v4613
    %6913 = vmatpush2.bf16.msra.mxu0 %v4612
    %6914 = vmatprep.subr.bf16.mxu0 %v4605
    %6915 = vmatpush2.bf16.msra.mxu0 %v4604
    %6916 = vmatprep.subr.bf16.mxu0 %v4597
    %6917 = vmatpush2.bf16.msra.mxu0 %v4596
    %6918 = vmatprep.subr.bf16.mxu0 %v4589
    %6919 = vmatpush2.bf16.msra.mxu0 %v4588
    %6920 = vmatprep.subr.bf16.mxu0 %v4581
    %6921 = vmatpush2.bf16.msra.mxu0 %v4580
    %6922 = vmatprep.mubr.bf16.mxu0 %v403
    %6923 = vmatmul.mubr.bf16.gmra.mxu0 %v402
    %v6924 = vpop.f32.mrf.mxu0
    %v6925 = vadd.f32 0.0, %v6924
    %v6926 = vpop.f32.mrf.mxu0
    %v6927 = vadd.f32 0.0, %v6926
    %v6928 = vpop.f32.mrf.mxu0
    %v6929 = vpop.f32.mrf.mxu0
    %6930 = vdwg.mxu0
    %6931 = vmatprep.subr.bf16.mxu0 %v4701
    %6932 = vmatpush1.bf16.msra.mxu0 %v4700
    %6933 = vmatprep.subr.bf16.mxu0 %v4693
    %6934 = vmatpush1.bf16.msra.mxu0 %v4692
    %6935 = vmatprep.subr.bf16.mxu0 %v4685
    %6936 = vmatpush1.bf16.msra.mxu0 %v4684
    %6937 = vmatprep.subr.bf16.mxu0 %v4677
    %6938 = vmatpush1.bf16.msra.mxu0 %v4676
    %6939 = vmatprep.subr.bf16.mxu0 %v4669
    %6940 = vmatpush1.bf16.msra.mxu0 %v4668
    %6941 = vmatprep.subr.bf16.mxu0 %v4661
    %6942 = vmatpush1.bf16.msra.mxu0 %v4660
    %6943 = vmatprep.subr.bf16.mxu0 %v4653
    %6944 = vmatpush1.bf16.msra.mxu0 %v4652
    %6945 = vmatprep.subr.bf16.mxu0 %v4645
    %6946 = vmatpush1.bf16.msra.mxu0 %v4644
    %6947 = vmatprep.subr.bf16.mxu0 %v4765
    %6948 = vmatpush2.bf16.msra.mxu0 %v4764
    %6949 = vmatprep.subr.bf16.mxu0 %v4757
    %6950 = vmatpush2.bf16.msra.mxu0 %v4756
    %6951 = vmatprep.subr.bf16.mxu0 %v4749
    %6952 = vmatpush2.bf16.msra.mxu0 %v4748
    %6953 = vmatprep.subr.bf16.mxu0 %v4741
    %6954 = vmatpush2.bf16.msra.mxu0 %v4740
    %6955 = vmatprep.subr.bf16.mxu0 %v4733
    %6956 = vmatpush2.bf16.msra.mxu0 %v4732
    %6957 = vmatprep.subr.bf16.mxu0 %v4725
    %6958 = vmatpush2.bf16.msra.mxu0 %v4724
    %6959 = vmatprep.subr.bf16.mxu0 %v4717
    %6960 = vmatpush2.bf16.msra.mxu0 %v4716
    %6961 = vmatprep.subr.bf16.mxu0 %v4709
    %6962 = vmatpush2.bf16.msra.mxu0 %v4708
    %6963 = vmatprep.mubr.bf16.mxu0 %v405
    %6964 = vmatmul.mubr.bf16.gmra.mxu0 %v404
    %v6965 = vpop.f32.mrf.mxu0
    %v6966 = vadd.f32 %v6925, %v6965
    %v6967 = vpop.f32.mrf.mxu0
    %v6968 = vadd.f32 %v6927, %v6967
    %v6969 = vpop.f32.mrf.mxu0
    %v6970 = vpop.f32.mrf.mxu0
    %6971 = vdwg.mxu0
    %6972 = vmatprep.subr.bf16.mxu0 %v4829
    %6973 = vmatpush1.bf16.msra.mxu0 %v4828
    %6974 = vmatprep.subr.bf16.mxu0 %v4821
    %6975 = vmatpush1.bf16.msra.mxu0 %v4820
    %6976 = vmatprep.subr.bf16.mxu0 %v4813
    %6977 = vmatpush1.bf16.msra.mxu0 %v4812
    %6978 = vmatprep.subr.bf16.mxu0 %v4805
    %6979 = vmatpush1.bf16.msra.mxu0 %v4804
    %6980 = vmatprep.subr.bf16.mxu0 %v4797
    %6981 = vmatpush1.bf16.msra.mxu0 %v4796
    %6982 = vmatprep.subr.bf16.mxu0 %v4789
    %6983 = vmatpush1.bf16.msra.mxu0 %v4788
    %6984 = vmatprep.subr.bf16.mxu0 %v4781
    %6985 = vmatpush1.bf16.msra.mxu0 %v4780
    %6986 = vmatprep.subr.bf16.mxu0 %v4773
    %6987 = vmatpush1.bf16.msra.mxu0 %v4772
    %6988 = vmatprep.subr.bf16.mxu0 %v4893
    %6989 = vmatpush2.bf16.msra.mxu0 %v4892
    %6990 = vmatprep.subr.bf16.mxu0 %v4885
    %6991 = vmatpush2.bf16.msra.mxu0 %v4884
    %6992 = vmatprep.subr.bf16.mxu0 %v4877
    %6993 = vmatpush2.bf16.msra.mxu0 %v4876
    %6994 = vmatprep.subr.bf16.mxu0 %v4869
    %6995 = vmatpush2.bf16.msra.mxu0 %v4868
    %6996 = vmatprep.subr.bf16.mxu0 %v4861
    %6997 = vmatpush2.bf16.msra.mxu0 %v4860
    %6998 = vmatprep.subr.bf16.mxu0 %v4853
    %6999 = vmatpush2.bf16.msra.mxu0 %v4852
    %7000 = vmatprep.subr.bf16.mxu0 %v4845
    %7001 = vmatpush2.bf16.msra.mxu0 %v4844
    %7002 = vmatprep.subr.bf16.mxu0 %v4837
    %7003 = vmatpush2.bf16.msra.mxu0 %v4836
    %7004 = vmatprep.mubr.bf16.mxu0 %v407
    %7005 = vmatmul.mubr.bf16.gmra.mxu0 %v406
    %v7006 = vpop.f32.mrf.mxu0
    %v7007 = vadd.f32 %v6966, %v7006
    %v7008 = vpop.f32.mrf.mxu0
    %v7009 = vadd.f32 %v6968, %v7008
    %v7010 = vpop.f32.mrf.mxu0
    %v7011 = vpop.f32.mrf.mxu0
    %7012 = vdwg.mxu0
    %7013 = vmatprep.subr.bf16.mxu0 %v4957
    %7014 = vmatpush1.bf16.msra.mxu0 %v4956
    %7015 = vmatprep.subr.bf16.mxu0 %v4949
    %7016 = vmatpush1.bf16.msra.mxu0 %v4948
    %7017 = vmatprep.subr.bf16.mxu0 %v4941
    %7018 = vmatpush1.bf16.msra.mxu0 %v4940
    %7019 = vmatprep.subr.bf16.mxu0 %v4933
    %7020 = vmatpush1.bf16.msra.mxu0 %v4932
    %7021 = vmatprep.subr.bf16.mxu0 %v4925
    %7022 = vmatpush1.bf16.msra.mxu0 %v4924
    %7023 = vmatprep.subr.bf16.mxu0 %v4917
    %7024 = vmatpush1.bf16.msra.mxu0 %v4916
    %7025 = vmatprep.subr.bf16.mxu0 %v4909
    %7026 = vmatpush1.bf16.msra.mxu0 %v4908
    %7027 = vmatprep.subr.bf16.mxu0 %v4901
    %7028 = vmatpush1.bf16.msra.mxu0 %v4900
    %7029 = vmatprep.subr.bf16.mxu0 %v5021
    %7030 = vmatpush2.bf16.msra.mxu0 %v5020
    %7031 = vmatprep.subr.bf16.mxu0 %v5013
    %7032 = vmatpush2.bf16.msra.mxu0 %v5012
    %7033 = vmatprep.subr.bf16.mxu0 %v5005
    %7034 = vmatpush2.bf16.msra.mxu0 %v5004
    %7035 = vmatprep.subr.bf16.mxu0 %v4997
    %7036 = vmatpush2.bf16.msra.mxu0 %v4996
    %7037 = vmatprep.subr.bf16.mxu0 %v4989
    %7038 = vmatpush2.bf16.msra.mxu0 %v4988
    %7039 = vmatprep.subr.bf16.mxu0 %v4981
    %7040 = vmatpush2.bf16.msra.mxu0 %v4980
    %7041 = vmatprep.subr.bf16.mxu0 %v4973
    %7042 = vmatpush2.bf16.msra.mxu0 %v4972
    %7043 = vmatprep.subr.bf16.mxu0 %v4965
    %7044 = vmatpush2.bf16.msra.mxu0 %v4964
    %7045 = vmatprep.mubr.bf16.mxu0 %v409
    %7046 = vmatmul.mubr.bf16.gmra.mxu0 %v408
    %v7047 = vpop.f32.mrf.mxu0
    %v7048 = vadd.f32 %v7007, %v7047
    %v7049 = vpop.f32.mrf.mxu0
    %v7050 = vadd.f32 %v7009, %v7049
    %v7051 = vpop.f32.mrf.mxu0
    %v7052 = vpop.f32.mrf.mxu0
    %7053 = vdwg.mxu0
    %7054 = vmatprep.subr.bf16.mxu0 %v5085
    %7055 = vmatpush1.bf16.msra.mxu0 %v5084
    %7056 = vmatprep.subr.bf16.mxu0 %v5077
    %7057 = vmatpush1.bf16.msra.mxu0 %v5076
    %7058 = vmatprep.subr.bf16.mxu0 %v5069
    %7059 = vmatpush1.bf16.msra.mxu0 %v5068
    %7060 = vmatprep.subr.bf16.mxu0 %v5061
    %7061 = vmatpush1.bf16.msra.mxu0 %v5060
    %7062 = vmatprep.subr.bf16.mxu0 %v5053
    %7063 = vmatpush1.bf16.msra.mxu0 %v5052
    %7064 = vmatprep.subr.bf16.mxu0 %v5045
    %7065 = vmatpush1.bf16.msra.mxu0 %v5044
    %7066 = vmatprep.subr.bf16.mxu0 %v5037
    %7067 = vmatpush1.bf16.msra.mxu0 %v5036
    %7068 = vmatprep.subr.bf16.mxu0 %v5029
    %7069 = vmatpush1.bf16.msra.mxu0 %v5028
    %7070 = vmatprep.subr.bf16.mxu0 %v5149
    %7071 = vmatpush2.bf16.msra.mxu0 %v5148
    %7072 = vmatprep.subr.bf16.mxu0 %v5141
    %7073 = vmatpush2.bf16.msra.mxu0 %v5140
    %7074 = vmatprep.subr.bf16.mxu0 %v5133
    %7075 = vmatpush2.bf16.msra.mxu0 %v5132
    %7076 = vmatprep.subr.bf16.mxu0 %v5125
    %7077 = vmatpush2.bf16.msra.mxu0 %v5124
    %7078 = vmatprep.subr.bf16.mxu0 %v5117
    %7079 = vmatpush2.bf16.msra.mxu0 %v5116
    %7080 = vmatprep.subr.bf16.mxu0 %v5109
    %7081 = vmatpush2.bf16.msra.mxu0 %v5108
    %7082 = vmatprep.subr.bf16.mxu0 %v5101
    %7083 = vmatpush2.bf16.msra.mxu0 %v5100
    %7084 = vmatprep.subr.bf16.mxu0 %v5093
    %7085 = vmatpush2.bf16.msra.mxu0 %v5092
    %7086 = vmatprep.mubr.bf16.mxu0 %v411
    %7087 = vmatmul.mubr.bf16.gmra.mxu0 %v410
    %v7088 = vpop.f32.mrf.mxu0
    %v7089 = vadd.f32 %v7048, %v7088
    %v7090 = vpop.f32.mrf.mxu0
    %v7091 = vadd.f32 %v7050, %v7090
    %v7092 = vpop.f32.mrf.mxu0
    %v7093 = vpop.f32.mrf.mxu0
    %7094 = vdwg.mxu0
    %7095 = vmatprep.subr.bf16.mxu0 %v5213
    %7096 = vmatpush1.bf16.msra.mxu0 %v5212
    %7097 = vmatprep.subr.bf16.mxu0 %v5205
    %7098 = vmatpush1.bf16.msra.mxu0 %v5204
    %7099 = vmatprep.subr.bf16.mxu0 %v5197
    %7100 = vmatpush1.bf16.msra.mxu0 %v5196
    %7101 = vmatprep.subr.bf16.mxu0 %v5189
    %7102 = vmatpush1.bf16.msra.mxu0 %v5188
    %7103 = vmatprep.subr.bf16.mxu0 %v5181
    %7104 = vmatpush1.bf16.msra.mxu0 %v5180
    %7105 = vmatprep.subr.bf16.mxu0 %v5173
    %7106 = vmatpush1.bf16.msra.mxu0 %v5172
    %7107 = vmatprep.subr.bf16.mxu0 %v5165
    %7108 = vmatpush1.bf16.msra.mxu0 %v5164
    %7109 = vmatprep.subr.bf16.mxu0 %v5157
    %7110 = vmatpush1.bf16.msra.mxu0 %v5156
    %7111 = vmatprep.subr.bf16.mxu0 %v5277
    %7112 = vmatpush2.bf16.msra.mxu0 %v5276
    %7113 = vmatprep.subr.bf16.mxu0 %v5269
    %7114 = vmatpush2.bf16.msra.mxu0 %v5268
    %7115 = vmatprep.subr.bf16.mxu0 %v5261
    %7116 = vmatpush2.bf16.msra.mxu0 %v5260
    %7117 = vmatprep.subr.bf16.mxu0 %v5253
    %7118 = vmatpush2.bf16.msra.mxu0 %v5252
    %7119 = vmatprep.subr.bf16.mxu0 %v5245
    %7120 = vmatpush2.bf16.msra.mxu0 %v5244
    %7121 = vmatprep.subr.bf16.mxu0 %v5237
    %7122 = vmatpush2.bf16.msra.mxu0 %v5236
    %7123 = vmatprep.subr.bf16.mxu0 %v5229
    %7124 = vmatpush2.bf16.msra.mxu0 %v5228
    %7125 = vmatprep.subr.bf16.mxu0 %v5221
    %7126 = vmatpush2.bf16.msra.mxu0 %v5220
    %7127 = vmatprep.mubr.bf16.mxu0 %v413
    %7128 = vmatmul.mubr.bf16.gmra.mxu0 %v412
    %v7129 = vpop.f32.mrf.mxu0
    %v7130 = vadd.f32 %v7089, %v7129
    %v7131 = vpop.f32.mrf.mxu0
    %v7132 = vadd.f32 %v7091, %v7131
    %v7133 = vpop.f32.mrf.mxu0
    %v7134 = vpop.f32.mrf.mxu0
    %7135 = vdwg.mxu0
    %7136 = vmatprep.subr.bf16.mxu0 %v5341
    %7137 = vmatpush1.bf16.msra.mxu0 %v5340
    %7138 = vmatprep.subr.bf16.mxu0 %v5333
    %7139 = vmatpush1.bf16.msra.mxu0 %v5332
    %7140 = vmatprep.subr.bf16.mxu0 %v5325
    %7141 = vmatpush1.bf16.msra.mxu0 %v5324
    %7142 = vmatprep.subr.bf16.mxu0 %v5317
    %7143 = vmatpush1.bf16.msra.mxu0 %v5316
    %7144 = vmatprep.subr.bf16.mxu0 %v5309
    %7145 = vmatpush1.bf16.msra.mxu0 %v5308
    %7146 = vmatprep.subr.bf16.mxu0 %v5301
    %7147 = vmatpush1.bf16.msra.mxu0 %v5300
    %7148 = vmatprep.subr.bf16.mxu0 %v5293
    %7149 = vmatpush1.bf16.msra.mxu0 %v5292
    %7150 = vmatprep.subr.bf16.mxu0 %v5285
    %7151 = vmatpush1.bf16.msra.mxu0 %v5284
    %7152 = vmatprep.subr.bf16.mxu0 %v5405
    %7153 = vmatpush2.bf16.msra.mxu0 %v5404
    %7154 = vmatprep.subr.bf16.mxu0 %v5397
    %7155 = vmatpush2.bf16.msra.mxu0 %v5396
    %7156 = vmatprep.subr.bf16.mxu0 %v5389
    %7157 = vmatpush2.bf16.msra.mxu0 %v5388
    %7158 = vmatprep.subr.bf16.mxu0 %v5381
    %7159 = vmatpush2.bf16.msra.mxu0 %v5380
    %7160 = vmatprep.subr.bf16.mxu0 %v5373
    %7161 = vmatpush2.bf16.msra.mxu0 %v5372
    %7162 = vmatprep.subr.bf16.mxu0 %v5365
    %7163 = vmatpush2.bf16.msra.mxu0 %v5364
    %7164 = vmatprep.subr.bf16.mxu0 %v5357
    %7165 = vmatpush2.bf16.msra.mxu0 %v5356
    %7166 = vmatprep.subr.bf16.mxu0 %v5349
    %7167 = vmatpush2.bf16.msra.mxu0 %v5348
    %7168 = vmatprep.mubr.bf16.mxu0 %v415
    %7169 = vmatmul.mubr.bf16.gmra.mxu0 %v414
    %v7170 = vpop.f32.mrf.mxu0
    %v7171 = vadd.f32 %v7130, %v7170
    %v7172 = vpop.f32.mrf.mxu0
    %v7173 = vadd.f32 %v7132, %v7172
    %v7174 = vpop.f32.mrf.mxu0
    %v7175 = vpop.f32.mrf.mxu0
    %7176 = vdwg.mxu0
    %7177 = vmatprep.subr.bf16.mxu0 %v5469
    %7178 = vmatpush1.bf16.msra.mxu0 %v5468
    %7179 = vmatprep.subr.bf16.mxu0 %v5461
    %7180 = vmatpush1.bf16.msra.mxu0 %v5460
    %7181 = vmatprep.subr.bf16.mxu0 %v5453
    %7182 = vmatpush1.bf16.msra.mxu0 %v5452
    %7183 = vmatprep.subr.bf16.mxu0 %v5445
    %7184 = vmatpush1.bf16.msra.mxu0 %v5444
    %7185 = vmatprep.subr.bf16.mxu0 %v5437
    %7186 = vmatpush1.bf16.msra.mxu0 %v5436
    %7187 = vmatprep.subr.bf16.mxu0 %v5429
    %7188 = vmatpush1.bf16.msra.mxu0 %v5428
    %7189 = vmatprep.subr.bf16.mxu0 %v5421
    %7190 = vmatpush1.bf16.msra.mxu0 %v5420
    %7191 = vmatprep.subr.bf16.mxu0 %v5413
    %7192 = vmatpush1.bf16.msra.mxu0 %v5412
    %7193 = vmatprep.subr.bf16.mxu0 %v5533
    %7194 = vmatpush2.bf16.msra.mxu0 %v5532
    %7195 = vmatprep.subr.bf16.mxu0 %v5525
    %7196 = vmatpush2.bf16.msra.mxu0 %v5524
    %7197 = vmatprep.subr.bf16.mxu0 %v5517
    %7198 = vmatpush2.bf16.msra.mxu0 %v5516
    %7199 = vmatprep.subr.bf16.mxu0 %v5509
    %7200 = vmatpush2.bf16.msra.mxu0 %v5508
    %7201 = vmatprep.subr.bf16.mxu0 %v5501
    %7202 = vmatpush2.bf16.msra.mxu0 %v5500
    %7203 = vmatprep.subr.bf16.mxu0 %v5493
    %7204 = vmatpush2.bf16.msra.mxu0 %v5492
    %7205 = vmatprep.subr.bf16.mxu0 %v5485
    %7206 = vmatpush2.bf16.msra.mxu0 %v5484
    %7207 = vmatprep.subr.bf16.mxu0 %v5477
    %7208 = vmatpush2.bf16.msra.mxu0 %v5476
    %7209 = vmatprep.mubr.bf16.mxu0 %v417
    %7210 = vmatmul.mubr.bf16.gmra.mxu0 %v416
    %v7211 = vpop.f32.mrf.mxu0
    %v7212 = vadd.f32 %v7171, %v7211
    %v7213 = vpop.f32.mrf.mxu0
    %v7214 = vadd.f32 %v7173, %v7213
    %v7215 = vpop.f32.mrf.mxu0
    %v7216 = vpop.f32.mrf.mxu0
    %7217 = vdwg.mxu0
    %7218 = vmatprep.subr.bf16.mxu0 %v4575
    %7219 = vmatpush1.bf16.msra.mxu0 %v4574
    %7220 = vmatprep.subr.bf16.mxu0 %v4567
    %7221 = vmatpush1.bf16.msra.mxu0 %v4566
    %7222 = vmatprep.subr.bf16.mxu0 %v4559
    %7223 = vmatpush1.bf16.msra.mxu0 %v4558
    %7224 = vmatprep.subr.bf16.mxu0 %v4551
    %7225 = vmatpush1.bf16.msra.mxu0 %v4550
    %7226 = vmatprep.subr.bf16.mxu0 %v4543
    %7227 = vmatpush1.bf16.msra.mxu0 %v4542
    %7228 = vmatprep.subr.bf16.mxu0 %v4535
    %7229 = vmatpush1.bf16.msra.mxu0 %v4534
    %7230 = vmatprep.subr.bf16.mxu0 %v4527
    %7231 = vmatpush1.bf16.msra.mxu0 %v4526
    %7232 = vmatprep.subr.bf16.mxu0 %v4519
    %7233 = vmatpush1.bf16.msra.mxu0 %v4518
    %7234 = vmatprep.subr.bf16.mxu0 %v4639
    %7235 = vmatpush2.bf16.msra.mxu0 %v4638
    %7236 = vmatprep.subr.bf16.mxu0 %v4631
    %7237 = vmatpush2.bf16.msra.mxu0 %v4630
    %7238 = vmatprep.subr.bf16.mxu0 %v4623
    %7239 = vmatpush2.bf16.msra.mxu0 %v4622
    %7240 = vmatprep.subr.bf16.mxu0 %v4615
    %7241 = vmatpush2.bf16.msra.mxu0 %v4614
    %7242 = vmatprep.subr.bf16.mxu0 %v4607
    %7243 = vmatpush2.bf16.msra.mxu0 %v4606
    %7244 = vmatprep.subr.bf16.mxu0 %v4599
    %7245 = vmatpush2.bf16.msra.mxu0 %v4598
    %7246 = vmatprep.subr.bf16.mxu0 %v4591
    %7247 = vmatpush2.bf16.msra.mxu0 %v4590
    %7248 = vmatprep.subr.bf16.mxu0 %v4583
    %7249 = vmatpush2.bf16.msra.mxu0 %v4582
    %7250 = vmatprep.mubr.bf16.mxu0 %v403
    %7251 = vmatmul.mubr.bf16.gmra.mxu0 %v402
    %v7252 = vpop.f32.mrf.mxu0
    %v7253 = vadd.f32 0.0, %v7252
    %v7254 = vpop.f32.mrf.mxu0
    %v7255 = vadd.f32 0.0, %v7254
    %v7256 = vpop.f32.mrf.mxu0
    %v7257 = vpop.f32.mrf.mxu0
    %7258 = vdwg.mxu0
    %7259 = vmatprep.subr.bf16.mxu0 %v4703
    %7260 = vmatpush1.bf16.msra.mxu0 %v4702
    %7261 = vmatprep.subr.bf16.mxu0 %v4695
    %7262 = vmatpush1.bf16.msra.mxu0 %v4694
    %7263 = vmatprep.subr.bf16.mxu0 %v4687
    %7264 = vmatpush1.bf16.msra.mxu0 %v4686
    %7265 = vmatprep.subr.bf16.mxu0 %v4679
    %7266 = vmatpush1.bf16.msra.mxu0 %v4678
    %7267 = vmatprep.subr.bf16.mxu0 %v4671
    %7268 = vmatpush1.bf16.msra.mxu0 %v4670
    %7269 = vmatprep.subr.bf16.mxu0 %v4663
    %7270 = vmatpush1.bf16.msra.mxu0 %v4662
    %7271 = vmatprep.subr.bf16.mxu0 %v4655
    %7272 = vmatpush1.bf16.msra.mxu0 %v4654
    %7273 = vmatprep.subr.bf16.mxu0 %v4647
    %7274 = vmatpush1.bf16.msra.mxu0 %v4646
    %7275 = vmatprep.subr.bf16.mxu0 %v4767
    %7276 = vmatpush2.bf16.msra.mxu0 %v4766
    %7277 = vmatprep.subr.bf16.mxu0 %v4759
    %7278 = vmatpush2.bf16.msra.mxu0 %v4758
    %7279 = vmatprep.subr.bf16.mxu0 %v4751
    %7280 = vmatpush2.bf16.msra.mxu0 %v4750
    %7281 = vmatprep.subr.bf16.mxu0 %v4743
    %7282 = vmatpush2.bf16.msra.mxu0 %v4742
    %7283 = vmatprep.subr.bf16.mxu0 %v4735
    %7284 = vmatpush2.bf16.msra.mxu0 %v4734
    %7285 = vmatprep.subr.bf16.mxu0 %v4727
    %7286 = vmatpush2.bf16.msra.mxu0 %v4726
    %7287 = vmatprep.subr.bf16.mxu0 %v4719
    %7288 = vmatpush2.bf16.msra.mxu0 %v4718
    %7289 = vmatprep.subr.bf16.mxu0 %v4711
    %7290 = vmatpush2.bf16.msra.mxu0 %v4710
    %7291 = vmatprep.mubr.bf16.mxu0 %v405
    %7292 = vmatmul.mubr.bf16.gmra.mxu0 %v404
    %v7293 = vpop.f32.mrf.mxu0
    %v7294 = vadd.f32 %v7253, %v7293
    %v7295 = vpop.f32.mrf.mxu0
    %v7296 = vadd.f32 %v7255, %v7295
    %v7297 = vpop.f32.mrf.mxu0
    %v7298 = vpop.f32.mrf.mxu0
    %7299 = vdwg.mxu0
    %7300 = vmatprep.subr.bf16.mxu0 %v4831
    %7301 = vmatpush1.bf16.msra.mxu0 %v4830
    %7302 = vmatprep.subr.bf16.mxu0 %v4823
    %7303 = vmatpush1.bf16.msra.mxu0 %v4822
    %7304 = vmatprep.subr.bf16.mxu0 %v4815
    %7305 = vmatpush1.bf16.msra.mxu0 %v4814
    %7306 = vmatprep.subr.bf16.mxu0 %v4807
    %7307 = vmatpush1.bf16.msra.mxu0 %v4806
    %7308 = vmatprep.subr.bf16.mxu0 %v4799
    %7309 = vmatpush1.bf16.msra.mxu0 %v4798
    %7310 = vmatprep.subr.bf16.mxu0 %v4791
    %7311 = vmatpush1.bf16.msra.mxu0 %v4790
    %7312 = vmatprep.subr.bf16.mxu0 %v4783
    %7313 = vmatpush1.bf16.msra.mxu0 %v4782
    %7314 = vmatprep.subr.bf16.mxu0 %v4775
    %7315 = vmatpush1.bf16.msra.mxu0 %v4774
    %7316 = vmatprep.subr.bf16.mxu0 %v4895
    %7317 = vmatpush2.bf16.msra.mxu0 %v4894
    %7318 = vmatprep.subr.bf16.mxu0 %v4887
    %7319 = vmatpush2.bf16.msra.mxu0 %v4886
    %7320 = vmatprep.subr.bf16.mxu0 %v4879
    %7321 = vmatpush2.bf16.msra.mxu0 %v4878
    %7322 = vmatprep.subr.bf16.mxu0 %v4871
    %7323 = vmatpush2.bf16.msra.mxu0 %v4870
    %7324 = vmatprep.subr.bf16.mxu0 %v4863
    %7325 = vmatpush2.bf16.msra.mxu0 %v4862
    %7326 = vmatprep.subr.bf16.mxu0 %v4855
    %7327 = vmatpush2.bf16.msra.mxu0 %v4854
    %7328 = vmatprep.subr.bf16.mxu0 %v4847
    %7329 = vmatpush2.bf16.msra.mxu0 %v4846
    %7330 = vmatprep.subr.bf16.mxu0 %v4839
    %7331 = vmatpush2.bf16.msra.mxu0 %v4838
    %7332 = vmatprep.mubr.bf16.mxu0 %v407
    %7333 = vmatmul.mubr.bf16.gmra.mxu0 %v406
    %v7334 = vpop.f32.mrf.mxu0
    %v7335 = vadd.f32 %v7294, %v7334
    %v7336 = vpop.f32.mrf.mxu0
    %v7337 = vadd.f32 %v7296, %v7336
    %v7338 = vpop.f32.mrf.mxu0
    %v7339 = vpop.f32.mrf.mxu0
    %7340 = vdwg.mxu0
    %7341 = vmatprep.subr.bf16.mxu0 %v4959
    %7342 = vmatpush1.bf16.msra.mxu0 %v4958
    %7343 = vmatprep.subr.bf16.mxu0 %v4951
    %7344 = vmatpush1.bf16.msra.mxu0 %v4950
    %7345 = vmatprep.subr.bf16.mxu0 %v4943
    %7346 = vmatpush1.bf16.msra.mxu0 %v4942
    %7347 = vmatprep.subr.bf16.mxu0 %v4935
    %7348 = vmatpush1.bf16.msra.mxu0 %v4934
    %7349 = vmatprep.subr.bf16.mxu0 %v4927
    %7350 = vmatpush1.bf16.msra.mxu0 %v4926
    %7351 = vmatprep.subr.bf16.mxu0 %v4919
    %7352 = vmatpush1.bf16.msra.mxu0 %v4918
    %7353 = vmatprep.subr.bf16.mxu0 %v4911
    %7354 = vmatpush1.bf16.msra.mxu0 %v4910
    %7355 = vmatprep.subr.bf16.mxu0 %v4903
    %7356 = vmatpush1.bf16.msra.mxu0 %v4902
    %7357 = vmatprep.subr.bf16.mxu0 %v5023
    %7358 = vmatpush2.bf16.msra.mxu0 %v5022
    %7359 = vmatprep.subr.bf16.mxu0 %v5015
    %7360 = vmatpush2.bf16.msra.mxu0 %v5014
    %7361 = vmatprep.subr.bf16.mxu0 %v5007
    %7362 = vmatpush2.bf16.msra.mxu0 %v5006
    %7363 = vmatprep.subr.bf16.mxu0 %v4999
    %7364 = vmatpush2.bf16.msra.mxu0 %v4998
    %7365 = vmatprep.subr.bf16.mxu0 %v4991
    %7366 = vmatpush2.bf16.msra.mxu0 %v4990
    %7367 = vmatprep.subr.bf16.mxu0 %v4983
    %7368 = vmatpush2.bf16.msra.mxu0 %v4982
    %7369 = vmatprep.subr.bf16.mxu0 %v4975
    %7370 = vmatpush2.bf16.msra.mxu0 %v4974
    %7371 = vmatprep.subr.bf16.mxu0 %v4967
    %7372 = vmatpush2.bf16.msra.mxu0 %v4966
    %7373 = vmatprep.mubr.bf16.mxu0 %v409
    %7374 = vmatmul.mubr.bf16.gmra.mxu0 %v408
    %v7375 = vpop.f32.mrf.mxu0
    %v7376 = vadd.f32 %v7335, %v7375
    %v7377 = vpop.f32.mrf.mxu0
    %v7378 = vadd.f32 %v7337, %v7377
    %v7379 = vpop.f32.mrf.mxu0
    %v7380 = vpop.f32.mrf.mxu0
    %7381 = vdwg.mxu0
    %7382 = vmatprep.subr.bf16.mxu0 %v5087
    %7383 = vmatpush1.bf16.msra.mxu0 %v5086
    %7384 = vmatprep.subr.bf16.mxu0 %v5079
    %7385 = vmatpush1.bf16.msra.mxu0 %v5078
    %7386 = vmatprep.subr.bf16.mxu0 %v5071
    %7387 = vmatpush1.bf16.msra.mxu0 %v5070
    %7388 = vmatprep.subr.bf16.mxu0 %v5063
    %7389 = vmatpush1.bf16.msra.mxu0 %v5062
    %7390 = vmatprep.subr.bf16.mxu0 %v5055
    %7391 = vmatpush1.bf16.msra.mxu0 %v5054
    %7392 = vmatprep.subr.bf16.mxu0 %v5047
    %7393 = vmatpush1.bf16.msra.mxu0 %v5046
    %7394 = vmatprep.subr.bf16.mxu0 %v5039
    %7395 = vmatpush1.bf16.msra.mxu0 %v5038
    %7396 = vmatprep.subr.bf16.mxu0 %v5031
    %7397 = vmatpush1.bf16.msra.mxu0 %v5030
    %7398 = vmatprep.subr.bf16.mxu0 %v5151
    %7399 = vmatpush2.bf16.msra.mxu0 %v5150
    %7400 = vmatprep.subr.bf16.mxu0 %v5143
    %7401 = vmatpush2.bf16.msra.mxu0 %v5142
    %7402 = vmatprep.subr.bf16.mxu0 %v5135
    %7403 = vmatpush2.bf16.msra.mxu0 %v5134
    %7404 = vmatprep.subr.bf16.mxu0 %v5127
    %7405 = vmatpush2.bf16.msra.mxu0 %v5126
    %7406 = vmatprep.subr.bf16.mxu0 %v5119
    %7407 = vmatpush2.bf16.msra.mxu0 %v5118
    %7408 = vmatprep.subr.bf16.mxu0 %v5111
    %7409 = vmatpush2.bf16.msra.mxu0 %v5110
    %7410 = vmatprep.subr.bf16.mxu0 %v5103
    %7411 = vmatpush2.bf16.msra.mxu0 %v5102
    %7412 = vmatprep.subr.bf16.mxu0 %v5095
    %7413 = vmatpush2.bf16.msra.mxu0 %v5094
    %7414 = vmatprep.mubr.bf16.mxu0 %v411
    %7415 = vmatmul.mubr.bf16.gmra.mxu0 %v410
    %v7416 = vpop.f32.mrf.mxu0
    %v7417 = vadd.f32 %v7376, %v7416
    %v7418 = vpop.f32.mrf.mxu0
    %v7419 = vadd.f32 %v7378, %v7418
    %v7420 = vpop.f32.mrf.mxu0
    %v7421 = vpop.f32.mrf.mxu0
    %7422 = vdwg.mxu0
    %7423 = vmatprep.subr.bf16.mxu0 %v5215
    %7424 = vmatpush1.bf16.msra.mxu0 %v5214
    %7425 = vmatprep.subr.bf16.mxu0 %v5207
    %7426 = vmatpush1.bf16.msra.mxu0 %v5206
    %7427 = vmatprep.subr.bf16.mxu0 %v5199
    %7428 = vmatpush1.bf16.msra.mxu0 %v5198
    %7429 = vmatprep.subr.bf16.mxu0 %v5191
    %7430 = vmatpush1.bf16.msra.mxu0 %v5190
    %7431 = vmatprep.subr.bf16.mxu0 %v5183
    %7432 = vmatpush1.bf16.msra.mxu0 %v5182
    %7433 = vmatprep.subr.bf16.mxu0 %v5175
    %7434 = vmatpush1.bf16.msra.mxu0 %v5174
    %7435 = vmatprep.subr.bf16.mxu0 %v5167
    %7436 = vmatpush1.bf16.msra.mxu0 %v5166
    %7437 = vmatprep.subr.bf16.mxu0 %v5159
    %7438 = vmatpush1.bf16.msra.mxu0 %v5158
    %7439 = vmatprep.subr.bf16.mxu0 %v5279
    %7440 = vmatpush2.bf16.msra.mxu0 %v5278
    %7441 = vmatprep.subr.bf16.mxu0 %v5271
    %7442 = vmatpush2.bf16.msra.mxu0 %v5270
    %7443 = vmatprep.subr.bf16.mxu0 %v5263
    %7444 = vmatpush2.bf16.msra.mxu0 %v5262
    %7445 = vmatprep.subr.bf16.mxu0 %v5255
    %7446 = vmatpush2.bf16.msra.mxu0 %v5254
    %7447 = vmatprep.subr.bf16.mxu0 %v5247
    %7448 = vmatpush2.bf16.msra.mxu0 %v5246
    %7449 = vmatprep.subr.bf16.mxu0 %v5239
    %7450 = vmatpush2.bf16.msra.mxu0 %v5238
    %7451 = vmatprep.subr.bf16.mxu0 %v5231
    %7452 = vmatpush2.bf16.msra.mxu0 %v5230
    %7453 = vmatprep.subr.bf16.mxu0 %v5223
    %7454 = vmatpush2.bf16.msra.mxu0 %v5222
    %7455 = vmatprep.mubr.bf16.mxu0 %v413
    %7456 = vmatmul.mubr.bf16.gmra.mxu0 %v412
    %v7457 = vpop.f32.mrf.mxu0
    %v7458 = vadd.f32 %v7417, %v7457
    %v7459 = vpop.f32.mrf.mxu0
    %v7460 = vadd.f32 %v7419, %v7459
    %v7461 = vpop.f32.mrf.mxu0
    %v7462 = vpop.f32.mrf.mxu0
    %7463 = vdwg.mxu0
    %7464 = vmatprep.subr.bf16.mxu0 %v5343
    %7465 = vmatpush1.bf16.msra.mxu0 %v5342
    %7466 = vmatprep.subr.bf16.mxu0 %v5335
    %7467 = vmatpush1.bf16.msra.mxu0 %v5334
    %7468 = vmatprep.subr.bf16.mxu0 %v5327
    %7469 = vmatpush1.bf16.msra.mxu0 %v5326
    %7470 = vmatprep.subr.bf16.mxu0 %v5319
    %7471 = vmatpush1.bf16.msra.mxu0 %v5318
    %7472 = vmatprep.subr.bf16.mxu0 %v5311
    %7473 = vmatpush1.bf16.msra.mxu0 %v5310
    %7474 = vmatprep.subr.bf16.mxu0 %v5303
    %7475 = vmatpush1.bf16.msra.mxu0 %v5302
    %7476 = vmatprep.subr.bf16.mxu0 %v5295
    %7477 = vmatpush1.bf16.msra.mxu0 %v5294
    %7478 = vmatprep.subr.bf16.mxu0 %v5287
    %7479 = vmatpush1.bf16.msra.mxu0 %v5286
    %7480 = vmatprep.subr.bf16.mxu0 %v5407
    %7481 = vmatpush2.bf16.msra.mxu0 %v5406
    %7482 = vmatprep.subr.bf16.mxu0 %v5399
    %7483 = vmatpush2.bf16.msra.mxu0 %v5398
    %7484 = vmatprep.subr.bf16.mxu0 %v5391
    %7485 = vmatpush2.bf16.msra.mxu0 %v5390
    %7486 = vmatprep.subr.bf16.mxu0 %v5383
    %7487 = vmatpush2.bf16.msra.mxu0 %v5382
    %7488 = vmatprep.subr.bf16.mxu0 %v5375
    %7489 = vmatpush2.bf16.msra.mxu0 %v5374
    %7490 = vmatprep.subr.bf16.mxu0 %v5367
    %7491 = vmatpush2.bf16.msra.mxu0 %v5366
    %7492 = vmatprep.subr.bf16.mxu0 %v5359
    %7493 = vmatpush2.bf16.msra.mxu0 %v5358
    %7494 = vmatprep.subr.bf16.mxu0 %v5351
    %7495 = vmatpush2.bf16.msra.mxu0 %v5350
    %7496 = vmatprep.mubr.bf16.mxu0 %v415
    %7497 = vmatmul.mubr.bf16.gmra.mxu0 %v414
    %v7498 = vpop.f32.mrf.mxu0
    %v7499 = vadd.f32 %v7458, %v7498
    %v7500 = vpop.f32.mrf.mxu0
    %v7501 = vadd.f32 %v7460, %v7500
    %v7502 = vpop.f32.mrf.mxu0
    %v7503 = vpop.f32.mrf.mxu0
    %7504 = vdwg.mxu0
    %7505 = vmatprep.subr.bf16.mxu0 %v5471
    %7506 = vmatpush1.bf16.msra.mxu0 %v5470
    %7507 = vmatprep.subr.bf16.mxu0 %v5463
    %7508 = vmatpush1.bf16.msra.mxu0 %v5462
    %7509 = vmatprep.subr.bf16.mxu0 %v5455
    %7510 = vmatpush1.bf16.msra.mxu0 %v5454
    %7511 = vmatprep.subr.bf16.mxu0 %v5447
    %7512 = vmatpush1.bf16.msra.mxu0 %v5446
    %7513 = vmatprep.subr.bf16.mxu0 %v5439
    %7514 = vmatpush1.bf16.msra.mxu0 %v5438
    %7515 = vmatprep.subr.bf16.mxu0 %v5431
    %7516 = vmatpush1.bf16.msra.mxu0 %v5430
    %7517 = vmatprep.subr.bf16.mxu0 %v5423
    %7518 = vmatpush1.bf16.msra.mxu0 %v5422
    %7519 = vmatprep.subr.bf16.mxu0 %v5415
    %7520 = vmatpush1.bf16.msra.mxu0 %v5414
    %7521 = vmatprep.subr.bf16.mxu0 %v5535
    %7522 = vmatpush2.bf16.msra.mxu0 %v5534
    %7523 = vmatprep.subr.bf16.mxu0 %v5527
    %7524 = vmatpush2.bf16.msra.mxu0 %v5526
    %7525 = vmatprep.subr.bf16.mxu0 %v5519
    %7526 = vmatpush2.bf16.msra.mxu0 %v5518
    %7527 = vmatprep.subr.bf16.mxu0 %v5511
    %7528 = vmatpush2.bf16.msra.mxu0 %v5510
    %7529 = vmatprep.subr.bf16.mxu0 %v5503
    %7530 = vmatpush2.bf16.msra.mxu0 %v5502
    %7531 = vmatprep.subr.bf16.mxu0 %v5495
    %7532 = vmatpush2.bf16.msra.mxu0 %v5494
    %7533 = vmatprep.subr.bf16.mxu0 %v5487
    %7534 = vmatpush2.bf16.msra.mxu0 %v5486
    %7535 = vmatprep.subr.bf16.mxu0 %v5479
    %7536 = vmatpush2.bf16.msra.mxu0 %v5478
    %7537 = vmatprep.mubr.bf16.mxu0 %v417
    %7538 = vmatmul.mubr.bf16.gmra.mxu0 %v416
    %v7539 = vpop.f32.mrf.mxu0
    %v7540 = vadd.f32 %v7499, %v7539
    %v7541 = vpop.f32.mrf.mxu0
    %v7542 = vadd.f32 %v7501, %v7541
    %v7543 = vpop.f32.mrf.mxu0
    %v7544 = vpop.f32.mrf.mxu0
    %7545 = vdwg.mxu0
    %7546 = vmatprep.subr.bf16.mxu0 %v4577
    %7547 = vmatpush1.bf16.msra.mxu0 %v4576
    %7548 = vmatprep.subr.bf16.mxu0 %v4569
    %7549 = vmatpush1.bf16.msra.mxu0 %v4568
    %7550 = vmatprep.subr.bf16.mxu0 %v4561
    %7551 = vmatpush1.bf16.msra.mxu0 %v4560
    %7552 = vmatprep.subr.bf16.mxu0 %v4553
    %7553 = vmatpush1.bf16.msra.mxu0 %v4552
    %7554 = vmatprep.subr.bf16.mxu0 %v4545
    %7555 = vmatpush1.bf16.msra.mxu0 %v4544
    %7556 = vmatprep.subr.bf16.mxu0 %v4537
    %7557 = vmatpush1.bf16.msra.mxu0 %v4536
    %7558 = vmatprep.subr.bf16.mxu0 %v4529
    %7559 = vmatpush1.bf16.msra.mxu0 %v4528
    %7560 = vmatprep.subr.bf16.mxu0 %v4521
    %7561 = vmatpush1.bf16.msra.mxu0 %v4520
    %7562 = vmatprep.subr.bf16.mxu0 %v4641
    %7563 = vmatpush2.bf16.msra.mxu0 %v4640
    %7564 = vmatprep.subr.bf16.mxu0 %v4633
    %7565 = vmatpush2.bf16.msra.mxu0 %v4632
    %7566 = vmatprep.subr.bf16.mxu0 %v4625
    %7567 = vmatpush2.bf16.msra.mxu0 %v4624
    %7568 = vmatprep.subr.bf16.mxu0 %v4617
    %7569 = vmatpush2.bf16.msra.mxu0 %v4616
    %7570 = vmatprep.subr.bf16.mxu0 %v4609
    %7571 = vmatpush2.bf16.msra.mxu0 %v4608
    %7572 = vmatprep.subr.bf16.mxu0 %v4601
    %7573 = vmatpush2.bf16.msra.mxu0 %v4600
    %7574 = vmatprep.subr.bf16.mxu0 %v4593
    %7575 = vmatpush2.bf16.msra.mxu0 %v4592
    %7576 = vmatprep.subr.bf16.mxu0 %v4585
    %7577 = vmatpush2.bf16.msra.mxu0 %v4584
    %7578 = vmatprep.mubr.bf16.mxu0 %v403
    %7579 = vmatmul.mubr.bf16.gmra.mxu0 %v402
    %v7580 = vpop.f32.mrf.mxu0
    %v7581 = vadd.f32 0.0, %v7580
    %v7582 = vpop.f32.mrf.mxu0
    %v7583 = vadd.f32 0.0, %v7582
    %v7584 = vpop.f32.mrf.mxu0
    %v7585 = vpop.f32.mrf.mxu0
    %7586 = vdwg.mxu0
    %7587 = vmatprep.subr.bf16.mxu0 %v4705
    %7588 = vmatpush1.bf16.msra.mxu0 %v4704
    %7589 = vmatprep.subr.bf16.mxu0 %v4697
    %7590 = vmatpush1.bf16.msra.mxu0 %v4696
    %7591 = vmatprep.subr.bf16.mxu0 %v4689
    %7592 = vmatpush1.bf16.msra.mxu0 %v4688
    %7593 = vmatprep.subr.bf16.mxu0 %v4681
    %7594 = vmatpush1.bf16.msra.mxu0 %v4680
    %7595 = vmatprep.subr.bf16.mxu0 %v4673
    %7596 = vmatpush1.bf16.msra.mxu0 %v4672
    %7597 = vmatprep.subr.bf16.mxu0 %v4665
    %7598 = vmatpush1.bf16.msra.mxu0 %v4664
    %7599 = vmatprep.subr.bf16.mxu0 %v4657
    %7600 = vmatpush1.bf16.msra.mxu0 %v4656
    %7601 = vmatprep.subr.bf16.mxu0 %v4649
    %7602 = vmatpush1.bf16.msra.mxu0 %v4648
    %7603 = vmatprep.subr.bf16.mxu0 %v4769
    %7604 = vmatpush2.bf16.msra.mxu0 %v4768
    %7605 = vmatprep.subr.bf16.mxu0 %v4761
    %7606 = vmatpush2.bf16.msra.mxu0 %v4760
    %7607 = vmatprep.subr.bf16.mxu0 %v4753
    %7608 = vmatpush2.bf16.msra.mxu0 %v4752
    %7609 = vmatprep.subr.bf16.mxu0 %v4745
    %7610 = vmatpush2.bf16.msra.mxu0 %v4744
    %7611 = vmatprep.subr.bf16.mxu0 %v4737
    %7612 = vmatpush2.bf16.msra.mxu0 %v4736
    %7613 = vmatprep.subr.bf16.mxu0 %v4729
    %7614 = vmatpush2.bf16.msra.mxu0 %v4728
    %7615 = vmatprep.subr.bf16.mxu0 %v4721
    %7616 = vmatpush2.bf16.msra.mxu0 %v4720
    %7617 = vmatprep.subr.bf16.mxu0 %v4713
    %7618 = vmatpush2.bf16.msra.mxu0 %v4712
    %7619 = vmatprep.mubr.bf16.mxu0 %v405
    %7620 = vmatmul.mubr.bf16.gmra.mxu0 %v404
    %v7621 = vpop.f32.mrf.mxu0
    %v7622 = vadd.f32 %v7581, %v7621
    %v7623 = vpop.f32.mrf.mxu0
    %v7624 = vadd.f32 %v7583, %v7623
    %v7625 = vpop.f32.mrf.mxu0
    %v7626 = vpop.f32.mrf.mxu0
    %7627 = vdwg.mxu0
    %7628 = vmatprep.subr.bf16.mxu0 %v4833
    %7629 = vmatpush1.bf16.msra.mxu0 %v4832
    %7630 = vmatprep.subr.bf16.mxu0 %v4825
    %7631 = vmatpush1.bf16.msra.mxu0 %v4824
    %7632 = vmatprep.subr.bf16.mxu0 %v4817
    %7633 = vmatpush1.bf16.msra.mxu0 %v4816
    %7634 = vmatprep.subr.bf16.mxu0 %v4809
    %7635 = vmatpush1.bf16.msra.mxu0 %v4808
    %7636 = vmatprep.subr.bf16.mxu0 %v4801
    %7637 = vmatpush1.bf16.msra.mxu0 %v4800
    %7638 = vmatprep.subr.bf16.mxu0 %v4793
    %7639 = vmatpush1.bf16.msra.mxu0 %v4792
    %7640 = vmatprep.subr.bf16.mxu0 %v4785
    %7641 = vmatpush1.bf16.msra.mxu0 %v4784
    %7642 = vmatprep.subr.bf16.mxu0 %v4777
    %7643 = vmatpush1.bf16.msra.mxu0 %v4776
    %7644 = vmatprep.subr.bf16.mxu0 %v4897
    %7645 = vmatpush2.bf16.msra.mxu0 %v4896
    %7646 = vmatprep.subr.bf16.mxu0 %v4889
    %7647 = vmatpush2.bf16.msra.mxu0 %v4888
    %7648 = vmatprep.subr.bf16.mxu0 %v4881
    %7649 = vmatpush2.bf16.msra.mxu0 %v4880
    %7650 = vmatprep.subr.bf16.mxu0 %v4873
    %7651 = vmatpush2.bf16.msra.mxu0 %v4872
    %7652 = vmatprep.subr.bf16.mxu0 %v4865
    %7653 = vmatpush2.bf16.msra.mxu0 %v4864
    %7654 = vmatprep.subr.bf16.mxu0 %v4857
    %7655 = vmatpush2.bf16.msra.mxu0 %v4856
    %7656 = vmatprep.subr.bf16.mxu0 %v4849
    %7657 = vmatpush2.bf16.msra.mxu0 %v4848
    %7658 = vmatprep.subr.bf16.mxu0 %v4841
    %7659 = vmatpush2.bf16.msra.mxu0 %v4840
    %7660 = vmatprep.mubr.bf16.mxu0 %v407
    %7661 = vmatmul.mubr.bf16.gmra.mxu0 %v406
    %v7662 = vpop.f32.mrf.mxu0
    %v7663 = vadd.f32 %v7622, %v7662
    %v7664 = vpop.f32.mrf.mxu0
    %v7665 = vadd.f32 %v7624, %v7664
    %v7666 = vpop.f32.mrf.mxu0
    %v7667 = vpop.f32.mrf.mxu0
    %7668 = vdwg.mxu0
    %7669 = vmatprep.subr.bf16.mxu0 %v4961
    %7670 = vmatpush1.bf16.msra.mxu0 %v4960
    %7671 = vmatprep.subr.bf16.mxu0 %v4953
    %7672 = vmatpush1.bf16.msra.mxu0 %v4952
    %7673 = vmatprep.subr.bf16.mxu0 %v4945
    %7674 = vmatpush1.bf16.msra.mxu0 %v4944
    %7675 = vmatprep.subr.bf16.mxu0 %v4937
    %7676 = vmatpush1.bf16.msra.mxu0 %v4936
    %7677 = vmatprep.subr.bf16.mxu0 %v4929
    %7678 = vmatpush1.bf16.msra.mxu0 %v4928
    %7679 = vmatprep.subr.bf16.mxu0 %v4921
    %7680 = vmatpush1.bf16.msra.mxu0 %v4920
    %7681 = vmatprep.subr.bf16.mxu0 %v4913
    %7682 = vmatpush1.bf16.msra.mxu0 %v4912
    %7683 = vmatprep.subr.bf16.mxu0 %v4905
    %7684 = vmatpush1.bf16.msra.mxu0 %v4904
    %7685 = vmatprep.subr.bf16.mxu0 %v5025
    %7686 = vmatpush2.bf16.msra.mxu0 %v5024
    %7687 = vmatprep.subr.bf16.mxu0 %v5017
    %7688 = vmatpush2.bf16.msra.mxu0 %v5016
    %7689 = vmatprep.subr.bf16.mxu0 %v5009
    %7690 = vmatpush2.bf16.msra.mxu0 %v5008
    %7691 = vmatprep.subr.bf16.mxu0 %v5001
    %7692 = vmatpush2.bf16.msra.mxu0 %v5000
    %7693 = vmatprep.subr.bf16.mxu0 %v4993
    %7694 = vmatpush2.bf16.msra.mxu0 %v4992
    %7695 = vmatprep.subr.bf16.mxu0 %v4985
    %7696 = vmatpush2.bf16.msra.mxu0 %v4984
    %7697 = vmatprep.subr.bf16.mxu0 %v4977
    %7698 = vmatpush2.bf16.msra.mxu0 %v4976
    %7699 = vmatprep.subr.bf16.mxu0 %v4969
    %7700 = vmatpush2.bf16.msra.mxu0 %v4968
    %7701 = vmatprep.mubr.bf16.mxu0 %v409
    %7702 = vmatmul.mubr.bf16.gmra.mxu0 %v408
    %v7703 = vpop.f32.mrf.mxu0
    %v7704 = vadd.f32 %v7663, %v7703
    %v7705 = vpop.f32.mrf.mxu0
    %v7706 = vadd.f32 %v7665, %v7705
    %v7707 = vpop.f32.mrf.mxu0
    %v7708 = vpop.f32.mrf.mxu0
    %7709 = vdwg.mxu0
    %7710 = vmatprep.subr.bf16.mxu0 %v5089
    %7711 = vmatpush1.bf16.msra.mxu0 %v5088
    %7712 = vmatprep.subr.bf16.mxu0 %v5081
    %7713 = vmatpush1.bf16.msra.mxu0 %v5080
    %7714 = vmatprep.subr.bf16.mxu0 %v5073
    %7715 = vmatpush1.bf16.msra.mxu0 %v5072
    %7716 = vmatprep.subr.bf16.mxu0 %v5065
    %7717 = vmatpush1.bf16.msra.mxu0 %v5064
    %7718 = vmatprep.subr.bf16.mxu0 %v5057
    %7719 = vmatpush1.bf16.msra.mxu0 %v5056
    %7720 = vmatprep.subr.bf16.mxu0 %v5049
    %7721 = vmatpush1.bf16.msra.mxu0 %v5048
    %7722 = vmatprep.subr.bf16.mxu0 %v5041
    %7723 = vmatpush1.bf16.msra.mxu0 %v5040
    %7724 = vmatprep.subr.bf16.mxu0 %v5033
    %7725 = vmatpush1.bf16.msra.mxu0 %v5032
    %7726 = vmatprep.subr.bf16.mxu0 %v5153
    %7727 = vmatpush2.bf16.msra.mxu0 %v5152
    %7728 = vmatprep.subr.bf16.mxu0 %v5145
    %7729 = vmatpush2.bf16.msra.mxu0 %v5144
    %7730 = vmatprep.subr.bf16.mxu0 %v5137
    %7731 = vmatpush2.bf16.msra.mxu0 %v5136
    %7732 = vmatprep.subr.bf16.mxu0 %v5129
    %7733 = vmatpush2.bf16.msra.mxu0 %v5128
    %7734 = vmatprep.subr.bf16.mxu0 %v5121
    %7735 = vmatpush2.bf16.msra.mxu0 %v5120
    %7736 = vmatprep.subr.bf16.mxu0 %v5113
    %7737 = vmatpush2.bf16.msra.mxu0 %v5112
    %7738 = vmatprep.subr.bf16.mxu0 %v5105
    %7739 = vmatpush2.bf16.msra.mxu0 %v5104
    %7740 = vmatprep.subr.bf16.mxu0 %v5097
    %7741 = vmatpush2.bf16.msra.mxu0 %v5096
    %7742 = vmatprep.mubr.bf16.mxu0 %v411
    %7743 = vmatmul.mubr.bf16.gmra.mxu0 %v410
    %v7744 = vpop.f32.mrf.mxu0
    %v7745 = vadd.f32 %v7704, %v7744
    %v7746 = vpop.f32.mrf.mxu0
    %v7747 = vadd.f32 %v7706, %v7746
    %v7748 = vpop.f32.mrf.mxu0
    %v7749 = vpop.f32.mrf.mxu0
    %7750 = vdwg.mxu0
    %7751 = vmatprep.subr.bf16.mxu0 %v5217
    %7752 = vmatpush1.bf16.msra.mxu0 %v5216
    %7753 = vmatprep.subr.bf16.mxu0 %v5209
    %7754 = vmatpush1.bf16.msra.mxu0 %v5208
    %7755 = vmatprep.subr.bf16.mxu0 %v5201
    %7756 = vmatpush1.bf16.msra.mxu0 %v5200
    %7757 = vmatprep.subr.bf16.mxu0 %v5193
    %7758 = vmatpush1.bf16.msra.mxu0 %v5192
    %7759 = vmatprep.subr.bf16.mxu0 %v5185
    %7760 = vmatpush1.bf16.msra.mxu0 %v5184
    %7761 = vmatprep.subr.bf16.mxu0 %v5177
    %7762 = vmatpush1.bf16.msra.mxu0 %v5176
    %7763 = vmatprep.subr.bf16.mxu0 %v5169
    %7764 = vmatpush1.bf16.msra.mxu0 %v5168
    %7765 = vmatprep.subr.bf16.mxu0 %v5161
    %7766 = vmatpush1.bf16.msra.mxu0 %v5160
    %7767 = vmatprep.subr.bf16.mxu0 %v5281
    %7768 = vmatpush2.bf16.msra.mxu0 %v5280
    %7769 = vmatprep.subr.bf16.mxu0 %v5273
    %7770 = vmatpush2.bf16.msra.mxu0 %v5272
    %7771 = vmatprep.subr.bf16.mxu0 %v5265
    %7772 = vmatpush2.bf16.msra.mxu0 %v5264
    %7773 = vmatprep.subr.bf16.mxu0 %v5257
    %7774 = vmatpush2.bf16.msra.mxu0 %v5256
    %7775 = vmatprep.subr.bf16.mxu0 %v5249
    %7776 = vmatpush2.bf16.msra.mxu0 %v5248
    %7777 = vmatprep.subr.bf16.mxu0 %v5241
    %7778 = vmatpush2.bf16.msra.mxu0 %v5240
    %7779 = vmatprep.subr.bf16.mxu0 %v5233
    %7780 = vmatpush2.bf16.msra.mxu0 %v5232
    %7781 = vmatprep.subr.bf16.mxu0 %v5225
    %7782 = vmatpush2.bf16.msra.mxu0 %v5224
    %7783 = vmatprep.mubr.bf16.mxu0 %v413
    %7784 = vmatmul.mubr.bf16.gmra.mxu0 %v412
    %v7785 = vpop.f32.mrf.mxu0
    %v7786 = vadd.f32 %v7745, %v7785
    %v7787 = vpop.f32.mrf.mxu0
    %v7788 = vadd.f32 %v7747, %v7787
    %v7789 = vpop.f32.mrf.mxu0
    %v7790 = vpop.f32.mrf.mxu0
    %7791 = vdwg.mxu0
    %7792 = vmatprep.subr.bf16.mxu0 %v5345
    %7793 = vmatpush1.bf16.msra.mxu0 %v5344
    %7794 = vmatprep.subr.bf16.mxu0 %v5337
    %7795 = vmatpush1.bf16.msra.mxu0 %v5336
    %7796 = vmatprep.subr.bf16.mxu0 %v5329
    %7797 = vmatpush1.bf16.msra.mxu0 %v5328
    %7798 = vmatprep.subr.bf16.mxu0 %v5321
    %7799 = vmatpush1.bf16.msra.mxu0 %v5320
    %7800 = vmatprep.subr.bf16.mxu0 %v5313
    %7801 = vmatpush1.bf16.msra.mxu0 %v5312
    %7802 = vmatprep.subr.bf16.mxu0 %v5305
    %7803 = vmatpush1.bf16.msra.mxu0 %v5304
    %7804 = vmatprep.subr.bf16.mxu0 %v5297
    %7805 = vmatpush1.bf16.msra.mxu0 %v5296
    %7806 = vmatprep.subr.bf16.mxu0 %v5289
    %7807 = vmatpush1.bf16.msra.mxu0 %v5288
    %7808 = vmatprep.subr.bf16.mxu0 %v5409
    %7809 = vmatpush2.bf16.msra.mxu0 %v5408
    %7810 = vmatprep.subr.bf16.mxu0 %v5401
    %7811 = vmatpush2.bf16.msra.mxu0 %v5400
    %7812 = vmatprep.subr.bf16.mxu0 %v5393
    %7813 = vmatpush2.bf16.msra.mxu0 %v5392
    %7814 = vmatprep.subr.bf16.mxu0 %v5385
    %7815 = vmatpush2.bf16.msra.mxu0 %v5384
    %7816 = vmatprep.subr.bf16.mxu0 %v5377
    %7817 = vmatpush2.bf16.msra.mxu0 %v5376
    %7818 = vmatprep.subr.bf16.mxu0 %v5369
    %7819 = vmatpush2.bf16.msra.mxu0 %v5368
    %7820 = vmatprep.subr.bf16.mxu0 %v5361
    %7821 = vmatpush2.bf16.msra.mxu0 %v5360
    %7822 = vmatprep.subr.bf16.mxu0 %v5353
    %7823 = vmatpush2.bf16.msra.mxu0 %v5352
    %7824 = vmatprep.mubr.bf16.mxu0 %v415
    %7825 = vmatmul.mubr.bf16.gmra.mxu0 %v414
    %v7826 = vpop.f32.mrf.mxu0
    %v7827 = vadd.f32 %v7786, %v7826
    %v7828 = vpop.f32.mrf.mxu0
    %v7829 = vadd.f32 %v7788, %v7828
    %v7830 = vpop.f32.mrf.mxu0
    %v7831 = vpop.f32.mrf.mxu0
    %7832 = vdwg.mxu0
    %7833 = vmatprep.subr.bf16.mxu0 %v5473
    %7834 = vmatpush1.bf16.msra.mxu0 %v5472
    %7835 = vmatprep.subr.bf16.mxu0 %v5465
    %7836 = vmatpush1.bf16.msra.mxu0 %v5464
    %7837 = vmatprep.subr.bf16.mxu0 %v5457
    %7838 = vmatpush1.bf16.msra.mxu0 %v5456
    %7839 = vmatprep.subr.bf16.mxu0 %v5449
    %7840 = vmatpush1.bf16.msra.mxu0 %v5448
    %7841 = vmatprep.subr.bf16.mxu0 %v5441
    %7842 = vmatpush1.bf16.msra.mxu0 %v5440
    %7843 = vmatprep.subr.bf16.mxu0 %v5433
    %7844 = vmatpush1.bf16.msra.mxu0 %v5432
    %7845 = vmatprep.subr.bf16.mxu0 %v5425
    %7846 = vmatpush1.bf16.msra.mxu0 %v5424
    %7847 = vmatprep.subr.bf16.mxu0 %v5417
    %7848 = vmatpush1.bf16.msra.mxu0 %v5416
    %7849 = vmatprep.subr.bf16.mxu0 %v5537
    %7850 = vmatpush2.bf16.msra.mxu0 %v5536
    %7851 = vmatprep.subr.bf16.mxu0 %v5529
    %7852 = vmatpush2.bf16.msra.mxu0 %v5528
    %7853 = vmatprep.subr.bf16.mxu0 %v5521
    %7854 = vmatpush2.bf16.msra.mxu0 %v5520
    %7855 = vmatprep.subr.bf16.mxu0 %v5513
    %7856 = vmatpush2.bf16.msra.mxu0 %v5512
    %7857 = vmatprep.subr.bf16.mxu0 %v5505
    %7858 = vmatpush2.bf16.msra.mxu0 %v5504
    %7859 = vmatprep.subr.bf16.mxu0 %v5497
    %7860 = vmatpush2.bf16.msra.mxu0 %v5496
    %7861 = vmatprep.subr.bf16.mxu0 %v5489
    %7862 = vmatpush2.bf16.msra.mxu0 %v5488
    %7863 = vmatprep.subr.bf16.mxu0 %v5481
    %7864 = vmatpush2.bf16.msra.mxu0 %v5480
    %7865 = vmatprep.mubr.bf16.mxu0 %v417
    %7866 = vmatmul.mubr.bf16.gmra.mxu0 %v416
    %v7867 = vpop.f32.mrf.mxu0
    %v7868 = vadd.f32 %v7827, %v7867
    %v7869 = vpop.f32.mrf.mxu0
    %v7870 = vadd.f32 %v7829, %v7869
    %v7871 = vpop.f32.mrf.mxu0
    %v7872 = vpop.f32.mrf.mxu0
    %7873 = vdwg.mxu0
    %v7874 = vld [vmem:[%s3] sm:$0xff]
    %v7875 = vld [vmem:[%s3 + $0x8] sm:$0xff]
    %v7876 = vld [vmem:[%s3 + $0x10] sm:$0xff]
    %v7877 = vld [vmem:[%s3 + $0x18] sm:$0xff]
    %v7878 = vld [vmem:[%s3 + $0x20] sm:$0xff]
    %v7879 = vld [vmem:[%s3 + $0x28] sm:$0xff]
    %v7880 = vld [vmem:[%s3 + $0x30] sm:$0xff]
    %v7881 = vld [vmem:[%s3 + $0x38] sm:$0xff]
    %v7882 = vld [vmem:[%s3 + $0x40] sm:$0xff]
    %v7883 = vld [vmem:[%s3 + $0x48] sm:$0xff]
    %v7884 = vld [vmem:[%s3 + $0x50] sm:$0xff]
    %v7885 = vld [vmem:[%s3 + $0x58] sm:$0xff]
    %v7886 = vld [vmem:[%s3 + $0x60] sm:$0xff]
    %v7887 = vld [vmem:[%s3 + $0x68] sm:$0xff]
    %v7888 = vld [vmem:[%s3 + $0x70] sm:$0xff]
    %v7889 = vld [vmem:[%s3 + $0x78] sm:$0xff]
    %v7890 = vld [vmem:[%s3 + $0x80] sm:$0xff]
    %v7891 = vld [vmem:[%s3 + $0x88] sm:$0xff]
    %v7892 = vld [vmem:[%s3 + $0x90] sm:$0xff]
    %v7893 = vld [vmem:[%s3 + $0x98] sm:$0xff]
    %v7894 = vld [vmem:[%s3 + $0xa0] sm:$0xff]
    %v7895 = vld [vmem:[%s3 + $0xa8] sm:$0xff]
    %v7896 = vld [vmem:[%s3 + $0xb0] sm:$0xff]
    %v7897 = vld [vmem:[%s3 + $0xb8] sm:$0xff]
    %v7898 = vld [vmem:[%s3 + $0xc0] sm:$0xff]
    %v7899 = vld [vmem:[%s3 + $0xc8] sm:$0xff]
    %v7900 = vld [vmem:[%s3 + $0xd0] sm:$0xff]
    %v7901 = vld [vmem:[%s3 + $0xd8] sm:$0xff]
    %v7902 = vld [vmem:[%s3 + $0xe0] sm:$0xff]
    %v7903 = vld [vmem:[%s3 + $0xe8] sm:$0xff]
    %v7904 = vld [vmem:[%s3 + $0xf0] sm:$0xff]
    %v7905 = vld [vmem:[%s3 + $0xf8] sm:$0xff]
    %v7906 = vld [vmem:[%s3 + $0x100] sm:$0xff]
    %v7907 = vld [vmem:[%s3 + $0x108] sm:$0xff]
    %v7908 = vld [vmem:[%s3 + $0x110] sm:$0xff]
    %v7909 = vld [vmem:[%s3 + $0x118] sm:$0xff]
    %v7910 = vld [vmem:[%s3 + $0x120] sm:$0xff]
    %v7911 = vld [vmem:[%s3 + $0x128] sm:$0xff]
    %v7912 = vld [vmem:[%s3 + $0x130] sm:$0xff]
    %v7913 = vld [vmem:[%s3 + $0x138] sm:$0xff]
    %v7914 = vld [vmem:[%s3 + $0x140] sm:$0xff]
    %v7915 = vld [vmem:[%s3 + $0x148] sm:$0xff]
    %v7916 = vld [vmem:[%s3 + $0x150] sm:$0xff]
    %v7917 = vld [vmem:[%s3 + $0x158] sm:$0xff]
    %v7918 = vld [vmem:[%s3 + $0x160] sm:$0xff]
    %v7919 = vld [vmem:[%s3 + $0x168] sm:$0xff]
    %v7920 = vld [vmem:[%s3 + $0x170] sm:$0xff]
    %v7921 = vld [vmem:[%s3 + $0x178] sm:$0xff]
    %v7922 = vld [vmem:[%s3 + $0x180] sm:$0xff]
    %v7923 = vld [vmem:[%s3 + $0x188] sm:$0xff]
    %v7924 = vld [vmem:[%s3 + $0x190] sm:$0xff]
    %v7925 = vld [vmem:[%s3 + $0x198] sm:$0xff]
    %v7926 = vld [vmem:[%s3 + $0x1a0] sm:$0xff]
    %v7927 = vld [vmem:[%s3 + $0x1a8] sm:$0xff]
    %v7928 = vld [vmem:[%s3 + $0x1b0] sm:$0xff]
    %v7929 = vld [vmem:[%s3 + $0x1b8] sm:$0xff]
    %v7930 = vld [vmem:[%s3 + $0x1c0] sm:$0xff]
    %v7931 = vld [vmem:[%s3 + $0x1c8] sm:$0xff]
    %v7932 = vld [vmem:[%s3 + $0x1d0] sm:$0xff]
    %v7933 = vld [vmem:[%s3 + $0x1d8] sm:$0xff]
    %v7934 = vld [vmem:[%s3 + $0x1e0] sm:$0xff]
    %v7935 = vld [vmem:[%s3 + $0x1e8] sm:$0xff]
    %v7936 = vld [vmem:[%s3 + $0x1f0] sm:$0xff]
    %v7937 = vld [vmem:[%s3 + $0x1f8] sm:$0xff]
    %v7938 = vld [vmem:[%s3 + $0x200] sm:$0xff]
    %v7939 = vld [vmem:[%s3 + $0x208] sm:$0xff]
    %v7940 = vld [vmem:[%s3 + $0x210] sm:$0xff]
    %v7941 = vld [vmem:[%s3 + $0x218] sm:$0xff]
    %v7942 = vld [vmem:[%s3 + $0x220] sm:$0xff]
    %v7943 = vld [vmem:[%s3 + $0x228] sm:$0xff]
    %v7944 = vld [vmem:[%s3 + $0x230] sm:$0xff]
    %v7945 = vld [vmem:[%s3 + $0x238] sm:$0xff]
    %v7946 = vld [vmem:[%s3 + $0x240] sm:$0xff]
    %v7947 = vld [vmem:[%s3 + $0x248] sm:$0xff]
    %v7948 = vld [vmem:[%s3 + $0x250] sm:$0xff]
    %v7949 = vld [vmem:[%s3 + $0x258] sm:$0xff]
    %v7950 = vld [vmem:[%s3 + $0x260] sm:$0xff]
    %v7951 = vld [vmem:[%s3 + $0x268] sm:$0xff]
    %v7952 = vld [vmem:[%s3 + $0x270] sm:$0xff]
    %v7953 = vld [vmem:[%s3 + $0x278] sm:$0xff]
    %v7954 = vld [vmem:[%s3 + $0x280] sm:$0xff]
    %v7955 = vld [vmem:[%s3 + $0x288] sm:$0xff]
    %v7956 = vld [vmem:[%s3 + $0x290] sm:$0xff]
    %v7957 = vld [vmem:[%s3 + $0x298] sm:$0xff]
    %v7958 = vld [vmem:[%s3 + $0x2a0] sm:$0xff]
    %v7959 = vld [vmem:[%s3 + $0x2a8] sm:$0xff]
    %v7960 = vld [vmem:[%s3 + $0x2b0] sm:$0xff]
    %v7961 = vld [vmem:[%s3 + $0x2b8] sm:$0xff]
    %v7962 = vld [vmem:[%s3 + $0x2c0] sm:$0xff]
    %v7963 = vld [vmem:[%s3 + $0x2c8] sm:$0xff]
    %v7964 = vld [vmem:[%s3 + $0x2d0] sm:$0xff]
    %v7965 = vld [vmem:[%s3 + $0x2d8] sm:$0xff]
    %v7966 = vld [vmem:[%s3 + $0x2e0] sm:$0xff]
    %v7967 = vld [vmem:[%s3 + $0x2e8] sm:$0xff]
    %v7968 = vld [vmem:[%s3 + $0x2f0] sm:$0xff]
    %v7969 = vld [vmem:[%s3 + $0x2f8] sm:$0xff]
    %v7970 = vld [vmem:[%s3 + $0x300] sm:$0xff]
    %v7971 = vld [vmem:[%s3 + $0x308] sm:$0xff]
    %v7972 = vld [vmem:[%s3 + $0x310] sm:$0xff]
    %v7973 = vld [vmem:[%s3 + $0x318] sm:$0xff]
    %v7974 = vld [vmem:[%s3 + $0x320] sm:$0xff]
    %v7975 = vld [vmem:[%s3 + $0x328] sm:$0xff]
    %v7976 = vld [vmem:[%s3 + $0x330] sm:$0xff]
    %v7977 = vld [vmem:[%s3 + $0x338] sm:$0xff]
    %v7978 = vld [vmem:[%s3 + $0x340] sm:$0xff]
    %v7979 = vld [vmem:[%s3 + $0x348] sm:$0xff]
    %v7980 = vld [vmem:[%s3 + $0x350] sm:$0xff]
    %v7981 = vld [vmem:[%s3 + $0x358] sm:$0xff]
    %v7982 = vld [vmem:[%s3 + $0x360] sm:$0xff]
    %v7983 = vld [vmem:[%s3 + $0x368] sm:$0xff]
    %v7984 = vld [vmem:[%s3 + $0x370] sm:$0xff]
    %v7985 = vld [vmem:[%s3 + $0x378] sm:$0xff]
    %v7986 = vld [vmem:[%s3 + $0x380] sm:$0xff]
    %v7987 = vld [vmem:[%s3 + $0x388] sm:$0xff]
    %v7988 = vld [vmem:[%s3 + $0x390] sm:$0xff]
    %v7989 = vld [vmem:[%s3 + $0x398] sm:$0xff]
    %v7990 = vld [vmem:[%s3 + $0x3a0] sm:$0xff]
    %v7991 = vld [vmem:[%s3 + $0x3a8] sm:$0xff]
    %v7992 = vld [vmem:[%s3 + $0x3b0] sm:$0xff]
    %v7993 = vld [vmem:[%s3 + $0x3b8] sm:$0xff]
    %v7994 = vld [vmem:[%s3 + $0x3c0] sm:$0xff]
    %v7995 = vld [vmem:[%s3 + $0x3c8] sm:$0xff]
    %v7996 = vld [vmem:[%s3 + $0x3d0] sm:$0xff]
    %v7997 = vld [vmem:[%s3 + $0x3d8] sm:$0xff]
    %v7998 = vld [vmem:[%s3 + $0x3e0] sm:$0xff]
    %v7999 = vld [vmem:[%s3 + $0x3e8] sm:$0xff]
    %v8000 = vld [vmem:[%s3 + $0x3f0] sm:$0xff]
    %v8001 = vld [vmem:[%s3 + $0x3f8] sm:$0xff]
    %8002 = vmatprep.subr.mxu0 0.0
    %8003 = vmatpush1.msra.mxu0 %v7889
    %8004 = vmatprep.subr.mxu0 0.0
    %8005 = vmatpush1.msra.mxu0 %v7888
    %8006 = vmatprep.subr.mxu0 0.0
    %8007 = vmatpush1.msra.mxu0 %v7887
    %8008 = vmatprep.subr.mxu0 0.0
    %8009 = vmatpush1.msra.mxu0 %v7886
    %8010 = vmatprep.subr.mxu0 0.0
    %8011 = vmatpush1.msra.mxu0 %v7885
    %8012 = vmatprep.subr.mxu0 0.0
    %8013 = vmatpush1.msra.mxu0 %v7884
    %8014 = vmatprep.subr.mxu0 0.0
    %8015 = vmatpush1.msra.mxu0 %v7883
    %8016 = vmatprep.subr.mxu0 0.0
    %8017 = vmatpush1.msra.mxu0 %v7882
    %8018 = vmatprep.subr.mxu0 0.0
    %8019 = vmatpush1.msra.mxu0 %v7881
    %8020 = vmatprep.subr.mxu0 0.0
    %8021 = vmatpush1.msra.mxu0 %v7880
    %8022 = vmatprep.subr.mxu0 0.0
    %8023 = vmatpush1.msra.mxu0 %v7879
    %8024 = vmatprep.subr.mxu0 0.0
    %8025 = vmatpush1.msra.mxu0 %v7878
    %8026 = vmatprep.subr.mxu0 0.0
    %8027 = vmatpush1.msra.mxu0 %v7877
    %8028 = vmatprep.subr.mxu0 0.0
    %8029 = vmatpush1.msra.mxu0 %v7876
    %8030 = vmatprep.subr.mxu0 0.0
    %8031 = vmatpush1.msra.mxu0 %v7875
    %8032 = vmatprep.subr.mxu0 0.0
    %8033 = vmatpush1.msra.mxu0 %v7874
    %8034 = vmatprep.subr.mxu0 0.0
    %8035 = vmatpush2.msra.mxu0 %v7905
    %8036 = vmatprep.subr.mxu0 0.0
    %8037 = vmatpush2.msra.mxu0 %v7904
    %8038 = vmatprep.subr.mxu0 0.0
    %8039 = vmatpush2.msra.mxu0 %v7903
    %8040 = vmatprep.subr.mxu0 0.0
    %8041 = vmatpush2.msra.mxu0 %v7902
    %8042 = vmatprep.subr.mxu0 0.0
    %8043 = vmatpush2.msra.mxu0 %v7901
    %8044 = vmatprep.subr.mxu0 0.0
    %8045 = vmatpush2.msra.mxu0 %v7900
    %8046 = vmatprep.subr.mxu0 0.0
    %8047 = vmatpush2.msra.mxu0 %v7899
    %8048 = vmatprep.subr.mxu0 0.0
    %8049 = vmatpush2.msra.mxu0 %v7898
    %8050 = vmatprep.subr.mxu0 0.0
    %8051 = vmatpush2.msra.mxu0 %v7897
    %8052 = vmatprep.subr.mxu0 0.0
    %8053 = vmatpush2.msra.mxu0 %v7896
    %8054 = vmatprep.subr.mxu0 0.0
    %8055 = vmatpush2.msra.mxu0 %v7895
    %8056 = vmatprep.subr.mxu0 0.0
    %8057 = vmatpush2.msra.mxu0 %v7894
    %8058 = vmatprep.subr.mxu0 0.0
    %8059 = vmatpush2.msra.mxu0 %v7893
    %8060 = vmatprep.subr.mxu0 0.0
    %8061 = vmatpush2.msra.mxu0 %v7892
    %8062 = vmatprep.subr.mxu0 0.0
    %8063 = vmatpush2.msra.mxu0 %v7891
    %8064 = vmatprep.subr.mxu0 0.0
    %8065 = vmatpush2.msra.mxu0 %v7890
    %8066 = vmatprep.mubr.f32.mxu0 %v6886
    %8067 = vmatmul.mubr.f32.gmra.mxu0 %v6884
    %v8068 = vpop.f32.mrf.mxu0
    %v8069 = vadd.f32 0.0, %v8068
    %v8070 = vpop.f32.mrf.mxu0
    %8071 = vdwg.mxu0
    %8072 = vmatprep.subr.mxu0 0.0
    %8073 = vmatpush1.msra.mxu0 %v7921
    %8074 = vmatprep.subr.mxu0 0.0
    %8075 = vmatpush1.msra.mxu0 %v7920
    %8076 = vmatprep.subr.mxu0 0.0
    %8077 = vmatpush1.msra.mxu0 %v7919
    %8078 = vmatprep.subr.mxu0 0.0
    %8079 = vmatpush1.msra.mxu0 %v7918
    %8080 = vmatprep.subr.mxu0 0.0
    %8081 = vmatpush1.msra.mxu0 %v7917
    %8082 = vmatprep.subr.mxu0 0.0
    %8083 = vmatpush1.msra.mxu0 %v7916
    %8084 = vmatprep.subr.mxu0 0.0
    %8085 = vmatpush1.msra.mxu0 %v7915
    %8086 = vmatprep.subr.mxu0 0.0
    %8087 = vmatpush1.msra.mxu0 %v7914
    %8088 = vmatprep.subr.mxu0 0.0
    %8089 = vmatpush1.msra.mxu0 %v7913
    %8090 = vmatprep.subr.mxu0 0.0
    %8091 = vmatpush1.msra.mxu0 %v7912
    %8092 = vmatprep.subr.mxu0 0.0
    %8093 = vmatpush1.msra.mxu0 %v7911
    %8094 = vmatprep.subr.mxu0 0.0
    %8095 = vmatpush1.msra.mxu0 %v7910
    %8096 = vmatprep.subr.mxu0 0.0
    %8097 = vmatpush1.msra.mxu0 %v7909
    %8098 = vmatprep.subr.mxu0 0.0
    %8099 = vmatpush1.msra.mxu0 %v7908
    %8100 = vmatprep.subr.mxu0 0.0
    %8101 = vmatpush1.msra.mxu0 %v7907
    %8102 = vmatprep.subr.mxu0 0.0
    %8103 = vmatpush1.msra.mxu0 %v7906
    %8104 = vmatprep.subr.mxu0 0.0
    %8105 = vmatpush2.msra.mxu0 %v7937
    %8106 = vmatprep.subr.mxu0 0.0
    %8107 = vmatpush2.msra.mxu0 %v7936
    %8108 = vmatprep.subr.mxu0 0.0
    %8109 = vmatpush2.msra.mxu0 %v7935
    %8110 = vmatprep.subr.mxu0 0.0
    %8111 = vmatpush2.msra.mxu0 %v7934
    %8112 = vmatprep.subr.mxu0 0.0
    %8113 = vmatpush2.msra.mxu0 %v7933
    %8114 = vmatprep.subr.mxu0 0.0
    %8115 = vmatpush2.msra.mxu0 %v7932
    %8116 = vmatprep.subr.mxu0 0.0
    %8117 = vmatpush2.msra.mxu0 %v7931
    %8118 = vmatprep.subr.mxu0 0.0
    %8119 = vmatpush2.msra.mxu0 %v7930
    %8120 = vmatprep.subr.mxu0 0.0
    %8121 = vmatpush2.msra.mxu0 %v7929
    %8122 = vmatprep.subr.mxu0 0.0
    %8123 = vmatpush2.msra.mxu0 %v7928
    %8124 = vmatprep.subr.mxu0 0.0
    %8125 = vmatpush2.msra.mxu0 %v7927
    %8126 = vmatprep.subr.mxu0 0.0
    %8127 = vmatpush2.msra.mxu0 %v7926
    %8128 = vmatprep.subr.mxu0 0.0
    %8129 = vmatpush2.msra.mxu0 %v7925
    %8130 = vmatprep.subr.mxu0 0.0
    %8131 = vmatpush2.msra.mxu0 %v7924
    %8132 = vmatprep.subr.mxu0 0.0
    %8133 = vmatpush2.msra.mxu0 %v7923
    %8134 = vmatprep.subr.mxu0 0.0
    %8135 = vmatpush2.msra.mxu0 %v7922
    %8136 = vmatprep.mubr.f32.mxu0 %v7214
    %8137 = vmatmul.mubr.f32.gmra.mxu0 %v7212
    %v8138 = vpop.f32.mrf.mxu0
    %v8139 = vadd.f32 %v8069, %v8138
    %v8140 = vpop.f32.mrf.mxu0
    %8141 = vdwg.mxu0
    %8142 = vmatprep.subr.mxu0 0.0
    %8143 = vmatpush1.msra.mxu0 %v7953
    %8144 = vmatprep.subr.mxu0 0.0
    %8145 = vmatpush1.msra.mxu0 %v7952
    %8146 = vmatprep.subr.mxu0 0.0
    %8147 = vmatpush1.msra.mxu0 %v7951
    %8148 = vmatprep.subr.mxu0 0.0
    %8149 = vmatpush1.msra.mxu0 %v7950
    %8150 = vmatprep.subr.mxu0 0.0
    %8151 = vmatpush1.msra.mxu0 %v7949
    %8152 = vmatprep.subr.mxu0 0.0
    %8153 = vmatpush1.msra.mxu0 %v7948
    %8154 = vmatprep.subr.mxu0 0.0
    %8155 = vmatpush1.msra.mxu0 %v7947
    %8156 = vmatprep.subr.mxu0 0.0
    %8157 = vmatpush1.msra.mxu0 %v7946
    %8158 = vmatprep.subr.mxu0 0.0
    %8159 = vmatpush1.msra.mxu0 %v7945
    %8160 = vmatprep.subr.mxu0 0.0
    %8161 = vmatpush1.msra.mxu0 %v7944
    %8162 = vmatprep.subr.mxu0 0.0
    %8163 = vmatpush1.msra.mxu0 %v7943
    %8164 = vmatprep.subr.mxu0 0.0
    %8165 = vmatpush1.msra.mxu0 %v7942
    %8166 = vmatprep.subr.mxu0 0.0
    %8167 = vmatpush1.msra.mxu0 %v7941
    %8168 = vmatprep.subr.mxu0 0.0
    %8169 = vmatpush1.msra.mxu0 %v7940
    %8170 = vmatprep.subr.mxu0 0.0
    %8171 = vmatpush1.msra.mxu0 %v7939
    %8172 = vmatprep.subr.mxu0 0.0
    %8173 = vmatpush1.msra.mxu0 %v7938
    %8174 = vmatprep.subr.mxu0 0.0
    %8175 = vmatpush2.msra.mxu0 %v7969
    %8176 = vmatprep.subr.mxu0 0.0
    %8177 = vmatpush2.msra.mxu0 %v7968
    %8178 = vmatprep.subr.mxu0 0.0
    %8179 = vmatpush2.msra.mxu0 %v7967
    %8180 = vmatprep.subr.mxu0 0.0
    %8181 = vmatpush2.msra.mxu0 %v7966
    %8182 = vmatprep.subr.mxu0 0.0
    %8183 = vmatpush2.msra.mxu0 %v7965
    %8184 = vmatprep.subr.mxu0 0.0
    %8185 = vmatpush2.msra.mxu0 %v7964
    %8186 = vmatprep.subr.mxu0 0.0
    %8187 = vmatpush2.msra.mxu0 %v7963
    %8188 = vmatprep.subr.mxu0 0.0
    %8189 = vmatpush2.msra.mxu0 %v7962
    %8190 = vmatprep.subr.mxu0 0.0
    %8191 = vmatpush2.msra.mxu0 %v7961
    %8192 = vmatprep.subr.mxu0 0.0
    %8193 = vmatpush2.msra.mxu0 %v7960
    %8194 = vmatprep.subr.mxu0 0.0
    %8195 = vmatpush2.msra.mxu0 %v7959
    %8196 = vmatprep.subr.mxu0 0.0
    %8197 = vmatpush2.msra.mxu0 %v7958
    %8198 = vmatprep.subr.mxu0 0.0
    %8199 = vmatpush2.msra.mxu0 %v7957
    %8200 = vmatprep.subr.mxu0 0.0
    %8201 = vmatpush2.msra.mxu0 %v7956
    %8202 = vmatprep.subr.mxu0 0.0
    %8203 = vmatpush2.msra.mxu0 %v7955
    %8204 = vmatprep.subr.mxu0 0.0
    %8205 = vmatpush2.msra.mxu0 %v7954
    %8206 = vmatprep.mubr.f32.mxu0 %v7542
    %8207 = vmatmul.mubr.f32.gmra.mxu0 %v7540
    %v8208 = vpop.f32.mrf.mxu0
    %v8209 = vadd.f32 %v8139, %v8208
    %v8210 = vpop.f32.mrf.mxu0
    %8211 = vdwg.mxu0
    %8212 = vmatprep.subr.mxu0 0.0
    %8213 = vmatpush1.msra.mxu0 %v7985
    %8214 = vmatprep.subr.mxu0 0.0
    %8215 = vmatpush1.msra.mxu0 %v7984
    %8216 = vmatprep.subr.mxu0 0.0
    %8217 = vmatpush1.msra.mxu0 %v7983
    %8218 = vmatprep.subr.mxu0 0.0
    %8219 = vmatpush1.msra.mxu0 %v7982
    %8220 = vmatprep.subr.mxu0 0.0
    %8221 = vmatpush1.msra.mxu0 %v7981
    %8222 = vmatprep.subr.mxu0 0.0
    %8223 = vmatpush1.msra.mxu0 %v7980
    %8224 = vmatprep.subr.mxu0 0.0
    %8225 = vmatpush1.msra.mxu0 %v7979
    %8226 = vmatprep.subr.mxu0 0.0
    %8227 = vmatpush1.msra.mxu0 %v7978
    %8228 = vmatprep.subr.mxu0 0.0
    %8229 = vmatpush1.msra.mxu0 %v7977
    %8230 = vmatprep.subr.mxu0 0.0
    %8231 = vmatpush1.msra.mxu0 %v7976
    %8232 = vmatprep.subr.mxu0 0.0
    %8233 = vmatpush1.msra.mxu0 %v7975
    %8234 = vmatprep.subr.mxu0 0.0
    %8235 = vmatpush1.msra.mxu0 %v7974
    %8236 = vmatprep.subr.mxu0 0.0
    %8237 = vmatpush1.msra.mxu0 %v7973
    %8238 = vmatprep.subr.mxu0 0.0
    %8239 = vmatpush1.msra.mxu0 %v7972
    %8240 = vmatprep.subr.mxu0 0.0
    %8241 = vmatpush1.msra.mxu0 %v7971
    %8242 = vmatprep.subr.mxu0 0.0
    %8243 = vmatpush1.msra.mxu0 %v7970
    %8244 = vmatprep.subr.mxu0 0.0
    %8245 = vmatpush2.msra.mxu0 %v8001
    %8246 = vmatprep.subr.mxu0 0.0
    %8247 = vmatpush2.msra.mxu0 %v8000
    %8248 = vmatprep.subr.mxu0 0.0
    %8249 = vmatpush2.msra.mxu0 %v7999
    %8250 = vmatprep.subr.mxu0 0.0
    %8251 = vmatpush2.msra.mxu0 %v7998
    %8252 = vmatprep.subr.mxu0 0.0
    %8253 = vmatpush2.msra.mxu0 %v7997
    %8254 = vmatprep.subr.mxu0 0.0
    %8255 = vmatpush2.msra.mxu0 %v7996
    %8256 = vmatprep.subr.mxu0 0.0
    %8257 = vmatpush2.msra.mxu0 %v7995
    %8258 = vmatprep.subr.mxu0 0.0
    %8259 = vmatpush2.msra.mxu0 %v7994
    %8260 = vmatprep.subr.mxu0 0.0
    %8261 = vmatpush2.msra.mxu0 %v7993
    %8262 = vmatprep.subr.mxu0 0.0
    %8263 = vmatpush2.msra.mxu0 %v7992
    %8264 = vmatprep.subr.mxu0 0.0
    %8265 = vmatpush2.msra.mxu0 %v7991
    %8266 = vmatprep.subr.mxu0 0.0
    %8267 = vmatpush2.msra.mxu0 %v7990
    %8268 = vmatprep.subr.mxu0 0.0
    %8269 = vmatpush2.msra.mxu0 %v7989
    %8270 = vmatprep.subr.mxu0 0.0
    %8271 = vmatpush2.msra.mxu0 %v7988
    %8272 = vmatprep.subr.mxu0 0.0
    %8273 = vmatpush2.msra.mxu0 %v7987
    %8274 = vmatprep.subr.mxu0 0.0
    %8275 = vmatpush2.msra.mxu0 %v7986
    %8276 = vmatprep.mubr.f32.mxu0 %v7870
    %8277 = vmatmul.mubr.f32.gmra.mxu0 %v7868
    %v8278 = vpop.f32.mrf.mxu0
    %v8279 = vadd.f32 %v8209, %v8278
    %v8280 = vpop.f32.mrf.mxu0
    %8281 = vdwg.mxu0
    %vm8282 = vcmask 123904
    %v8283 = vsel %vm8282, %v8279, 0.0
    %v8284 = vrot.slane %v8283, 4
    %v8285 = vadd.f32 %v8283, %v8284
    %v8286 = vrot.slane %v8285, 2
    %v8287 = vadd.f32 %v8285, %v8286
    %v8288 = vrot.slane %v8287, 1
    %v8289 = vadd.f32 %v8287, %v8288
    %v8290 = vmul.f32 %v6884, %v6884
    %v8291 = vmul.f32 %v6886, %v6886
    %v8292 = vmul.f32 %v7212, %v7212
    %v8293 = vmul.f32 %v7214, %v7214
    %v8294 = vmul.f32 %v7540, %v7540
    %v8295 = vmul.f32 %v7542, %v7542
    %v8296 = vmul.f32 %v7868, %v7868
    %v8297 = vmul.f32 %v7870, %v7870
    %8298 = vmatprep.subr.mxu0 0.0
    %8299 = vmatpush1.msra.mxu0 %v7889
    %8300 = vmatprep.subr.mxu0 0.0
    %8301 = vmatpush1.msra.mxu0 %v7888
    %8302 = vmatprep.subr.mxu0 0.0
    %8303 = vmatpush1.msra.mxu0 %v7887
    %8304 = vmatprep.subr.mxu0 0.0
    %8305 = vmatpush1.msra.mxu0 %v7886
    %8306 = vmatprep.subr.mxu0 0.0
    %8307 = vmatpush1.msra.mxu0 %v7885
    %8308 = vmatprep.subr.mxu0 0.0
    %8309 = vmatpush1.msra.mxu0 %v7884
    %8310 = vmatprep.subr.mxu0 0.0
    %8311 = vmatpush1.msra.mxu0 %v7883
    %8312 = vmatprep.subr.mxu0 0.0
    %8313 = vmatpush1.msra.mxu0 %v7882
    %8314 = vmatprep.subr.mxu0 0.0
    %8315 = vmatpush1.msra.mxu0 %v7881
    %8316 = vmatprep.subr.mxu0 0.0
    %8317 = vmatpush1.msra.mxu0 %v7880
    %8318 = vmatprep.subr.mxu0 0.0
    %8319 = vmatpush1.msra.mxu0 %v7879
    %8320 = vmatprep.subr.mxu0 0.0
    %8321 = vmatpush1.msra.mxu0 %v7878
    %8322 = vmatprep.subr.mxu0 0.0
    %8323 = vmatpush1.msra.mxu0 %v7877
    %8324 = vmatprep.subr.mxu0 0.0
    %8325 = vmatpush1.msra.mxu0 %v7876
    %8326 = vmatprep.subr.mxu0 0.0
    %8327 = vmatpush1.msra.mxu0 %v7875
    %8328 = vmatprep.subr.mxu0 0.0
    %8329 = vmatpush1.msra.mxu0 %v7874
    %8330 = vmatprep.subr.mxu0 0.0
    %8331 = vmatpush2.msra.mxu0 %v7905
    %8332 = vmatprep.subr.mxu0 0.0
    %8333 = vmatpush2.msra.mxu0 %v7904
    %8334 = vmatprep.subr.mxu0 0.0
    %8335 = vmatpush2.msra.mxu0 %v7903
    %8336 = vmatprep.subr.mxu0 0.0
    %8337 = vmatpush2.msra.mxu0 %v7902
    %8338 = vmatprep.subr.mxu0 0.0
    %8339 = vmatpush2.msra.mxu0 %v7901
    %8340 = vmatprep.subr.mxu0 0.0
    %8341 = vmatpush2.msra.mxu0 %v7900
    %8342 = vmatprep.subr.mxu0 0.0
    %8343 = vmatpush2.msra.mxu0 %v7899
    %8344 = vmatprep.subr.mxu0 0.0
    %8345 = vmatpush2.msra.mxu0 %v7898
    %8346 = vmatprep.subr.mxu0 0.0
    %8347 = vmatpush2.msra.mxu0 %v7897
    %8348 = vmatprep.subr.mxu0 0.0
    %8349 = vmatpush2.msra.mxu0 %v7896
    %8350 = vmatprep.subr.mxu0 0.0
    %8351 = vmatpush2.msra.mxu0 %v7895
    %8352 = vmatprep.subr.mxu0 0.0
    %8353 = vmatpush2.msra.mxu0 %v7894
    %8354 = vmatprep.subr.mxu0 0.0
    %8355 = vmatpush2.msra.mxu0 %v7893
    %8356 = vmatprep.subr.mxu0 0.0
    %8357 = vmatpush2.msra.mxu0 %v7892
    %8358 = vmatprep.subr.mxu0 0.0
    %8359 = vmatpush2.msra.mxu0 %v7891
    %8360 = vmatprep.subr.mxu0 0.0
    %8361 = vmatpush2.msra.mxu0 %v7890
    %8362 = vmatprep.mubr.f32.mxu0 %v8291
    %8363 = vmatmul.mubr.f32.gmra.mxu0 %v8290
    %v8364 = vpop.f32.mrf.mxu0
    %v8365 = vadd.f32 0.0, %v8364
    %v8366 = vpop.f32.mrf.mxu0
    %8367 = vdwg.mxu0
    %8368 = vmatprep.subr.mxu0 0.0
    %8369 = vmatpush1.msra.mxu0 %v7921
    %8370 = vmatprep.subr.mxu0 0.0
    %8371 = vmatpush1.msra.mxu0 %v7920
    %8372 = vmatprep.subr.mxu0 0.0
    %8373 = vmatpush1.msra.mxu0 %v7919
    %8374 = vmatprep.subr.mxu0 0.0
    %8375 = vmatpush1.msra.mxu0 %v7918
    %8376 = vmatprep.subr.mxu0 0.0
    %8377 = vmatpush1.msra.mxu0 %v7917
    %8378 = vmatprep.subr.mxu0 0.0
    %8379 = vmatpush1.msra.mxu0 %v7916
    %8380 = vmatprep.subr.mxu0 0.0
    %8381 = vmatpush1.msra.mxu0 %v7915
    %8382 = vmatprep.subr.mxu0 0.0
    %8383 = vmatpush1.msra.mxu0 %v7914
    %8384 = vmatprep.subr.mxu0 0.0
    %8385 = vmatpush1.msra.mxu0 %v7913
    %8386 = vmatprep.subr.mxu0 0.0
    %8387 = vmatpush1.msra.mxu0 %v7912
    %8388 = vmatprep.subr.mxu0 0.0
    %8389 = vmatpush1.msra.mxu0 %v7911
    %8390 = vmatprep.subr.mxu0 0.0
    %8391 = vmatpush1.msra.mxu0 %v7910
    %8392 = vmatprep.subr.mxu0 0.0
    %8393 = vmatpush1.msra.mxu0 %v7909
    %8394 = vmatprep.subr.mxu0 0.0
    %8395 = vmatpush1.msra.mxu0 %v7908
    %8396 = vmatprep.subr.mxu0 0.0
    %8397 = vmatpush1.msra.mxu0 %v7907
    %8398 = vmatprep.subr.mxu0 0.0
    %8399 = vmatpush1.msra.mxu0 %v7906
    %8400 = vmatprep.subr.mxu0 0.0
    %8401 = vmatpush2.msra.mxu0 %v7937
    %8402 = vmatprep.subr.mxu0 0.0
    %8403 = vmatpush2.msra.mxu0 %v7936
    %8404 = vmatprep.subr.mxu0 0.0
    %8405 = vmatpush2.msra.mxu0 %v7935
    %8406 = vmatprep.subr.mxu0 0.0
    %8407 = vmatpush2.msra.mxu0 %v7934
    %8408 = vmatprep.subr.mxu0 0.0
    %8409 = vmatpush2.msra.mxu0 %v7933
    %8410 = vmatprep.subr.mxu0 0.0
    %8411 = vmatpush2.msra.mxu0 %v7932
    %8412 = vmatprep.subr.mxu0 0.0
    %8413 = vmatpush2.msra.mxu0 %v7931
    %8414 = vmatprep.subr.mxu0 0.0
    %8415 = vmatpush2.msra.mxu0 %v7930
    %8416 = vmatprep.subr.mxu0 0.0
    %8417 = vmatpush2.msra.mxu0 %v7929
    %8418 = vmatprep.subr.mxu0 0.0
    %8419 = vmatpush2.msra.mxu0 %v7928
    %8420 = vmatprep.subr.mxu0 0.0
    %8421 = vmatpush2.msra.mxu0 %v7927
    %8422 = vmatprep.subr.mxu0 0.0
    %8423 = vmatpush2.msra.mxu0 %v7926
    %8424 = vmatprep.subr.mxu0 0.0
    %8425 = vmatpush2.msra.mxu0 %v7925
    %8426 = vmatprep.subr.mxu0 0.0
    %8427 = vmatpush2.msra.mxu0 %v7924
    %8428 = vmatprep.subr.mxu0 0.0
    %8429 = vmatpush2.msra.mxu0 %v7923
    %8430 = vmatprep.subr.mxu0 0.0
    %8431 = vmatpush2.msra.mxu0 %v7922
    %8432 = vmatprep.mubr.f32.mxu0 %v8293
    %8433 = vmatmul.mubr.f32.gmra.mxu0 %v8292
    %v8434 = vpop.f32.mrf.mxu0
    %v8435 = vadd.f32 %v8365, %v8434
    %v8436 = vpop.f32.mrf.mxu0
    %8437 = vdwg.mxu0
    %8438 = vmatprep.subr.mxu0 0.0
    %8439 = vmatpush1.msra.mxu0 %v7953
    %8440 = vmatprep.subr.mxu0 0.0
    %8441 = vmatpush1.msra.mxu0 %v7952
    %8442 = vmatprep.subr.mxu0 0.0
    %8443 = vmatpush1.msra.mxu0 %v7951
    %8444 = vmatprep.subr.mxu0 0.0
    %8445 = vmatpush1.msra.mxu0 %v7950
    %8446 = vmatprep.subr.mxu0 0.0
    %8447 = vmatpush1.msra.mxu0 %v7949
    %8448 = vmatprep.subr.mxu0 0.0
    %8449 = vmatpush1.msra.mxu0 %v7948
    %8450 = vmatprep.subr.mxu0 0.0
    %8451 = vmatpush1.msra.mxu0 %v7947
    %8452 = vmatprep.subr.mxu0 0.0
    %8453 = vmatpush1.msra.mxu0 %v7946
    %8454 = vmatprep.subr.mxu0 0.0
    %8455 = vmatpush1.msra.mxu0 %v7945
    %8456 = vmatprep.subr.mxu0 0.0
    %8457 = vmatpush1.msra.mxu0 %v7944
    %8458 = vmatprep.subr.mxu0 0.0
    %8459 = vmatpush1.msra.mxu0 %v7943
    %8460 = vmatprep.subr.mxu0 0.0
    %8461 = vmatpush1.msra.mxu0 %v7942
    %8462 = vmatprep.subr.mxu0 0.0
    %8463 = vmatpush1.msra.mxu0 %v7941
    %8464 = vmatprep.subr.mxu0 0.0
    %8465 = vmatpush1.msra.mxu0 %v7940
    %8466 = vmatprep.subr.mxu0 0.0
    %8467 = vmatpush1.msra.mxu0 %v7939
    %8468 = vmatprep.subr.mxu0 0.0
    %8469 = vmatpush1.msra.mxu0 %v7938
    %8470 = vmatprep.subr.mxu0 0.0
    %8471 = vmatpush2.msra.mxu0 %v7969
    %8472 = vmatprep.subr.mxu0 0.0
    %8473 = vmatpush2.msra.mxu0 %v7968
    %8474 = vmatprep.subr.mxu0 0.0
    %8475 = vmatpush2.msra.mxu0 %v7967
    %8476 = vmatprep.subr.mxu0 0.0
    %8477 = vmatpush2.msra.mxu0 %v7966
    %8478 = vmatprep.subr.mxu0 0.0
    %8479 = vmatpush2.msra.mxu0 %v7965
    %8480 = vmatprep.subr.mxu0 0.0
    %8481 = vmatpush2.msra.mxu0 %v7964
    %8482 = vmatprep.subr.mxu0 0.0
    %8483 = vmatpush2.msra.mxu0 %v7963
    %8484 = vmatprep.subr.mxu0 0.0
    %8485 = vmatpush2.msra.mxu0 %v7962
    %8486 = vmatprep.subr.mxu0 0.0
    %8487 = vmatpush2.msra.mxu0 %v7961
    %8488 = vmatprep.subr.mxu0 0.0
    %8489 = vmatpush2.msra.mxu0 %v7960
    %8490 = vmatprep.subr.mxu0 0.0
    %8491 = vmatpush2.msra.mxu0 %v7959
    %8492 = vmatprep.subr.mxu0 0.0
    %8493 = vmatpush2.msra.mxu0 %v7958
    %8494 = vmatprep.subr.mxu0 0.0
    %8495 = vmatpush2.msra.mxu0 %v7957
    %8496 = vmatprep.subr.mxu0 0.0
    %8497 = vmatpush2.msra.mxu0 %v7956
    %8498 = vmatprep.subr.mxu0 0.0
    %8499 = vmatpush2.msra.mxu0 %v7955
    %8500 = vmatprep.subr.mxu0 0.0
    %8501 = vmatpush2.msra.mxu0 %v7954
    %8502 = vmatprep.mubr.f32.mxu0 %v8295
    %8503 = vmatmul.mubr.f32.gmra.mxu0 %v8294
    %v8504 = vpop.f32.mrf.mxu0
    %v8505 = vadd.f32 %v8435, %v8504
    %v8506 = vpop.f32.mrf.mxu0
    %8507 = vdwg.mxu0
    %8508 = vmatprep.subr.mxu0 0.0
    %8509 = vmatpush1.msra.mxu0 %v7985
    %8510 = vmatprep.subr.mxu0 0.0
    %8511 = vmatpush1.msra.mxu0 %v7984
    %8512 = vmatprep.subr.mxu0 0.0
    %8513 = vmatpush1.msra.mxu0 %v7983
    %8514 = vmatprep.subr.mxu0 0.0
    %8515 = vmatpush1.msra.mxu0 %v7982
    %8516 = vmatprep.subr.mxu0 0.0
    %8517 = vmatpush1.msra.mxu0 %v7981
    %8518 = vmatprep.subr.mxu0 0.0
    %8519 = vmatpush1.msra.mxu0 %v7980
    %8520 = vmatprep.subr.mxu0 0.0
    %8521 = vmatpush1.msra.mxu0 %v7979
    %8522 = vmatprep.subr.mxu0 0.0
    %8523 = vmatpush1.msra.mxu0 %v7978
    %8524 = vmatprep.subr.mxu0 0.0
    %8525 = vmatpush1.msra.mxu0 %v7977
    %8526 = vmatprep.subr.mxu0 0.0
    %8527 = vmatpush1.msra.mxu0 %v7976
    %8528 = vmatprep.subr.mxu0 0.0
    %8529 = vmatpush1.msra.mxu0 %v7975
    %8530 = vmatprep.subr.mxu0 0.0
    %8531 = vmatpush1.msra.mxu0 %v7974
    %8532 = vmatprep.subr.mxu0 0.0
    %8533 = vmatpush1.msra.mxu0 %v7973
    %8534 = vmatprep.subr.mxu0 0.0
    %8535 = vmatpush1.msra.mxu0 %v7972
    %8536 = vmatprep.subr.mxu0 0.0
    %8537 = vmatpush1.msra.mxu0 %v7971
    %8538 = vmatprep.subr.mxu0 0.0
    %8539 = vmatpush1.msra.mxu0 %v7970
    %8540 = vmatprep.subr.mxu0 0.0
    %8541 = vmatpush2.msra.mxu0 %v8001
    %8542 = vmatprep.subr.mxu0 0.0
    %8543 = vmatpush2.msra.mxu0 %v8000
    %8544 = vmatprep.subr.mxu0 0.0
    %8545 = vmatpush2.msra.mxu0 %v7999
    %8546 = vmatprep.subr.mxu0 0.0
    %8547 = vmatpush2.msra.mxu0 %v7998
    %8548 = vmatprep.subr.mxu0 0.0
    %8549 = vmatpush2.msra.mxu0 %v7997
    %8550 = vmatprep.subr.mxu0 0.0
    %8551 = vmatpush2.msra.mxu0 %v7996
    %8552 = vmatprep.subr.mxu0 0.0
    %8553 = vmatpush2.msra.mxu0 %v7995
    %8554 = vmatprep.subr.mxu0 0.0
    %8555 = vmatpush2.msra.mxu0 %v7994
    %8556 = vmatprep.subr.mxu0 0.0
    %8557 = vmatpush2.msra.mxu0 %v7993
    %8558 = vmatprep.subr.mxu0 0.0
    %8559 = vmatpush2.msra.mxu0 %v7992
    %8560 = vmatprep.subr.mxu0 0.0
    %8561 = vmatpush2.msra.mxu0 %v7991
    %8562 = vmatprep.subr.mxu0 0.0
    %8563 = vmatpush2.msra.mxu0 %v7990
    %8564 = vmatprep.subr.mxu0 0.0
    %8565 = vmatpush2.msra.mxu0 %v7989
    %8566 = vmatprep.subr.mxu0 0.0
    %8567 = vmatpush2.msra.mxu0 %v7988
    %8568 = vmatprep.subr.mxu0 0.0
    %8569 = vmatpush2.msra.mxu0 %v7987
    %8570 = vmatprep.subr.mxu0 0.0
    %8571 = vmatpush2.msra.mxu0 %v7986
    %8572 = vmatprep.mubr.f32.mxu0 %v8297
    %8573 = vmatmul.mubr.f32.gmra.mxu0 %v8296
    %v8574 = vpop.f32.mrf.mxu0
    %v8575 = vadd.f32 %v8505, %v8574
    %v8576 = vpop.f32.mrf.mxu0
    %8577 = vdwg.mxu0
    %v8578 = vsel %vm8282, %v8575, 0.0
    %v8579 = vrot.slane %v8578, 4
    %v8580 = vadd.f32 %v8578, %v8579
    %v8581 = vrot.slane %v8580, 2
    %v8582 = vadd.f32 %v8580, %v8581
    %v8583 = vrot.slane %v8582, 1
    %v8584 = vadd.f32 %v8582, %v8583
    %v8585 = vmul.f32 %v8289, 0.0078125
    %v8586 = vmul.f32 %v8584, 0.0078125
    %v8587 = vmul.f32 %v8585, %v8585
    %v8588 = vsub.f32 %v8586, %v8587
    %v8589 = vmax.f32 %v8588, 0.0
    %v8590 = vld [vmem:[#allocation7] sm:$0x1]
    %v8591 = vadd.f32 %v8589, 1e-05
    %v8592 = vrsqrt.pop %v8591
    %v8593 = vmul.f32 %v8590, %v8592
    %v8594 = vld [vmem:[#allocation9] sm:$0x1]
    %v8595 = vmul.f32 %v8585, %v8593
    %v8596 = vsub.f32 %v8594, %v8595
    %v8597 = vld [vmem:[#allocation6] sm:$0xff]
    %v8598 = vld [vmem:[#allocation6 + $0x8] sm:$0xff]
    %v8599 = vld [vmem:[#allocation6 + $0x10] sm:$0xff]
    %v8600 = vld [vmem:[#allocation6 + $0x18] sm:$0xff]
    %v8601 = vld [vmem:[#allocation6 + $0x20] sm:$0xff]
    %v8602 = vld [vmem:[#allocation6 + $0x28] sm:$0xff]
    %v8603 = vld [vmem:[#allocation6 + $0x30] sm:$0xff]
    %v8604 = vld [vmem:[#allocation6 + $0x38] sm:$0xff]
    %v8605 = vld [vmem:[#allocation6 + $0x40] sm:$0xff]
    %v8606 = vld [vmem:[#allocation6 + $0x48] sm:$0xff]
    %v8607 = vld [vmem:[#allocation6 + $0x50] sm:$0xff]
    %v8608 = vld [vmem:[#allocation6 + $0x58] sm:$0xff]
    %v8609 = vld [vmem:[#allocation6 + $0x60] sm:$0xff]
    %v8610 = vld [vmem:[#allocation6 + $0x68] sm:$0xff]
    %v8611 = vld [vmem:[#allocation6 + $0x70] sm:$0xff]
    %v8612 = vld [vmem:[#allocation6 + $0x78] sm:$0xff]
    %vm8613 = vcmask 130048
    %v8615 = vsel %vm8613, %v8593, 0
    %8617 = vmatprep.subr.mxu0 0.0
    %8618 = vmatpush1.msra.mxu0 0.0
    %8619 = vmatprep.subr.mxu0 0.0
    %8620 = vmatpush1.msra.mxu0 0.0
    %8621 = vmatprep.subr.mxu0 0.0
    %8622 = vmatpush1.msra.mxu0 0.0
    %8623 = vmatprep.subr.mxu0 0.0
    %8624 = vmatpush1.msra.mxu0 0.0
    %8625 = vmatprep.subr.mxu0 0.0
    %8626 = vmatpush1.msra.mxu0 0.0
    %8627 = vmatprep.subr.mxu0 0.0
    %8628 = vmatpush1.msra.mxu0 0.0
    %8629 = vmatprep.subr.mxu0 0.0
    %8630 = vmatpush1.msra.mxu0 0.0
    %8631 = vmatprep.subr.mxu0 0.0
    %8632 = vmatpush1.msra.mxu0 0.0
    %8633 = vmatprep.subr.mxu0 0.0
    %8634 = vmatpush1.msra.mxu0 0.0
    %8635 = vmatprep.subr.mxu0 0.0
    %8636 = vmatpush1.msra.mxu0 0.0
    %8637 = vmatprep.subr.mxu0 0.0
    %8638 = vmatpush1.msra.mxu0 0.0
    %8639 = vmatprep.subr.mxu0 0.0
    %8640 = vmatpush1.msra.mxu0 0.0
    %8641 = vmatprep.subr.mxu0 0.0
    %8642 = vmatpush1.msra.mxu0 0.0
    %8643 = vmatprep.subr.mxu0 0.0
    %8644 = vmatpush1.msra.mxu0 0.0
    %8645 = vmatprep.subr.mxu0 %v8606
    %8646 = vmatpush1.msra.mxu0 %v8605
    %8647 = vmatprep.subr.mxu0 %v8598
    %8648 = vmatpush1.msra.mxu0 %v8597
    %8649 = vmatprep.subr.mxu0 0.0
    %8650 = vmatpush2.msra.mxu0 0.0
    %8651 = vmatprep.subr.mxu0 0.0
    %8652 = vmatpush2.msra.mxu0 0.0
    %8653 = vmatprep.subr.mxu0 0.0
    %8654 = vmatpush2.msra.mxu0 0.0
    %8655 = vmatprep.subr.mxu0 0.0
    %8656 = vmatpush2.msra.mxu0 0.0
    %8657 = vmatprep.subr.mxu0 0.0
    %8658 = vmatpush2.msra.mxu0 0.0
    %8659 = vmatprep.subr.mxu0 0.0
    %8660 = vmatpush2.msra.mxu0 0.0
    %8661 = vmatprep.subr.mxu0 0.0
    %8662 = vmatpush2.msra.mxu0 0.0
    %8663 = vmatprep.subr.mxu0 0.0
    %8664 = vmatpush2.msra.mxu0 0.0
    %8665 = vmatprep.subr.mxu0 0.0
    %8666 = vmatpush2.msra.mxu0 0.0
    %8667 = vmatprep.subr.mxu0 0.0
    %8668 = vmatpush2.msra.mxu0 0.0
    %8669 = vmatprep.subr.mxu0 0.0
    %8670 = vmatpush2.msra.mxu0 0.0
    %8671 = vmatprep.subr.mxu0 0.0
    %8672 = vmatpush2.msra.mxu0 0.0
    %8673 = vmatprep.subr.mxu0 0.0
    %8674 = vmatpush2.msra.mxu0 0.0
    %8675 = vmatprep.subr.mxu0 0.0
    %8676 = vmatpush2.msra.mxu0 0.0
    %8677 = vmatprep.subr.mxu0 0.0
    %8678 = vmatpush2.msra.mxu0 0.0
    %8679 = vmatprep.subr.mxu0 0.0
    %8680 = vmatpush2.msra.mxu0 0.0
    %8681 = vmatprep.mubr.f32.mxu0 0.0
    %8682 = vmatmul.mubr.f32.gmra.mxu0 %v8615
    %v8683 = vpop.f32.mrf.mxu0
    %v8684 = vadd.f32 0.0, %v8683
    %v8685 = vpop.f32.mrf.mxu0
    %v8686 = vadd.f32 0.0, %v8685
    %8687 = vdwg.mxu0
    %8688 = vmatprep.subr.mxu0 0.0
    %8689 = vmatpush1.msra.mxu0 0.0
    %8690 = vmatprep.subr.mxu0 0.0
    %8691 = vmatpush1.msra.mxu0 0.0
    %8692 = vmatprep.subr.mxu0 0.0
    %8693 = vmatpush1.msra.mxu0 0.0
    %8694 = vmatprep.subr.mxu0 0.0
    %8695 = vmatpush1.msra.mxu0 0.0
    %8696 = vmatprep.subr.mxu0 0.0
    %8697 = vmatpush1.msra.mxu0 0.0
    %8698 = vmatprep.subr.mxu0 0.0
    %8699 = vmatpush1.msra.mxu0 0.0
    %8700 = vmatprep.subr.mxu0 0.0
    %8701 = vmatpush1.msra.mxu0 0.0
    %8702 = vmatprep.subr.mxu0 0.0
    %8703 = vmatpush1.msra.mxu0 0.0
    %8704 = vmatprep.subr.mxu0 0.0
    %8705 = vmatpush1.msra.mxu0 0.0
    %8706 = vmatprep.subr.mxu0 0.0
    %8707 = vmatpush1.msra.mxu0 0.0
    %8708 = vmatprep.subr.mxu0 0.0
    %8709 = vmatpush1.msra.mxu0 0.0
    %8710 = vmatprep.subr.mxu0 0.0
    %8711 = vmatpush1.msra.mxu0 0.0
    %8712 = vmatprep.subr.mxu0 0.0
    %8713 = vmatpush1.msra.mxu0 0.0
    %8714 = vmatprep.subr.mxu0 0.0
    %8715 = vmatpush1.msra.mxu0 0.0
    %8716 = vmatprep.subr.mxu0 %v8608
    %8717 = vmatpush1.msra.mxu0 %v8607
    %8718 = vmatprep.subr.mxu0 %v8600
    %8719 = vmatpush1.msra.mxu0 %v8599
    %8720 = vmatprep.subr.mxu0 0.0
    %8721 = vmatpush2.msra.mxu0 0.0
    %8722 = vmatprep.subr.mxu0 0.0
    %8723 = vmatpush2.msra.mxu0 0.0
    %8724 = vmatprep.subr.mxu0 0.0
    %8725 = vmatpush2.msra.mxu0 0.0
    %8726 = vmatprep.subr.mxu0 0.0
    %8727 = vmatpush2.msra.mxu0 0.0
    %8728 = vmatprep.subr.mxu0 0.0
    %8729 = vmatpush2.msra.mxu0 0.0
    %8730 = vmatprep.subr.mxu0 0.0
    %8731 = vmatpush2.msra.mxu0 0.0
    %8732 = vmatprep.subr.mxu0 0.0
    %8733 = vmatpush2.msra.mxu0 0.0
    %8734 = vmatprep.subr.mxu0 0.0
    %8735 = vmatpush2.msra.mxu0 0.0
    %8736 = vmatprep.subr.mxu0 0.0
    %8737 = vmatpush2.msra.mxu0 0.0
    %8738 = vmatprep.subr.mxu0 0.0
    %8739 = vmatpush2.msra.mxu0 0.0
    %8740 = vmatprep.subr.mxu0 0.0
    %8741 = vmatpush2.msra.mxu0 0.0
    %8742 = vmatprep.subr.mxu0 0.0
    %8743 = vmatpush2.msra.mxu0 0.0
    %8744 = vmatprep.subr.mxu0 0.0
    %8745 = vmatpush2.msra.mxu0 0.0
    %8746 = vmatprep.subr.mxu0 0.0
    %8747 = vmatpush2.msra.mxu0 0.0
    %8748 = vmatprep.subr.mxu0 0.0
    %8749 = vmatpush2.msra.mxu0 0.0
    %8750 = vmatprep.subr.mxu0 0.0
    %8751 = vmatpush2.msra.mxu0 0.0
    %8752 = vmatprep.mubr.f32.mxu0 0.0
    %8753 = vmatmul.mubr.f32.gmra.mxu0 %v8615
    %v8754 = vpop.f32.mrf.mxu0
    %v8755 = vadd.f32 0.0, %v8754
    %v8756 = vpop.f32.mrf.mxu0
    %v8757 = vadd.f32 0.0, %v8756
    %8758 = vdwg.mxu0
    %8759 = vmatprep.subr.mxu0 0.0
    %8760 = vmatpush1.msra.mxu0 0.0
    %8761 = vmatprep.subr.mxu0 0.0
    %8762 = vmatpush1.msra.mxu0 0.0
    %8763 = vmatprep.subr.mxu0 0.0
    %8764 = vmatpush1.msra.mxu0 0.0
    %8765 = vmatprep.subr.mxu0 0.0
    %8766 = vmatpush1.msra.mxu0 0.0
    %8767 = vmatprep.subr.mxu0 0.0
    %8768 = vmatpush1.msra.mxu0 0.0
    %8769 = vmatprep.subr.mxu0 0.0
    %8770 = vmatpush1.msra.mxu0 0.0
    %8771 = vmatprep.subr.mxu0 0.0
    %8772 = vmatpush1.msra.mxu0 0.0
    %8773 = vmatprep.subr.mxu0 0.0
    %8774 = vmatpush1.msra.mxu0 0.0
    %8775 = vmatprep.subr.mxu0 0.0
    %8776 = vmatpush1.msra.mxu0 0.0
    %8777 = vmatprep.subr.mxu0 0.0
    %8778 = vmatpush1.msra.mxu0 0.0
    %8779 = vmatprep.subr.mxu0 0.0
    %8780 = vmatpush1.msra.mxu0 0.0
    %8781 = vmatprep.subr.mxu0 0.0
    %8782 = vmatpush1.msra.mxu0 0.0
    %8783 = vmatprep.subr.mxu0 0.0
    %8784 = vmatpush1.msra.mxu0 0.0
    %8785 = vmatprep.subr.mxu0 0.0
    %8786 = vmatpush1.msra.mxu0 0.0
    %8787 = vmatprep.subr.mxu0 %v8610
    %8788 = vmatpush1.msra.mxu0 %v8609
    %8789 = vmatprep.subr.mxu0 %v8602
    %8790 = vmatpush1.msra.mxu0 %v8601
    %8791 = vmatprep.subr.mxu0 0.0
    %8792 = vmatpush2.msra.mxu0 0.0
    %8793 = vmatprep.subr.mxu0 0.0
    %8794 = vmatpush2.msra.mxu0 0.0
    %8795 = vmatprep.subr.mxu0 0.0
    %8796 = vmatpush2.msra.mxu0 0.0
    %8797 = vmatprep.subr.mxu0 0.0
    %8798 = vmatpush2.msra.mxu0 0.0
    %8799 = vmatprep.subr.mxu0 0.0
    %8800 = vmatpush2.msra.mxu0 0.0
    %8801 = vmatprep.subr.mxu0 0.0
    %8802 = vmatpush2.msra.mxu0 0.0
    %8803 = vmatprep.subr.mxu0 0.0
    %8804 = vmatpush2.msra.mxu0 0.0
    %8805 = vmatprep.subr.mxu0 0.0
    %8806 = vmatpush2.msra.mxu0 0.0
    %8807 = vmatprep.subr.mxu0 0.0
    %8808 = vmatpush2.msra.mxu0 0.0
    %8809 = vmatprep.subr.mxu0 0.0
    %8810 = vmatpush2.msra.mxu0 0.0
    %8811 = vmatprep.subr.mxu0 0.0
    %8812 = vmatpush2.msra.mxu0 0.0
    %8813 = vmatprep.subr.mxu0 0.0
    %8814 = vmatpush2.msra.mxu0 0.0
    %8815 = vmatprep.subr.mxu0 0.0
    %8816 = vmatpush2.msra.mxu0 0.0
    %8817 = vmatprep.subr.mxu0 0.0
    %8818 = vmatpush2.msra.mxu0 0.0
    %8819 = vmatprep.subr.mxu0 0.0
    %8820 = vmatpush2.msra.mxu0 0.0
    %8821 = vmatprep.subr.mxu0 0.0
    %8822 = vmatpush2.msra.mxu0 0.0
    %8823 = vmatprep.mubr.f32.mxu0 0.0
    %8824 = vmatmul.mubr.f32.gmra.mxu0 %v8615
    %v8825 = vpop.f32.mrf.mxu0
    %v8826 = vadd.f32 0.0, %v8825
    %v8827 = vpop.f32.mrf.mxu0
    %v8828 = vadd.f32 0.0, %v8827
    %8829 = vdwg.mxu0
    %8830 = vmatprep.subr.mxu0 0.0
    %8831 = vmatpush1.msra.mxu0 0.0
    %8832 = vmatprep.subr.mxu0 0.0
    %8833 = vmatpush1.msra.mxu0 0.0
    %8834 = vmatprep.subr.mxu0 0.0
    %8835 = vmatpush1.msra.mxu0 0.0
    %8836 = vmatprep.subr.mxu0 0.0
    %8837 = vmatpush1.msra.mxu0 0.0
    %8838 = vmatprep.subr.mxu0 0.0
    %8839 = vmatpush1.msra.mxu0 0.0
    %8840 = vmatprep.subr.mxu0 0.0
    %8841 = vmatpush1.msra.mxu0 0.0
    %8842 = vmatprep.subr.mxu0 0.0
    %8843 = vmatpush1.msra.mxu0 0.0
    %8844 = vmatprep.subr.mxu0 0.0
    %8845 = vmatpush1.msra.mxu0 0.0
    %8846 = vmatprep.subr.mxu0 0.0
    %8847 = vmatpush1.msra.mxu0 0.0
    %8848 = vmatprep.subr.mxu0 0.0
    %8849 = vmatpush1.msra.mxu0 0.0
    %8850 = vmatprep.subr.mxu0 0.0
    %8851 = vmatpush1.msra.mxu0 0.0
    %8852 = vmatprep.subr.mxu0 0.0
    %8853 = vmatpush1.msra.mxu0 0.0
    %8854 = vmatprep.subr.mxu0 0.0
    %8855 = vmatpush1.msra.mxu0 0.0
    %8856 = vmatprep.subr.mxu0 0.0
    %8857 = vmatpush1.msra.mxu0 0.0
    %8858 = vmatprep.subr.mxu0 %v8612
    %8859 = vmatpush1.msra.mxu0 %v8611
    %8860 = vmatprep.subr.mxu0 %v8604
    %8861 = vmatpush1.msra.mxu0 %v8603
    %8862 = vmatprep.subr.mxu0 0.0
    %8863 = vmatpush2.msra.mxu0 0.0
    %8864 = vmatprep.subr.mxu0 0.0
    %8865 = vmatpush2.msra.mxu0 0.0
    %8866 = vmatprep.subr.mxu0 0.0
    %8867 = vmatpush2.msra.mxu0 0.0
    %8868 = vmatprep.subr.mxu0 0.0
    %8869 = vmatpush2.msra.mxu0 0.0
    %8870 = vmatprep.subr.mxu0 0.0
    %8871 = vmatpush2.msra.mxu0 0.0
    %8872 = vmatprep.subr.mxu0 0.0
    %8873 = vmatpush2.msra.mxu0 0.0
    %8874 = vmatprep.subr.mxu0 0.0
    %8875 = vmatpush2.msra.mxu0 0.0
    %8876 = vmatprep.subr.mxu0 0.0
    %8877 = vmatpush2.msra.mxu0 0.0
    %8878 = vmatprep.subr.mxu0 0.0
    %8879 = vmatpush2.msra.mxu0 0.0
    %8880 = vmatprep.subr.mxu0 0.0
    %8881 = vmatpush2.msra.mxu0 0.0
    %8882 = vmatprep.subr.mxu0 0.0
    %8883 = vmatpush2.msra.mxu0 0.0
    %8884 = vmatprep.subr.mxu0 0.0
    %8885 = vmatpush2.msra.mxu0 0.0
    %8886 = vmatprep.subr.mxu0 0.0
    %8887 = vmatpush2.msra.mxu0 0.0
    %8888 = vmatprep.subr.mxu0 0.0
    %8889 = vmatpush2.msra.mxu0 0.0
    %8890 = vmatprep.subr.mxu0 0.0
    %8891 = vmatpush2.msra.mxu0 0.0
    %8892 = vmatprep.subr.mxu0 0.0
    %8893 = vmatpush2.msra.mxu0 0.0
    %8894 = vmatprep.mubr.f32.mxu0 0.0
    %8895 = vmatmul.mubr.f32.gmra.mxu0 %v8615
    %v8896 = vpop.f32.mrf.mxu0
    %v8897 = vadd.f32 0.0, %v8896
    %v8898 = vpop.f32.mrf.mxu0
    %v8899 = vadd.f32 0.0, %v8898
    %8900 = vdwg.mxu0
    %v8902 = vsel %vm8613, %v8596, 0
    %8904 = vmatprep.subr.mxu0 0.0
    %8905 = vmatpush1.msra.mxu0 0.0
    %8906 = vmatprep.subr.mxu0 0.0
    %8907 = vmatpush1.msra.mxu0 0.0
    %8908 = vmatprep.subr.mxu0 0.0
    %8909 = vmatpush1.msra.mxu0 0.0
    %8910 = vmatprep.subr.mxu0 0.0
    %8911 = vmatpush1.msra.mxu0 0.0
    %8912 = vmatprep.subr.mxu0 0.0
    %8913 = vmatpush1.msra.mxu0 0.0
    %8914 = vmatprep.subr.mxu0 0.0
    %8915 = vmatpush1.msra.mxu0 0.0
    %8916 = vmatprep.subr.mxu0 0.0
    %8917 = vmatpush1.msra.mxu0 0.0
    %8918 = vmatprep.subr.mxu0 0.0
    %8919 = vmatpush1.msra.mxu0 0.0
    %8920 = vmatprep.subr.mxu0 0.0
    %8921 = vmatpush1.msra.mxu0 0.0
    %8922 = vmatprep.subr.mxu0 0.0
    %8923 = vmatpush1.msra.mxu0 0.0
    %8924 = vmatprep.subr.mxu0 0.0
    %8925 = vmatpush1.msra.mxu0 0.0
    %8926 = vmatprep.subr.mxu0 0.0
    %8927 = vmatpush1.msra.mxu0 0.0
    %8928 = vmatprep.subr.mxu0 0.0
    %8929 = vmatpush1.msra.mxu0 0.0
    %8930 = vmatprep.subr.mxu0 0.0
    %8931 = vmatpush1.msra.mxu0 0.0
    %8932 = vmatprep.subr.mxu0 %v8606
    %8933 = vmatpush1.msra.mxu0 %v8605
    %8934 = vmatprep.subr.mxu0 %v8598
    %8935 = vmatpush1.msra.mxu0 %v8597
    %8936 = vmatprep.subr.mxu0 0.0
    %8937 = vmatpush2.msra.mxu0 0.0
    %8938 = vmatprep.subr.mxu0 0.0
    %8939 = vmatpush2.msra.mxu0 0.0
    %8940 = vmatprep.subr.mxu0 0.0
    %8941 = vmatpush2.msra.mxu0 0.0
    %8942 = vmatprep.subr.mxu0 0.0
    %8943 = vmatpush2.msra.mxu0 0.0
    %8944 = vmatprep.subr.mxu0 0.0
    %8945 = vmatpush2.msra.mxu0 0.0
    %8946 = vmatprep.subr.mxu0 0.0
    %8947 = vmatpush2.msra.mxu0 0.0
    %8948 = vmatprep.subr.mxu0 0.0
    %8949 = vmatpush2.msra.mxu0 0.0
    %8950 = vmatprep.subr.mxu0 0.0
    %8951 = vmatpush2.msra.mxu0 0.0
    %8952 = vmatprep.subr.mxu0 0.0
    %8953 = vmatpush2.msra.mxu0 0.0
    %8954 = vmatprep.subr.mxu0 0.0
    %8955 = vmatpush2.msra.mxu0 0.0
    %8956 = vmatprep.subr.mxu0 0.0
    %8957 = vmatpush2.msra.mxu0 0.0
    %8958 = vmatprep.subr.mxu0 0.0
    %8959 = vmatpush2.msra.mxu0 0.0
    %8960 = vmatprep.subr.mxu0 0.0
    %8961 = vmatpush2.msra.mxu0 0.0
    %8962 = vmatprep.subr.mxu0 0.0
    %8963 = vmatpush2.msra.mxu0 0.0
    %8964 = vmatprep.subr.mxu0 0.0
    %8965 = vmatpush2.msra.mxu0 0.0
    %8966 = vmatprep.subr.mxu0 0.0
    %8967 = vmatpush2.msra.mxu0 0.0
    %8968 = vmatprep.mubr.f32.mxu0 0.0
    %8969 = vmatmul.mubr.f32.gmra.mxu0 %v8902
    %v8970 = vpop.f32.mrf.mxu0
    %v8971 = vadd.f32 0.0, %v8970
    %v8972 = vpop.f32.mrf.mxu0
    %v8973 = vadd.f32 0.0, %v8972
    %8974 = vdwg.mxu0
    %8975 = vmatprep.subr.mxu0 0.0
    %8976 = vmatpush1.msra.mxu0 0.0
    %8977 = vmatprep.subr.mxu0 0.0
    %8978 = vmatpush1.msra.mxu0 0.0
    %8979 = vmatprep.subr.mxu0 0.0
    %8980 = vmatpush1.msra.mxu0 0.0
    %8981 = vmatprep.subr.mxu0 0.0
    %8982 = vmatpush1.msra.mxu0 0.0
    %8983 = vmatprep.subr.mxu0 0.0
    %8984 = vmatpush1.msra.mxu0 0.0
    %8985 = vmatprep.subr.mxu0 0.0
    %8986 = vmatpush1.msra.mxu0 0.0
    %8987 = vmatprep.subr.mxu0 0.0
    %8988 = vmatpush1.msra.mxu0 0.0
    %8989 = vmatprep.subr.mxu0 0.0
    %8990 = vmatpush1.msra.mxu0 0.0
    %8991 = vmatprep.subr.mxu0 0.0
    %8992 = vmatpush1.msra.mxu0 0.0
    %8993 = vmatprep.subr.mxu0 0.0
    %8994 = vmatpush1.msra.mxu0 0.0
    %8995 = vmatprep.subr.mxu0 0.0
    %8996 = vmatpush1.msra.mxu0 0.0
    %8997 = vmatprep.subr.mxu0 0.0
    %8998 = vmatpush1.msra.mxu0 0.0
    %8999 = vmatprep.subr.mxu0 0.0
    %9000 = vmatpush1.msra.mxu0 0.0
    %9001 = vmatprep.subr.mxu0 0.0
    %9002 = vmatpush1.msra.mxu0 0.0
    %9003 = vmatprep.subr.mxu0 %v8608
    %9004 = vmatpush1.msra.mxu0 %v8607
    %9005 = vmatprep.subr.mxu0 %v8600
    %9006 = vmatpush1.msra.mxu0 %v8599
    %9007 = vmatprep.subr.mxu0 0.0
    %9008 = vmatpush2.msra.mxu0 0.0
    %9009 = vmatprep.subr.mxu0 0.0
    %9010 = vmatpush2.msra.mxu0 0.0
    %9011 = vmatprep.subr.mxu0 0.0
    %9012 = vmatpush2.msra.mxu0 0.0
    %9013 = vmatprep.subr.mxu0 0.0
    %9014 = vmatpush2.msra.mxu0 0.0
    %9015 = vmatprep.subr.mxu0 0.0
    %9016 = vmatpush2.msra.mxu0 0.0
    %9017 = vmatprep.subr.mxu0 0.0
    %9018 = vmatpush2.msra.mxu0 0.0
    %9019 = vmatprep.subr.mxu0 0.0
    %9020 = vmatpush2.msra.mxu0 0.0
    %9021 = vmatprep.subr.mxu0 0.0
    %9022 = vmatpush2.msra.mxu0 0.0
    %9023 = vmatprep.subr.mxu0 0.0
    %9024 = vmatpush2.msra.mxu0 0.0
    %9025 = vmatprep.subr.mxu0 0.0
    %9026 = vmatpush2.msra.mxu0 0.0
    %9027 = vmatprep.subr.mxu0 0.0
    %9028 = vmatpush2.msra.mxu0 0.0
    %9029 = vmatprep.subr.mxu0 0.0
    %9030 = vmatpush2.msra.mxu0 0.0
    %9031 = vmatprep.subr.mxu0 0.0
    %9032 = vmatpush2.msra.mxu0 0.0
    %9033 = vmatprep.subr.mxu0 0.0
    %9034 = vmatpush2.msra.mxu0 0.0
    %9035 = vmatprep.subr.mxu0 0.0
    %9036 = vmatpush2.msra.mxu0 0.0
    %9037 = vmatprep.subr.mxu0 0.0
    %9038 = vmatpush2.msra.mxu0 0.0
    %9039 = vmatprep.mubr.f32.mxu0 0.0
    %9040 = vmatmul.mubr.f32.gmra.mxu0 %v8902
    %v9041 = vpop.f32.mrf.mxu0
    %v9042 = vadd.f32 0.0, %v9041
    %v9043 = vpop.f32.mrf.mxu0
    %v9044 = vadd.f32 0.0, %v9043
    %9045 = vdwg.mxu0
    %9046 = vmatprep.subr.mxu0 0.0
    %9047 = vmatpush1.msra.mxu0 0.0
    %9048 = vmatprep.subr.mxu0 0.0
    %9049 = vmatpush1.msra.mxu0 0.0
    %9050 = vmatprep.subr.mxu0 0.0
    %9051 = vmatpush1.msra.mxu0 0.0
    %9052 = vmatprep.subr.mxu0 0.0
    %9053 = vmatpush1.msra.mxu0 0.0
    %9054 = vmatprep.subr.mxu0 0.0
    %9055 = vmatpush1.msra.mxu0 0.0
    %9056 = vmatprep.subr.mxu0 0.0
    %9057 = vmatpush1.msra.mxu0 0.0
    %9058 = vmatprep.subr.mxu0 0.0
    %9059 = vmatpush1.msra.mxu0 0.0
    %9060 = vmatprep.subr.mxu0 0.0
    %9061 = vmatpush1.msra.mxu0 0.0
    %9062 = vmatprep.subr.mxu0 0.0
    %9063 = vmatpush1.msra.mxu0 0.0
    %9064 = vmatprep.subr.mxu0 0.0
    %9065 = vmatpush1.msra.mxu0 0.0
    %9066 = vmatprep.subr.mxu0 0.0
    %9067 = vmatpush1.msra.mxu0 0.0
    %9068 = vmatprep.subr.mxu0 0.0
    %9069 = vmatpush1.msra.mxu0 0.0
    %9070 = vmatprep.subr.mxu0 0.0
    %9071 = vmatpush1.msra.mxu0 0.0
    %9072 = vmatprep.subr.mxu0 0.0
    %9073 = vmatpush1.msra.mxu0 0.0
    %9074 = vmatprep.subr.mxu0 %v8610
    %9075 = vmatpush1.msra.mxu0 %v8609
    %9076 = vmatprep.subr.mxu0 %v8602
    %9077 = vmatpush1.msra.mxu0 %v8601
    %9078 = vmatprep.subr.mxu0 0.0
    %9079 = vmatpush2.msra.mxu0 0.0
    %9080 = vmatprep.subr.mxu0 0.0
    %9081 = vmatpush2.msra.mxu0 0.0
    %9082 = vmatprep.subr.mxu0 0.0
    %9083 = vmatpush2.msra.mxu0 0.0
    %9084 = vmatprep.subr.mxu0 0.0
    %9085 = vmatpush2.msra.mxu0 0.0
    %9086 = vmatprep.subr.mxu0 0.0
    %9087 = vmatpush2.msra.mxu0 0.0
    %9088 = vmatprep.subr.mxu0 0.0
    %9089 = vmatpush2.msra.mxu0 0.0
    %9090 = vmatprep.subr.mxu0 0.0
    %9091 = vmatpush2.msra.mxu0 0.0
    %9092 = vmatprep.subr.mxu0 0.0
    %9093 = vmatpush2.msra.mxu0 0.0
    %9094 = vmatprep.subr.mxu0 0.0
    %9095 = vmatpush2.msra.mxu0 0.0
    %9096 = vmatprep.subr.mxu0 0.0
    %9097 = vmatpush2.msra.mxu0 0.0
    %9098 = vmatprep.subr.mxu0 0.0
    %9099 = vmatpush2.msra.mxu0 0.0
    %9100 = vmatprep.subr.mxu0 0.0
    %9101 = vmatpush2.msra.mxu0 0.0
    %9102 = vmatprep.subr.mxu0 0.0
    %9103 = vmatpush2.msra.mxu0 0.0
    %9104 = vmatprep.subr.mxu0 0.0
    %9105 = vmatpush2.msra.mxu0 0.0
    %9106 = vmatprep.subr.mxu0 0.0
    %9107 = vmatpush2.msra.mxu0 0.0
    %9108 = vmatprep.subr.mxu0 0.0
    %9109 = vmatpush2.msra.mxu0 0.0
    %9110 = vmatprep.mubr.f32.mxu0 0.0
    %9111 = vmatmul.mubr.f32.gmra.mxu0 %v8902
    %v9112 = vpop.f32.mrf.mxu0
    %v9113 = vadd.f32 0.0, %v9112
    %v9114 = vpop.f32.mrf.mxu0
    %v9115 = vadd.f32 0.0, %v9114
    %9116 = vdwg.mxu0
    %9117 = vmatprep.subr.mxu0 0.0
    %9118 = vmatpush1.msra.mxu0 0.0
    %9119 = vmatprep.subr.mxu0 0.0
    %9120 = vmatpush1.msra.mxu0 0.0
    %9121 = vmatprep.subr.mxu0 0.0
    %9122 = vmatpush1.msra.mxu0 0.0
    %9123 = vmatprep.subr.mxu0 0.0
    %9124 = vmatpush1.msra.mxu0 0.0
    %9125 = vmatprep.subr.mxu0 0.0
    %9126 = vmatpush1.msra.mxu0 0.0
    %9127 = vmatprep.subr.mxu0 0.0
    %9128 = vmatpush1.msra.mxu0 0.0
    %9129 = vmatprep.subr.mxu0 0.0
    %9130 = vmatpush1.msra.mxu0 0.0
    %9131 = vmatprep.subr.mxu0 0.0
    %9132 = vmatpush1.msra.mxu0 0.0
    %9133 = vmatprep.subr.mxu0 0.0
    %9134 = vmatpush1.msra.mxu0 0.0
    %9135 = vmatprep.subr.mxu0 0.0
    %9136 = vmatpush1.msra.mxu0 0.0
    %9137 = vmatprep.subr.mxu0 0.0
    %9138 = vmatpush1.msra.mxu0 0.0
    %9139 = vmatprep.subr.mxu0 0.0
    %9140 = vmatpush1.msra.mxu0 0.0
    %9141 = vmatprep.subr.mxu0 0.0
    %9142 = vmatpush1.msra.mxu0 0.0
    %9143 = vmatprep.subr.mxu0 0.0
    %9144 = vmatpush1.msra.mxu0 0.0
    %9145 = vmatprep.subr.mxu0 %v8612
    %9146 = vmatpush1.msra.mxu0 %v8611
    %9147 = vmatprep.subr.mxu0 %v8604
    %9148 = vmatpush1.msra.mxu0 %v8603
    %9149 = vmatprep.subr.mxu0 0.0
    %9150 = vmatpush2.msra.mxu0 0.0
    %9151 = vmatprep.subr.mxu0 0.0
    %9152 = vmatpush2.msra.mxu0 0.0
    %9153 = vmatprep.subr.mxu0 0.0
    %9154 = vmatpush2.msra.mxu0 0.0
    %9155 = vmatprep.subr.mxu0 0.0
    %9156 = vmatpush2.msra.mxu0 0.0
    %9157 = vmatprep.subr.mxu0 0.0
    %9158 = vmatpush2.msra.mxu0 0.0
    %9159 = vmatprep.subr.mxu0 0.0
    %9160 = vmatpush2.msra.mxu0 0.0
    %9161 = vmatprep.subr.mxu0 0.0
    %9162 = vmatpush2.msra.mxu0 0.0
    %9163 = vmatprep.subr.mxu0 0.0
    %9164 = vmatpush2.msra.mxu0 0.0
    %9165 = vmatprep.subr.mxu0 0.0
    %9166 = vmatpush2.msra.mxu0 0.0
    %9167 = vmatprep.subr.mxu0 0.0
    %9168 = vmatpush2.msra.mxu0 0.0
    %9169 = vmatprep.subr.mxu0 0.0
    %9170 = vmatpush2.msra.mxu0 0.0
    %9171 = vmatprep.subr.mxu0 0.0
    %9172 = vmatpush2.msra.mxu0 0.0
    %9173 = vmatprep.subr.mxu0 0.0
    %9174 = vmatpush2.msra.mxu0 0.0
    %9175 = vmatprep.subr.mxu0 0.0
    %9176 = vmatpush2.msra.mxu0 0.0
    %9177 = vmatprep.subr.mxu0 0.0
    %9178 = vmatpush2.msra.mxu0 0.0
    %9179 = vmatprep.subr.mxu0 0.0
    %9180 = vmatpush2.msra.mxu0 0.0
    %9181 = vmatprep.mubr.f32.mxu0 0.0
    %9182 = vmatmul.mubr.f32.gmra.mxu0 %v8902
    %v9183 = vpop.f32.mrf.mxu0
    %v9184 = vadd.f32 0.0, %v9183
    %v9185 = vpop.f32.mrf.mxu0
    %v9186 = vadd.f32 0.0, %v9185
    %9187 = vdwg.mxu0
    %v9188 = vlaneseq
    %v9189 = vshrl.u32 %v9188, 7
    %v9190 = vsub.s32 0, %v9189
    %v9191 = vrot.slane %v8684, %v9190
    %v9192 = vlaneseq
    %v9193 = vshrl.u32 %v9192, 7
    %v9194 = vsub.s32 0, %v9193
    %v9195 = vrot.slane %v8686, %v9194
    %v9196 = vlaneseq
    %v9197 = vshrl.u32 %v9196, 7
    %v9198 = vsub.s32 0, %v9197
    %v9199 = vrot.slane %v8755, %v9198
    %v9200 = vlaneseq
    %v9201 = vshrl.u32 %v9200, 7
    %v9202 = vsub.s32 0, %v9201
    %v9203 = vrot.slane %v8757, %v9202
    %v9204 = vlaneseq
    %v9205 = vshrl.u32 %v9204, 7
    %v9206 = vsub.s32 0, %v9205
    %v9207 = vrot.slane %v8826, %v9206
    %v9208 = vlaneseq
    %v9209 = vshrl.u32 %v9208, 7
    %v9210 = vsub.s32 0, %v9209
    %v9211 = vrot.slane %v8828, %v9210
    %v9212 = vlaneseq
    %v9213 = vshrl.u32 %v9212, 7
    %v9214 = vsub.s32 0, %v9213
    %v9215 = vrot.slane %v8897, %v9214
    %v9216 = vlaneseq
    %v9217 = vshrl.u32 %v9216, 7
    %v9218 = vsub.s32 0, %v9217
    %v9219 = vrot.slane %v8899, %v9218
    %v9220 = vmul.f32 %v6884, %v9191
    %v9221 = vmul.f32 %v6886, %v9195
    %v9222 = vmul.f32 %v7212, %v9199
    %v9223 = vmul.f32 %v7214, %v9203
    %v9224 = vmul.f32 %v7540, %v9207
    %v9225 = vmul.f32 %v7542, %v9211
    %v9226 = vmul.f32 %v7868, %v9215
    %v9227 = vmul.f32 %v7870, %v9219
    %v9228 = vlaneseq
    %v9229 = vshrl.u32 %v9228, 7
    %v9230 = vsub.s32 0, %v9229
    %v9231 = vrot.slane %v8971, %v9230
    %v9232 = vlaneseq
    %v9233 = vshrl.u32 %v9232, 7
    %v9234 = vsub.s32 0, %v9233
    %v9235 = vrot.slane %v8973, %v9234
    %v9236 = vlaneseq
    %v9237 = vshrl.u32 %v9236, 7
    %v9238 = vsub.s32 0, %v9237
    %v9239 = vrot.slane %v9042, %v9238
    %v9240 = vlaneseq
    %v9241 = vshrl.u32 %v9240, 7
    %v9242 = vsub.s32 0, %v9241
    %v9243 = vrot.slane %v9044, %v9242
    %v9244 = vlaneseq
    %v9245 = vshrl.u32 %v9244, 7
    %v9246 = vsub.s32 0, %v9245
    %v9247 = vrot.slane %v9113, %v9246
    %v9248 = vlaneseq
    %v9249 = vshrl.u32 %v9248, 7
    %v9250 = vsub.s32 0, %v9249
    %v9251 = vrot.slane %v9115, %v9250
    %v9252 = vlaneseq
    %v9253 = vshrl.u32 %v9252, 7
    %v9254 = vsub.s32 0, %v9253
    %v9255 = vrot.slane %v9184, %v9254
    %v9256 = vlaneseq
    %v9257 = vshrl.u32 %v9256, 7
    %v9258 = vsub.s32 0, %v9257
    %v9259 = vrot.slane %v9186, %v9258
    %v9260 = vadd.f32 %v9220, %v9231
    %v9261 = vadd.f32 %v9221, %v9235
    %v9262 = vadd.f32 %v9222, %v9239
    %v9263 = vadd.f32 %v9223, %v9243
    %v9264 = vadd.f32 %v9224, %v9247
    %v9265 = vadd.f32 %v9225, %v9251
    %v9266 = vadd.f32 %v9226, %v9255
    %v9267 = vadd.f32 %v9227, %v9259
    %v9268 = vmax.f32 %v9260, 0.0
    %v9269 = vmax.f32 %v9261, 0.0
    %v9270 = vmax.f32 %v9262, 0.0
    %v9271 = vmax.f32 %v9263, 0.0
    %v9272 = vmax.f32 %v9264, 0.0
    %v9273 = vmax.f32 %v9265, 0.0
    %v9274 = vmax.f32 %v9266, 0.0
    %v9275 = vmax.f32 %v9267, 0.0
    %v9276 = vpack.c.bf16 %v9268, %v9268
    %v9277 = vpack.c.bf16 %v9269, %v9269
    %v9278 = vpack.c.bf16 %v9270, %v9270
    %v9279 = vpack.c.bf16 %v9271, %v9271
    %v9280 = vpack.c.bf16 %v9272, %v9272
    %v9281 = vpack.c.bf16 %v9273, %v9273
    %v9282 = vpack.c.bf16 %v9274, %v9274
    %v9283 = vpack.c.bf16 %v9275, %v9275
    %v9284 = vld [vmem:[#allocation10] sm:$0xff]
    %v9285 = vld [vmem:[#allocation10 + $0x8] sm:$0xff]
    %v9286 = vld [vmem:[#allocation10 + $0x10] sm:$0xff]
    %v9287 = vld [vmem:[#allocation10 + $0x18] sm:$0xff]
    %v9288 = vld [vmem:[#allocation10 + $0x20] sm:$0xff]
    %v9289 = vld [vmem:[#allocation10 + $0x28] sm:$0xff]
    %v9290 = vld [vmem:[#allocation10 + $0x30] sm:$0xff]
    %v9291 = vld [vmem:[#allocation10 + $0x38] sm:$0xff]
    %v9292 = vld [vmem:[#allocation10 + $0x40] sm:$0xff]
    %v9293 = vld [vmem:[#allocation10 + $0x48] sm:$0xff]
    %v9294 = vld [vmem:[#allocation10 + $0x50] sm:$0xff]
    %v9295 = vld [vmem:[#allocation10 + $0x58] sm:$0xff]
    %v9296 = vld [vmem:[#allocation10 + $0x60] sm:$0xff]
    %v9297 = vld [vmem:[#allocation10 + $0x68] sm:$0xff]
    %v9298 = vld [vmem:[#allocation10 + $0x70] sm:$0xff]
    %v9299 = vld [vmem:[#allocation10 + $0x78] sm:$0xff]
    %v9300 = vld [vmem:[#allocation10 + $0x80] sm:$0xff]
    %v9301 = vld [vmem:[#allocation10 + $0x88] sm:$0xff]
    %v9302 = vld [vmem:[#allocation10 + $0x90] sm:$0xff]
    %v9303 = vld [vmem:[#allocation10 + $0x98] sm:$0xff]
    %v9304 = vld [vmem:[#allocation10 + $0xa0] sm:$0xff]
    %v9305 = vld [vmem:[#allocation10 + $0xa8] sm:$0xff]
    %v9306 = vld [vmem:[#allocation10 + $0xb0] sm:$0xff]
    %v9307 = vld [vmem:[#allocation10 + $0xb8] sm:$0xff]
    %v9308 = vld [vmem:[#allocation10 + $0xc0] sm:$0xff]
    %v9309 = vld [vmem:[#allocation10 + $0xc8] sm:$0xff]
    %v9310 = vld [vmem:[#allocation10 + $0xd0] sm:$0xff]
    %v9311 = vld [vmem:[#allocation10 + $0xd8] sm:$0xff]
    %v9312 = vld [vmem:[#allocation10 + $0xe0] sm:$0xff]
    %v9313 = vld [vmem:[#allocation10 + $0xe8] sm:$0xff]
    %v9314 = vld [vmem:[#allocation10 + $0xf0] sm:$0xff]
    %v9315 = vld [vmem:[#allocation10 + $0xf8] sm:$0xff]
    %v9316 = vld [vmem:[#allocation10 + $0x100] sm:$0xff]
    %v9317 = vld [vmem:[#allocation10 + $0x108] sm:$0xff]
    %v9318 = vld [vmem:[#allocation10 + $0x110] sm:$0xff]
    %v9319 = vld [vmem:[#allocation10 + $0x118] sm:$0xff]
    %v9320 = vld [vmem:[#allocation10 + $0x120] sm:$0xff]
    %v9321 = vld [vmem:[#allocation10 + $0x128] sm:$0xff]
    %v9322 = vld [vmem:[#allocation10 + $0x130] sm:$0xff]
    %v9323 = vld [vmem:[#allocation10 + $0x138] sm:$0xff]
    %v9324 = vld [vmem:[#allocation10 + $0x140] sm:$0xff]
    %v9325 = vld [vmem:[#allocation10 + $0x148] sm:$0xff]
    %v9326 = vld [vmem:[#allocation10 + $0x150] sm:$0xff]
    %v9327 = vld [vmem:[#allocation10 + $0x158] sm:$0xff]
    %v9328 = vld [vmem:[#allocation10 + $0x160] sm:$0xff]
    %v9329 = vld [vmem:[#allocation10 + $0x168] sm:$0xff]
    %v9330 = vld [vmem:[#allocation10 + $0x170] sm:$0xff]
    %v9331 = vld [vmem:[#allocation10 + $0x178] sm:$0xff]
    %v9332 = vld [vmem:[#allocation10 + $0x180] sm:$0xff]
    %v9333 = vld [vmem:[#allocation10 + $0x188] sm:$0xff]
    %v9334 = vld [vmem:[#allocation10 + $0x190] sm:$0xff]
    %v9335 = vld [vmem:[#allocation10 + $0x198] sm:$0xff]
    %v9336 = vld [vmem:[#allocation10 + $0x1a0] sm:$0xff]
    %v9337 = vld [vmem:[#allocation10 + $0x1a8] sm:$0xff]
    %v9338 = vld [vmem:[#allocation10 + $0x1b0] sm:$0xff]
    %v9339 = vld [vmem:[#allocation10 + $0x1b8] sm:$0xff]
    %v9340 = vld [vmem:[#allocation10 + $0x1c0] sm:$0xff]
    %v9341 = vld [vmem:[#allocation10 + $0x1c8] sm:$0xff]
    %v9342 = vld [vmem:[#allocation10 + $0x1d0] sm:$0xff]
    %v9343 = vld [vmem:[#allocation10 + $0x1d8] sm:$0xff]
    %v9344 = vld [vmem:[#allocation10 + $0x1e0] sm:$0xff]
    %v9345 = vld [vmem:[#allocation10 + $0x1e8] sm:$0xff]
    %v9346 = vld [vmem:[#allocation10 + $0x1f0] sm:$0xff]
    %v9347 = vld [vmem:[#allocation10 + $0x1f8] sm:$0xff]
    %v9348 = vld [vmem:[#allocation10 + $0x200] sm:$0xff]
    %v9349 = vld [vmem:[#allocation10 + $0x208] sm:$0xff]
    %v9350 = vld [vmem:[#allocation10 + $0x210] sm:$0xff]
    %v9351 = vld [vmem:[#allocation10 + $0x218] sm:$0xff]
    %v9352 = vld [vmem:[#allocation10 + $0x220] sm:$0xff]
    %v9353 = vld [vmem:[#allocation10 + $0x228] sm:$0xff]
    %v9354 = vld [vmem:[#allocation10 + $0x230] sm:$0xff]
    %v9355 = vld [vmem:[#allocation10 + $0x238] sm:$0xff]
    %v9356 = vld [vmem:[#allocation10 + $0x240] sm:$0xff]
    %v9357 = vld [vmem:[#allocation10 + $0x248] sm:$0xff]
    %v9358 = vld [vmem:[#allocation10 + $0x250] sm:$0xff]
    %v9359 = vld [vmem:[#allocation10 + $0x258] sm:$0xff]
    %v9360 = vld [vmem:[#allocation10 + $0x260] sm:$0xff]
    %v9361 = vld [vmem:[#allocation10 + $0x268] sm:$0xff]
    %v9362 = vld [vmem:[#allocation10 + $0x270] sm:$0xff]
    %v9363 = vld [vmem:[#allocation10 + $0x278] sm:$0xff]
    %v9364 = vld [vmem:[#allocation10 + $0x280] sm:$0xff]
    %v9365 = vld [vmem:[#allocation10 + $0x288] sm:$0xff]
    %v9366 = vld [vmem:[#allocation10 + $0x290] sm:$0xff]
    %v9367 = vld [vmem:[#allocation10 + $0x298] sm:$0xff]
    %v9368 = vld [vmem:[#allocation10 + $0x2a0] sm:$0xff]
    %v9369 = vld [vmem:[#allocation10 + $0x2a8] sm:$0xff]
    %v9370 = vld [vmem:[#allocation10 + $0x2b0] sm:$0xff]
    %v9371 = vld [vmem:[#allocation10 + $0x2b8] sm:$0xff]
    %v9372 = vld [vmem:[#allocation10 + $0x2c0] sm:$0xff]
    %v9373 = vld [vmem:[#allocation10 + $0x2c8] sm:$0xff]
    %v9374 = vld [vmem:[#allocation10 + $0x2d0] sm:$0xff]
    %v9375 = vld [vmem:[#allocation10 + $0x2d8] sm:$0xff]
    %v9376 = vld [vmem:[#allocation10 + $0x2e0] sm:$0xff]
    %v9377 = vld [vmem:[#allocation10 + $0x2e8] sm:$0xff]
    %v9378 = vld [vmem:[#allocation10 + $0x2f0] sm:$0xff]
    %v9379 = vld [vmem:[#allocation10 + $0x2f8] sm:$0xff]
    %v9380 = vld [vmem:[#allocation10 + $0x300] sm:$0xff]
    %v9381 = vld [vmem:[#allocation10 + $0x308] sm:$0xff]
    %v9382 = vld [vmem:[#allocation10 + $0x310] sm:$0xff]
    %v9383 = vld [vmem:[#allocation10 + $0x318] sm:$0xff]
    %v9384 = vld [vmem:[#allocation10 + $0x320] sm:$0xff]
    %v9385 = vld [vmem:[#allocation10 + $0x328] sm:$0xff]
    %v9386 = vld [vmem:[#allocation10 + $0x330] sm:$0xff]
    %v9387 = vld [vmem:[#allocation10 + $0x338] sm:$0xff]
    %v9388 = vld [vmem:[#allocation10 + $0x340] sm:$0xff]
    %v9389 = vld [vmem:[#allocation10 + $0x348] sm:$0xff]
    %v9390 = vld [vmem:[#allocation10 + $0x350] sm:$0xff]
    %v9391 = vld [vmem:[#allocation10 + $0x358] sm:$0xff]
    %v9392 = vld [vmem:[#allocation10 + $0x360] sm:$0xff]
    %v9393 = vld [vmem:[#allocation10 + $0x368] sm:$0xff]
    %v9394 = vld [vmem:[#allocation10 + $0x370] sm:$0xff]
    %v9395 = vld [vmem:[#allocation10 + $0x378] sm:$0xff]
    %v9396 = vld [vmem:[#allocation10 + $0x380] sm:$0xff]
    %v9397 = vld [vmem:[#allocation10 + $0x388] sm:$0xff]
    %v9398 = vld [vmem:[#allocation10 + $0x390] sm:$0xff]
    %v9399 = vld [vmem:[#allocation10 + $0x398] sm:$0xff]
    %v9400 = vld [vmem:[#allocation10 + $0x3a0] sm:$0xff]
    %v9401 = vld [vmem:[#allocation10 + $0x3a8] sm:$0xff]
    %v9402 = vld [vmem:[#allocation10 + $0x3b0] sm:$0xff]
    %v9403 = vld [vmem:[#allocation10 + $0x3b8] sm:$0xff]
    %v9404 = vld [vmem:[#allocation10 + $0x3c0] sm:$0xff]
    %v9405 = vld [vmem:[#allocation10 + $0x3c8] sm:$0xff]
    %v9406 = vld [vmem:[#allocation10 + $0x3d0] sm:$0xff]
    %v9407 = vld [vmem:[#allocation10 + $0x3d8] sm:$0xff]
    %v9408 = vld [vmem:[#allocation10 + $0x3e0] sm:$0xff]
    %v9409 = vld [vmem:[#allocation10 + $0x3e8] sm:$0xff]
    %v9410 = vld [vmem:[#allocation10 + $0x3f0] sm:$0xff]
    %v9411 = vld [vmem:[#allocation10 + $0x3f8] sm:$0xff]
    %v9540 = vunpack.c.l.b16 %v9284
    %v9541 = vunpack.c.h.b16 %v9284
    %v9542 = vunpack.c.l.b16 %v9285
    %v9543 = vunpack.c.h.b16 %v9285
    %v9544 = vunpack.c.l.b16 %v9286
    %v9545 = vunpack.c.h.b16 %v9286
    %v9546 = vunpack.c.l.b16 %v9287
    %v9547 = vunpack.c.h.b16 %v9287
    %v9548 = vunpack.c.l.b16 %v9288
    %v9549 = vunpack.c.h.b16 %v9288
    %v9550 = vunpack.c.l.b16 %v9289
    %v9551 = vunpack.c.h.b16 %v9289
    %v9552 = vunpack.c.l.b16 %v9290
    %v9553 = vunpack.c.h.b16 %v9290
    %v9554 = vunpack.c.l.b16 %v9291
    %v9555 = vunpack.c.h.b16 %v9291
    %v9556 = vunpack.c.l.b16 %v9292
    %v9557 = vunpack.c.h.b16 %v9292
    %v9558 = vunpack.c.l.b16 %v9293
    %v9559 = vunpack.c.h.b16 %v9293
    %v9560 = vunpack.c.l.b16 %v9294
    %v9561 = vunpack.c.h.b16 %v9294
    %v9562 = vunpack.c.l.b16 %v9295
    %v9563 = vunpack.c.h.b16 %v9295
    %v9564 = vunpack.c.l.b16 %v9296
    %v9565 = vunpack.c.h.b16 %v9296
    %v9566 = vunpack.c.l.b16 %v9297
    %v9567 = vunpack.c.h.b16 %v9297
    %v9568 = vunpack.c.l.b16 %v9298
    %v9569 = vunpack.c.h.b16 %v9298
    %v9570 = vunpack.c.l.b16 %v9299
    %v9571 = vunpack.c.h.b16 %v9299
    %v9572 = vunpack.c.l.b16 %v9300
    %v9573 = vunpack.c.h.b16 %v9300
    %v9574 = vunpack.c.l.b16 %v9301
    %v9575 = vunpack.c.h.b16 %v9301
    %v9576 = vunpack.c.l.b16 %v9302
    %v9577 = vunpack.c.h.b16 %v9302
    %v9578 = vunpack.c.l.b16 %v9303
    %v9579 = vunpack.c.h.b16 %v9303
    %v9580 = vunpack.c.l.b16 %v9304
    %v9581 = vunpack.c.h.b16 %v9304
    %v9582 = vunpack.c.l.b16 %v9305
    %v9583 = vunpack.c.h.b16 %v9305
    %v9584 = vunpack.c.l.b16 %v9306
    %v9585 = vunpack.c.h.b16 %v9306
    %v9586 = vunpack.c.l.b16 %v9307
    %v9587 = vunpack.c.h.b16 %v9307
    %v9588 = vunpack.c.l.b16 %v9308
    %v9589 = vunpack.c.h.b16 %v9308
    %v9590 = vunpack.c.l.b16 %v9309
    %v9591 = vunpack.c.h.b16 %v9309
    %v9592 = vunpack.c.l.b16 %v9310
    %v9593 = vunpack.c.h.b16 %v9310
    %v9594 = vunpack.c.l.b16 %v9311
    %v9595 = vunpack.c.h.b16 %v9311
    %v9596 = vunpack.c.l.b16 %v9312
    %v9597 = vunpack.c.h.b16 %v9312
    %v9598 = vunpack.c.l.b16 %v9313
    %v9599 = vunpack.c.h.b16 %v9313
    %v9600 = vunpack.c.l.b16 %v9314
    %v9601 = vunpack.c.h.b16 %v9314
    %v9602 = vunpack.c.l.b16 %v9315
    %v9603 = vunpack.c.h.b16 %v9315
    %v9604 = vunpack.c.l.b16 %v9316
    %v9605 = vunpack.c.h.b16 %v9316
    %v9606 = vunpack.c.l.b16 %v9317
    %v9607 = vunpack.c.h.b16 %v9317
    %v9608 = vunpack.c.l.b16 %v9318
    %v9609 = vunpack.c.h.b16 %v9318
    %v9610 = vunpack.c.l.b16 %v9319
    %v9611 = vunpack.c.h.b16 %v9319
    %v9612 = vunpack.c.l.b16 %v9320
    %v9613 = vunpack.c.h.b16 %v9320
    %v9614 = vunpack.c.l.b16 %v9321
    %v9615 = vunpack.c.h.b16 %v9321
    %v9616 = vunpack.c.l.b16 %v9322
    %v9617 = vunpack.c.h.b16 %v9322
    %v9618 = vunpack.c.l.b16 %v9323
    %v9619 = vunpack.c.h.b16 %v9323
    %v9620 = vunpack.c.l.b16 %v9324
    %v9621 = vunpack.c.h.b16 %v9324
    %v9622 = vunpack.c.l.b16 %v9325
    %v9623 = vunpack.c.h.b16 %v9325
    %v9624 = vunpack.c.l.b16 %v9326
    %v9625 = vunpack.c.h.b16 %v9326
    %v9626 = vunpack.c.l.b16 %v9327
    %v9627 = vunpack.c.h.b16 %v9327
    %v9628 = vunpack.c.l.b16 %v9328
    %v9629 = vunpack.c.h.b16 %v9328
    %v9630 = vunpack.c.l.b16 %v9329
    %v9631 = vunpack.c.h.b16 %v9329
    %v9632 = vunpack.c.l.b16 %v9330
    %v9633 = vunpack.c.h.b16 %v9330
    %v9634 = vunpack.c.l.b16 %v9331
    %v9635 = vunpack.c.h.b16 %v9331
    %v9636 = vunpack.c.l.b16 %v9332
    %v9637 = vunpack.c.h.b16 %v9332
    %v9638 = vunpack.c.l.b16 %v9333
    %v9639 = vunpack.c.h.b16 %v9333
    %v9640 = vunpack.c.l.b16 %v9334
    %v9641 = vunpack.c.h.b16 %v9334
    %v9642 = vunpack.c.l.b16 %v9335
    %v9643 = vunpack.c.h.b16 %v9335
    %v9644 = vunpack.c.l.b16 %v9336
    %v9645 = vunpack.c.h.b16 %v9336
    %v9646 = vunpack.c.l.b16 %v9337
    %v9647 = vunpack.c.h.b16 %v9337
    %v9648 = vunpack.c.l.b16 %v9338
    %v9649 = vunpack.c.h.b16 %v9338
    %v9650 = vunpack.c.l.b16 %v9339
    %v9651 = vunpack.c.h.b16 %v9339
    %v9652 = vunpack.c.l.b16 %v9340
    %v9653 = vunpack.c.h.b16 %v9340
    %v9654 = vunpack.c.l.b16 %v9341
    %v9655 = vunpack.c.h.b16 %v9341
    %v9656 = vunpack.c.l.b16 %v9342
    %v9657 = vunpack.c.h.b16 %v9342
    %v9658 = vunpack.c.l.b16 %v9343
    %v9659 = vunpack.c.h.b16 %v9343
    %v9660 = vunpack.c.l.b16 %v9344
    %v9661 = vunpack.c.h.b16 %v9344
    %v9662 = vunpack.c.l.b16 %v9345
    %v9663 = vunpack.c.h.b16 %v9345
    %v9664 = vunpack.c.l.b16 %v9346
    %v9665 = vunpack.c.h.b16 %v9346
    %v9666 = vunpack.c.l.b16 %v9347
    %v9667 = vunpack.c.h.b16 %v9347
    %v9668 = vunpack.c.l.b16 %v9348
    %v9669 = vunpack.c.h.b16 %v9348
    %v9670 = vunpack.c.l.b16 %v9349
    %v9671 = vunpack.c.h.b16 %v9349
    %v9672 = vunpack.c.l.b16 %v9350
    %v9673 = vunpack.c.h.b16 %v9350
    %v9674 = vunpack.c.l.b16 %v9351
    %v9675 = vunpack.c.h.b16 %v9351
    %v9676 = vunpack.c.l.b16 %v9352
    %v9677 = vunpack.c.h.b16 %v9352
    %v9678 = vunpack.c.l.b16 %v9353
    %v9679 = vunpack.c.h.b16 %v9353
    %v9680 = vunpack.c.l.b16 %v9354
    %v9681 = vunpack.c.h.b16 %v9354
    %v9682 = vunpack.c.l.b16 %v9355
    %v9683 = vunpack.c.h.b16 %v9355
    %v9684 = vunpack.c.l.b16 %v9356
    %v9685 = vunpack.c.h.b16 %v9356
    %v9686 = vunpack.c.l.b16 %v9357
    %v9687 = vunpack.c.h.b16 %v9357
    %v9688 = vunpack.c.l.b16 %v9358
    %v9689 = vunpack.c.h.b16 %v9358
    %v9690 = vunpack.c.l.b16 %v9359
    %v9691 = vunpack.c.h.b16 %v9359
    %v9692 = vunpack.c.l.b16 %v9360
    %v9693 = vunpack.c.h.b16 %v9360
    %v9694 = vunpack.c.l.b16 %v9361
    %v9695 = vunpack.c.h.b16 %v9361
    %v9696 = vunpack.c.l.b16 %v9362
    %v9697 = vunpack.c.h.b16 %v9362
    %v9698 = vunpack.c.l.b16 %v9363
    %v9699 = vunpack.c.h.b16 %v9363
    %v9700 = vunpack.c.l.b16 %v9364
    %v9701 = vunpack.c.h.b16 %v9364
    %v9702 = vunpack.c.l.b16 %v9365
    %v9703 = vunpack.c.h.b16 %v9365
    %v9704 = vunpack.c.l.b16 %v9366
    %v9705 = vunpack.c.h.b16 %v9366
    %v9706 = vunpack.c.l.b16 %v9367
    %v9707 = vunpack.c.h.b16 %v9367
    %v9708 = vunpack.c.l.b16 %v9368
    %v9709 = vunpack.c.h.b16 %v9368
    %v9710 = vunpack.c.l.b16 %v9369
    %v9711 = vunpack.c.h.b16 %v9369
    %v9712 = vunpack.c.l.b16 %v9370
    %v9713 = vunpack.c.h.b16 %v9370
    %v9714 = vunpack.c.l.b16 %v9371
    %v9715 = vunpack.c.h.b16 %v9371
    %v9716 = vunpack.c.l.b16 %v9372
    %v9717 = vunpack.c.h.b16 %v9372
    %v9718 = vunpack.c.l.b16 %v9373
    %v9719 = vunpack.c.h.b16 %v9373
    %v9720 = vunpack.c.l.b16 %v9374
    %v9721 = vunpack.c.h.b16 %v9374
    %v9722 = vunpack.c.l.b16 %v9375
    %v9723 = vunpack.c.h.b16 %v9375
    %v9724 = vunpack.c.l.b16 %v9376
    %v9725 = vunpack.c.h.b16 %v9376
    %v9726 = vunpack.c.l.b16 %v9377
    %v9727 = vunpack.c.h.b16 %v9377
    %v9728 = vunpack.c.l.b16 %v9378
    %v9729 = vunpack.c.h.b16 %v9378
    %v9730 = vunpack.c.l.b16 %v9379
    %v9731 = vunpack.c.h.b16 %v9379
    %v9732 = vunpack.c.l.b16 %v9380
    %v9733 = vunpack.c.h.b16 %v9380
    %v9734 = vunpack.c.l.b16 %v9381
    %v9735 = vunpack.c.h.b16 %v9381
    %v9736 = vunpack.c.l.b16 %v9382
    %v9737 = vunpack.c.h.b16 %v9382
    %v9738 = vunpack.c.l.b16 %v9383
    %v9739 = vunpack.c.h.b16 %v9383
    %v9740 = vunpack.c.l.b16 %v9384
    %v9741 = vunpack.c.h.b16 %v9384
    %v9742 = vunpack.c.l.b16 %v9385
    %v9743 = vunpack.c.h.b16 %v9385
    %v9744 = vunpack.c.l.b16 %v9386
    %v9745 = vunpack.c.h.b16 %v9386
    %v9746 = vunpack.c.l.b16 %v9387
    %v9747 = vunpack.c.h.b16 %v9387
    %v9748 = vunpack.c.l.b16 %v9388
    %v9749 = vunpack.c.h.b16 %v9388
    %v9750 = vunpack.c.l.b16 %v9389
    %v9751 = vunpack.c.h.b16 %v9389
    %v9752 = vunpack.c.l.b16 %v9390
    %v9753 = vunpack.c.h.b16 %v9390
    %v9754 = vunpack.c.l.b16 %v9391
    %v9755 = vunpack.c.h.b16 %v9391
    %v9756 = vunpack.c.l.b16 %v9392
    %v9757 = vunpack.c.h.b16 %v9392
    %v9758 = vunpack.c.l.b16 %v9393
    %v9759 = vunpack.c.h.b16 %v9393
    %v9760 = vunpack.c.l.b16 %v9394
    %v9761 = vunpack.c.h.b16 %v9394
    %v9762 = vunpack.c.l.b16 %v9395
    %v9763 = vunpack.c.h.b16 %v9395
    %v9764 = vunpack.c.l.b16 %v9396
    %v9765 = vunpack.c.h.b16 %v9396
    %v9766 = vunpack.c.l.b16 %v9397
    %v9767 = vunpack.c.h.b16 %v9397
    %v9768 = vunpack.c.l.b16 %v9398
    %v9769 = vunpack.c.h.b16 %v9398
    %v9770 = vunpack.c.l.b16 %v9399
    %v9771 = vunpack.c.h.b16 %v9399
    %v9772 = vunpack.c.l.b16 %v9400
    %v9773 = vunpack.c.h.b16 %v9400
    %v9774 = vunpack.c.l.b16 %v9401
    %v9775 = vunpack.c.h.b16 %v9401
    %v9776 = vunpack.c.l.b16 %v9402
    %v9777 = vunpack.c.h.b16 %v9402
    %v9778 = vunpack.c.l.b16 %v9403
    %v9779 = vunpack.c.h.b16 %v9403
    %v9780 = vunpack.c.l.b16 %v9404
    %v9781 = vunpack.c.h.b16 %v9404
    %v9782 = vunpack.c.l.b16 %v9405
    %v9783 = vunpack.c.h.b16 %v9405
    %v9784 = vunpack.c.l.b16 %v9406
    %v9785 = vunpack.c.h.b16 %v9406
    %v9786 = vunpack.c.l.b16 %v9407
    %v9787 = vunpack.c.h.b16 %v9407
    %v9788 = vunpack.c.l.b16 %v9408
    %v9789 = vunpack.c.h.b16 %v9408
    %v9790 = vunpack.c.l.b16 %v9409
    %v9791 = vunpack.c.h.b16 %v9409
    %v9792 = vunpack.c.l.b16 %v9410
    %v9793 = vunpack.c.h.b16 %v9410
    %v9794 = vunpack.c.l.b16 %v9411
    %v9795 = vunpack.c.h.b16 %v9411
    %v9796 = vpack.c.b16 %v9542, %v9540
    %v9797 = vpack.c.b16 %v9543, %v9541
    %v9798 = vpack.c.b16 %v9546, %v9544
    %v9799 = vpack.c.b16 %v9547, %v9545
    %v9800 = vpack.c.b16 %v9550, %v9548
    %v9801 = vpack.c.b16 %v9551, %v9549
    %v9802 = vpack.c.b16 %v9554, %v9552
    %v9803 = vpack.c.b16 %v9555, %v9553
    %v9804 = vpack.c.b16 %v9558, %v9556
    %v9805 = vpack.c.b16 %v9559, %v9557
    %v9806 = vpack.c.b16 %v9562, %v9560
    %v9807 = vpack.c.b16 %v9563, %v9561
    %v9808 = vpack.c.b16 %v9566, %v9564
    %v9809 = vpack.c.b16 %v9567, %v9565
    %v9810 = vpack.c.b16 %v9570, %v9568
    %v9811 = vpack.c.b16 %v9571, %v9569
    %v9812 = vpack.c.b16 %v9574, %v9572
    %v9813 = vpack.c.b16 %v9575, %v9573
    %v9814 = vpack.c.b16 %v9578, %v9576
    %v9815 = vpack.c.b16 %v9579, %v9577
    %v9816 = vpack.c.b16 %v9582, %v9580
    %v9817 = vpack.c.b16 %v9583, %v9581
    %v9818 = vpack.c.b16 %v9586, %v9584
    %v9819 = vpack.c.b16 %v9587, %v9585
    %v9820 = vpack.c.b16 %v9590, %v9588
    %v9821 = vpack.c.b16 %v9591, %v9589
    %v9822 = vpack.c.b16 %v9594, %v9592
    %v9823 = vpack.c.b16 %v9595, %v9593
    %v9824 = vpack.c.b16 %v9598, %v9596
    %v9825 = vpack.c.b16 %v9599, %v9597
    %v9826 = vpack.c.b16 %v9602, %v9600
    %v9827 = vpack.c.b16 %v9603, %v9601
    %v9828 = vpack.c.b16 %v9606, %v9604
    %v9829 = vpack.c.b16 %v9607, %v9605
    %v9830 = vpack.c.b16 %v9610, %v9608
    %v9831 = vpack.c.b16 %v9611, %v9609
    %v9832 = vpack.c.b16 %v9614, %v9612
    %v9833 = vpack.c.b16 %v9615, %v9613
    %v9834 = vpack.c.b16 %v9618, %v9616
    %v9835 = vpack.c.b16 %v9619, %v9617
    %v9836 = vpack.c.b16 %v9622, %v9620
    %v9837 = vpack.c.b16 %v9623, %v9621
    %v9838 = vpack.c.b16 %v9626, %v9624
    %v9839 = vpack.c.b16 %v9627, %v9625
    %v9840 = vpack.c.b16 %v9630, %v9628
    %v9841 = vpack.c.b16 %v9631, %v9629
    %v9842 = vpack.c.b16 %v9634, %v9632
    %v9843 = vpack.c.b16 %v9635, %v9633
    %v9844 = vpack.c.b16 %v9638, %v9636
    %v9845 = vpack.c.b16 %v9639, %v9637
    %v9846 = vpack.c.b16 %v9642, %v9640
    %v9847 = vpack.c.b16 %v9643, %v9641
    %v9848 = vpack.c.b16 %v9646, %v9644
    %v9849 = vpack.c.b16 %v9647, %v9645
    %v9850 = vpack.c.b16 %v9650, %v9648
    %v9851 = vpack.c.b16 %v9651, %v9649
    %v9852 = vpack.c.b16 %v9654, %v9652
    %v9853 = vpack.c.b16 %v9655, %v9653
    %v9854 = vpack.c.b16 %v9658, %v9656
    %v9855 = vpack.c.b16 %v9659, %v9657
    %v9856 = vpack.c.b16 %v9662, %v9660
    %v9857 = vpack.c.b16 %v9663, %v9661
    %v9858 = vpack.c.b16 %v9666, %v9664
    %v9859 = vpack.c.b16 %v9667, %v9665
    %v9860 = vpack.c.b16 %v9670, %v9668
    %v9861 = vpack.c.b16 %v9671, %v9669
    %v9862 = vpack.c.b16 %v9674, %v9672
    %v9863 = vpack.c.b16 %v9675, %v9673
    %v9864 = vpack.c.b16 %v9678, %v9676
    %v9865 = vpack.c.b16 %v9679, %v9677
    %v9866 = vpack.c.b16 %v9682, %v9680
    %v9867 = vpack.c.b16 %v9683, %v9681
    %v9868 = vpack.c.b16 %v9686, %v9684
    %v9869 = vpack.c.b16 %v9687, %v9685
    %v9870 = vpack.c.b16 %v9690, %v9688
    %v9871 = vpack.c.b16 %v9691, %v9689
    %v9872 = vpack.c.b16 %v9694, %v9692
    %v9873 = vpack.c.b16 %v9695, %v9693
    %v9874 = vpack.c.b16 %v9698, %v9696
    %v9875 = vpack.c.b16 %v9699, %v9697
    %v9876 = vpack.c.b16 %v9702, %v9700
    %v9877 = vpack.c.b16 %v9703, %v9701
    %v9878 = vpack.c.b16 %v9706, %v9704
    %v9879 = vpack.c.b16 %v9707, %v9705
    %v9880 = vpack.c.b16 %v9710, %v9708
    %v9881 = vpack.c.b16 %v9711, %v9709
    %v9882 = vpack.c.b16 %v9714, %v9712
    %v9883 = vpack.c.b16 %v9715, %v9713
    %v9884 = vpack.c.b16 %v9718, %v9716
    %v9885 = vpack.c.b16 %v9719, %v9717
    %v9886 = vpack.c.b16 %v9722, %v9720
    %v9887 = vpack.c.b16 %v9723, %v9721
    %v9888 = vpack.c.b16 %v9726, %v9724
    %v9889 = vpack.c.b16 %v9727, %v9725
    %v9890 = vpack.c.b16 %v9730, %v9728
    %v9891 = vpack.c.b16 %v9731, %v9729
    %v9892 = vpack.c.b16 %v9734, %v9732
    %v9893 = vpack.c.b16 %v9735, %v9733
    %v9894 = vpack.c.b16 %v9738, %v9736
    %v9895 = vpack.c.b16 %v9739, %v9737
    %v9896 = vpack.c.b16 %v9742, %v9740
    %v9897 = vpack.c.b16 %v9743, %v9741
    %v9898 = vpack.c.b16 %v9746, %v9744
    %v9899 = vpack.c.b16 %v9747, %v9745
    %v9900 = vpack.c.b16 %v9750, %v9748
    %v9901 = vpack.c.b16 %v9751, %v9749
    %v9902 = vpack.c.b16 %v9754, %v9752
    %v9903 = vpack.c.b16 %v9755, %v9753
    %v9904 = vpack.c.b16 %v9758, %v9756
    %v9905 = vpack.c.b16 %v9759, %v9757
    %v9906 = vpack.c.b16 %v9762, %v9760
    %v9907 = vpack.c.b16 %v9763, %v9761
    %v9908 = vpack.c.b16 %v9766, %v9764
    %v9909 = vpack.c.b16 %v9767, %v9765
    %v9910 = vpack.c.b16 %v9770, %v9768
    %v9911 = vpack.c.b16 %v9771, %v9769
    %v9912 = vpack.c.b16 %v9774, %v9772
    %v9913 = vpack.c.b16 %v9775, %v9773
    %v9914 = vpack.c.b16 %v9778, %v9776
    %v9915 = vpack.c.b16 %v9779, %v9777
    %v9916 = vpack.c.b16 %v9782, %v9780
    %v9917 = vpack.c.b16 %v9783, %v9781
    %v9918 = vpack.c.b16 %v9786, %v9784
    %v9919 = vpack.c.b16 %v9787, %v9785
    %v9920 = vpack.c.b16 %v9790, %v9788
    %v9921 = vpack.c.b16 %v9791, %v9789
    %v9922 = vpack.c.b16 %v9794, %v9792
    %v9923 = vpack.c.b16 %v9795, %v9793
    %10052 = vmatprep.subr.bf16.mxu0 %v9811
    %10053 = vmatpush1.bf16.msra.mxu0 %v9810
    %10054 = vmatprep.subr.bf16.mxu0 %v9809
    %10055 = vmatpush1.bf16.msra.mxu0 %v9808
    %10056 = vmatprep.subr.bf16.mxu0 %v9807
    %10057 = vmatpush1.bf16.msra.mxu0 %v9806
    %10058 = vmatprep.subr.bf16.mxu0 %v9805
    %10059 = vmatpush1.bf16.msra.mxu0 %v9804
    %10060 = vmatprep.subr.bf16.mxu0 %v9803
    %10061 = vmatpush1.bf16.msra.mxu0 %v9802
    %10062 = vmatprep.subr.bf16.mxu0 %v9801
    %10063 = vmatpush1.bf16.msra.mxu0 %v9800
    %10064 = vmatprep.subr.bf16.mxu0 %v9799
    %10065 = vmatpush1.bf16.msra.mxu0 %v9798
    %10066 = vmatprep.subr.bf16.mxu0 %v9797
    %10067 = vmatpush1.bf16.msra.mxu0 %v9796
    %10068 = vmatprep.subr.bf16.mxu0 %v9827
    %10069 = vmatpush2.bf16.msra.mxu0 %v9826
    %10070 = vmatprep.subr.bf16.mxu0 %v9825
    %10071 = vmatpush2.bf16.msra.mxu0 %v9824
    %10072 = vmatprep.subr.bf16.mxu0 %v9823
    %10073 = vmatpush2.bf16.msra.mxu0 %v9822
    %10074 = vmatprep.subr.bf16.mxu0 %v9821
    %10075 = vmatpush2.bf16.msra.mxu0 %v9820
    %10076 = vmatprep.subr.bf16.mxu0 %v9819
    %10077 = vmatpush2.bf16.msra.mxu0 %v9818
    %10078 = vmatprep.subr.bf16.mxu0 %v9817
    %10079 = vmatpush2.bf16.msra.mxu0 %v9816
    %10080 = vmatprep.subr.bf16.mxu0 %v9815
    %10081 = vmatpush2.bf16.msra.mxu0 %v9814
    %10082 = vmatprep.subr.bf16.mxu0 %v9813
    %10083 = vmatpush2.bf16.msra.mxu0 %v9812
    %10084 = vmatprep.mubr.bf16.mxu0 %v9277
    %10085 = vmatmul.mubr.bf16.gmra.mxu0 %v9276
    %v10086 = vpop.f32.mrf.mxu0
    %v10087 = vadd.f32 0.0, %v10086
    %v10088 = vpop.f32.mrf.mxu0
    %v10089 = vadd.f32 0.0, %v10088
    %v10090 = vpop.f32.mrf.mxu0
    %v10091 = vpop.f32.mrf.mxu0
    %10092 = vdwg.mxu0
    %10093 = vmatprep.subr.bf16.mxu0 %v9843
    %10094 = vmatpush1.bf16.msra.mxu0 %v9842
    %10095 = vmatprep.subr.bf16.mxu0 %v9841
    %10096 = vmatpush1.bf16.msra.mxu0 %v9840
    %10097 = vmatprep.subr.bf16.mxu0 %v9839
    %10098 = vmatpush1.bf16.msra.mxu0 %v9838
    %10099 = vmatprep.subr.bf16.mxu0 %v9837
    %10100 = vmatpush1.bf16.msra.mxu0 %v9836
    %10101 = vmatprep.subr.bf16.mxu0 %v9835
    %10102 = vmatpush1.bf16.msra.mxu0 %v9834
    %10103 = vmatprep.subr.bf16.mxu0 %v9833
    %10104 = vmatpush1.bf16.msra.mxu0 %v9832
    %10105 = vmatprep.subr.bf16.mxu0 %v9831
    %10106 = vmatpush1.bf16.msra.mxu0 %v9830
    %10107 = vmatprep.subr.bf16.mxu0 %v9829
    %10108 = vmatpush1.bf16.msra.mxu0 %v9828
    %10109 = vmatprep.subr.bf16.mxu0 %v9859
    %10110 = vmatpush2.bf16.msra.mxu0 %v9858
    %10111 = vmatprep.subr.bf16.mxu0 %v9857
    %10112 = vmatpush2.bf16.msra.mxu0 %v9856
    %10113 = vmatprep.subr.bf16.mxu0 %v9855
    %10114 = vmatpush2.bf16.msra.mxu0 %v9854
    %10115 = vmatprep.subr.bf16.mxu0 %v9853
    %10116 = vmatpush2.bf16.msra.mxu0 %v9852
    %10117 = vmatprep.subr.bf16.mxu0 %v9851
    %10118 = vmatpush2.bf16.msra.mxu0 %v9850
    %10119 = vmatprep.subr.bf16.mxu0 %v9849
    %10120 = vmatpush2.bf16.msra.mxu0 %v9848
    %10121 = vmatprep.subr.bf16.mxu0 %v9847
    %10122 = vmatpush2.bf16.msra.mxu0 %v9846
    %10123 = vmatprep.subr.bf16.mxu0 %v9845
    %10124 = vmatpush2.bf16.msra.mxu0 %v9844
    %10125 = vmatprep.mubr.bf16.mxu0 %v9279
    %10126 = vmatmul.mubr.bf16.gmra.mxu0 %v9278
    %v10127 = vpop.f32.mrf.mxu0
    %v10128 = vadd.f32 %v10087, %v10127
    %v10129 = vpop.f32.mrf.mxu0
    %v10130 = vadd.f32 %v10089, %v10129
    %v10131 = vpop.f32.mrf.mxu0
    %v10132 = vpop.f32.mrf.mxu0
    %10133 = vdwg.mxu0
    %10134 = vmatprep.subr.bf16.mxu0 %v9875
    %10135 = vmatpush1.bf16.msra.mxu0 %v9874
    %10136 = vmatprep.subr.bf16.mxu0 %v9873
    %10137 = vmatpush1.bf16.msra.mxu0 %v9872
    %10138 = vmatprep.subr.bf16.mxu0 %v9871
    %10139 = vmatpush1.bf16.msra.mxu0 %v9870
    %10140 = vmatprep.subr.bf16.mxu0 %v9869
    %10141 = vmatpush1.bf16.msra.mxu0 %v9868
    %10142 = vmatprep.subr.bf16.mxu0 %v9867
    %10143 = vmatpush1.bf16.msra.mxu0 %v9866
    %10144 = vmatprep.subr.bf16.mxu0 %v9865
    %10145 = vmatpush1.bf16.msra.mxu0 %v9864
    %10146 = vmatprep.subr.bf16.mxu0 %v9863
    %10147 = vmatpush1.bf16.msra.mxu0 %v9862
    %10148 = vmatprep.subr.bf16.mxu0 %v9861
    %10149 = vmatpush1.bf16.msra.mxu0 %v9860
    %10150 = vmatprep.subr.bf16.mxu0 %v9891
    %10151 = vmatpush2.bf16.msra.mxu0 %v9890
    %10152 = vmatprep.subr.bf16.mxu0 %v9889
    %10153 = vmatpush2.bf16.msra.mxu0 %v9888
    %10154 = vmatprep.subr.bf16.mxu0 %v9887
    %10155 = vmatpush2.bf16.msra.mxu0 %v9886
    %10156 = vmatprep.subr.bf16.mxu0 %v9885
    %10157 = vmatpush2.bf16.msra.mxu0 %v9884
    %10158 = vmatprep.subr.bf16.mxu0 %v9883
    %10159 = vmatpush2.bf16.msra.mxu0 %v9882
    %10160 = vmatprep.subr.bf16.mxu0 %v9881
    %10161 = vmatpush2.bf16.msra.mxu0 %v9880
    %10162 = vmatprep.subr.bf16.mxu0 %v9879
    %10163 = vmatpush2.bf16.msra.mxu0 %v9878
    %10164 = vmatprep.subr.bf16.mxu0 %v9877
    %10165 = vmatpush2.bf16.msra.mxu0 %v9876
    %10166 = vmatprep.mubr.bf16.mxu0 %v9281
    %10167 = vmatmul.mubr.bf16.gmra.mxu0 %v9280
    %v10168 = vpop.f32.mrf.mxu0
    %v10169 = vadd.f32 %v10128, %v10168
    %v10170 = vpop.f32.mrf.mxu0
    %v10171 = vadd.f32 %v10130, %v10170
    %v10172 = vpop.f32.mrf.mxu0
    %v10173 = vpop.f32.mrf.mxu0
    %10174 = vdwg.mxu0
    %10175 = vmatprep.subr.bf16.mxu0 %v9907
    %10176 = vmatpush1.bf16.msra.mxu0 %v9906
    %10177 = vmatprep.subr.bf16.mxu0 %v9905
    %10178 = vmatpush1.bf16.msra.mxu0 %v9904
    %10179 = vmatprep.subr.bf16.mxu0 %v9903
    %10180 = vmatpush1.bf16.msra.mxu0 %v9902
    %10181 = vmatprep.subr.bf16.mxu0 %v9901
    %10182 = vmatpush1.bf16.msra.mxu0 %v9900
    %10183 = vmatprep.subr.bf16.mxu0 %v9899
    %10184 = vmatpush1.bf16.msra.mxu0 %v9898
    %10185 = vmatprep.subr.bf16.mxu0 %v9897
    %10186 = vmatpush1.bf16.msra.mxu0 %v9896
    %10187 = vmatprep.subr.bf16.mxu0 %v9895
    %10188 = vmatpush1.bf16.msra.mxu0 %v9894
    %10189 = vmatprep.subr.bf16.mxu0 %v9893
    %10190 = vmatpush1.bf16.msra.mxu0 %v9892
    %10191 = vmatprep.subr.bf16.mxu0 %v9923
    %10192 = vmatpush2.bf16.msra.mxu0 %v9922
    %10193 = vmatprep.subr.bf16.mxu0 %v9921
    %10194 = vmatpush2.bf16.msra.mxu0 %v9920
    %10195 = vmatprep.subr.bf16.mxu0 %v9919
    %10196 = vmatpush2.bf16.msra.mxu0 %v9918
    %10197 = vmatprep.subr.bf16.mxu0 %v9917
    %10198 = vmatpush2.bf16.msra.mxu0 %v9916
    %10199 = vmatprep.subr.bf16.mxu0 %v9915
    %10200 = vmatpush2.bf16.msra.mxu0 %v9914
    %10201 = vmatprep.subr.bf16.mxu0 %v9913
    %10202 = vmatpush2.bf16.msra.mxu0 %v9912
    %10203 = vmatprep.subr.bf16.mxu0 %v9911
    %10204 = vmatpush2.bf16.msra.mxu0 %v9910
    %10205 = vmatprep.subr.bf16.mxu0 %v9909
    %10206 = vmatpush2.bf16.msra.mxu0 %v9908
    %10207 = vmatprep.mubr.bf16.mxu0 %v9283
    %10208 = vmatmul.mubr.bf16.gmra.mxu0 %v9282
    %v10209 = vpop.f32.mrf.mxu0
    %v10210 = vadd.f32 %v10169, %v10209
    %v10211 = vpop.f32.mrf.mxu0
    %v10212 = vadd.f32 %v10171, %v10211
    %v10213 = vpop.f32.mrf.mxu0
    %v10214 = vpop.f32.mrf.mxu0
    %10215 = vdwg.mxu0
    %v10216 = vld [vmem:[%s8] sm:$0xff]
    %v10217 = vld [vmem:[%s8 + $0x8] sm:$0xff]
    %v10218 = vld [vmem:[%s8 + $0x10] sm:$0xff]
    %v10219 = vld [vmem:[%s8 + $0x18] sm:$0xff]
    %v10220 = vld [vmem:[%s8 + $0x20] sm:$0xff]
    %v10221 = vld [vmem:[%s8 + $0x28] sm:$0xff]
    %v10222 = vld [vmem:[%s8 + $0x30] sm:$0xff]
    %v10223 = vld [vmem:[%s8 + $0x38] sm:$0xff]
    %v10224 = vld [vmem:[%s8 + $0x40] sm:$0xff]
    %v10225 = vld [vmem:[%s8 + $0x48] sm:$0xff]
    %v10226 = vld [vmem:[%s8 + $0x50] sm:$0xff]
    %v10227 = vld [vmem:[%s8 + $0x58] sm:$0xff]
    %v10228 = vld [vmem:[%s8 + $0x60] sm:$0xff]
    %v10229 = vld [vmem:[%s8 + $0x68] sm:$0xff]
    %v10230 = vld [vmem:[%s8 + $0x70] sm:$0xff]
    %v10231 = vld [vmem:[%s8 + $0x78] sm:$0xff]
    %v10232 = vld [vmem:[%s8 + $0x80] sm:$0xff]
    %v10233 = vld [vmem:[%s8 + $0x88] sm:$0xff]
    %v10234 = vld [vmem:[%s8 + $0x90] sm:$0xff]
    %v10235 = vld [vmem:[%s8 + $0x98] sm:$0xff]
    %v10236 = vld [vmem:[%s8 + $0xa0] sm:$0xff]
    %v10237 = vld [vmem:[%s8 + $0xa8] sm:$0xff]
    %v10238 = vld [vmem:[%s8 + $0xb0] sm:$0xff]
    %v10239 = vld [vmem:[%s8 + $0xb8] sm:$0xff]
    %v10240 = vld [vmem:[%s8 + $0xc0] sm:$0xff]
    %v10241 = vld [vmem:[%s8 + $0xc8] sm:$0xff]
    %v10242 = vld [vmem:[%s8 + $0xd0] sm:$0xff]
    %v10243 = vld [vmem:[%s8 + $0xd8] sm:$0xff]
    %v10244 = vld [vmem:[%s8 + $0xe0] sm:$0xff]
    %v10245 = vld [vmem:[%s8 + $0xe8] sm:$0xff]
    %v10246 = vld [vmem:[%s8 + $0xf0] sm:$0xff]
    %v10247 = vld [vmem:[%s8 + $0xf8] sm:$0xff]
    %10248 = vmatprep.subr.mxu0 0.0
    %10249 = vmatpush1.msra.mxu0 %v10231
    %10250 = vmatprep.subr.mxu0 0.0
    %10251 = vmatpush1.msra.mxu0 %v10230
    %10252 = vmatprep.subr.mxu0 0.0
    %10253 = vmatpush1.msra.mxu0 %v10229
    %10254 = vmatprep.subr.mxu0 0.0
    %10255 = vmatpush1.msra.mxu0 %v10228
    %10256 = vmatprep.subr.mxu0 0.0
    %10257 = vmatpush1.msra.mxu0 %v10227
    %10258 = vmatprep.subr.mxu0 0.0
    %10259 = vmatpush1.msra.mxu0 %v10226
    %10260 = vmatprep.subr.mxu0 0.0
    %10261 = vmatpush1.msra.mxu0 %v10225
    %10262 = vmatprep.subr.mxu0 0.0
    %10263 = vmatpush1.msra.mxu0 %v10224
    %10264 = vmatprep.subr.mxu0 0.0
    %10265 = vmatpush1.msra.mxu0 %v10223
    %10266 = vmatprep.subr.mxu0 0.0
    %10267 = vmatpush1.msra.mxu0 %v10222
    %10268 = vmatprep.subr.mxu0 0.0
    %10269 = vmatpush1.msra.mxu0 %v10221
    %10270 = vmatprep.subr.mxu0 0.0
    %10271 = vmatpush1.msra.mxu0 %v10220
    %10272 = vmatprep.subr.mxu0 0.0
    %10273 = vmatpush1.msra.mxu0 %v10219
    %10274 = vmatprep.subr.mxu0 0.0
    %10275 = vmatpush1.msra.mxu0 %v10218
    %10276 = vmatprep.subr.mxu0 0.0
    %10277 = vmatpush1.msra.mxu0 %v10217
    %10278 = vmatprep.subr.mxu0 0.0
    %10279 = vmatpush1.msra.mxu0 %v10216
    %10280 = vmatprep.subr.mxu0 0.0
    %10281 = vmatpush2.msra.mxu0 %v10247
    %10282 = vmatprep.subr.mxu0 0.0
    %10283 = vmatpush2.msra.mxu0 %v10246
    %10284 = vmatprep.subr.mxu0 0.0
    %10285 = vmatpush2.msra.mxu0 %v10245
    %10286 = vmatprep.subr.mxu0 0.0
    %10287 = vmatpush2.msra.mxu0 %v10244
    %10288 = vmatprep.subr.mxu0 0.0
    %10289 = vmatpush2.msra.mxu0 %v10243
    %10290 = vmatprep.subr.mxu0 0.0
    %10291 = vmatpush2.msra.mxu0 %v10242
    %10292 = vmatprep.subr.mxu0 0.0
    %10293 = vmatpush2.msra.mxu0 %v10241
    %10294 = vmatprep.subr.mxu0 0.0
    %10295 = vmatpush2.msra.mxu0 %v10240
    %10296 = vmatprep.subr.mxu0 0.0
    %10297 = vmatpush2.msra.mxu0 %v10239
    %10298 = vmatprep.subr.mxu0 0.0
    %10299 = vmatpush2.msra.mxu0 %v10238
    %10300 = vmatprep.subr.mxu0 0.0
    %10301 = vmatpush2.msra.mxu0 %v10237
    %10302 = vmatprep.subr.mxu0 0.0
    %10303 = vmatpush2.msra.mxu0 %v10236
    %10304 = vmatprep.subr.mxu0 0.0
    %10305 = vmatpush2.msra.mxu0 %v10235
    %10306 = vmatprep.subr.mxu0 0.0
    %10307 = vmatpush2.msra.mxu0 %v10234
    %10308 = vmatprep.subr.mxu0 0.0
    %10309 = vmatpush2.msra.mxu0 %v10233
    %10310 = vmatprep.subr.mxu0 0.0
    %10311 = vmatpush2.msra.mxu0 %v10232
    %10312 = vmatprep.mubr.f32.mxu0 %v10212
    %10313 = vmatmul.mubr.f32.gmra.mxu0 %v10210
    %v10314 = vpop.f32.mrf.mxu0
    %v10315 = vadd.f32 0.0, %v10314
    %v10316 = vpop.f32.mrf.mxu0
    %10317 = vdwg.mxu0
    %v10318 = vsel %vm8282, %v10315, 0.0
    %v10319 = vrot.slane %v10318, 4
    %v10320 = vadd.f32 %v10318, %v10319
    %v10321 = vrot.slane %v10320, 2
    %v10322 = vadd.f32 %v10320, %v10321
    %v10323 = vrot.slane %v10322, 1
    %v10324 = vadd.f32 %v10322, %v10323
    %v10325 = vmul.f32 %v10210, %v10210
    %v10326 = vmul.f32 %v10212, %v10212
    %10327 = vmatprep.subr.mxu0 0.0
    %10328 = vmatpush1.msra.mxu0 %v10231
    %10329 = vmatprep.subr.mxu0 0.0
    %10330 = vmatpush1.msra.mxu0 %v10230
    %10331 = vmatprep.subr.mxu0 0.0
    %10332 = vmatpush1.msra.mxu0 %v10229
    %10333 = vmatprep.subr.mxu0 0.0
    %10334 = vmatpush1.msra.mxu0 %v10228
    %10335 = vmatprep.subr.mxu0 0.0
    %10336 = vmatpush1.msra.mxu0 %v10227
    %10337 = vmatprep.subr.mxu0 0.0
    %10338 = vmatpush1.msra.mxu0 %v10226
    %10339 = vmatprep.subr.mxu0 0.0
    %10340 = vmatpush1.msra.mxu0 %v10225
    %10341 = vmatprep.subr.mxu0 0.0
    %10342 = vmatpush1.msra.mxu0 %v10224
    %10343 = vmatprep.subr.mxu0 0.0
    %10344 = vmatpush1.msra.mxu0 %v10223
    %10345 = vmatprep.subr.mxu0 0.0
    %10346 = vmatpush1.msra.mxu0 %v10222
    %10347 = vmatprep.subr.mxu0 0.0
    %10348 = vmatpush1.msra.mxu0 %v10221
    %10349 = vmatprep.subr.mxu0 0.0
    %10350 = vmatpush1.msra.mxu0 %v10220
    %10351 = vmatprep.subr.mxu0 0.0
    %10352 = vmatpush1.msra.mxu0 %v10219
    %10353 = vmatprep.subr.mxu0 0.0
    %10354 = vmatpush1.msra.mxu0 %v10218
    %10355 = vmatprep.subr.mxu0 0.0
    %10356 = vmatpush1.msra.mxu0 %v10217
    %10357 = vmatprep.subr.mxu0 0.0
    %10358 = vmatpush1.msra.mxu0 %v10216
    %10359 = vmatprep.subr.mxu0 0.0
    %10360 = vmatpush2.msra.mxu0 %v10247
    %10361 = vmatprep.subr.mxu0 0.0
    %10362 = vmatpush2.msra.mxu0 %v10246
    %10363 = vmatprep.subr.mxu0 0.0
    %10364 = vmatpush2.msra.mxu0 %v10245
    %10365 = vmatprep.subr.mxu0 0.0
    %10366 = vmatpush2.msra.mxu0 %v10244
    %10367 = vmatprep.subr.mxu0 0.0
    %10368 = vmatpush2.msra.mxu0 %v10243
    %10369 = vmatprep.subr.mxu0 0.0
    %10370 = vmatpush2.msra.mxu0 %v10242
    %10371 = vmatprep.subr.mxu0 0.0
    %10372 = vmatpush2.msra.mxu0 %v10241
    %10373 = vmatprep.subr.mxu0 0.0
    %10374 = vmatpush2.msra.mxu0 %v10240
    %10375 = vmatprep.subr.mxu0 0.0
    %10376 = vmatpush2.msra.mxu0 %v10239
    %10377 = vmatprep.subr.mxu0 0.0
    %10378 = vmatpush2.msra.mxu0 %v10238
    %10379 = vmatprep.subr.mxu0 0.0
    %10380 = vmatpush2.msra.mxu0 %v10237
    %10381 = vmatprep.subr.mxu0 0.0
    %10382 = vmatpush2.msra.mxu0 %v10236
    %10383 = vmatprep.subr.mxu0 0.0
    %10384 = vmatpush2.msra.mxu0 %v10235
    %10385 = vmatprep.subr.mxu0 0.0
    %10386 = vmatpush2.msra.mxu0 %v10234
    %10387 = vmatprep.subr.mxu0 0.0
    %10388 = vmatpush2.msra.mxu0 %v10233
    %10389 = vmatprep.subr.mxu0 0.0
    %10390 = vmatpush2.msra.mxu0 %v10232
    %10391 = vmatprep.mubr.f32.mxu0 %v10326
    %10392 = vmatmul.mubr.f32.gmra.mxu0 %v10325
    %v10393 = vpop.f32.mrf.mxu0
    %v10394 = vadd.f32 0.0, %v10393
    %v10395 = vpop.f32.mrf.mxu0
    %10396 = vdwg.mxu0
    %v10397 = vsel %vm8282, %v10394, 0.0
    %v10398 = vrot.slane %v10397, 4
    %v10399 = vadd.f32 %v10397, %v10398
    %v10400 = vrot.slane %v10399, 2
    %v10401 = vadd.f32 %v10399, %v10400
    %v10402 = vrot.slane %v10401, 1
    %v10403 = vadd.f32 %v10401, %v10402
    %v10404 = vmul.f32 %v10324, 0.03125
    %v10405 = vmul.f32 %v10403, 0.03125
    %v10406 = vmul.f32 %v10404, %v10404
    %v10407 = vsub.f32 %v10405, %v10406
    %v10408 = vmax.f32 %v10407, 0.0
    %v10409 = vld [vmem:[#allocation13] sm:$0x1]
    %v10410 = vadd.f32 %v10408, 1e-05
    %v10411 = vrsqrt.pop %v10410
    %v10412 = vmul.f32 %v10409, %v10411
    %v10413 = vld [vmem:[#allocation15] sm:$0x1]
    %v10414 = vmul.f32 %v10404, %v10412
    %v10415 = vsub.f32 %v10413, %v10414
    %v10416 = vld [vmem:[#allocation12] sm:$0xff]
    %v10417 = vld [vmem:[#allocation12 + $0x8] sm:$0xff]
    %v10418 = vld [vmem:[#allocation12 + $0x10] sm:$0xff]
    %v10419 = vld [vmem:[#allocation12 + $0x18] sm:$0xff]
    %v10421 = vsel %vm8613, %v10412, 0
    %10423 = vmatprep.subr.mxu0 0.0
    %10424 = vmatpush1.msra.mxu0 0.0
    %10425 = vmatprep.subr.mxu0 0.0
    %10426 = vmatpush1.msra.mxu0 0.0
    %10427 = vmatprep.subr.mxu0 0.0
    %10428 = vmatpush1.msra.mxu0 0.0
    %10429 = vmatprep.subr.mxu0 0.0
    %10430 = vmatpush1.msra.mxu0 0.0
    %10431 = vmatprep.subr.mxu0 0.0
    %10432 = vmatpush1.msra.mxu0 0.0
    %10433 = vmatprep.subr.mxu0 0.0
    %10434 = vmatpush1.msra.mxu0 0.0
    %10435 = vmatprep.subr.mxu0 0.0
    %10436 = vmatpush1.msra.mxu0 0.0
    %10437 = vmatprep.subr.mxu0 0.0
    %10438 = vmatpush1.msra.mxu0 0.0
    %10439 = vmatprep.subr.mxu0 0.0
    %10440 = vmatpush1.msra.mxu0 0.0
    %10441 = vmatprep.subr.mxu0 0.0
    %10442 = vmatpush1.msra.mxu0 0.0
    %10443 = vmatprep.subr.mxu0 0.0
    %10444 = vmatpush1.msra.mxu0 0.0
    %10445 = vmatprep.subr.mxu0 0.0
    %10446 = vmatpush1.msra.mxu0 0.0
    %10447 = vmatprep.subr.mxu0 0.0
    %10448 = vmatpush1.msra.mxu0 0.0
    %10449 = vmatprep.subr.mxu0 0.0
    %10450 = vmatpush1.msra.mxu0 0.0
    %10451 = vmatprep.subr.mxu0 %v10419
    %10452 = vmatpush1.msra.mxu0 %v10418
    %10453 = vmatprep.subr.mxu0 %v10417
    %10454 = vmatpush1.msra.mxu0 %v10416
    %10455 = vmatprep.subr.mxu0 0.0
    %10456 = vmatpush2.msra.mxu0 0.0
    %10457 = vmatprep.subr.mxu0 0.0
    %10458 = vmatpush2.msra.mxu0 0.0
    %10459 = vmatprep.subr.mxu0 0.0
    %10460 = vmatpush2.msra.mxu0 0.0
    %10461 = vmatprep.subr.mxu0 0.0
    %10462 = vmatpush2.msra.mxu0 0.0
    %10463 = vmatprep.subr.mxu0 0.0
    %10464 = vmatpush2.msra.mxu0 0.0
    %10465 = vmatprep.subr.mxu0 0.0
    %10466 = vmatpush2.msra.mxu0 0.0
    %10467 = vmatprep.subr.mxu0 0.0
    %10468 = vmatpush2.msra.mxu0 0.0
    %10469 = vmatprep.subr.mxu0 0.0
    %10470 = vmatpush2.msra.mxu0 0.0
    %10471 = vmatprep.subr.mxu0 0.0
    %10472 = vmatpush2.msra.mxu0 0.0
    %10473 = vmatprep.subr.mxu0 0.0
    %10474 = vmatpush2.msra.mxu0 0.0
    %10475 = vmatprep.subr.mxu0 0.0
    %10476 = vmatpush2.msra.mxu0 0.0
    %10477 = vmatprep.subr.mxu0 0.0
    %10478 = vmatpush2.msra.mxu0 0.0
    %10479 = vmatprep.subr.mxu0 0.0
    %10480 = vmatpush2.msra.mxu0 0.0
    %10481 = vmatprep.subr.mxu0 0.0
    %10482 = vmatpush2.msra.mxu0 0.0
    %10483 = vmatprep.subr.mxu0 0.0
    %10484 = vmatpush2.msra.mxu0 0.0
    %10485 = vmatprep.subr.mxu0 0.0
    %10486 = vmatpush2.msra.mxu0 0.0
    %10487 = vmatprep.mubr.f32.mxu0 0.0
    %10488 = vmatmul.mubr.f32.gmra.mxu0 %v10421
    %v10489 = vpop.f32.mrf.mxu0
    %v10490 = vadd.f32 0.0, %v10489
    %v10491 = vpop.f32.mrf.mxu0
    %v10492 = vadd.f32 0.0, %v10491
    %10493 = vdwg.mxu0
    %v10495 = vsel %vm8613, %v10415, 0
    %10497 = vmatprep.subr.mxu0 0.0
    %10498 = vmatpush1.msra.mxu0 0.0
    %10499 = vmatprep.subr.mxu0 0.0
    %10500 = vmatpush1.msra.mxu0 0.0
    %10501 = vmatprep.subr.mxu0 0.0
    %10502 = vmatpush1.msra.mxu0 0.0
    %10503 = vmatprep.subr.mxu0 0.0
    %10504 = vmatpush1.msra.mxu0 0.0
    %10505 = vmatprep.subr.mxu0 0.0
    %10506 = vmatpush1.msra.mxu0 0.0
    %10507 = vmatprep.subr.mxu0 0.0
    %10508 = vmatpush1.msra.mxu0 0.0
    %10509 = vmatprep.subr.mxu0 0.0
    %10510 = vmatpush1.msra.mxu0 0.0
    %10511 = vmatprep.subr.mxu0 0.0
    %10512 = vmatpush1.msra.mxu0 0.0
    %10513 = vmatprep.subr.mxu0 0.0
    %10514 = vmatpush1.msra.mxu0 0.0
    %10515 = vmatprep.subr.mxu0 0.0
    %10516 = vmatpush1.msra.mxu0 0.0
    %10517 = vmatprep.subr.mxu0 0.0
    %10518 = vmatpush1.msra.mxu0 0.0
    %10519 = vmatprep.subr.mxu0 0.0
    %10520 = vmatpush1.msra.mxu0 0.0
    %10521 = vmatprep.subr.mxu0 0.0
    %10522 = vmatpush1.msra.mxu0 0.0
    %10523 = vmatprep.subr.mxu0 0.0
    %10524 = vmatpush1.msra.mxu0 0.0
    %10525 = vmatprep.subr.mxu0 %v10419
    %10526 = vmatpush1.msra.mxu0 %v10418
    %10527 = vmatprep.subr.mxu0 %v10417
    %10528 = vmatpush1.msra.mxu0 %v10416
    %10529 = vmatprep.subr.mxu0 0.0
    %10530 = vmatpush2.msra.mxu0 0.0
    %10531 = vmatprep.subr.mxu0 0.0
    %10532 = vmatpush2.msra.mxu0 0.0
    %10533 = vmatprep.subr.mxu0 0.0
    %10534 = vmatpush2.msra.mxu0 0.0
    %10535 = vmatprep.subr.mxu0 0.0
    %10536 = vmatpush2.msra.mxu0 0.0
    %10537 = vmatprep.subr.mxu0 0.0
    %10538 = vmatpush2.msra.mxu0 0.0
    %10539 = vmatprep.subr.mxu0 0.0
    %10540 = vmatpush2.msra.mxu0 0.0
    %10541 = vmatprep.subr.mxu0 0.0
    %10542 = vmatpush2.msra.mxu0 0.0
    %10543 = vmatprep.subr.mxu0 0.0
    %10544 = vmatpush2.msra.mxu0 0.0
    %10545 = vmatprep.subr.mxu0 0.0
    %10546 = vmatpush2.msra.mxu0 0.0
    %10547 = vmatprep.subr.mxu0 0.0
    %10548 = vmatpush2.msra.mxu0 0.0
    %10549 = vmatprep.subr.mxu0 0.0
    %10550 = vmatpush2.msra.mxu0 0.0
    %10551 = vmatprep.subr.mxu0 0.0
    %10552 = vmatpush2.msra.mxu0 0.0
    %10553 = vmatprep.subr.mxu0 0.0
    %10554 = vmatpush2.msra.mxu0 0.0
    %10555 = vmatprep.subr.mxu0 0.0
    %10556 = vmatpush2.msra.mxu0 0.0
    %10557 = vmatprep.subr.mxu0 0.0
    %10558 = vmatpush2.msra.mxu0 0.0
    %10559 = vmatprep.subr.mxu0 0.0
    %10560 = vmatpush2.msra.mxu0 0.0
    %10561 = vmatprep.mubr.f32.mxu0 0.0
    %10562 = vmatmul.mubr.f32.gmra.mxu0 %v10495
    %v10563 = vpop.f32.mrf.mxu0
    %v10564 = vadd.f32 0.0, %v10563
    %v10565 = vpop.f32.mrf.mxu0
    %v10566 = vadd.f32 0.0, %v10565
    %10567 = vdwg.mxu0
    %v10568 = vlaneseq
    %v10569 = vshrl.u32 %v10568, 7
    %v10570 = vsub.s32 0, %v10569
    %v10571 = vrot.slane %v10490, %v10570
    %v10572 = vlaneseq
    %v10573 = vshrl.u32 %v10572, 7
    %v10574 = vsub.s32 0, %v10573
    %v10575 = vrot.slane %v10492, %v10574
    %v10576 = vmul.f32 %v10210, %v10571
    %v10577 = vmul.f32 %v10212, %v10575
    %v10578 = vlaneseq
    %v10579 = vshrl.u32 %v10578, 7
    %v10580 = vsub.s32 0, %v10579
    %v10581 = vrot.slane %v10564, %v10580
    %v10582 = vlaneseq
    %v10583 = vshrl.u32 %v10582, 7
    %v10584 = vsub.s32 0, %v10583
    %v10585 = vrot.slane %v10566, %v10584
    %v10586 = vadd.f32 %v10576, %v10581
    %v10587 = vadd.f32 %v10577, %v10585
    %v10588 = vmax.f32 %v10586, 0.0
    %v10589 = vmax.f32 %v10587, 0.0
    %v10590 = vpack.c.bf16 %v10588, %v10588
    %v10591 = vpack.c.bf16 %v10589, %v10589
    %v10592 = vld [vmem:[%s12] sm:$0xf]
    %v10593 = vld [vmem:[%s12 + $0x4] sm:$0xf]
    %v10594 = vld [vmem:[%s12 + $0x8] sm:$0xf]
    %v10595 = vld [vmem:[%s12 + $0xc] sm:$0xf]
    %v10596 = vld [vmem:[%s12 + $0x10] sm:$0xf]
    %v10597 = vld [vmem:[%s12 + $0x14] sm:$0xf]
    %v10598 = vld [vmem:[%s12 + $0x18] sm:$0xf]
    %v10599 = vld [vmem:[%s12 + $0x1c] sm:$0xf]
    %v10600 = vld [vmem:[%s12 + $0x20] sm:$0xf]
    %v10601 = vld [vmem:[%s12 + $0x24] sm:$0xf]
    %v10602 = vld [vmem:[%s12 + $0x28] sm:$0xf]
    %v10603 = vld [vmem:[%s12 + $0x2c] sm:$0xf]
    %v10604 = vld [vmem:[%s12 + $0x30] sm:$0xf]
    %v10605 = vld [vmem:[%s12 + $0x34] sm:$0xf]
    %v10606 = vld [vmem:[%s12 + $0x38] sm:$0xf]
    %v10607 = vld [vmem:[%s12 + $0x3c] sm:$0xf]
    %v10608 = vld [vmem:[%s12 + $0x40] sm:$0xf]
    %v10609 = vld [vmem:[%s12 + $0x44] sm:$0xf]
    %v10610 = vld [vmem:[%s12 + $0x48] sm:$0xf]
    %v10611 = vld [vmem:[%s12 + $0x4c] sm:$0xf]
    %v10612 = vld [vmem:[%s12 + $0x50] sm:$0xf]
    %v10613 = vld [vmem:[%s12 + $0x54] sm:$0xf]
    %v10614 = vld [vmem:[%s12 + $0x58] sm:$0xf]
    %v10615 = vld [vmem:[%s12 + $0x5c] sm:$0xf]
    %v10616 = vld [vmem:[%s12 + $0x60] sm:$0xf]
    %v10617 = vld [vmem:[%s12 + $0x64] sm:$0xf]
    %v10618 = vld [vmem:[%s12 + $0x68] sm:$0xf]
    %v10619 = vld [vmem:[%s12 + $0x6c] sm:$0xf]
    %v10620 = vld [vmem:[%s12 + $0x70] sm:$0xf]
    %v10621 = vld [vmem:[%s12 + $0x74] sm:$0xf]
    %v10622 = vld [vmem:[%s12 + $0x78] sm:$0xf]
    %v10623 = vld [vmem:[%s12 + $0x7c] sm:$0xf]
    %v10656 = vunpack.c.l.b16 %v10592
    %v10657 = vunpack.c.l.b16 %v10593
    %v10658 = vunpack.c.l.b16 %v10594
    %v10659 = vunpack.c.l.b16 %v10595
    %v10660 = vunpack.c.l.b16 %v10596
    %v10661 = vunpack.c.l.b16 %v10597
    %v10662 = vunpack.c.l.b16 %v10598
    %v10663 = vunpack.c.l.b16 %v10599
    %v10664 = vunpack.c.l.b16 %v10600
    %v10665 = vunpack.c.l.b16 %v10601
    %v10666 = vunpack.c.l.b16 %v10602
    %v10667 = vunpack.c.l.b16 %v10603
    %v10668 = vunpack.c.l.b16 %v10604
    %v10669 = vunpack.c.l.b16 %v10605
    %v10670 = vunpack.c.l.b16 %v10606
    %v10671 = vunpack.c.l.b16 %v10607
    %v10672 = vunpack.c.l.b16 %v10608
    %v10673 = vunpack.c.l.b16 %v10609
    %v10674 = vunpack.c.l.b16 %v10610
    %v10675 = vunpack.c.l.b16 %v10611
    %v10676 = vunpack.c.l.b16 %v10612
    %v10677 = vunpack.c.l.b16 %v10613
    %v10678 = vunpack.c.l.b16 %v10614
    %v10679 = vunpack.c.l.b16 %v10615
    %v10680 = vunpack.c.l.b16 %v10616
    %v10681 = vunpack.c.l.b16 %v10617
    %v10682 = vunpack.c.l.b16 %v10618
    %v10683 = vunpack.c.l.b16 %v10619
    %v10684 = vunpack.c.l.b16 %v10620
    %v10685 = vunpack.c.l.b16 %v10621
    %v10686 = vunpack.c.l.b16 %v10622
    %v10687 = vunpack.c.l.b16 %v10623
    %v10688 = vpack.c.b16 %v10657, %v10656
    %v10689 = vpack.c.b16 %v10659, %v10658
    %v10690 = vpack.c.b16 %v10661, %v10660
    %v10691 = vpack.c.b16 %v10663, %v10662
    %v10692 = vpack.c.b16 %v10665, %v10664
    %v10693 = vpack.c.b16 %v10667, %v10666
    %v10694 = vpack.c.b16 %v10669, %v10668
    %v10695 = vpack.c.b16 %v10671, %v10670
    %v10696 = vpack.c.b16 %v10673, %v10672
    %v10697 = vpack.c.b16 %v10675, %v10674
    %v10698 = vpack.c.b16 %v10677, %v10676
    %v10699 = vpack.c.b16 %v10679, %v10678
    %v10700 = vpack.c.b16 %v10681, %v10680
    %v10701 = vpack.c.b16 %v10683, %v10682
    %v10702 = vpack.c.b16 %v10685, %v10684
    %v10703 = vpack.c.b16 %v10687, %v10686
    %10720 = vmatprep.subr.bf16.mxu0 0
    %10721 = vmatpush1.bf16.msra.mxu0 %v10695
    %10722 = vmatprep.subr.bf16.mxu0 0
    %10723 = vmatpush1.bf16.msra.mxu0 %v10694
    %10724 = vmatprep.subr.bf16.mxu0 0
    %10725 = vmatpush1.bf16.msra.mxu0 %v10693
    %10726 = vmatprep.subr.bf16.mxu0 0
    %10727 = vmatpush1.bf16.msra.mxu0 %v10692
    %10728 = vmatprep.subr.bf16.mxu0 0
    %10729 = vmatpush1.bf16.msra.mxu0 %v10691
    %10730 = vmatprep.subr.bf16.mxu0 0
    %10731 = vmatpush1.bf16.msra.mxu0 %v10690
    %10732 = vmatprep.subr.bf16.mxu0 0
    %10733 = vmatpush1.bf16.msra.mxu0 %v10689
    %10734 = vmatprep.subr.bf16.mxu0 0
    %10735 = vmatpush1.bf16.msra.mxu0 %v10688
    %10736 = vmatprep.subr.bf16.mxu0 0
    %10737 = vmatpush2.bf16.msra.mxu0 %v10703
    %10738 = vmatprep.subr.bf16.mxu0 0
    %10739 = vmatpush2.bf16.msra.mxu0 %v10702
    %10740 = vmatprep.subr.bf16.mxu0 0
    %10741 = vmatpush2.bf16.msra.mxu0 %v10701
    %10742 = vmatprep.subr.bf16.mxu0 0
    %10743 = vmatpush2.bf16.msra.mxu0 %v10700
    %10744 = vmatprep.subr.bf16.mxu0 0
    %10745 = vmatpush2.bf16.msra.mxu0 %v10699
    %10746 = vmatprep.subr.bf16.mxu0 0
    %10747 = vmatpush2.bf16.msra.mxu0 %v10698
    %10748 = vmatprep.subr.bf16.mxu0 0
    %10749 = vmatpush2.bf16.msra.mxu0 %v10697
    %10750 = vmatprep.subr.bf16.mxu0 0
    %10751 = vmatpush2.bf16.msra.mxu0 %v10696
    %10752 = vmatprep.mubr.bf16.mxu0 %v10591
    %10753 = vmatmul.mubr.bf16.gmra.mxu0 %v10590
    %v10754 = vpop.f32.mrf.mxu0
    %v10755 = vadd.f32 0.0, %v10754
    %v10756 = vpop.f32.mrf.mxu0
    %v10757 = vpop.f32.mrf.mxu0
    %v10758 = vpop.f32.mrf.mxu0
    %10759 = vdwg.mxu0
    %v10760 = vld [vmem:[%s13] sm:$0xff]
    %v10761 = vld [vmem:[%s13 + $0x8] sm:$0xff]
    %v10762 = vld [vmem:[%s13 + $0x10] sm:$0xff]
    %v10763 = vld [vmem:[%s13 + $0x18] sm:$0xff]
    %v10764 = vld [vmem:[%s13 + $0x20] sm:$0xff]
    %v10765 = vld [vmem:[%s13 + $0x28] sm:$0xff]
    %v10766 = vld [vmem:[%s13 + $0x30] sm:$0xff]
    %v10767 = vld [vmem:[%s13 + $0x38] sm:$0xff]
    %vm10768 = vcmask 523264
    %v10770 = vsel %vm10768, %v10755, 0
    %10772 = vmatprep.subr.mxu0 0.0
    %10773 = vmatpush1.msra.mxu0 0.0
    %10774 = vmatprep.subr.mxu0 0.0
    %10775 = vmatpush1.msra.mxu0 0.0
    %10776 = vmatprep.subr.mxu0 0.0
    %10777 = vmatpush1.msra.mxu0 0.0
    %10778 = vmatprep.subr.mxu0 0.0
    %10779 = vmatpush1.msra.mxu0 0.0
    %10780 = vmatprep.subr.mxu0 0.0
    %10781 = vmatpush1.msra.mxu0 0.0
    %10782 = vmatprep.subr.mxu0 0.0
    %10783 = vmatpush1.msra.mxu0 0.0
    %10784 = vmatprep.subr.mxu0 0.0
    %10785 = vmatpush1.msra.mxu0 0.0
    %10786 = vmatprep.subr.mxu0 0.0
    %10787 = vmatpush1.msra.mxu0 0.0
    %10788 = vmatprep.subr.mxu0 0.0
    %10789 = vmatpush1.msra.mxu0 %v10767
    %10790 = vmatprep.subr.mxu0 0.0
    %10791 = vmatpush1.msra.mxu0 %v10766
    %10792 = vmatprep.subr.mxu0 0.0
    %10793 = vmatpush1.msra.mxu0 %v10765
    %10794 = vmatprep.subr.mxu0 0.0
    %10795 = vmatpush1.msra.mxu0 %v10764
    %10796 = vmatprep.subr.mxu0 0.0
    %10797 = vmatpush1.msra.mxu0 %v10763
    %10798 = vmatprep.subr.mxu0 0.0
    %10799 = vmatpush1.msra.mxu0 %v10762
    %10800 = vmatprep.subr.mxu0 0.0
    %10801 = vmatpush1.msra.mxu0 %v10761
    %10802 = vmatprep.subr.mxu0 0.0
    %10803 = vmatpush1.msra.mxu0 %v10760
    %10804 = vmatprep.subr.mxu0 0.0
    %10805 = vmatpush2.msra.mxu0 0.0
    %10806 = vmatprep.subr.mxu0 0.0
    %10807 = vmatpush2.msra.mxu0 0.0
    %10808 = vmatprep.subr.mxu0 0.0
    %10809 = vmatpush2.msra.mxu0 0.0
    %10810 = vmatprep.subr.mxu0 0.0
    %10811 = vmatpush2.msra.mxu0 0.0
    %10812 = vmatprep.subr.mxu0 0.0
    %10813 = vmatpush2.msra.mxu0 0.0
    %10814 = vmatprep.subr.mxu0 0.0
    %10815 = vmatpush2.msra.mxu0 0.0
    %10816 = vmatprep.subr.mxu0 0.0
    %10817 = vmatpush2.msra.mxu0 0.0
    %10818 = vmatprep.subr.mxu0 0.0
    %10819 = vmatpush2.msra.mxu0 0.0
    %10820 = vmatprep.subr.mxu0 0.0
    %10821 = vmatpush2.msra.mxu0 0.0
    %10822 = vmatprep.subr.mxu0 0.0
    %10823 = vmatpush2.msra.mxu0 0.0
    %10824 = vmatprep.subr.mxu0 0.0
    %10825 = vmatpush2.msra.mxu0 0.0
    %10826 = vmatprep.subr.mxu0 0.0
    %10827 = vmatpush2.msra.mxu0 0.0
    %10828 = vmatprep.subr.mxu0 0.0
    %10829 = vmatpush2.msra.mxu0 0.0
    %10830 = vmatprep.subr.mxu0 0.0
    %10831 = vmatpush2.msra.mxu0 0.0
    %10832 = vmatprep.subr.mxu0 0.0
    %10833 = vmatpush2.msra.mxu0 0.0
    %10834 = vmatprep.subr.mxu0 0.0
    %10835 = vmatpush2.msra.mxu0 0.0
    %10836 = vmatprep.mubr.f32.mxu0 0.0
    %10837 = vmatmul.mubr.f32.gmra.mxu0 %v10770
    %v10838 = vpop.f32.mrf.mxu0
    %v10839 = vadd.f32 0.0, %v10838
    %v10840 = vpop.f32.mrf.mxu0
    %10841 = vdwg.mxu0
    %v10842 = vsel %vm8282, %v10839, 0.0
    %v10843 = vrot.slane %v10842, 4
    %v10844 = vadd.f32 %v10842, %v10843
    %v10845 = vrot.slane %v10844, 2
    %v10846 = vadd.f32 %v10844, %v10845
    %v10847 = vrot.slane %v10846, 1
    %v10848 = vadd.f32 %v10846, %v10847
    %v10849 = vmul.f32 %v10755, %v10755
    %v10851 = vsel %vm10768, %v10849, 0
    %10853 = vmatprep.subr.mxu0 0.0
    %10854 = vmatpush1.msra.mxu0 0.0
    %10855 = vmatprep.subr.mxu0 0.0
    %10856 = vmatpush1.msra.mxu0 0.0
    %10857 = vmatprep.subr.mxu0 0.0
    %10858 = vmatpush1.msra.mxu0 0.0
    %10859 = vmatprep.subr.mxu0 0.0
    %10860 = vmatpush1.msra.mxu0 0.0
    %10861 = vmatprep.subr.mxu0 0.0
    %10862 = vmatpush1.msra.mxu0 0.0
    %10863 = vmatprep.subr.mxu0 0.0
    %10864 = vmatpush1.msra.mxu0 0.0
    %10865 = vmatprep.subr.mxu0 0.0
    %10866 = vmatpush1.msra.mxu0 0.0
    %10867 = vmatprep.subr.mxu0 0.0
    %10868 = vmatpush1.msra.mxu0 0.0
    %10869 = vmatprep.subr.mxu0 0.0
    %10870 = vmatpush1.msra.mxu0 %v10767
    %10871 = vmatprep.subr.mxu0 0.0
    %10872 = vmatpush1.msra.mxu0 %v10766
    %10873 = vmatprep.subr.mxu0 0.0
    %10874 = vmatpush1.msra.mxu0 %v10765
    %10875 = vmatprep.subr.mxu0 0.0
    %10876 = vmatpush1.msra.mxu0 %v10764
    %10877 = vmatprep.subr.mxu0 0.0
    %10878 = vmatpush1.msra.mxu0 %v10763
    %10879 = vmatprep.subr.mxu0 0.0
    %10880 = vmatpush1.msra.mxu0 %v10762
    %10881 = vmatprep.subr.mxu0 0.0
    %10882 = vmatpush1.msra.mxu0 %v10761
    %10883 = vmatprep.subr.mxu0 0.0
    %10884 = vmatpush1.msra.mxu0 %v10760
    %10885 = vmatprep.subr.mxu0 0.0
    %10886 = vmatpush2.msra.mxu0 0.0
    %10887 = vmatprep.subr.mxu0 0.0
    %10888 = vmatpush2.msra.mxu0 0.0
    %10889 = vmatprep.subr.mxu0 0.0
    %10890 = vmatpush2.msra.mxu0 0.0
    %10891 = vmatprep.subr.mxu0 0.0
    %10892 = vmatpush2.msra.mxu0 0.0
    %10893 = vmatprep.subr.mxu0 0.0
    %10894 = vmatpush2.msra.mxu0 0.0
    %10895 = vmatprep.subr.mxu0 0.0
    %10896 = vmatpush2.msra.mxu0 0.0
    %10897 = vmatprep.subr.mxu0 0.0
    %10898 = vmatpush2.msra.mxu0 0.0
    %10899 = vmatprep.subr.mxu0 0.0
    %10900 = vmatpush2.msra.mxu0 0.0
    %10901 = vmatprep.subr.mxu0 0.0
    %10902 = vmatpush2.msra.mxu0 0.0
    %10903 = vmatprep.subr.mxu0 0.0
    %10904 = vmatpush2.msra.mxu0 0.0
    %10905 = vmatprep.subr.mxu0 0.0
    %10906 = vmatpush2.msra.mxu0 0.0
    %10907 = vmatprep.subr.mxu0 0.0
    %10908 = vmatpush2.msra.mxu0 0.0
    %10909 = vmatprep.subr.mxu0 0.0
    %10910 = vmatpush2.msra.mxu0 0.0
    %10911 = vmatprep.subr.mxu0 0.0
    %10912 = vmatpush2.msra.mxu0 0.0
    %10913 = vmatprep.subr.mxu0 0.0
    %10914 = vmatpush2.msra.mxu0 0.0
    %10915 = vmatprep.subr.mxu0 0.0
    %10916 = vmatpush2.msra.mxu0 0.0
    %10917 = vmatprep.mubr.f32.mxu0 0.0
    %10918 = vmatmul.mubr.f32.gmra.mxu0 %v10851
    %v10919 = vpop.f32.mrf.mxu0
    %v10920 = vadd.f32 0.0, %v10919
    %v10921 = vpop.f32.mrf.mxu0
    %10922 = vdwg.mxu0
    %v10923 = vsel %vm8282, %v10920, 0.0
    %v10924 = vrot.slane %v10923, 4
    %v10925 = vadd.f32 %v10923, %v10924
    %v10926 = vrot.slane %v10925, 2
    %v10927 = vadd.f32 %v10925, %v10926
    %v10928 = vrot.slane %v10927, 1
    %v10929 = vadd.f32 %v10927, %v10928
    %v10930 = vmul.f32 %v10848, 0.125
    %v10931 = vmul.f32 %v10929, 0.125
    %v10932 = vmul.f32 %v10930, %v10930
    %v10933 = vsub.f32 %v10931, %v10932
    %v10934 = vmax.f32 %v10933, 0.0
    %v10935 = vld [vmem:[#allocation18] sm:$0x1]
    %v10936 = vadd.f32 %v10934, 1e-05
    %v10937 = vrsqrt.pop %v10936
    %v10938 = vmul.f32 %v10935, %v10937
    %v10939 = vld [vmem:[#allocation19] sm:$0x1]
    %v10940 = vmul.f32 %v10930, %v10938
    %v10941 = vsub.f32 %v10939, %v10940
    %v10942 = vld [vmem:[#allocation16] sm:$0xff]
    %v10943 = vld [vmem:[#allocation16 + $0x8] sm:$0xff]
    %v10945 = vsel %vm8613, %v10938, 0
    %10947 = vmatprep.subr.mxu0 0.0
    %10948 = vmatpush1.msra.mxu0 0.0
    %10949 = vmatprep.subr.mxu0 0.0
    %10950 = vmatpush1.msra.mxu0 0.0
    %10951 = vmatprep.subr.mxu0 0.0
    %10952 = vmatpush1.msra.mxu0 0.0
    %10953 = vmatprep.subr.mxu0 0.0
    %10954 = vmatpush1.msra.mxu0 0.0
    %10955 = vmatprep.subr.mxu0 0.0
    %10956 = vmatpush1.msra.mxu0 0.0
    %10957 = vmatprep.subr.mxu0 0.0
    %10958 = vmatpush1.msra.mxu0 0.0
    %10959 = vmatprep.subr.mxu0 0.0
    %10960 = vmatpush1.msra.mxu0 0.0
    %10961 = vmatprep.subr.mxu0 0.0
    %10962 = vmatpush1.msra.mxu0 0.0
    %10963 = vmatprep.subr.mxu0 0.0
    %10964 = vmatpush1.msra.mxu0 0.0
    %10965 = vmatprep.subr.mxu0 0.0
    %10966 = vmatpush1.msra.mxu0 0.0
    %10967 = vmatprep.subr.mxu0 0.0
    %10968 = vmatpush1.msra.mxu0 0.0
    %10969 = vmatprep.subr.mxu0 0.0
    %10970 = vmatpush1.msra.mxu0 0.0
    %10971 = vmatprep.subr.mxu0 0.0
    %10972 = vmatpush1.msra.mxu0 0.0
    %10973 = vmatprep.subr.mxu0 0.0
    %10974 = vmatpush1.msra.mxu0 0.0
    %10975 = vmatprep.subr.mxu0 0.0
    %10976 = vmatpush1.msra.mxu0 %v10943
    %10977 = vmatprep.subr.mxu0 0.0
    %10978 = vmatpush1.msra.mxu0 %v10942
    %10979 = vmatprep.subr.mxu0 0.0
    %10980 = vmatpush2.msra.mxu0 0.0
    %10981 = vmatprep.subr.mxu0 0.0
    %10982 = vmatpush2.msra.mxu0 0.0
    %10983 = vmatprep.subr.mxu0 0.0
    %10984 = vmatpush2.msra.mxu0 0.0
    %10985 = vmatprep.subr.mxu0 0.0
    %10986 = vmatpush2.msra.mxu0 0.0
    %10987 = vmatprep.subr.mxu0 0.0
    %10988 = vmatpush2.msra.mxu0 0.0
    %10989 = vmatprep.subr.mxu0 0.0
    %10990 = vmatpush2.msra.mxu0 0.0
    %10991 = vmatprep.subr.mxu0 0.0
    %10992 = vmatpush2.msra.mxu0 0.0
    %10993 = vmatprep.subr.mxu0 0.0
    %10994 = vmatpush2.msra.mxu0 0.0
    %10995 = vmatprep.subr.mxu0 0.0
    %10996 = vmatpush2.msra.mxu0 0.0
    %10997 = vmatprep.subr.mxu0 0.0
    %10998 = vmatpush2.msra.mxu0 0.0
    %10999 = vmatprep.subr.mxu0 0.0
    %11000 = vmatpush2.msra.mxu0 0.0
    %11001 = vmatprep.subr.mxu0 0.0
    %11002 = vmatpush2.msra.mxu0 0.0
    %11003 = vmatprep.subr.mxu0 0.0
    %11004 = vmatpush2.msra.mxu0 0.0
    %11005 = vmatprep.subr.mxu0 0.0
    %11006 = vmatpush2.msra.mxu0 0.0
    %11007 = vmatprep.subr.mxu0 0.0
    %11008 = vmatpush2.msra.mxu0 0.0
    %11009 = vmatprep.subr.mxu0 0.0
    %11010 = vmatpush2.msra.mxu0 0.0
    %11011 = vmatprep.mubr.f32.mxu0 0.0
    %11012 = vmatmul.mubr.f32.gmra.mxu0 %v10945
    %v11013 = vpop.f32.mrf.mxu0
    %v11014 = vadd.f32 0.0, %v11013
    %v11015 = vpop.f32.mrf.mxu0
    %11016 = vdwg.mxu0
    %v11018 = vsel %vm8613, %v10941, 0
    %11020 = vmatprep.subr.mxu0 0.0
    %11021 = vmatpush1.msra.mxu0 0.0
    %11022 = vmatprep.subr.mxu0 0.0
    %11023 = vmatpush1.msra.mxu0 0.0
    %11024 = vmatprep.subr.mxu0 0.0
    %11025 = vmatpush1.msra.mxu0 0.0
    %11026 = vmatprep.subr.mxu0 0.0
    %11027 = vmatpush1.msra.mxu0 0.0
    %11028 = vmatprep.subr.mxu0 0.0
    %11029 = vmatpush1.msra.mxu0 0.0
    %11030 = vmatprep.subr.mxu0 0.0
    %11031 = vmatpush1.msra.mxu0 0.0
    %11032 = vmatprep.subr.mxu0 0.0
    %11033 = vmatpush1.msra.mxu0 0.0
    %11034 = vmatprep.subr.mxu0 0.0
    %11035 = vmatpush1.msra.mxu0 0.0
    %11036 = vmatprep.subr.mxu0 0.0
    %11037 = vmatpush1.msra.mxu0 0.0
    %11038 = vmatprep.subr.mxu0 0.0
    %11039 = vmatpush1.msra.mxu0 0.0
    %11040 = vmatprep.subr.mxu0 0.0
    %11041 = vmatpush1.msra.mxu0 0.0
    %11042 = vmatprep.subr.mxu0 0.0
    %11043 = vmatpush1.msra.mxu0 0.0
    %11044 = vmatprep.subr.mxu0 0.0
    %11045 = vmatpush1.msra.mxu0 0.0
    %11046 = vmatprep.subr.mxu0 0.0
    %11047 = vmatpush1.msra.mxu0 0.0
    %11048 = vmatprep.subr.mxu0 0.0
    %11049 = vmatpush1.msra.mxu0 %v10943
    %11050 = vmatprep.subr.mxu0 0.0
    %11051 = vmatpush1.msra.mxu0 %v10942
    %11052 = vmatprep.subr.mxu0 0.0
    %11053 = vmatpush2.msra.mxu0 0.0
    %11054 = vmatprep.subr.mxu0 0.0
    %11055 = vmatpush2.msra.mxu0 0.0
    %11056 = vmatprep.subr.mxu0 0.0
    %11057 = vmatpush2.msra.mxu0 0.0
    %11058 = vmatprep.subr.mxu0 0.0
    %11059 = vmatpush2.msra.mxu0 0.0
    %11060 = vmatprep.subr.mxu0 0.0
    %11061 = vmatpush2.msra.mxu0 0.0
    %11062 = vmatprep.subr.mxu0 0.0
    %11063 = vmatpush2.msra.mxu0 0.0
    %11064 = vmatprep.subr.mxu0 0.0
    %11065 = vmatpush2.msra.mxu0 0.0
    %11066 = vmatprep.subr.mxu0 0.0
    %11067 = vmatpush2.msra.mxu0 0.0
    %11068 = vmatprep.subr.mxu0 0.0
    %11069 = vmatpush2.msra.mxu0 0.0
    %11070 = vmatprep.subr.mxu0 0.0
    %11071 = vmatpush2.msra.mxu0 0.0
    %11072 = vmatprep.subr.mxu0 0.0
    %11073 = vmatpush2.msra.mxu0 0.0
    %11074 = vmatprep.subr.mxu0 0.0
    %11075 = vmatpush2.msra.mxu0 0.0
    %11076 = vmatprep.subr.mxu0 0.0
    %11077 = vmatpush2.msra.mxu0 0.0
    %11078 = vmatprep.subr.mxu0 0.0
    %11079 = vmatpush2.msra.mxu0 0.0
    %11080 = vmatprep.subr.mxu0 0.0
    %11081 = vmatpush2.msra.mxu0 0.0
    %11082 = vmatprep.subr.mxu0 0.0
    %11083 = vmatpush2.msra.mxu0 0.0
    %11084 = vmatprep.mubr.f32.mxu0 0.0
    %11085 = vmatmul.mubr.f32.gmra.mxu0 %v11018
    %v11086 = vpop.f32.mrf.mxu0
    %v11087 = vadd.f32 0.0, %v11086
    %v11088 = vpop.f32.mrf.mxu0
    %11089 = vdwg.mxu0
    %v11090 = vlaneseq
    %v11091 = vshrl.u32 %v11090, 7
    %v11092 = vsub.s32 0, %v11091
    %v11093 = vrot.slane %v11014, %v11092
    %v11094 = vmul.f32 %v10755, %v11093
    %v11095 = vlaneseq
    %v11096 = vshrl.u32 %v11095, 7
    %v11097 = vsub.s32 0, %v11096
    %v11098 = vrot.slane %v11087, %v11097
    %v11099 = vadd.f32 %v11094, %v11098
    %v11100 = vmax.f32 %v11099, 0.0
    %v11101 = vld [vmem:[%s17] sm:$0xff]
    %v11102 = vld [vmem:[%s17 + $0x8] sm:$0xff]
    %v11103 = vld [vmem:[%s17 + $0x10] sm:$0xff]
    %v11104 = vld [vmem:[%s17 + $0x18] sm:$0xff]
    %v11105 = vld [vmem:[%s17 + $0x20] sm:$0xff]
    %v11106 = vld [vmem:[%s17 + $0x28] sm:$0xff]
    %v11107 = vld [vmem:[%s17 + $0x30] sm:$0xff]
    %v11108 = vld [vmem:[%s17 + $0x38] sm:$0xff]
    %v11109 = vld [vmem:[#allocation21] sm:$0x1]
    %v11111 = vlaneseq
    %v11112 = vshrl.u32 %v11111, 7
    %v11113 = vsub.s32 0, %v11112
    %v11114 = vrot.slane %v11109, %v11113
    %v11117 = vsel %vm10768, %v11100, 0
    %11119 = vmatprep.subr.mxu0 0.0
    %11120 = vmatpush1.msra.mxu0 0.0
    %11121 = vmatprep.subr.mxu0 0.0
    %11122 = vmatpush1.msra.mxu0 0.0
    %11123 = vmatprep.subr.mxu0 0.0
    %11124 = vmatpush1.msra.mxu0 0.0
    %11125 = vmatprep.subr.mxu0 0.0
    %11126 = vmatpush1.msra.mxu0 0.0
    %11127 = vmatprep.subr.mxu0 0.0
    %11128 = vmatpush1.msra.mxu0 0.0
    %11129 = vmatprep.subr.mxu0 0.0
    %11130 = vmatpush1.msra.mxu0 0.0
    %11131 = vmatprep.subr.mxu0 0.0
    %11132 = vmatpush1.msra.mxu0 0.0
    %11133 = vmatprep.subr.mxu0 0.0
    %11134 = vmatpush1.msra.mxu0 0.0
    %11135 = vmatprep.subr.mxu0 0.0
    %11136 = vmatpush1.msra.mxu0 %v11108
    %11137 = vmatprep.subr.mxu0 0.0
    %11138 = vmatpush1.msra.mxu0 %v11107
    %11139 = vmatprep.subr.mxu0 0.0
    %11140 = vmatpush1.msra.mxu0 %v11106
    %11141 = vmatprep.subr.mxu0 0.0
    %11142 = vmatpush1.msra.mxu0 %v11105
    %11143 = vmatprep.subr.mxu0 0.0
    %11144 = vmatpush1.msra.mxu0 %v11104
    %11145 = vmatprep.subr.mxu0 0.0
    %11146 = vmatpush1.msra.mxu0 %v11103
    %11147 = vmatprep.subr.mxu0 0.0
    %11148 = vmatpush1.msra.mxu0 %v11102
    %11149 = vmatprep.subr.mxu0 0.0
    %11150 = vmatpush1.msra.mxu0 %v11101
    %11151 = vmatprep.subr.mxu0 0.0
    %11152 = vmatpush2.msra.mxu0 0.0
    %11153 = vmatprep.subr.mxu0 0.0
    %11154 = vmatpush2.msra.mxu0 0.0
    %11155 = vmatprep.subr.mxu0 0.0
    %11156 = vmatpush2.msra.mxu0 0.0
    %11157 = vmatprep.subr.mxu0 0.0
    %11158 = vmatpush2.msra.mxu0 0.0
    %11159 = vmatprep.subr.mxu0 0.0
    %11160 = vmatpush2.msra.mxu0 0.0
    %11161 = vmatprep.subr.mxu0 0.0
    %11162 = vmatpush2.msra.mxu0 0.0
    %11163 = vmatprep.subr.mxu0 0.0
    %11164 = vmatpush2.msra.mxu0 0.0
    %11165 = vmatprep.subr.mxu0 0.0
    %11166 = vmatpush2.msra.mxu0 0.0
    %11167 = vmatprep.subr.mxu0 0.0
    %11168 = vmatpush2.msra.mxu0 0.0
    %11169 = vmatprep.subr.mxu0 0.0
    %11170 = vmatpush2.msra.mxu0 0.0
    %11171 = vmatprep.subr.mxu0 0.0
    %11172 = vmatpush2.msra.mxu0 0.0
    %11173 = vmatprep.subr.mxu0 0.0
    %11174 = vmatpush2.msra.mxu0 0.0
    %11175 = vmatprep.subr.mxu0 0.0
    %11176 = vmatpush2.msra.mxu0 0.0
    %11177 = vmatprep.subr.mxu0 0.0
    %11178 = vmatpush2.msra.mxu0 0.0
    %11179 = vmatprep.subr.mxu0 0.0
    %11180 = vmatpush2.msra.mxu0 0.0
    %11181 = vmatprep.subr.mxu0 0.0
    %11182 = vmatpush2.msra.mxu0 0.0
    %11183 = vmatprep.mubr.f32.mxu0 0.0
    %11184 = vmatmul.mubr.f32.gmra.mxu0 %v11117
    %v11185 = vpop.f32.mrf.mxu0
    %v11186 = vadd.f32 %v11114, %v11185
    %v11187 = vpop.f32.mrf.mxu0
    %11188 = vdwg.mxu0
    %v11189 = vld [vmem:[#allocation2] sm:$0x3]
    %v11190 = vmul.f32 %v11186, 0.5
    %v11191 = vmul.f32 %v11190, 1.442695
    %v11192 = vpow.pop %v11191
    %11194 = vrot.lane.b32.xlu0 %v11192, 120
    %v11195 = vpop.permute.xlu0 %11194
    %v11197 = vmul.f32 %v11189, %v11195
    %v11198 = vadd.f32 %v11186, %v11197
    %v11199 = vld [vmem:[#allocation22] sm:$0xff]
    %v11200 = vld [vmem:[#allocation24] sm:$0x1]
    %v11202 = vlaneseq
    %v11203 = vshrl.u32 %v11202, 7
    %v11204 = vsub.s32 0, %v11203
    %v11205 = vrot.slane %v11200, %v11204
    %vm11207 = vcmask 64512
    %v11209 = vsel %vm11207, %v11198, 0
    %11211 = vmatprep.subr.mxu0 0.0
    %11212 = vmatpush1.msra.mxu0 0.0
    %11213 = vmatprep.subr.mxu0 0.0
    %11214 = vmatpush1.msra.mxu0 0.0
    %11215 = vmatprep.subr.mxu0 0.0
    %11216 = vmatpush1.msra.mxu0 0.0
    %11217 = vmatprep.subr.mxu0 0.0
    %11218 = vmatpush1.msra.mxu0 0.0
    %11219 = vmatprep.subr.mxu0 0.0
    %11220 = vmatpush1.msra.mxu0 0.0
    %11221 = vmatprep.subr.mxu0 0.0
    %11222 = vmatpush1.msra.mxu0 0.0
    %11223 = vmatprep.subr.mxu0 0.0
    %11224 = vmatpush1.msra.mxu0 0.0
    %11225 = vmatprep.subr.mxu0 0.0
    %11226 = vmatpush1.msra.mxu0 0.0
    %11227 = vmatprep.subr.mxu0 0.0
    %11228 = vmatpush1.msra.mxu0 0.0
    %11229 = vmatprep.subr.mxu0 0.0
    %11230 = vmatpush1.msra.mxu0 0.0
    %11231 = vmatprep.subr.mxu0 0.0
    %11232 = vmatpush1.msra.mxu0 0.0
    %11233 = vmatprep.subr.mxu0 0.0
    %11234 = vmatpush1.msra.mxu0 0.0
    %11235 = vmatprep.subr.mxu0 0.0
    %11236 = vmatpush1.msra.mxu0 0.0
    %11237 = vmatprep.subr.mxu0 0.0
    %11238 = vmatpush1.msra.mxu0 0.0
    %11239 = vmatprep.subr.mxu0 0.0
    %11240 = vmatpush1.msra.mxu0 0.0
    %11241 = vmatprep.subr.mxu0 0.0
    %11242 = vmatpush1.msra.mxu0 %v11199
    %11243 = vmatprep.subr.mxu0 0.0
    %11244 = vmatpush2.msra.mxu0 0.0
    %11245 = vmatprep.subr.mxu0 0.0
    %11246 = vmatpush2.msra.mxu0 0.0
    %11247 = vmatprep.subr.mxu0 0.0
    %11248 = vmatpush2.msra.mxu0 0.0
    %11249 = vmatprep.subr.mxu0 0.0
    %11250 = vmatpush2.msra.mxu0 0.0
    %11251 = vmatprep.subr.mxu0 0.0
    %11252 = vmatpush2.msra.mxu0 0.0
    %11253 = vmatprep.subr.mxu0 0.0
    %11254 = vmatpush2.msra.mxu0 0.0
    %11255 = vmatprep.subr.mxu0 0.0
    %11256 = vmatpush2.msra.mxu0 0.0
    %11257 = vmatprep.subr.mxu0 0.0
    %11258 = vmatpush2.msra.mxu0 0.0
    %11259 = vmatprep.subr.mxu0 0.0
    %11260 = vmatpush2.msra.mxu0 0.0
    %11261 = vmatprep.subr.mxu0 0.0
    %11262 = vmatpush2.msra.mxu0 0.0
    %11263 = vmatprep.subr.mxu0 0.0
    %11264 = vmatpush2.msra.mxu0 0.0
    %11265 = vmatprep.subr.mxu0 0.0
    %11266 = vmatpush2.msra.mxu0 0.0
    %11267 = vmatprep.subr.mxu0 0.0
    %11268 = vmatpush2.msra.mxu0 0.0
    %11269 = vmatprep.subr.mxu0 0.0
    %11270 = vmatpush2.msra.mxu0 0.0
    %11271 = vmatprep.subr.mxu0 0.0
    %11272 = vmatpush2.msra.mxu0 0.0
    %11273 = vmatprep.subr.mxu0 0.0
    %11274 = vmatpush2.msra.mxu0 0.0
    %11275 = vmatprep.mubr.f32.mxu0 0.0
    %11276 = vmatmul.mubr.f32.gmra.mxu0 %v11209
    %v11277 = vpop.f32.mrf.mxu0
    %v11278 = vadd.f32 %v11205, %v11277
    %v11279 = vpop.f32.mrf.mxu0
    %11280 = vdwg.mxu0
    %v11281 = vld [vmem:[#allocation25] sm:$0xff]
    %v11282 = vld [vmem:[#allocation27] sm:$0x1]
    %v11284 = vlaneseq
    %v11285 = vshrl.u32 %v11284, 7
    %v11286 = vsub.s32 0, %v11285
    %v11287 = vrot.slane %v11282, %v11286
    %v11290 = vsel %vm11207, %v11278, 0
    %11292 = vmatprep.subr.mxu0 0.0
    %11293 = vmatpush1.msra.mxu0 0.0
    %11294 = vmatprep.subr.mxu0 0.0
    %11295 = vmatpush1.msra.mxu0 0.0
    %11296 = vmatprep.subr.mxu0 0.0
    %11297 = vmatpush1.msra.mxu0 0.0
    %11298 = vmatprep.subr.mxu0 0.0
    %11299 = vmatpush1.msra.mxu0 0.0
    %11300 = vmatprep.subr.mxu0 0.0
    %11301 = vmatpush1.msra.mxu0 0.0
    %11302 = vmatprep.subr.mxu0 0.0
    %11303 = vmatpush1.msra.mxu0 0.0
    %11304 = vmatprep.subr.mxu0 0.0
    %11305 = vmatpush1.msra.mxu0 0.0
    %11306 = vmatprep.subr.mxu0 0.0
    %11307 = vmatpush1.msra.mxu0 0.0
    %11308 = vmatprep.subr.mxu0 0.0
    %11309 = vmatpush1.msra.mxu0 0.0
    %11310 = vmatprep.subr.mxu0 0.0
    %11311 = vmatpush1.msra.mxu0 0.0
    %11312 = vmatprep.subr.mxu0 0.0
    %11313 = vmatpush1.msra.mxu0 0.0
    %11314 = vmatprep.subr.mxu0 0.0
    %11315 = vmatpush1.msra.mxu0 0.0
    %11316 = vmatprep.subr.mxu0 0.0
    %11317 = vmatpush1.msra.mxu0 0.0
    %11318 = vmatprep.subr.mxu0 0.0
    %11319 = vmatpush1.msra.mxu0 0.0
    %11320 = vmatprep.subr.mxu0 0.0
    %11321 = vmatpush1.msra.mxu0 0.0
    %11322 = vmatprep.subr.mxu0 0.0
    %11323 = vmatpush1.msra.mxu0 %v11281
    %11324 = vmatprep.subr.mxu0 0.0
    %11325 = vmatpush2.msra.mxu0 0.0
    %11326 = vmatprep.subr.mxu0 0.0
    %11327 = vmatpush2.msra.mxu0 0.0
    %11328 = vmatprep.subr.mxu0 0.0
    %11329 = vmatpush2.msra.mxu0 0.0
    %11330 = vmatprep.subr.mxu0 0.0
    %11331 = vmatpush2.msra.mxu0 0.0
    %11332 = vmatprep.subr.mxu0 0.0
    %11333 = vmatpush2.msra.mxu0 0.0
    %11334 = vmatprep.subr.mxu0 0.0
    %11335 = vmatpush2.msra.mxu0 0.0
    %11336 = vmatprep.subr.mxu0 0.0
    %11337 = vmatpush2.msra.mxu0 0.0
    %11338 = vmatprep.subr.mxu0 0.0
    %11339 = vmatpush2.msra.mxu0 0.0
    %11340 = vmatprep.subr.mxu0 0.0
    %11341 = vmatpush2.msra.mxu0 0.0
    %11342 = vmatprep.subr.mxu0 0.0
    %11343 = vmatpush2.msra.mxu0 0.0
    %11344 = vmatprep.subr.mxu0 0.0
    %11345 = vmatpush2.msra.mxu0 0.0
    %11346 = vmatprep.subr.mxu0 0.0
    %11347 = vmatpush2.msra.mxu0 0.0
    %11348 = vmatprep.subr.mxu0 0.0
    %11349 = vmatpush2.msra.mxu0 0.0
    %11350 = vmatprep.subr.mxu0 0.0
    %11351 = vmatpush2.msra.mxu0 0.0
    %11352 = vmatprep.subr.mxu0 0.0
    %11353 = vmatpush2.msra.mxu0 0.0
    %11354 = vmatprep.subr.mxu0 0.0
    %11355 = vmatpush2.msra.mxu0 0.0
    %11356 = vmatprep.mubr.f32.mxu0 0.0
    %11357 = vmatmul.mubr.f32.gmra.mxu0 %v11290
    %v11358 = vpop.f32.mrf.mxu0
    %v11359 = vadd.f32 %v11287, %v11358
    %v11360 = vpop.f32.mrf.mxu0
    %11361 = vdwg.mxu0
    %v11362 = vadd.f32 %v11359, %v11198
    %vm11363 = vcmask 58368
    %v11364 = vsel %vm11363, %v11362, 0.0
    %11365 = vadd.xlane.f32.xlu0 %v11364
    %v11366 = vpop.xlane.xlu0 %11365
    %v11367 = vrcp.pop 8.0
    %v11368 = vmul.f32 %v11366, %v11367
    %v11369 = vsub.f32 %v11362, %v11368
    %v11370 = vmul.f32 %v11369, %v11369
    %v11371 = vsel %vm11363, %v11370, 0.0
    %11372 = vadd.xlane.f32.xlu0 %v11371
    %v11373 = vpop.xlane.xlu0 %11372
    %v11374 = vmul.f32 %v11373, %v11367
    %v11375 = vadd.f32 %v11374, 1e-05
    %v11376 = vrsqrt.pop %v11375
    %v11377 = vmul.f32 %v11369, %v11376
    %v11378 = vld [vmem:[#allocation28] sm:$0x1]
    %v11380 = vlaneseq
    %v11381 = vshrl.u32 %v11380, 7
    %v11382 = vsub.s32 0, %v11381
    %v11383 = vrot.slane %v11378, %v11382
    %v11385 = vmul.f32 %v11377, %v11383
    %v11386 = vld [vmem:[#allocation30] sm:$0x1]
    %v11388 = vlaneseq
    %v11389 = vshrl.u32 %v11388, 7
    %v11390 = vsub.s32 0, %v11389
    %v11391 = vrot.slane %v11386, %v11390
    %v11393 = vadd.f32 %v11385, %v11391
    %11395 = vrot.lane.b32.xlu0 %v11186, 8
    %v11396 = vpop.permute.xlu0 %11395
    %11398 = vrot.lane.b32.xlu0 %v11198, 24
    %v11399 = vpop.permute.xlu0 %11398
    %v11401 = vsel %vm11207, %v11393, %v11396
    %v11402 = vsel %vm8613, %v11401, %v11396
    %vm11403 = vcmask 195584
    %v11404 = vsel %vm11403, %v11402, %v11399
    %vm11405 = vcmask 254976
    %11406 = vst.msk [vmem:[%s25] sm:$0x3] %vm11405, %v11404
    // Predicated region
    $region178: #{manifold_forward.1} parent=1 // pred_check
      _
    $region179: #{manifold_forward.1} parent=1 // pred_check_branch
      %11408 = sbr.rel (0) target = $region181
    $region180: #{manifold_forward.1} parent=1 // pred_region
      _
    $region181: #{manifold_forward.1} parent=1 // pred_fallthru
      _
    // Predicated region
    $region182: #{manifold_forward.1} parent=1 // pred_check
      _
    $region183: #{manifold_forward.1} parent=1 // pred_check_branch
      %11410 = sbr.rel (0) target = $region185
    $region184: #{manifold_forward.1} parent=1 // pred_region
      _
    $region185: #{manifold_forward.1} parent=1 // pred_fallthru
      _
    %11411 = vsyncpa [#allocation3], 1
    %11412 = vsyncpa [#allocation5], 1
    %11413 = vsyncpa [#allocation8], 1
    %11414 = vsyncpa [#allocation11], 1
    %11415 = vsyncpa [#allocation14], 1
    %11416 = vsyncpa [#allocation17], 1
    %11417 = vsyncpa [#allocation20], 1
    %11418 = vsyncpa [#allocation23], 1
    %11419 = vsyncpa [#allocation26], 1
    %11420 = vsyncpa [#allocation29], 1

</llo_original>
